<compile_context>
chip_gen: v6e
topology: v6e:2x2x1
jax: 0.10.0
libtpu: 0.0.40
codegen_flags: <defaults>
</compile_context>

<pallas_src>
import jax
import jax.numpy as jnp
from jax import lax
from jax.experimental import pallas as pl
from jax.experimental.pallas import tpu as pltpu


C_PAD = 128   # conv/residual channels padded 96 -> 128 (lane-dense)
OFF = 8       # sublane-aligned offset of the valid rows inside the work buffer


def _round_up(x, m):
    return (x + m - 1) // m * m


# -----------------------------------------------------------------------------
# Fully fused forward kernel (one grid step = B_TILE batch elements)
# -----------------------------------------------------------------------------
def _make_fused_kernel(*, K1, Cin, Kr, dils, L1, LBUF, P, Lpool, H, BT):
    KC1 = K1 * Cin
    M = BT * LBUF
    inv_p = 1.0 / float(P)

    def kernel(x_ref, w1_ref, s1_ref, b1_ref,
               wr_ref, srs_ref, brs_ref,
               wd1_ref, sd_ref, bd_ref, wd2_ref, o_ref):
        f32, bf16 = jnp.float32, jnp.bfloat16

        # Per-sample row-validity mask in the flat (BT*LBUF, C_PAD) layout:
        # rows [OFF, OFF+L1) of every sample carry real data; everything else
        # is forced to exactly zero so rolled taps see correct zero padding.
        rr = lax.broadcasted_iota(jnp.int32, (BT, LBUF, C_PAD), 1).reshape(M, C_PAD)
        row_mask = (rr >= OFF) & (rr < OFF + L1)

        # ---- Conv1d(Cin->C, k=K1, 'valid') + folded BN + ReLU ---------------
        # Input was im2col'd host-side -> a single bf16 MXU dot with K=K1*Cin.
        xin = x_ref[...].reshape(M, KC1)
        y = jnp.dot(xin, w1_ref[...], preferred_element_type=f32)
        y = y * s1_ref[...] + b1_ref[...]
        act = jnp.where(row_mask, jnp.maximum(y, 0.0), 0.0)      # (M, C_PAD) f32
        skip = act                                               # residual skip

        # ---- Residual tower: Conv1d('same', dil=1/2/4) + BN + ReLU ----------
        # Kr taps fused along the contraction dim: lane-concat of the rolled
        # activations -> one K = Kr*C_PAD dot per block.  Rolls are on the flat
        # buffer; OFF/LBUF headroom keeps every tap inside its own sample at
        # all rows that survive the mask.
        for i, d in enumerate(dils):
            left = d * (Kr - 1) // 2                             # PyTorch 'same'
            taps = []
            for k in range(Kr):
                shift = (left - k * d) % M
                xk = act if shift == 0 else pltpu.roll(act, shift=shift, axis=0)
                taps.append(xk.astype(bf16))
            lhs = jnp.concatenate(taps, axis=-1)                 # (M, Kr*C_PAD)
            y = jnp.dot(lhs, wr_ref[i], preferred_element_type=f32)
            y = y * srs_ref[i] + brs_ref[i]
            act = jnp.where(row_mask, jnp.maximum(y, 0.0), 0.0)

        # ---- Residual add + AvgPool1d(P, stride=1) via XLU rolls + adds -----
        s_sum = act + skip                                       # zero off-rows
        pooled = s_sum
        for j in range(1, P):
            pooled = pooled + pltpu.roll(s_sum, shift=M - j, axis=0)
        pooled = (pooled * inv_p).reshape(BT, LBUF, C_PAD)
        # valid pooled rows per sample: [OFF, OFF+Lpool)

        # ---- Flatten (channel-major) + Linear(flat -> H) + BN + ReLU --------
        # Lane-concat of the Lpool valid pooled rows reproduces PyTorch's
        # flatten order against the (Lpool*C_PAD, H) weight slab, so the whole
        # flatten+Linear is a single K = Lpool*C_PAD dot with M = BT.
        rows_d = [pooled[:, OFF + l, :].astype(bf16) for l in range(Lpool)]
        lhs_d = jnp.concatenate(rows_d, axis=-1)                 # (BT, Lpool*C_PAD)
        h1 = jnp.dot(lhs_d, wd1_ref[...], preferred_element_type=f32)
        h1 = jnp.maximum(h1 * sd_ref[...] + bd_ref[...], 0.0)

        # ---- Linear(H -> 1), output lanes padded to 128 ----------------------
        out = jnp.dot(h1.astype(bf16), wd2_ref[...], preferred_element_type=f32)
        o_ref[...] = out.astype(o_ref.dtype)                     # (BT, 128) store

    return kernel


# -----------------------------------------------------------------------------
# Parameter construction (synthetic, already folded / padded to kernel layout)
# -----------------------------------------------------------------------------
def _fold_bn(gamma, beta, mean, var, eps=1e-5):
    scale = gamma / jnp.sqrt(var + eps)
    shift = beta - mean * scale
    return scale, shift


def _bn_params(key, c):
    k1, k2, k3, k4 = jax.random.split(key, 4)
    gamma = 1.0 + 0.1 * jax.random.normal(k1, (c,), jnp.float32)
    beta = 0.1 * jax.random.normal(k2, (c,), jnp.float32)
    mean = 0.1 * jax.random.normal(k3, (c,), jnp.float32)
    var = 1.0 + 0.2 * jax.random.uniform(k4, (c,), jnp.float32)
    return _fold_bn(gamma, beta, mean, var)


def _pad_lane(a, target):
    pad = target - a.shape[-1]
    if pad == 0:
        return a
    return jnp.pad(a, [(0, 0)] * (a.ndim - 1) + [(0, pad)])


def init_params(key, *, input_len, input_channels=4, conv_channels=96,
                conv_kernel=11, num_residual_blocks=3, residual_channels=96,
                residual_kernel=3, residual_dilation_base=2,
                avg_pool_kernel=10, dense_hidden=256):
    assert conv_channels == residual_channels and residual_channels <= C_PAD
    C, L, Cin = conv_channels, input_len, input_channels
    K1, Kr, P, H, NB = (conv_kernel, residual_kernel, avg_pool_kernel,
                        dense_hidden, num_residual_blocks)
    dils = tuple(residual_dilation_base ** i for i in range(NB))

    L1 = L - K1 + 1                          # conv1 'valid' output length
    Lpool = L1 - P + 1                       # AvgPool1d(P, stride=1) output length
    assert L1 > 0 and Lpool > 0
    lefts = [d * (Kr - 1) // 2 for d in dils]             # PyTorch 'same' left pad
    rights = [d * (Kr - 1) - lf for d, lf in zip(dils, lefts)]
    assert OFF >= max(lefts), "increase OFF for larger residual dilation/kernel"
    LBUF = _round_up(OFF + L1 + max(rights), 8)

    cfg = dict(L=L, Cin=Cin, C=C, K1=K1, Kr=Kr, dils=dils, NB=NB, L1=L1, P=P,
               Lpool=Lpool, LBUF=LBUF, H=H)
    keys = iter(jax.random.split(key, 4 + 2 * NB + 6))
    p = {"cfg": cfg}

    # Conv1 (PyTorch weight (Cout,Cin,K)) -> im2col layout (K1*Cin, C_PAD), bf16.
    w1 = jax.random.normal(next(keys), (K1, Cin, C), jnp.float32) * (K1 * Cin) ** -0.5
    p["w1"] = _pad_lane(w1, C_PAD).reshape(K1 * Cin, C_PAD).astype(jnp.bfloat16)
    s, b = _bn_params(next(keys), C)
    p["bn1_scale"] = _pad_lane(s, C_PAD)[None, :]
    p["bn1_shift"] = _pad_lane(b, C_PAD)[None, :]

    # Residual tower weights stacked as (NB, Kr*C_PAD, C_PAD): the Kr taps are
    # fused along the contraction dim (row index = k*C_PAD + cin) + folded BN.
    wr, srs, brs = [], [], []
    for _ in range(NB):
        w = jax.random.normal(next(keys), (Kr, C, C), jnp.float32) * (Kr * C) ** -0.5
        w = jnp.pad(w, ((0, 0), (0, C_PAD - C), (0, C_PAD - C)))
        wr.append(w.reshape(Kr * C_PAD, C_PAD))
        s, b = _bn_params(next(keys), C)
        srs.append(_pad_lane(s, C_PAD)[None, :])
        brs.append(_pad_lane(b, C_PAD)[None, :])
    p["wr"] = jnp.stack(wr).astype(jnp.bfloat16)
    p["bnr_scale"] = jnp.stack(srs)
    p["bnr_shift"] = jnp.stack(brs)

    # Dense1: PyTorch Linear(C*Lpool -> H) weight W[h, c*Lpool + l] re-laid out
    # as a (Lpool*C_PAD, H) slab with row index l*C_PAD + c, matching the
    # in-kernel lane-concat of the Lpool pooled rows (channel axis zero-padded).
    flatten_dim = C * Lpool
    wd1 = jax.random.normal(next(keys), (Lpool, C, H), jnp.float32) * flatten_dim ** -0.5
    wd1 = jnp.pad(wd1, ((0, 0), (0, C_PAD - C), (0, 0)))
    p["wd1"] = wd1.reshape(Lpool * C_PAD, H).astype(jnp.bfloat16)
    s, b = _bn_params(next(keys), H)
    p["bnd_scale"] = s[None, :]
    p["bnd_shift"] = b[None, :]

    # Dense2: Linear(H -> 1), lane-padded to 128 (column 0 carries the logit).
    wd2 = jax.random.normal(next(keys), (H, 1), jnp.float32) * H ** -0.5
    p["wd2"] = _pad_lane(wd2, C_PAD).astype(jnp.bfloat16)
    return p


# -----------------------------------------------------------------------------
# Forward wrapper (single pallas_call, batch-tiled parallel grid)
# -----------------------------------------------------------------------------
def residualbind_forward(params, x_ncl, *, b_tile=16):
    cfg = params["cfg"]
    Cin, K1, Kr = cfg["Cin"], cfg["K1"], cfg["Kr"]
    dils, NB, L1, P = cfg["dils"], cfg["NB"], cfg["L1"], cfg["P"]
    Lpool, LBUF, H = cfg["Lpool"], cfg["LBUF"], cfg["H"]
    N = x_ncl.shape[0]
    BT = b_tile
    assert BT % 8 == 0, "b_tile must be a multiple of 8 (sublane-aligned tiles)"
    N_pad = _round_up(N, BT)
    KC1 = K1 * Cin

    # Host-side prep (tiny, one-time): PyTorch NCL -> NLC, im2col over the
    # conv1 receptive field (lane index = k*Cin + ci), place the L1 output
    # rows at sublane offset OFF of the 8-aligned work buffer, pad the batch
    # to a multiple of B_TILE, cast to bf16.
    x = jnp.transpose(x_ncl, (0, 2, 1)).astype(jnp.float32)            # (N, L, Cin)
    x = jnp.concatenate([x[:, k:k + L1, :] for k in range(K1)], axis=-1)  # (N, L1, KC1)
    x = jnp.pad(x, ((0, N_pad - N), (OFF, LBUF - OFF - L1), (0, 0)))
    x = x.astype(jnp.bfloat16)

    kernel = _make_fused_kernel(K1=K1, Cin=Cin, Kr=Kr, dils=dils, L1=L1,
                                LBUF=LBUF, P=P, Lpool=Lpool, H=H, BT=BT)

    c2 = lambda n: (0, 0)
    c3 = lambda n: (0, 0, 0)
    out = pl.pallas_call(
        kernel,
        out_shape=jax.ShapeDtypeStruct((N_pad, C_PAD), jnp.float32),
        grid=(N_pad // BT,),
        in_specs=[
            pl.BlockSpec((BT, LBUF, KC1), lambda n: (n, 0, 0)),  # im2col'd input tile
            pl.BlockSpec((KC1, C_PAD), c2),                      # conv1 weight
            pl.BlockSpec((1, C_PAD), c2),                        # conv1 BN scale
            pl.BlockSpec((1, C_PAD), c2),                        # conv1 BN shift
            pl.BlockSpec((NB, Kr * C_PAD, C_PAD), c3),           # residual weights (tap-fused)
            pl.BlockSpec((NB, 1, C_PAD), c3),                    # residual BN scales
            pl.BlockSpec((NB, 1, C_PAD), c3),                    # residual BN shifts
            pl.BlockSpec((Lpool * C_PAD, H), c2),                # dense1 weight slab
            pl.BlockSpec((1, H), c2),                            # dense1 BN scale
            pl.BlockSpec((1, H), c2),                            # dense1 BN shift
            pl.BlockSpec((H, C_PAD), c2),                        # dense2 weight (padded)
        ],
        out_specs=pl.BlockSpec((BT, C_PAD), lambda n: (n, 0)),
        compiler_params=pltpu.CompilerParams(
            dimension_semantics=("parallel",),
            vmem_limit_bytes=32 * 1024 * 1024,
        ),
    )(x, params["w1"], params["bn1_scale"], params["bn1_shift"],
      params["wr"], params["bnr_scale"], params["bnr_shift"],
      params["wd1"], params["bnd_scale"], params["bnd_shift"], params["wd2"])

    return out[:N, :1]   # (N, 1): the real logit lives in lane 0


if __name__ == "__main__":
    key = jax.random.PRNGKey(0)
    kx, kp = jax.random.split(key)

    N, C_IN, L = 32, 4, 32                       # small, module-consistent shapes
    B_TILE = 16                                  # -> 2 "parallel" grid steps
    x_ncl = jax.random.normal(kx, (N, C_IN, L), jnp.float32)   # PyTorch NCL input

    params = init_params(kp, input_len=L, input_channels=C_IN)
    fwd = jax.jit(lambda xx: residualbind_forward(params, xx, b_tile=B_TILE))
    out = jax.block_until_ready(fwd(x_ncl))

    assert out.shape == (N, 1), out.shape
    assert bool(jnp.all(jnp.isfinite(out)))
    print("KERNEL_OK")
</pallas_src>

<mosaic_0001>
module attributes {stable_mosaic.version = 11 : i64} {
  func.func @kernel(%arg0: i32, %arg1: memref<16x40x44xbf16, #tpu.memory_space<vmem>>, %arg2: memref<44x128xbf16, #tpu.memory_space<vmem>>, %arg3: memref<1x128xf32, #tpu.memory_space<vmem>>, %arg4: memref<1x128xf32, #tpu.memory_space<vmem>>, %arg5: memref<3x384x128xbf16, #tpu.memory_space<vmem>>, %arg6: memref<3x1x128xf32, #tpu.memory_space<vmem>>, %arg7: memref<3x1x128xf32, #tpu.memory_space<vmem>>, %arg8: memref<1664x256xbf16, #tpu.memory_space<vmem>>, %arg9: memref<1x256xf32, #tpu.memory_space<vmem>>, %arg10: memref<1x256xf32, #tpu.memory_space<vmem>>, %arg11: memref<256x128xbf16, #tpu.memory_space<vmem>>, %arg12: memref<16x128xf32, #tpu.memory_space<vmem>>) attributes {dimension_semantics = [#tpu.dimension_semantics<parallel>], iteration_bounds = array<i64: 2>, scalar_prefetch = 0 : i64, scratch_operands = 0 : i64, tpu.core_type = #tpu.core_type<tc>, window_params = [{transform_indices = @transform_0, window_bounds = array<i64: 16, 40, 44>}, {pipeline_mode = #tpu.pipeline_mode<synchronous>, transform_indices = @transform_1, window_bounds = array<i64: 44, 128>}, {pipeline_mode = #tpu.pipeline_mode<synchronous>, transform_indices = @transform_2, window_bounds = array<i64: 1, 128>}, {pipeline_mode = #tpu.pipeline_mode<synchronous>, transform_indices = @transform_3, window_bounds = array<i64: 1, 128>}, {pipeline_mode = #tpu.pipeline_mode<synchronous>, transform_indices = @transform_4, window_bounds = array<i64: 3, 384, 128>}, {pipeline_mode = #tpu.pipeline_mode<synchronous>, transform_indices = @transform_5, window_bounds = array<i64: 3, 1, 128>}, {pipeline_mode = #tpu.pipeline_mode<synchronous>, transform_indices = @transform_6, window_bounds = array<i64: 3, 1, 128>}, {pipeline_mode = #tpu.pipeline_mode<synchronous>, transform_indices = @transform_7, window_bounds = array<i64: 1664, 256>}, {pipeline_mode = #tpu.pipeline_mode<synchronous>, transform_indices = @transform_8, window_bounds = array<i64: 1, 256>}, {pipeline_mode = #tpu.pipeline_mode<synchronous>, transform_indices = @transform_9, window_bounds = array<i64: 1, 256>}, {pipeline_mode = #tpu.pipeline_mode<synchronous>, transform_indices = @transform_10, window_bounds = array<i64: 256, 128>}, {transform_indices = @transform_11, window_bounds = array<i64: 16, 128>}]} {
    %0 = tpu.iota {dimensions = array<i32: 1>} : vector<16x40x128xi32>
    %1 = vector.shape_cast %0 : vector<16x40x128xi32> to vector<640x128xi32>
    %c8_i32 = arith.constant 8 : i32
    %2 = vector.broadcast %c8_i32 : i32 to vector<640x128xi32>
    %3 = arith.cmpi sge, %1, %2 : vector<640x128xi32>
    %c30_i32 = arith.constant 30 : i32
    %4 = vector.broadcast %c30_i32 : i32 to vector<640x128xi32>
    %5 = arith.cmpi slt, %1, %4 : vector<640x128xi32>
    %6 = arith.andi %3, %5 : vector<640x128xi1>
    %c0 = arith.constant 0 : index
    %c0_0 = arith.constant 0 : index
    %c0_1 = arith.constant 0 : index
    %7 = vector.load %arg1[%c0, %c0_0, %c0_1] : memref<16x40x44xbf16, #tpu.memory_space<vmem>>, vector<16x40x44xbf16>
    %8 = vector.shape_cast %7 : vector<16x40x44xbf16> to vector<640x44xbf16>
    %c0_2 = arith.constant 0 : index
    %c0_3 = arith.constant 0 : index
    %9 = vector.load %arg2[%c0_2, %c0_3] : memref<44x128xbf16, #tpu.memory_space<vmem>>, vector<44x128xbf16>
    %cst = arith.constant dense<0.000000e+00> : vector<640x128xf32>
    %10 = tpu.matmul %8, %9, %cst {dimension_numbers = #tpu.dot_dimension_numbers<[1], [0], [0], [1], [0, 0, 1, 1], [], []>} : vector<640x44xbf16>, vector<44x128xbf16>, vector<640x128xf32> -> vector<640x128xf32>
    %c0_4 = arith.constant 0 : index
    %c0_5 = arith.constant 0 : index
    %11 = vector.load %arg3[%c0_4, %c0_5] : memref<1x128xf32, #tpu.memory_space<vmem>>, vector<1x128xf32>
    %12 = vector.broadcast %11 : vector<1x128xf32> to vector<640x128xf32>
    %13 = arith.mulf %10, %12 : vector<640x128xf32>
    %c0_6 = arith.constant 0 : index
    %c0_7 = arith.constant 0 : index
    %14 = vector.load %arg4[%c0_6, %c0_7] : memref<1x128xf32, #tpu.memory_space<vmem>>, vector<1x128xf32>
    %15 = vector.broadcast %14 : vector<1x128xf32> to vector<640x128xf32>
    %16 = arith.addf %13, %15 : vector<640x128xf32>
    %cst_8 = arith.constant 0.000000e+00 : f32
    %17 = vector.broadcast %cst_8 : f32 to vector<640x128xf32>
    %18 = arith.maximumf %16, %17 : vector<640x128xf32>
    %cst_9 = arith.constant 0.000000e+00 : f32
    %19 = vector.broadcast %cst_9 : f32 to vector<640x128xf32>
    %20 = arith.select %6, %18, %19 : vector<640x128xi1>, vector<640x128xf32>
    %c1_i32 = arith.constant 1 : i32
    %21 = tpu.dynamic_rotate %20 by %c1_i32 dim 0 : vector<640x128xf32>, i32 -> vector<640x128xf32>
    %22 = arith.truncf %21 : vector<640x128xf32> to vector<640x128xbf16>
    %23 = arith.truncf %20 : vector<640x128xf32> to vector<640x128xbf16>
    %c639_i32 = arith.constant 639 : i32
    %24 = tpu.dynamic_rotate %20 by %c639_i32 dim 0 : vector<640x128xf32>, i32 -> vector<640x128xf32>
    %25 = arith.truncf %24 : vector<640x128xf32> to vector<640x128xbf16>
    %26 = tpu.concatenate %22, %23, %25 in 1 : vector<640x128xbf16>, vector<640x128xbf16>, vector<640x128xbf16> -> vector<640x384xbf16>
    %c0_10 = arith.constant 0 : index
    %c0_11 = arith.constant 0 : index
    %c0_12 = arith.constant 0 : index
    %27 = vector.load %arg5[%c0_10, %c0_11, %c0_12] : memref<3x384x128xbf16, #tpu.memory_space<vmem>>, vector<1x384x128xbf16>
    %28 = vector.shape_cast %27 : vector<1x384x128xbf16> to vector<384x128xbf16>
    %cst_13 = arith.constant dense<0.000000e+00> : vector<640x128xf32>
    %29 = tpu.matmul %26, %28, %cst_13 {dimension_numbers = #tpu.dot_dimension_numbers<[1], [0], [0], [1], [0, 0, 1, 1], [], []>} : vector<640x384xbf16>, vector<384x128xbf16>, vector<640x128xf32> -> vector<640x128xf32>
    %c0_14 = arith.constant 0 : index
    %c0_15 = arith.constant 0 : index
    %c0_16 = arith.constant 0 : index
    %30 = vector.load %arg6[%c0_14, %c0_15, %c0_16] : memref<3x1x128xf32, #tpu.memory_space<vmem>>, vector<1x1x128xf32>
    %31 = vector.shape_cast %30 : vector<1x1x128xf32> to vector<1x128xf32>
    %32 = vector.broadcast %31 : vector<1x128xf32> to vector<640x128xf32>
    %33 = arith.mulf %29, %32 : vector<640x128xf32>
    %c0_17 = arith.constant 0 : index
    %c0_18 = arith.constant 0 : index
    %c0_19 = arith.constant 0 : index
    %34 = vector.load %arg7[%c0_17, %c0_18, %c0_19] : memref<3x1x128xf32, #tpu.memory_space<vmem>>, vector<1x1x128xf32>
    %35 = vector.shape_cast %34 : vector<1x1x128xf32> to vector<1x128xf32>
    %36 = vector.broadcast %35 : vector<1x128xf32> to vector<640x128xf32>
    %37 = arith.addf %33, %36 : vector<640x128xf32>
    %cst_20 = arith.constant 0.000000e+00 : f32
    %38 = vector.broadcast %cst_20 : f32 to vector<640x128xf32>
    %39 = arith.maximumf %37, %38 : vector<640x128xf32>
    %cst_21 = arith.constant 0.000000e+00 : f32
    %40 = vector.broadcast %cst_21 : f32 to vector<640x128xf32>
    %41 = arith.select %6, %39, %40 : vector<640x128xi1>, vector<640x128xf32>
    %c2_i32 = arith.constant 2 : i32
    %42 = tpu.dynamic_rotate %41 by %c2_i32 dim 0 : vector<640x128xf32>, i32 -> vector<640x128xf32>
    %43 = arith.truncf %42 : vector<640x128xf32> to vector<640x128xbf16>
    %44 = arith.truncf %41 : vector<640x128xf32> to vector<640x128xbf16>
    %c638_i32 = arith.constant 638 : i32
    %45 = tpu.dynamic_rotate %41 by %c638_i32 dim 0 : vector<640x128xf32>, i32 -> vector<640x128xf32>
    %46 = arith.truncf %45 : vector<640x128xf32> to vector<640x128xbf16>
    %47 = tpu.concatenate %43, %44, %46 in 1 : vector<640x128xbf16>, vector<640x128xbf16>, vector<640x128xbf16> -> vector<640x384xbf16>
    %c1 = arith.constant 1 : index
    %c0_22 = arith.constant 0 : index
    %c0_23 = arith.constant 0 : index
    %48 = vector.load %arg5[%c1, %c0_22, %c0_23] : memref<3x384x128xbf16, #tpu.memory_space<vmem>>, vector<1x384x128xbf16>
    %49 = vector.shape_cast %48 : vector<1x384x128xbf16> to vector<384x128xbf16>
    %cst_24 = arith.constant dense<0.000000e+00> : vector<640x128xf32>
    %50 = tpu.matmul %47, %49, %cst_24 {dimension_numbers = #tpu.dot_dimension_numbers<[1], [0], [0], [1], [0, 0, 1, 1], [], []>} : vector<640x384xbf16>, vector<384x128xbf16>, vector<640x128xf32> -> vector<640x128xf32>
    %c1_25 = arith.constant 1 : index
    %c0_26 = arith.constant 0 : index
    %c0_27 = arith.constant 0 : index
    %51 = vector.load %arg6[%c1_25, %c0_26, %c0_27] : memref<3x1x128xf32, #tpu.memory_space<vmem>>, vector<1x1x128xf32>
    %52 = vector.shape_cast %51 : vector<1x1x128xf32> to vector<1x128xf32>
    %53 = vector.broadcast %52 : vector<1x128xf32> to vector<640x128xf32>
    %54 = arith.mulf %50, %53 : vector<640x128xf32>
    %c1_28 = arith.constant 1 : index
    %c0_29 = arith.constant 0 : index
    %c0_30 = arith.constant 0 : index
    %55 = vector.load %arg7[%c1_28, %c0_29, %c0_30] : memref<3x1x128xf32, #tpu.memory_space<vmem>>, vector<1x1x128xf32>
    %56 = vector.shape_cast %55 : vector<1x1x128xf32> to vector<1x128xf32>
    %57 = vector.broadcast %56 : vector<1x128xf32> to vector<640x128xf32>
    %58 = arith.addf %54, %57 : vector<640x128xf32>
    %cst_31 = arith.constant 0.000000e+00 : f32
    %59 = vector.broadcast %cst_31 : f32 to vector<640x128xf32>
    %60 = arith.maximumf %58, %59 : vector<640x128xf32>
    %cst_32 = arith.constant 0.000000e+00 : f32
    %61 = vector.broadcast %cst_32 : f32 to vector<640x128xf32>
    %62 = arith.select %6, %60, %61 : vector<640x128xi1>, vector<640x128xf32>
    %c4_i32 = arith.constant 4 : i32
    %63 = tpu.dynamic_rotate %62 by %c4_i32 dim 0 : vector<640x128xf32>, i32 -> vector<640x128xf32>
    %64 = arith.truncf %63 : vector<640x128xf32> to vector<640x128xbf16>
    %65 = arith.truncf %62 : vector<640x128xf32> to vector<640x128xbf16>
    %c636_i32 = arith.constant 636 : i32
    %66 = tpu.dynamic_rotate %62 by %c636_i32 dim 0 : vector<640x128xf32>, i32 -> vector<640x128xf32>
    %67 = arith.truncf %66 : vector<640x128xf32> to vector<640x128xbf16>
    %68 = tpu.concatenate %64, %65, %67 in 1 : vector<640x128xbf16>, vector<640x128xbf16>, vector<640x128xbf16> -> vector<640x384xbf16>
    %c2 = arith.constant 2 : index
    %c0_33 = arith.constant 0 : index
    %c0_34 = arith.constant 0 : index
    %69 = vector.load %arg5[%c2, %c0_33, %c0_34] : memref<3x384x128xbf16, #tpu.memory_space<vmem>>, vector<1x384x128xbf16>
    %70 = vector.shape_cast %69 : vector<1x384x128xbf16> to vector<384x128xbf16>
    %cst_35 = arith.constant dense<0.000000e+00> : vector<640x128xf32>
    %71 = tpu.matmul %68, %70, %cst_35 {dimension_numbers = #tpu.dot_dimension_numbers<[1], [0], [0], [1], [0, 0, 1, 1], [], []>} : vector<640x384xbf16>, vector<384x128xbf16>, vector<640x128xf32> -> vector<640x128xf32>
    %c2_36 = arith.constant 2 : index
    %c0_37 = arith.constant 0 : index
    %c0_38 = arith.constant 0 : index
    %72 = vector.load %arg6[%c2_36, %c0_37, %c0_38] : memref<3x1x128xf32, #tpu.memory_space<vmem>>, vector<1x1x128xf32>
    %73 = vector.shape_cast %72 : vector<1x1x128xf32> to vector<1x128xf32>
    %74 = vector.broadcast %73 : vector<1x128xf32> to vector<640x128xf32>
    %75 = arith.mulf %71, %74 : vector<640x128xf32>
    %c2_39 = arith.constant 2 : index
    %c0_40 = arith.constant 0 : index
    %c0_41 = arith.constant 0 : index
    %76 = vector.load %arg7[%c2_39, %c0_40, %c0_41] : memref<3x1x128xf32, #tpu.memory_space<vmem>>, vector<1x1x128xf32>
    %77 = vector.shape_cast %76 : vector<1x1x128xf32> to vector<1x128xf32>
    %78 = vector.broadcast %77 : vector<1x128xf32> to vector<640x128xf32>
    %79 = arith.addf %75, %78 : vector<640x128xf32>
    %cst_42 = arith.constant 0.000000e+00 : f32
    %80 = vector.broadcast %cst_42 : f32 to vector<640x128xf32>
    %81 = arith.maximumf %79, %80 : vector<640x128xf32>
    %cst_43 = arith.constant 0.000000e+00 : f32
    %82 = vector.broadcast %cst_43 : f32 to vector<640x128xf32>
    %83 = arith.select %6, %81, %82 : vector<640x128xi1>, vector<640x128xf32>
    %84 = arith.addf %83, %20 : vector<640x128xf32>
    %c639_i32_44 = arith.constant 639 : i32
    %85 = tpu.dynamic_rotate %84 by %c639_i32_44 dim 0 : vector<640x128xf32>, i32 -> vector<640x128xf32>
    %86 = arith.addf %84, %85 : vector<640x128xf32>
    %c638_i32_45 = arith.constant 638 : i32
    %87 = tpu.dynamic_rotate %84 by %c638_i32_45 dim 0 : vector<640x128xf32>, i32 -> vector<640x128xf32>
    %88 = arith.addf %86, %87 : vector<640x128xf32>
    %c637_i32 = arith.constant 637 : i32
    %89 = tpu.dynamic_rotate %84 by %c637_i32 dim 0 : vector<640x128xf32>, i32 -> vector<640x128xf32>
    %90 = arith.addf %88, %89 : vector<640x128xf32>
    %c636_i32_46 = arith.constant 636 : i32
    %91 = tpu.dynamic_rotate %84 by %c636_i32_46 dim 0 : vector<640x128xf32>, i32 -> vector<640x128xf32>
    %92 = arith.addf %90, %91 : vector<640x128xf32>
    %c635_i32 = arith.constant 635 : i32
    %93 = tpu.dynamic_rotate %84 by %c635_i32 dim 0 : vector<640x128xf32>, i32 -> vector<640x128xf32>
    %94 = arith.addf %92, %93 : vector<640x128xf32>
    %c634_i32 = arith.constant 634 : i32
    %95 = tpu.dynamic_rotate %84 by %c634_i32 dim 0 : vector<640x128xf32>, i32 -> vector<640x128xf32>
    %96 = arith.addf %94, %95 : vector<640x128xf32>
    %c633_i32 = arith.constant 633 : i32
    %97 = tpu.dynamic_rotate %84 by %c633_i32 dim 0 : vector<640x128xf32>, i32 -> vector<640x128xf32>
    %98 = arith.addf %96, %97 : vector<640x128xf32>
    %c632_i32 = arith.constant 632 : i32
    %99 = tpu.dynamic_rotate %84 by %c632_i32 dim 0 : vector<640x128xf32>, i32 -> vector<640x128xf32>
    %100 = arith.addf %98, %99 : vector<640x128xf32>
    %c631_i32 = arith.constant 631 : i32
    %101 = tpu.dynamic_rotate %84 by %c631_i32 dim 0 : vector<640x128xf32>, i32 -> vector<640x128xf32>
    %102 = arith.addf %100, %101 : vector<640x128xf32>
    %cst_47 = arith.constant 1.000000e-01 : f32
    %103 = vector.broadcast %cst_47 : f32 to vector<640x128xf32>
    %104 = arith.mulf %102, %103 : vector<640x128xf32>
    %105 = vector.shape_cast %104 : vector<640x128xf32> to vector<16x40x128xf32>
    %106 = vector.extract_strided_slice %105 {offsets = [0, 8, 0], sizes = [16, 1, 128], strides = [1, 1, 1]} : vector<16x40x128xf32> to vector<16x1x128xf32>
    %107 = vector.shape_cast %106 : vector<16x1x128xf32> to vector<16x128xf32>
    %108 = arith.truncf %107 : vector<16x128xf32> to vector<16x128xbf16>
    %109 = vector.extract_strided_slice %105 {offsets = [0, 9, 0], sizes = [16, 1, 128], strides = [1, 1, 1]} : vector<16x40x128xf32> to vector<16x1x128xf32>
    %110 = vector.shape_cast %109 : vector<16x1x128xf32> to vector<16x128xf32>
    %111 = arith.truncf %110 : vector<16x128xf32> to vector<16x128xbf16>
    %112 = vector.extract_strided_slice %105 {offsets = [0, 10, 0], sizes = [16, 1, 128], strides = [1, 1, 1]} : vector<16x40x128xf32> to vector<16x1x128xf32>
    %113 = vector.shape_cast %112 : vector<16x1x128xf32> to vector<16x128xf32>
    %114 = arith.truncf %113 : vector<16x128xf32> to vector<16x128xbf16>
    %115 = vector.extract_strided_slice %105 {offsets = [0, 11, 0], sizes = [16, 1, 128], strides = [1, 1, 1]} : vector<16x40x128xf32> to vector<16x1x128xf32>
    %116 = vector.shape_cast %115 : vector<16x1x128xf32> to vector<16x128xf32>
    %117 = arith.truncf %116 : vector<16x128xf32> to vector<16x128xbf16>
    %118 = vector.extract_strided_slice %105 {offsets = [0, 12, 0], sizes = [16, 1, 128], strides = [1, 1, 1]} : vector<16x40x128xf32> to vector<16x1x128xf32>
    %119 = vector.shape_cast %118 : vector<16x1x128xf32> to vector<16x128xf32>
    %120 = arith.truncf %119 : vector<16x128xf32> to vector<16x128xbf16>
    %121 = vector.extract_strided_slice %105 {offsets = [0, 13, 0], sizes = [16, 1, 128], strides = [1, 1, 1]} : vector<16x40x128xf32> to vector<16x1x128xf32>
    %122 = vector.shape_cast %121 : vector<16x1x128xf32> to vector<16x128xf32>
    %123 = arith.truncf %122 : vector<16x128xf32> to vector<16x128xbf16>
    %124 = vector.extract_strided_slice %105 {offsets = [0, 14, 0], sizes = [16, 1, 128], strides = [1, 1, 1]} : vector<16x40x128xf32> to vector<16x1x128xf32>
    %125 = vector.shape_cast %124 : vector<16x1x128xf32> to vector<16x128xf32>
    %126 = arith.truncf %125 : vector<16x128xf32> to vector<16x128xbf16>
    %127 = vector.extract_strided_slice %105 {offsets = [0, 15, 0], sizes = [16, 1, 128], strides = [1, 1, 1]} : vector<16x40x128xf32> to vector<16x1x128xf32>
    %128 = vector.shape_cast %127 : vector<16x1x128xf32> to vector<16x128xf32>
    %129 = arith.truncf %128 : vector<16x128xf32> to vector<16x128xbf16>
    %130 = vector.extract_strided_slice %105 {offsets = [0, 16, 0], sizes = [16, 1, 128], strides = [1, 1, 1]} : vector<16x40x128xf32> to vector<16x1x128xf32>
    %131 = vector.shape_cast %130 : vector<16x1x128xf32> to vector<16x128xf32>
    %132 = arith.truncf %131 : vector<16x128xf32> to vector<16x128xbf16>
    %133 = vector.extract_strided_slice %105 {offsets = [0, 17, 0], sizes = [16, 1, 128], strides = [1, 1, 1]} : vector<16x40x128xf32> to vector<16x1x128xf32>
    %134 = vector.shape_cast %133 : vector<16x1x128xf32> to vector<16x128xf32>
    %135 = arith.truncf %134 : vector<16x128xf32> to vector<16x128xbf16>
    %136 = vector.extract_strided_slice %105 {offsets = [0, 18, 0], sizes = [16, 1, 128], strides = [1, 1, 1]} : vector<16x40x128xf32> to vector<16x1x128xf32>
    %137 = vector.shape_cast %136 : vector<16x1x128xf32> to vector<16x128xf32>
    %138 = arith.truncf %137 : vector<16x128xf32> to vector<16x128xbf16>
    %139 = vector.extract_strided_slice %105 {offsets = [0, 19, 0], sizes = [16, 1, 128], strides = [1, 1, 1]} : vector<16x40x128xf32> to vector<16x1x128xf32>
    %140 = vector.shape_cast %139 : vector<16x1x128xf32> to vector<16x128xf32>
    %141 = arith.truncf %140 : vector<16x128xf32> to vector<16x128xbf16>
    %142 = vector.extract_strided_slice %105 {offsets = [0, 20, 0], sizes = [16, 1, 128], strides = [1, 1, 1]} : vector<16x40x128xf32> to vector<16x1x128xf32>
    %143 = vector.shape_cast %142 : vector<16x1x128xf32> to vector<16x128xf32>
    %144 = arith.truncf %143 : vector<16x128xf32> to vector<16x128xbf16>
    %145 = tpu.concatenate %108, %111, %114, %117, %120, %123, %126, %129, %132, %135, %138, %141, %144 in 1 : vector<16x128xbf16>, vector<16x128xbf16>, vector<16x128xbf16>, vector<16x128xbf16>, vector<16x128xbf16>, vector<16x128xbf16>, vector<16x128xbf16>, vector<16x128xbf16>, vector<16x128xbf16>, vector<16x128xbf16>, vector<16x128xbf16>, vector<16x128xbf16>, vector<16x128xbf16> -> vector<16x1664xbf16>
    %c0_48 = arith.constant 0 : index
    %c0_49 = arith.constant 0 : index
    %146 = vector.load %arg8[%c0_48, %c0_49] : memref<1664x256xbf16, #tpu.memory_space<vmem>>, vector<1664x256xbf16>
    %cst_50 = arith.constant dense<0.000000e+00> : vector<16x256xf32>
    %147 = tpu.matmul %145, %146, %cst_50 {dimension_numbers = #tpu.dot_dimension_numbers<[1], [0], [0], [1], [0, 0, 1, 1], [], []>} : vector<16x1664xbf16>, vector<1664x256xbf16>, vector<16x256xf32> -> vector<16x256xf32>
    %c0_51 = arith.constant 0 : index
    %c0_52 = arith.constant 0 : index
    %148 = vector.load %arg9[%c0_51, %c0_52] : memref<1x256xf32, #tpu.memory_space<vmem>>, vector<1x256xf32>
    %149 = vector.broadcast %148 : vector<1x256xf32> to vector<16x256xf32>
    %150 = arith.mulf %147, %149 : vector<16x256xf32>
    %c0_53 = arith.constant 0 : index
    %c0_54 = arith.constant 0 : index
    %151 = vector.load %arg10[%c0_53, %c0_54] : memref<1x256xf32, #tpu.memory_space<vmem>>, vector<1x256xf32>
    %152 = vector.broadcast %151 : vector<1x256xf32> to vector<16x256xf32>
    %153 = arith.addf %150, %152 : vector<16x256xf32>
    %cst_55 = arith.constant 0.000000e+00 : f32
    %154 = vector.broadcast %cst_55 : f32 to vector<16x256xf32>
    %155 = arith.maximumf %153, %154 : vector<16x256xf32>
    %156 = arith.truncf %155 : vector<16x256xf32> to vector<16x256xbf16>
    %c0_56 = arith.constant 0 : index
    %c0_57 = arith.constant 0 : index
    %157 = vector.load %arg11[%c0_56, %c0_57] : memref<256x128xbf16, #tpu.memory_space<vmem>>, vector<256x128xbf16>
    %cst_58 = arith.constant dense<0.000000e+00> : vector<16x128xf32>
    %158 = tpu.matmul %156, %157, %cst_58 {dimension_numbers = #tpu.dot_dimension_numbers<[1], [0], [0], [1], [0, 0, 1, 1], [], []>} : vector<16x256xbf16>, vector<256x128xbf16>, vector<16x128xf32> -> vector<16x128xf32>
    %c0_59 = arith.constant 0 : index
    %c0_60 = arith.constant 0 : index
    %159 = vector.load %arg12[%c0_59, %c0_60] : memref<16x128xf32, #tpu.memory_space<vmem>>, vector<16x128xf32>
    tpu.vector_store %arg12[%c0_59, %c0_60], %158 {strides = array<i32>} : memref<16x128xf32, #tpu.memory_space<vmem>>, vector<16x128xf32>,
    return
  }
  func.func @transform_0(%arg0: i32) -> (i32, i32, i32) {
    %c0_i32 = arith.constant 0 : i32
    %c0_i32_0 = arith.constant 0 : i32
    %c0_i32_1 = arith.constant 0 : i32
    return %arg0, %c0_i32, %c0_i32_0 : i32, i32, i32
  }
  func.func @transform_1(%arg0: i32) -> (i32, i32) {
    %c0_i32 = arith.constant 0 : i32
    %c0_i32_0 = arith.constant 0 : i32
    %c0_i32_1 = arith.constant 0 : i32
    return %c0_i32, %c0_i32_0 : i32, i32
  }
  func.func @transform_2(%arg0: i32) -> (i32, i32) {
    %c0_i32 = arith.constant 0 : i32
    %c0_i32_0 = arith.constant 0 : i32
    %c0_i32_1 = arith.constant 0 : i32
    return %c0_i32, %c0_i32_0 : i32, i32
  }
  func.func @transform_3(%arg0: i32) -> (i32, i32) {
    %c0_i32 = arith.constant 0 : i32
    %c0_i32_0 = arith.constant 0 : i32
    %c0_i32_1 = arith.constant 0 : i32
    return %c0_i32, %c0_i32_0 : i32, i32
  }
  func.func @transform_4(%arg0: i32) -> (i32, i32, i32) {
    %c0_i32 = arith.constant 0 : i32
    %c0_i32_0 = arith.constant 0 : i32
    %c0_i32_1 = arith.constant 0 : i32
    %c0_i32_2 = arith.constant 0 : i32
    return %c0_i32, %c0_i32_0, %c0_i32_1 : i32, i32, i32
  }
  func.func @transform_5(%arg0: i32) -> (i32, i32, i32) {
    %c0_i32 = arith.constant 0 : i32
    %c0_i32_0 = arith.constant 0 : i32
    %c0_i32_1 = arith.constant 0 : i32
    %c0_i32_2 = arith.constant 0 : i32
    return %c0_i32, %c0_i32_0, %c0_i32_1 : i32, i32, i32
  }
  func.func @transform_6(%arg0: i32) -> (i32, i32, i32) {
    %c0_i32 = arith.constant 0 : i32
    %c0_i32_0 = arith.constant 0 : i32
    %c0_i32_1 = arith.constant 0 : i32
    %c0_i32_2 = arith.constant 0 : i32
    return %c0_i32, %c0_i32_0, %c0_i32_1 : i32, i32, i32
  }
  func.func @transform_7(%arg0: i32) -> (i32, i32) {
    %c0_i32 = arith.constant 0 : i32
    %c0_i32_0 = arith.constant 0 : i32
    %c0_i32_1 = arith.constant 0 : i32
    return %c0_i32, %c0_i32_0 : i32, i32
  }
  func.func @transform_8(%arg0: i32) -> (i32, i32) {
    %c0_i32 = arith.constant 0 : i32
    %c0_i32_0 = arith.constant 0 : i32
    %c0_i32_1 = arith.constant 0 : i32
    return %c0_i32, %c0_i32_0 : i32, i32
  }
  func.func @transform_9(%arg0: i32) -> (i32, i32) {
    %c0_i32 = arith.constant 0 : i32
    %c0_i32_0 = arith.constant 0 : i32
    %c0_i32_1 = arith.constant 0 : i32
    return %c0_i32, %c0_i32_0 : i32, i32
  }
  func.func @transform_10(%arg0: i32) -> (i32, i32) {
    %c0_i32 = arith.constant 0 : i32
    %c0_i32_0 = arith.constant 0 : i32
    %c0_i32_1 = arith.constant 0 : i32
    return %c0_i32, %c0_i32_0 : i32, i32
  }
  func.func @transform_11(%arg0: i32) -> (i32, i32) {
    %c0_i32 = arith.constant 0 : i32
    %c0_i32_0 = arith.constant 0 : i32
    return %arg0, %c0_i32 : i32, i32
  }
}

</mosaic_0001>

<llo_original>
// kernel: _lambda_.1
$region0: #{_lambda_.1}
  #allocation0 [shape = 'u32[]', space=smem, size = 0x4, offset = 0x4, fixed_abs, tag = 'smem constant byte address 0x4 - core index']
  #allocation1 [shape = 'u32[144,128]{1,0:T(1,128)}', space=vmem, size = 0x12000, scoped, tag = 'internal scratch']
  %s0 = inlined_call_operand.vmem [shape: bf16[32,40,44], index: 0, kind: input, shape index: {}]
  %s1 = inlined_call_operand.vmem [shape: bf16[44,128], index: 1, kind: input, shape index: {}]
  %s2 = inlined_call_operand.vmem [shape: f32[1,128], index: 2, kind: input, shape index: {}]
  %s3 = inlined_call_operand.vmem [shape: f32[1,128], index: 3, kind: input, shape index: {}]
  %s4 = inlined_call_operand.vmem [shape: bf16[3,384,128], index: 4, kind: input, shape index: {}]
  %s5 = inlined_call_operand.vmem [shape: f32[3,1,128], index: 5, kind: input, shape index: {}]
  %s6 = inlined_call_operand.vmem [shape: f32[3,1,128], index: 6, kind: input, shape index: {}]
  %s7 = inlined_call_operand.vmem [shape: bf16[1664,256], index: 7, kind: input, shape index: {}]
  %s8 = inlined_call_operand.vmem [shape: f32[1,256], index: 8, kind: input, shape index: {}]
  %s9 = inlined_call_operand.vmem [shape: f32[1,256], index: 9, kind: input, shape index: {}]
  %s10 = inlined_call_operand.vmem [shape: bf16[256,128], index: 10, kind: input, shape index: {}]
  %s11 = inlined_call_operand.vmem [shape: f32[32,128], index: 11, kind: output, shape index: {}]
  %s12 = sld [smem:[#allocation0]]
  $region77: #{_lambda_.1} parent=0
    _
  %s14 = ssub.s32 1, %s12
  %s15 = scalar_select 0, %s14, %s12
  loop: start=0, step=1, limit=4
  $region2: #{_lambda_.1} parent=0 // loop_pre_header
    _
  $region3: #{_lambda_.1} parent=0 // loop_header
    %s17 = sphi 0, %s21
    %p18 = scmp.ge.s32.totalorder %s17, 4
    %s27 = sphi 0, %s29
    %s30 = sphi 0, %s27
    %s31 = sphi 0, %s30
    %s47 = sphi 0, %s31
    %s51 = sphi 0, %s51
    %s53 = sphi 0, %s51
    %s54 = sphi 0, %s53
    %s68 = sphi 0, %s54
    %s72 = sphi 0, %s72
    %s74 = sphi 0, %s72
    %s75 = sphi 0, %s74
    %s89 = sphi 0, %s75
    %s93 = sphi 0, %s93
    %s95 = sphi 0, %s93
    %s96 = sphi 0, %s95
    %s110 = sphi 0, %s96
    %s114 = sphi 0, %s114
    %s116 = sphi 0, %s114
    %s117 = sphi 0, %s116
    %s131 = sphi 0, %s117
    %s135 = sphi 0, %s135
    %s137 = sphi 0, %s135
    %s138 = sphi 0, %s137
    %s152 = sphi 0, %s138
    %s156 = sphi 0, %s156
    %s158 = sphi 0, %s156
    %s159 = sphi 0, %s158
    %s173 = sphi 0, %s159
    %s177 = sphi 0, %s177
    %s179 = sphi 0, %s177
    %s180 = sphi 0, %s179
    %s194 = sphi 0, %s180
    %s198 = sphi 0, %s198
    %s200 = sphi 0, %s198
    %s201 = sphi 0, %s200
    %s215 = sphi 0, %s201
    %s219 = sphi 0, %s219
    %s221 = sphi 0, %s219
    %s222 = sphi 0, %s221
    %s236 = sphi 0, %s222
    %s240 = sphi 0, %s240
    %s242 = sphi 0, %s240
    %s243 = sphi 0, %s242
    %s257 = sphi 0, %s243
    %s263 = sphi 0, %s265
    %s266 = sphi 0, %s263
    %s267 = sphi 0, %s266
    %s283 = sphi 0, %s267
  $region4: #{_lambda_.1} parent=0 // loop_header_branch
    %20 = sbr.rel (%p18) target = $region8
  $region5: #{_lambda_.1} parent=0 // loop_body
    %s22 = ssub.s32 %s17, 1
    %s23 = ssub.s32 %s17, 2
    %s24 = sadd.s32 %s17, 1
    %s25 = ssub.s32 %s17, %s24
    %p26 = scmp.eq.s32.totalorder %s25, 0
    %s28 = sadd.s32 %s27, 1
    %s29 = scalar_select %p26, %s27, %s28
    %p32 = pneg %p26
    %p33 = scmp.eq.s32.totalorder %s17, 1
    %p34 = por %p32, %p33
    %p35 = scmp.ne.s32.totalorder %s27, %s30
    %p36 = scmp.eq.s32.totalorder %s17, 0
    %p37 = por %p35, %p36
    %p38 = scmp.ne.s32.totalorder %s27, %s30
    %p39 = scmp.eq.s32.totalorder %s22, 1
    %p40 = por %p38, %p39
    %p41 = scmp.ne.s32.totalorder %s30, %s31
    %p42 = scmp.eq.s32.totalorder %s22, 0
    %p43 = por %p41, %p42
    %p44 = scmp.ne.s32.totalorder %s30, %s31
    %p45 = scmp.eq.s32.totalorder %s23, 1
    %p46 = por %p44, %p45
    %p48 = scmp.ne.s32.totalorder %s31, %s47
    %p49 = scmp.eq.s32.totalorder %s23, 0
    %p50 = por %p48, %p49
    %s52 = sadd.s32 %s51, 1
    %p55 = scmp.eq.s32.totalorder %s17, 1
    %p56 = scmp.ne.s32.totalorder %s51, %s53
    %p57 = scmp.eq.s32.totalorder %s17, 0
    %p58 = por %p56, %p57
    %p59 = scmp.ne.s32.totalorder %s51, %s53
    %p60 = scmp.eq.s32.totalorder %s22, 1
    %p61 = por %p59, %p60
    %p62 = scmp.ne.s32.totalorder %s53, %s54
    %p63 = scmp.eq.s32.totalorder %s22, 0
    %p64 = por %p62, %p63
    %p65 = scmp.ne.s32.totalorder %s53, %s54
    %p66 = scmp.eq.s32.totalorder %s23, 1
    %p67 = por %p65, %p66
    %p69 = scmp.ne.s32.totalorder %s54, %s68
    %p70 = scmp.eq.s32.totalorder %s23, 0
    %p71 = por %p69, %p70
    %s73 = sadd.s32 %s72, 1
    %p76 = scmp.eq.s32.totalorder %s17, 1
    %p77 = scmp.ne.s32.totalorder %s72, %s74
    %p78 = scmp.eq.s32.totalorder %s17, 0
    %p79 = por %p77, %p78
    %p80 = scmp.ne.s32.totalorder %s72, %s74
    %p81 = scmp.eq.s32.totalorder %s22, 1
    %p82 = por %p80, %p81
    %p83 = scmp.ne.s32.totalorder %s74, %s75
    %p84 = scmp.eq.s32.totalorder %s22, 0
    %p85 = por %p83, %p84
    %p86 = scmp.ne.s32.totalorder %s74, %s75
    %p87 = scmp.eq.s32.totalorder %s23, 1
    %p88 = por %p86, %p87
    %p90 = scmp.ne.s32.totalorder %s75, %s89
    %p91 = scmp.eq.s32.totalorder %s23, 0
    %p92 = por %p90, %p91
    %s94 = sadd.s32 %s93, 1
    %p97 = scmp.eq.s32.totalorder %s17, 1
    %p98 = scmp.ne.s32.totalorder %s93, %s95
    %p99 = scmp.eq.s32.totalorder %s17, 0
    %p100 = por %p98, %p99
    %p101 = scmp.ne.s32.totalorder %s93, %s95
    %p102 = scmp.eq.s32.totalorder %s22, 1
    %p103 = por %p101, %p102
    %p104 = scmp.ne.s32.totalorder %s95, %s96
    %p105 = scmp.eq.s32.totalorder %s22, 0
    %p106 = por %p104, %p105
    %p107 = scmp.ne.s32.totalorder %s95, %s96
    %p108 = scmp.eq.s32.totalorder %s23, 1
    %p109 = por %p107, %p108
    %p111 = scmp.ne.s32.totalorder %s96, %s110
    %p112 = scmp.eq.s32.totalorder %s23, 0
    %p113 = por %p111, %p112
    %s115 = sadd.s32 %s114, 1
    %p118 = scmp.eq.s32.totalorder %s17, 1
    %p119 = scmp.ne.s32.totalorder %s114, %s116
    %p120 = scmp.eq.s32.totalorder %s17, 0
    %p121 = por %p119, %p120
    %p122 = scmp.ne.s32.totalorder %s114, %s116
    %p123 = scmp.eq.s32.totalorder %s22, 1
    %p124 = por %p122, %p123
    %p125 = scmp.ne.s32.totalorder %s116, %s117
    %p126 = scmp.eq.s32.totalorder %s22, 0
    %p127 = por %p125, %p126
    %p128 = scmp.ne.s32.totalorder %s116, %s117
    %p129 = scmp.eq.s32.totalorder %s23, 1
    %p130 = por %p128, %p129
    %p132 = scmp.ne.s32.totalorder %s117, %s131
    %p133 = scmp.eq.s32.totalorder %s23, 0
    %p134 = por %p132, %p133
    %s136 = sadd.s32 %s135, 1
    %p139 = scmp.eq.s32.totalorder %s17, 1
    %p140 = scmp.ne.s32.totalorder %s135, %s137
    %p141 = scmp.eq.s32.totalorder %s17, 0
    %p142 = por %p140, %p141
    %p143 = scmp.ne.s32.totalorder %s135, %s137
    %p144 = scmp.eq.s32.totalorder %s22, 1
    %p145 = por %p143, %p144
    %p146 = scmp.ne.s32.totalorder %s137, %s138
    %p147 = scmp.eq.s32.totalorder %s22, 0
    %p148 = por %p146, %p147
    %p149 = scmp.ne.s32.totalorder %s137, %s138
    %p150 = scmp.eq.s32.totalorder %s23, 1
    %p151 = por %p149, %p150
    %p153 = scmp.ne.s32.totalorder %s138, %s152
    %p154 = scmp.eq.s32.totalorder %s23, 0
    %p155 = por %p153, %p154
    %s157 = sadd.s32 %s156, 1
    %p160 = scmp.eq.s32.totalorder %s17, 1
    %p161 = scmp.ne.s32.totalorder %s156, %s158
    %p162 = scmp.eq.s32.totalorder %s17, 0
    %p163 = por %p161, %p162
    %p164 = scmp.ne.s32.totalorder %s156, %s158
    %p165 = scmp.eq.s32.totalorder %s22, 1
    %p166 = por %p164, %p165
    %p167 = scmp.ne.s32.totalorder %s158, %s159
    %p168 = scmp.eq.s32.totalorder %s22, 0
    %p169 = por %p167, %p168
    %p170 = scmp.ne.s32.totalorder %s158, %s159
    %p171 = scmp.eq.s32.totalorder %s23, 1
    %p172 = por %p170, %p171
    %p174 = scmp.ne.s32.totalorder %s159, %s173
    %p175 = scmp.eq.s32.totalorder %s23, 0
    %p176 = por %p174, %p175
    %s178 = sadd.s32 %s177, 1
    %p181 = scmp.eq.s32.totalorder %s17, 1
    %p182 = scmp.ne.s32.totalorder %s177, %s179
    %p183 = scmp.eq.s32.totalorder %s17, 0
    %p184 = por %p182, %p183
    %p185 = scmp.ne.s32.totalorder %s177, %s179
    %p186 = scmp.eq.s32.totalorder %s22, 1
    %p187 = por %p185, %p186
    %p188 = scmp.ne.s32.totalorder %s179, %s180
    %p189 = scmp.eq.s32.totalorder %s22, 0
    %p190 = por %p188, %p189
    %p191 = scmp.ne.s32.totalorder %s179, %s180
    %p192 = scmp.eq.s32.totalorder %s23, 1
    %p193 = por %p191, %p192
    %p195 = scmp.ne.s32.totalorder %s180, %s194
    %p196 = scmp.eq.s32.totalorder %s23, 0
    %p197 = por %p195, %p196
    %s199 = sadd.s32 %s198, 1
    %p202 = scmp.eq.s32.totalorder %s17, 1
    %p203 = scmp.ne.s32.totalorder %s198, %s200
    %p204 = scmp.eq.s32.totalorder %s17, 0
    %p205 = por %p203, %p204
    %p206 = scmp.ne.s32.totalorder %s198, %s200
    %p207 = scmp.eq.s32.totalorder %s22, 1
    %p208 = por %p206, %p207
    %p209 = scmp.ne.s32.totalorder %s200, %s201
    %p210 = scmp.eq.s32.totalorder %s22, 0
    %p211 = por %p209, %p210
    %p212 = scmp.ne.s32.totalorder %s200, %s201
    %p213 = scmp.eq.s32.totalorder %s23, 1
    %p214 = por %p212, %p213
    %p216 = scmp.ne.s32.totalorder %s201, %s215
    %p217 = scmp.eq.s32.totalorder %s23, 0
    %p218 = por %p216, %p217
    %s220 = sadd.s32 %s219, 1
    %p223 = scmp.eq.s32.totalorder %s17, 1
    %p224 = scmp.ne.s32.totalorder %s219, %s221
    %p225 = scmp.eq.s32.totalorder %s17, 0
    %p226 = por %p224, %p225
    %p227 = scmp.ne.s32.totalorder %s219, %s221
    %p228 = scmp.eq.s32.totalorder %s22, 1
    %p229 = por %p227, %p228
    %p230 = scmp.ne.s32.totalorder %s221, %s222
    %p231 = scmp.eq.s32.totalorder %s22, 0
    %p232 = por %p230, %p231
    %p233 = scmp.ne.s32.totalorder %s221, %s222
    %p234 = scmp.eq.s32.totalorder %s23, 1
    %p235 = por %p233, %p234
    %p237 = scmp.ne.s32.totalorder %s222, %s236
    %p238 = scmp.eq.s32.totalorder %s23, 0
    %p239 = por %p237, %p238
    %s241 = sadd.s32 %s240, 1
    %p244 = scmp.eq.s32.totalorder %s17, 1
    %p245 = scmp.ne.s32.totalorder %s240, %s242
    %p246 = scmp.eq.s32.totalorder %s17, 0
    %p247 = por %p245, %p246
    %p248 = scmp.ne.s32.totalorder %s240, %s242
    %p249 = scmp.eq.s32.totalorder %s22, 1
    %p250 = por %p248, %p249
    %p251 = scmp.ne.s32.totalorder %s242, %s243
    %p252 = scmp.eq.s32.totalorder %s22, 0
    %p253 = por %p251, %p252
    %p254 = scmp.ne.s32.totalorder %s242, %s243
    %p255 = scmp.eq.s32.totalorder %s23, 1
    %p256 = por %p254, %p255
    %p258 = scmp.ne.s32.totalorder %s243, %s257
    %p259 = scmp.eq.s32.totalorder %s23, 0
    %p260 = por %p258, %p259
    %s261 = ssub.s32 %s17, %s24
    %p262 = scmp.eq.s32.totalorder %s261, 0
    %s264 = sadd.s32 %s263, 1
    %s265 = scalar_select %p262, %s263, %s264
    %p268 = pneg %p262
    %p269 = scmp.eq.s32.totalorder %s17, 1
    %p270 = por %p268, %p269
    %p271 = scmp.ne.s32.totalorder %s263, %s266
    %p272 = scmp.eq.s32.totalorder %s17, 0
    %p273 = por %p271, %p272
    %p274 = scmp.ne.s32.totalorder %s263, %s266
    %p275 = scmp.eq.s32.totalorder %s22, 1
    %p276 = por %p274, %p275
    %p277 = scmp.ne.s32.totalorder %s266, %s267
    %p278 = scmp.eq.s32.totalorder %s22, 0
    %p279 = por %p277, %p278
    %p280 = scmp.ne.s32.totalorder %s266, %s267
    %p281 = scmp.eq.s32.totalorder %s23, 1
    %p282 = por %p280, %p281
    %p284 = scmp.ne.s32.totalorder %s267, %s283
    %p285 = scmp.eq.s32.totalorder %s23, 0
    %p286 = por %p284, %p285
    %p287 = scmp.le.s32.totalorder 1, %s17
    %p288 = scmp.lt.s32.totalorder %s17, 3
    %p289 = pnand %p287, %p288
    %p290 = pneg %p289
    // Predicated region
    $region9: #{_lambda_.1} parent=5 // pred_check
      _
    $region10: #{_lambda_.1} parent=5 // pred_check_branch
      %292 = sbr.rel (%p289) target = $region12
    $region11: #{_lambda_.1} parent=5 // pred_region
      %s293 = ssub.s32 %s17, 1
      // Predicated region
      $region13: #{_lambda_.1} parent=11 // pred_check
        %p294 = pneg %p64
      $region14: #{_lambda_.1} parent=11 // pred_check_branch
        %296 = sbr.rel (%p294) target = $region16
      $region15: #{_lambda_.1} parent=11 // pred_region
        _
      $region16: #{_lambda_.1} parent=11 // pred_fallthru
        _
      // Predicated region
      $region17: #{_lambda_.1} parent=11 // pred_check
        %p297 = pneg %p85
      $region18: #{_lambda_.1} parent=11 // pred_check_branch
        %299 = sbr.rel (%p297) target = $region20
      $region19: #{_lambda_.1} parent=11 // pred_region
        _
      $region20: #{_lambda_.1} parent=11 // pred_fallthru
        _
      // Predicated region
      $region21: #{_lambda_.1} parent=11 // pred_check
        %p300 = pneg %p106
      $region22: #{_lambda_.1} parent=11 // pred_check_branch
        %302 = sbr.rel (%p300) target = $region24
      $region23: #{_lambda_.1} parent=11 // pred_region
        _
      $region24: #{_lambda_.1} parent=11 // pred_fallthru
        _
      // Predicated region
      $region25: #{_lambda_.1} parent=11 // pred_check
        %p303 = pneg %p127
      $region26: #{_lambda_.1} parent=11 // pred_check_branch
        %305 = sbr.rel (%p303) target = $region28
      $region27: #{_lambda_.1} parent=11 // pred_region
        _
      $region28: #{_lambda_.1} parent=11 // pred_fallthru
        _
      // Predicated region
      $region29: #{_lambda_.1} parent=11 // pred_check
        %p306 = pneg %p148
      $region30: #{_lambda_.1} parent=11 // pred_check_branch
        %308 = sbr.rel (%p306) target = $region32
      $region31: #{_lambda_.1} parent=11 // pred_region
        _
      $region32: #{_lambda_.1} parent=11 // pred_fallthru
        _
      // Predicated region
      $region33: #{_lambda_.1} parent=11 // pred_check
        %p309 = pneg %p169
      $region34: #{_lambda_.1} parent=11 // pred_check_branch
        %311 = sbr.rel (%p309) target = $region36
      $region35: #{_lambda_.1} parent=11 // pred_region
        _
      $region36: #{_lambda_.1} parent=11 // pred_fallthru
        _
      // Predicated region
      $region37: #{_lambda_.1} parent=11 // pred_check
        %p312 = pneg %p190
      $region38: #{_lambda_.1} parent=11 // pred_check_branch
        %314 = sbr.rel (%p312) target = $region40
      $region39: #{_lambda_.1} parent=11 // pred_region
        _
      $region40: #{_lambda_.1} parent=11 // pred_fallthru
        _
      // Predicated region
      $region41: #{_lambda_.1} parent=11 // pred_check
        %p315 = pneg %p211
      $region42: #{_lambda_.1} parent=11 // pred_check_branch
        %317 = sbr.rel (%p315) target = $region44
      $region43: #{_lambda_.1} parent=11 // pred_region
        _
      $region44: #{_lambda_.1} parent=11 // pred_fallthru
        _
      // Predicated region
      $region45: #{_lambda_.1} parent=11 // pred_check
        %p318 = pneg %p232
      $region46: #{_lambda_.1} parent=11 // pred_check_branch
        %320 = sbr.rel (%p318) target = $region48
      $region47: #{_lambda_.1} parent=11 // pred_region
        _
      $region48: #{_lambda_.1} parent=11 // pred_fallthru
        _
      // Predicated region
      $region49: #{_lambda_.1} parent=11 // pred_check
        %p321 = pneg %p253
      $region50: #{_lambda_.1} parent=11 // pred_check_branch
        %323 = sbr.rel (%p321) target = $region52
      $region51: #{_lambda_.1} parent=11 // pred_region
        _
      $region52: #{_lambda_.1} parent=11 // pred_fallthru
        _
    $region12: #{_lambda_.1} parent=5 // pred_fallthru
      _
    %p324 = scmp.lt.s32.totalorder %s17, 2
    // Predicated region
    $region53: #{_lambda_.1} parent=5 // pred_check
      %p325 = pneg %p324
    $region54: #{_lambda_.1} parent=5 // pred_check_branch
      %327 = sbr.rel (%p325) target = $region56
    $region55: #{_lambda_.1} parent=5 // pred_region
      // Predicated region
      $region57: #{_lambda_.1} parent=55 // pred_check
        %p328 = pneg %p37
      $region58: #{_lambda_.1} parent=55 // pred_check_branch
        %330 = sbr.rel (%p328) target = $region60
      $region59: #{_lambda_.1} parent=55 // pred_region
        %s331 = smul.u32 16, %s17
        %p332 = scmp.lt.s32.totalorder %s331, 31
        %s333 = scalar_select %p332, %s331, 31
        %s334 = smul.addr %s333, 5
        %s335 = smul.addr %s334, 4
        %s336 = scalar_lea.vmem %s0, %s335
        %s337 = smul.u32 16, %s17
      $region60: #{_lambda_.1} parent=55 // pred_fallthru
        _
    $region56: #{_lambda_.1} parent=5 // pred_fallthru
      _
    %p338 = scmp.le.s32.totalorder 1, %s17
    %p339 = scmp.lt.s32.totalorder %s17, 3
    %p340 = pnand %p338, %p339
    %p341 = pneg %p340
    // Predicated region
    $region61: #{_lambda_.1} parent=5 // pred_check
      _
    $region62: #{_lambda_.1} parent=5 // pred_check_branch
      %343 = sbr.rel (%p340) target = $region64
    $region63: #{_lambda_.1} parent=5 // pred_region
      %s344 = ssub.s32 %s17, 1
      %s345 = smul.u32 16, %s22
      %p346 = scmp.lt.s32.totalorder %s345, 31
      %s347 = scalar_select %p346, %s345, 31
      %s348 = smul.addr %s347, 5
      %s349 = smul.addr %s348, 4
      %s350 = scalar_lea.vmem %s0, %s349
      %p351 = pneg %p43
      %p352 = pneg %p40
      %p353 = pneg %p64
      %p354 = pneg %p61
      %p355 = pneg %p85
      %p356 = pneg %p82
      %p357 = pneg %p106
      %p358 = pneg %p103
      %p359 = pneg %p127
      %p360 = pneg %p124
      %p361 = pneg %p148
      %p362 = pneg %p145
      %p363 = pneg %p169
      %p364 = pneg %p166
      %p365 = pneg %p190
      %p366 = pneg %p187
      %p367 = pneg %p211
      %p368 = pneg %p208
      %p369 = pneg %p232
      %p370 = pneg %p229
      %p371 = pneg %p253
      %p372 = pneg %p250
      %p373 = pneg %p279
      %p374 = pneg %p276
      %s375 = smul.u32 2, %s22
      %p376 = scmp.lt.s32.totalorder %s375, 3
      %s377 = scalar_select %p376, %s375, 3
      %s378 = smul.addr %s377, 8
      %s379 = scalar_lea.vmem %s11, %s378
      %s380 = smul.u32 16, %s22
      %p381 = scmp.lt.s32.totalorder %s380, 31
      %s382 = scalar_select %p381, %s380, 31
      %s383 = smul.addr %s382, 5
      %s384 = smul.addr %s383, 4
      %s385 = scalar_lea.vmem %s0, %s384
      %s386 = smul.u32 16, %s22
      %s387 = smul.u32 2, %s22
      %p388 = scmp.lt.s32.totalorder %s387, 3
      %s389 = scalar_select %p388, %s387, 3
      %s390 = smul.addr %s389, 8
      %s391 = scalar_lea.vmem %s11, %s390
      %s392 = smul.u32 2, %s22
      %v394 = vlaneseq
      %v395 = vshrl.u32 %v394, 7
      %v396 = vadd.s32 %v395, 8
      %v397 = vadd.s32 %v395, 16
      %v398 = vadd.s32 %v395, 24
      %v399 = vadd.s32 %v395, 32
      %vm400 = vcmp.ge.s32.totalorder %v395, 8
      %vm401 = vcmp.ge.s32.totalorder %v396, 8
      %vm402 = vcmp.ge.s32.totalorder %v397, 8
      %vm403 = vcmp.ge.s32.totalorder %v398, 8
      %vm404 = vcmp.ge.s32.totalorder %v399, 8
      %vm405 = vcmp.lt.s32.totalorder %v395, 30
      %vm406 = vcmp.lt.s32.totalorder %v396, 30
      %vm407 = vcmp.lt.s32.totalorder %v397, 30
      %vm408 = vcmp.lt.s32.totalorder %v398, 30
      %vm409 = vcmp.lt.s32.totalorder %v399, 30
      %vm410 = vmand %vm400, %vm405
      %vm411 = vmand %vm401, %vm406
      %vm412 = vmand %vm402, %vm407
      %vm413 = vmand %vm403, %vm408
      %vm414 = vmand %vm404, %vm409
      %v415 = vld [vmem:[%s385] sm:$0xf]
      %v416 = vld [vmem:[%s385 + $0x4] sm:$0xf]
      %v417 = vld [vmem:[%s385 + $0x8] sm:$0xf]
      %v418 = vld [vmem:[%s385 + $0xc] sm:$0xf]
      %v419 = vld [vmem:[%s385 + $0x10] sm:$0xf]
      %v420 = vld [vmem:[%s385 + $0x14] sm:$0xf]
      %v421 = vld [vmem:[%s385 + $0x18] sm:$0xf]
      %v422 = vld [vmem:[%s385 + $0x1c] sm:$0xf]
      %v423 = vld [vmem:[%s385 + $0x20] sm:$0xf]
      %v424 = vld [vmem:[%s385 + $0x24] sm:$0xf]
      %v425 = vld [vmem:[%s385 + $0x28] sm:$0xf]
      %v426 = vld [vmem:[%s385 + $0x2c] sm:$0xf]
      %v427 = vld [vmem:[%s385 + $0x30] sm:$0xf]
      %v428 = vld [vmem:[%s385 + $0x34] sm:$0xf]
      %v429 = vld [vmem:[%s385 + $0x38] sm:$0xf]
      %v430 = vld [vmem:[%s385 + $0x3c] sm:$0xf]
      %v431 = vld [vmem:[%s385 + $0x40] sm:$0xf]
      %v432 = vld [vmem:[%s385 + $0x44] sm:$0xf]
      %v433 = vld [vmem:[%s385 + $0x48] sm:$0xf]
      %v434 = vld [vmem:[%s385 + $0x4c] sm:$0xf]
      %v435 = vld [vmem:[%s385 + $0x50] sm:$0xf]
      %v436 = vld [vmem:[%s385 + $0x54] sm:$0xf]
      %v437 = vld [vmem:[%s385 + $0x58] sm:$0xf]
      %v438 = vld [vmem:[%s385 + $0x5c] sm:$0xf]
      %v439 = vld [vmem:[%s385 + $0x60] sm:$0xf]
      %v440 = vld [vmem:[%s385 + $0x64] sm:$0xf]
      %v441 = vld [vmem:[%s385 + $0x68] sm:$0xf]
      %v442 = vld [vmem:[%s385 + $0x6c] sm:$0xf]
      %v443 = vld [vmem:[%s385 + $0x70] sm:$0xf]
      %v444 = vld [vmem:[%s385 + $0x74] sm:$0xf]
      %v445 = vld [vmem:[%s385 + $0x78] sm:$0xf]
      %v446 = vld [vmem:[%s385 + $0x7c] sm:$0xf]
      %v447 = vld [vmem:[%s385 + $0x80] sm:$0xf]
      %v448 = vld [vmem:[%s385 + $0x84] sm:$0xf]
      %v449 = vld [vmem:[%s385 + $0x88] sm:$0xf]
      %v450 = vld [vmem:[%s385 + $0x8c] sm:$0xf]
      %v451 = vld [vmem:[%s385 + $0x90] sm:$0xf]
      %v452 = vld [vmem:[%s385 + $0x94] sm:$0xf]
      %v453 = vld [vmem:[%s385 + $0x98] sm:$0xf]
      %v454 = vld [vmem:[%s385 + $0x9c] sm:$0xf]
      %v455 = vld [vmem:[%s385 + $0xa0] sm:$0xf]
      %v456 = vld [vmem:[%s385 + $0xa4] sm:$0xf]
      %v457 = vld [vmem:[%s385 + $0xa8] sm:$0xf]
      %v458 = vld [vmem:[%s385 + $0xac] sm:$0xf]
      %v459 = vld [vmem:[%s385 + $0xb0] sm:$0xf]
      %v460 = vld [vmem:[%s385 + $0xb4] sm:$0xf]
      %v461 = vld [vmem:[%s385 + $0xb8] sm:$0xf]
      %v462 = vld [vmem:[%s385 + $0xbc] sm:$0xf]
      %v463 = vld [vmem:[%s385 + $0xc0] sm:$0xf]
      %v464 = vld [vmem:[%s385 + $0xc4] sm:$0xf]
      %v465 = vld [vmem:[%s385 + $0xc8] sm:$0xf]
      %v466 = vld [vmem:[%s385 + $0xcc] sm:$0xf]
      %v467 = vld [vmem:[%s385 + $0xd0] sm:$0xf]
      %v468 = vld [vmem:[%s385 + $0xd4] sm:$0xf]
      %v469 = vld [vmem:[%s385 + $0xd8] sm:$0xf]
      %v470 = vld [vmem:[%s385 + $0xdc] sm:$0xf]
      %v471 = vld [vmem:[%s385 + $0xe0] sm:$0xf]
      %v472 = vld [vmem:[%s385 + $0xe4] sm:$0xf]
      %v473 = vld [vmem:[%s385 + $0xe8] sm:$0xf]
      %v474 = vld [vmem:[%s385 + $0xec] sm:$0xf]
      %v475 = vld [vmem:[%s385 + $0xf0] sm:$0xf]
      %v476 = vld [vmem:[%s385 + $0xf4] sm:$0xf]
      %v477 = vld [vmem:[%s385 + $0xf8] sm:$0xf]
      %v478 = vld [vmem:[%s385 + $0xfc] sm:$0xf]
      %v479 = vld [vmem:[%s385 + $0x100] sm:$0xf]
      %v480 = vld [vmem:[%s385 + $0x104] sm:$0xf]
      %v481 = vld [vmem:[%s385 + $0x108] sm:$0xf]
      %v482 = vld [vmem:[%s385 + $0x10c] sm:$0xf]
      %v483 = vld [vmem:[%s385 + $0x110] sm:$0xf]
      %v484 = vld [vmem:[%s385 + $0x114] sm:$0xf]
      %v485 = vld [vmem:[%s385 + $0x118] sm:$0xf]
      %v486 = vld [vmem:[%s385 + $0x11c] sm:$0xf]
      %v487 = vld [vmem:[%s385 + $0x120] sm:$0xf]
      %v488 = vld [vmem:[%s385 + $0x124] sm:$0xf]
      %v489 = vld [vmem:[%s385 + $0x128] sm:$0xf]
      %v490 = vld [vmem:[%s385 + $0x12c] sm:$0xf]
      %v491 = vld [vmem:[%s385 + $0x130] sm:$0xf]
      %v492 = vld [vmem:[%s385 + $0x134] sm:$0xf]
      %v493 = vld [vmem:[%s385 + $0x138] sm:$0xf]
      %v494 = vld [vmem:[%s385 + $0x13c] sm:$0xf]
      %v495 = vld [vmem:[%s1] sm:$0xf]
      %v496 = vld [vmem:[%s1 + $0x4] sm:$0xf]
      %v497 = vld [vmem:[%s1 + $0x8] sm:$0xf]
      %v498 = vld [vmem:[%s1 + $0xc] sm:$0xf]
      %v499 = vld [vmem:[%s1 + $0x10] sm:$0xf]
      %v500 = vld [vmem:[%s1 + $0x14] sm:$0x3]
      %v581 = vunpack.c.l.b16 %v415
      %v582 = vunpack.c.l.b16 %v416
      %v583 = vunpack.c.l.b16 %v417
      %v584 = vunpack.c.l.b16 %v418
      %v585 = vunpack.c.l.b16 %v419
      %v586 = vunpack.c.l.b16 %v420
      %v587 = vunpack.c.l.b16 %v421
      %v588 = vunpack.c.l.b16 %v422
      %v589 = vunpack.c.l.b16 %v423
      %v590 = vunpack.c.l.b16 %v424
      %v591 = vunpack.c.l.b16 %v425
      %v592 = vunpack.c.l.b16 %v426
      %v593 = vunpack.c.l.b16 %v427
      %v594 = vunpack.c.l.b16 %v428
      %v595 = vunpack.c.l.b16 %v429
      %v596 = vunpack.c.l.b16 %v430
      %v597 = vunpack.c.l.b16 %v431
      %v598 = vunpack.c.l.b16 %v432
      %v599 = vunpack.c.l.b16 %v433
      %v600 = vunpack.c.l.b16 %v434
      %v601 = vunpack.c.l.b16 %v435
      %v602 = vunpack.c.l.b16 %v436
      %v603 = vunpack.c.l.b16 %v437
      %v604 = vunpack.c.l.b16 %v438
      %v605 = vunpack.c.l.b16 %v439
      %v606 = vunpack.c.l.b16 %v440
      %v607 = vunpack.c.l.b16 %v441
      %v608 = vunpack.c.l.b16 %v442
      %v609 = vunpack.c.l.b16 %v443
      %v610 = vunpack.c.l.b16 %v444
      %v611 = vunpack.c.l.b16 %v445
      %v612 = vunpack.c.l.b16 %v446
      %v613 = vunpack.c.l.b16 %v447
      %v614 = vunpack.c.l.b16 %v448
      %v615 = vunpack.c.l.b16 %v449
      %v616 = vunpack.c.l.b16 %v450
      %v617 = vunpack.c.l.b16 %v451
      %v618 = vunpack.c.l.b16 %v452
      %v619 = vunpack.c.l.b16 %v453
      %v620 = vunpack.c.l.b16 %v454
      %v621 = vunpack.c.l.b16 %v455
      %v622 = vunpack.c.l.b16 %v456
      %v623 = vunpack.c.l.b16 %v457
      %v624 = vunpack.c.l.b16 %v458
      %v625 = vunpack.c.l.b16 %v459
      %v626 = vunpack.c.l.b16 %v460
      %v627 = vunpack.c.l.b16 %v461
      %v628 = vunpack.c.l.b16 %v462
      %v629 = vunpack.c.l.b16 %v463
      %v630 = vunpack.c.l.b16 %v464
      %v631 = vunpack.c.l.b16 %v465
      %v632 = vunpack.c.l.b16 %v466
      %v633 = vunpack.c.l.b16 %v467
      %v634 = vunpack.c.l.b16 %v468
      %v635 = vunpack.c.l.b16 %v469
      %v636 = vunpack.c.l.b16 %v470
      %v637 = vunpack.c.l.b16 %v471
      %v638 = vunpack.c.l.b16 %v472
      %v639 = vunpack.c.l.b16 %v473
      %v640 = vunpack.c.l.b16 %v474
      %v641 = vunpack.c.l.b16 %v475
      %v642 = vunpack.c.l.b16 %v476
      %v643 = vunpack.c.l.b16 %v477
      %v644 = vunpack.c.l.b16 %v478
      %v645 = vunpack.c.l.b16 %v479
      %v646 = vunpack.c.l.b16 %v480
      %v647 = vunpack.c.l.b16 %v481
      %v648 = vunpack.c.l.b16 %v482
      %v649 = vunpack.c.l.b16 %v483
      %v650 = vunpack.c.l.b16 %v484
      %v651 = vunpack.c.l.b16 %v485
      %v652 = vunpack.c.l.b16 %v486
      %v653 = vunpack.c.l.b16 %v487
      %v654 = vunpack.c.l.b16 %v488
      %v655 = vunpack.c.l.b16 %v489
      %v656 = vunpack.c.l.b16 %v490
      %v657 = vunpack.c.l.b16 %v491
      %v658 = vunpack.c.l.b16 %v492
      %v659 = vunpack.c.l.b16 %v493
      %v660 = vunpack.c.l.b16 %v494
      %v661 = vpack.c.b16 %v582, %v581
      %v662 = vpack.c.b16 %v584, %v583
      %v663 = vpack.c.b16 %v586, %v585
      %v664 = vpack.c.b16 %v588, %v587
      %v665 = vpack.c.b16 %v590, %v589
      %v666 = vpack.c.b16 %v592, %v591
      %v667 = vpack.c.b16 %v594, %v593
      %v668 = vpack.c.b16 %v596, %v595
      %v669 = vpack.c.b16 %v598, %v597
      %v670 = vpack.c.b16 %v600, %v599
      %v671 = vpack.c.b16 %v602, %v601
      %v672 = vpack.c.b16 %v604, %v603
      %v673 = vpack.c.b16 %v606, %v605
      %v674 = vpack.c.b16 %v608, %v607
      %v675 = vpack.c.b16 %v610, %v609
      %v676 = vpack.c.b16 %v612, %v611
      %v677 = vpack.c.b16 %v614, %v613
      %v678 = vpack.c.b16 %v616, %v615
      %v679 = vpack.c.b16 %v618, %v617
      %v680 = vpack.c.b16 %v620, %v619
      %v681 = vpack.c.b16 %v622, %v621
      %v682 = vpack.c.b16 %v624, %v623
      %v683 = vpack.c.b16 %v626, %v625
      %v684 = vpack.c.b16 %v628, %v627
      %v685 = vpack.c.b16 %v630, %v629
      %v686 = vpack.c.b16 %v632, %v631
      %v687 = vpack.c.b16 %v634, %v633
      %v688 = vpack.c.b16 %v636, %v635
      %v689 = vpack.c.b16 %v638, %v637
      %v690 = vpack.c.b16 %v640, %v639
      %v691 = vpack.c.b16 %v642, %v641
      %v692 = vpack.c.b16 %v644, %v643
      %v693 = vpack.c.b16 %v646, %v645
      %v694 = vpack.c.b16 %v648, %v647
      %v695 = vpack.c.b16 %v650, %v649
      %v696 = vpack.c.b16 %v652, %v651
      %v697 = vpack.c.b16 %v654, %v653
      %v698 = vpack.c.b16 %v656, %v655
      %v699 = vpack.c.b16 %v658, %v657
      %v700 = vpack.c.b16 %v660, %v659
      %v707 = vunpack.c.l.b16 %v495
      %v708 = vunpack.c.l.b16 %v496
      %v709 = vunpack.c.l.b16 %v497
      %v710 = vunpack.c.l.b16 %v498
      %v711 = vunpack.c.l.b16 %v499
      %v712 = vunpack.c.l.b16 %v500
      %v713 = vpack.c.b16 %v708, %v707
      %v714 = vpack.c.b16 %v710, %v709
      %v715 = vpack.c.b16 %v712, %v711
      %vm718 = vcmask 359424
      %v720 = vsel %vm718, %v661, 0
      %v723 = vsel %vm718, %v662, 0
      %v726 = vsel %vm718, %v663, 0
      %v729 = vsel %vm718, %v664, 0
      %v732 = vsel %vm718, %v665, 0
      %v735 = vsel %vm718, %v666, 0
      %v738 = vsel %vm718, %v667, 0
      %v741 = vsel %vm718, %v668, 0
      %v744 = vsel %vm718, %v669, 0
      %v747 = vsel %vm718, %v670, 0
      %v750 = vsel %vm718, %v671, 0
      %v753 = vsel %vm718, %v672, 0
      %v756 = vsel %vm718, %v673, 0
      %v759 = vsel %vm718, %v674, 0
      %v762 = vsel %vm718, %v675, 0
      %v765 = vsel %vm718, %v676, 0
      %v768 = vsel %vm718, %v677, 0
      %v771 = vsel %vm718, %v678, 0
      %v774 = vsel %vm718, %v679, 0
      %v777 = vsel %vm718, %v680, 0
      %v780 = vsel %vm718, %v681, 0
      %v783 = vsel %vm718, %v682, 0
      %v786 = vsel %vm718, %v683, 0
      %v789 = vsel %vm718, %v684, 0
      %v792 = vsel %vm718, %v685, 0
      %v795 = vsel %vm718, %v686, 0
      %v798 = vsel %vm718, %v687, 0
      %v801 = vsel %vm718, %v688, 0
      %v804 = vsel %vm718, %v689, 0
      %v807 = vsel %vm718, %v690, 0
      %v810 = vsel %vm718, %v691, 0
      %v813 = vsel %vm718, %v692, 0
      %v816 = vsel %vm718, %v693, 0
      %v819 = vsel %vm718, %v694, 0
      %v822 = vsel %vm718, %v695, 0
      %v825 = vsel %vm718, %v696, 0
      %v828 = vsel %vm718, %v697, 0
      %v831 = vsel %vm718, %v698, 0
      %v834 = vsel %vm718, %v699, 0
      %v837 = vsel %vm718, %v700, 0
      %vm839 = vcmask 1045504
      %v841 = vsel %vm839, %v715, 0
      %843 = vmatprep.subr.bf16.mxu0 0
      %844 = vmatpush1.bf16.msra.mxu0 0
      %845 = vmatprep.subr.bf16.mxu0 0
      %846 = vmatpush1.bf16.msra.mxu0 0
      %847 = vmatprep.subr.bf16.mxu0 0
      %848 = vmatpush1.bf16.msra.mxu0 0
      %849 = vmatprep.subr.bf16.mxu0 0
      %850 = vmatpush1.bf16.msra.mxu0 0
      %851 = vmatprep.subr.bf16.mxu0 0
      %852 = vmatpush1.bf16.msra.mxu0 0
      %853 = vmatprep.subr.bf16.mxu0 0
      %854 = vmatpush1.bf16.msra.mxu0 %v841
      %855 = vmatprep.subr.bf16.mxu0 0
      %856 = vmatpush1.bf16.msra.mxu0 %v714
      %857 = vmatprep.subr.bf16.mxu0 0
      %858 = vmatpush1.bf16.msra.mxu0 %v713
      %859 = vmatprep.subr.bf16.mxu0 0
      %860 = vmatpush2.bf16.msra.mxu0 0
      %861 = vmatprep.subr.bf16.mxu0 0
      %862 = vmatpush2.bf16.msra.mxu0 0
      %863 = vmatprep.subr.bf16.mxu0 0
      %864 = vmatpush2.bf16.msra.mxu0 0
      %865 = vmatprep.subr.bf16.mxu0 0
      %866 = vmatpush2.bf16.msra.mxu0 0
      %867 = vmatprep.subr.bf16.mxu0 0
      %868 = vmatpush2.bf16.msra.mxu0 0
      %869 = vmatprep.subr.bf16.mxu0 0
      %870 = vmatpush2.bf16.msra.mxu0 0
      %871 = vmatprep.subr.bf16.mxu0 0
      %872 = vmatpush2.bf16.msra.mxu0 0
      %873 = vmatprep.subr.bf16.mxu0 0
      %874 = vmatpush2.bf16.msra.mxu0 0
      %875 = vmatprep.mubr.bf16.mxu0 0
      %876 = vmatmul.mubr.bf16.gmra.mxu0 %v720
      %v877 = vpop.f32.mrf.mxu0
      %v878 = vadd.f32 0.0, %v877
      %v879 = vpop.f32.mrf.mxu0
      %v880 = vpop.f32.mrf.mxu0
      %v881 = vadd.f32 0.0, %v880
      %v882 = vpop.f32.mrf.mxu0
      %883 = vmatprep.mubr.bf16.mxu0 0
      %884 = vmatmul.mubr.bf16.gmra.mxu0 %v723
      %v885 = vpop.f32.mrf.mxu0
      %v886 = vadd.f32 0.0, %v885
      %v887 = vpop.f32.mrf.mxu0
      %v888 = vpop.f32.mrf.mxu0
      %v889 = vadd.f32 0.0, %v888
      %v890 = vpop.f32.mrf.mxu0
      %891 = vmatprep.mubr.bf16.mxu0 0
      %892 = vmatmul.mubr.bf16.gmra.mxu0 %v726
      %v893 = vpop.f32.mrf.mxu0
      %v894 = vadd.f32 0.0, %v893
      %v895 = vpop.f32.mrf.mxu0
      %v896 = vpop.f32.mrf.mxu0
      %v897 = vadd.f32 0.0, %v896
      %v898 = vpop.f32.mrf.mxu0
      %899 = vmatprep.mubr.bf16.mxu0 0
      %900 = vmatmul.mubr.bf16.gmra.mxu0 %v729
      %v901 = vpop.f32.mrf.mxu0
      %v902 = vadd.f32 0.0, %v901
      %v903 = vpop.f32.mrf.mxu0
      %v904 = vpop.f32.mrf.mxu0
      %v905 = vadd.f32 0.0, %v904
      %v906 = vpop.f32.mrf.mxu0
      %907 = vmatprep.mubr.bf16.mxu0 0
      %908 = vmatmul.mubr.bf16.gmra.mxu0 %v732
      %v909 = vpop.f32.mrf.mxu0
      %v910 = vadd.f32 0.0, %v909
      %v911 = vpop.f32.mrf.mxu0
      %v912 = vpop.f32.mrf.mxu0
      %v913 = vadd.f32 0.0, %v912
      %v914 = vpop.f32.mrf.mxu0
      %915 = vmatprep.mubr.bf16.mxu0 0
      %916 = vmatmul.mubr.bf16.gmra.mxu0 %v735
      %v917 = vpop.f32.mrf.mxu0
      %v918 = vadd.f32 0.0, %v917
      %v919 = vpop.f32.mrf.mxu0
      %v920 = vpop.f32.mrf.mxu0
      %v921 = vadd.f32 0.0, %v920
      %v922 = vpop.f32.mrf.mxu0
      %923 = vmatprep.mubr.bf16.mxu0 0
      %924 = vmatmul.mubr.bf16.gmra.mxu0 %v738
      %v925 = vpop.f32.mrf.mxu0
      %v926 = vadd.f32 0.0, %v925
      %v927 = vpop.f32.mrf.mxu0
      %v928 = vpop.f32.mrf.mxu0
      %v929 = vadd.f32 0.0, %v928
      %v930 = vpop.f32.mrf.mxu0
      %931 = vmatprep.mubr.bf16.mxu0 0
      %932 = vmatmul.mubr.bf16.gmra.mxu0 %v741
      %v933 = vpop.f32.mrf.mxu0
      %v934 = vadd.f32 0.0, %v933
      %v935 = vpop.f32.mrf.mxu0
      %v936 = vpop.f32.mrf.mxu0
      %v937 = vadd.f32 0.0, %v936
      %v938 = vpop.f32.mrf.mxu0
      %939 = vmatprep.mubr.bf16.mxu0 0
      %940 = vmatmul.mubr.bf16.gmra.mxu0 %v744
      %v941 = vpop.f32.mrf.mxu0
      %v942 = vadd.f32 0.0, %v941
      %v943 = vpop.f32.mrf.mxu0
      %v944 = vpop.f32.mrf.mxu0
      %v945 = vadd.f32 0.0, %v944
      %v946 = vpop.f32.mrf.mxu0
      %947 = vmatprep.mubr.bf16.mxu0 0
      %948 = vmatmul.mubr.bf16.gmra.mxu0 %v747
      %v949 = vpop.f32.mrf.mxu0
      %v950 = vadd.f32 0.0, %v949
      %v951 = vpop.f32.mrf.mxu0
      %v952 = vpop.f32.mrf.mxu0
      %v953 = vadd.f32 0.0, %v952
      %v954 = vpop.f32.mrf.mxu0
      %955 = vmatprep.mubr.bf16.mxu0 0
      %956 = vmatmul.mubr.bf16.gmra.mxu0 %v750
      %v957 = vpop.f32.mrf.mxu0
      %v958 = vadd.f32 0.0, %v957
      %v959 = vpop.f32.mrf.mxu0
      %v960 = vpop.f32.mrf.mxu0
      %v961 = vadd.f32 0.0, %v960
      %v962 = vpop.f32.mrf.mxu0
      %963 = vmatprep.mubr.bf16.mxu0 0
      %964 = vmatmul.mubr.bf16.gmra.mxu0 %v753
      %v965 = vpop.f32.mrf.mxu0
      %v966 = vadd.f32 0.0, %v965
      %v967 = vpop.f32.mrf.mxu0
      %v968 = vpop.f32.mrf.mxu0
      %v969 = vadd.f32 0.0, %v968
      %v970 = vpop.f32.mrf.mxu0
      %971 = vmatprep.mubr.bf16.mxu0 0
      %972 = vmatmul.mubr.bf16.gmra.mxu0 %v756
      %v973 = vpop.f32.mrf.mxu0
      %v974 = vadd.f32 0.0, %v973
      %v975 = vpop.f32.mrf.mxu0
      %v976 = vpop.f32.mrf.mxu0
      %v977 = vadd.f32 0.0, %v976
      %v978 = vpop.f32.mrf.mxu0
      %979 = vmatprep.mubr.bf16.mxu0 0
      %980 = vmatmul.mubr.bf16.gmra.mxu0 %v759
      %v981 = vpop.f32.mrf.mxu0
      %v982 = vadd.f32 0.0, %v981
      %v983 = vpop.f32.mrf.mxu0
      %v984 = vpop.f32.mrf.mxu0
      %v985 = vadd.f32 0.0, %v984
      %v986 = vpop.f32.mrf.mxu0
      %987 = vmatprep.mubr.bf16.mxu0 0
      %988 = vmatmul.mubr.bf16.gmra.mxu0 %v762
      %v989 = vpop.f32.mrf.mxu0
      %v990 = vadd.f32 0.0, %v989
      %v991 = vpop.f32.mrf.mxu0
      %v992 = vpop.f32.mrf.mxu0
      %v993 = vadd.f32 0.0, %v992
      %v994 = vpop.f32.mrf.mxu0
      %995 = vmatprep.mubr.bf16.mxu0 0
      %996 = vmatmul.mubr.bf16.gmra.mxu0 %v765
      %v997 = vpop.f32.mrf.mxu0
      %v998 = vadd.f32 0.0, %v997
      %v999 = vpop.f32.mrf.mxu0
      %v1000 = vpop.f32.mrf.mxu0
      %v1001 = vadd.f32 0.0, %v1000
      %v1002 = vpop.f32.mrf.mxu0
      %1003 = vmatprep.mubr.bf16.mxu0 0
      %1004 = vmatmul.mubr.bf16.gmra.mxu0 %v768
      %v1005 = vpop.f32.mrf.mxu0
      %v1006 = vadd.f32 0.0, %v1005
      %v1007 = vpop.f32.mrf.mxu0
      %v1008 = vpop.f32.mrf.mxu0
      %v1009 = vadd.f32 0.0, %v1008
      %v1010 = vpop.f32.mrf.mxu0
      %1011 = vmatprep.mubr.bf16.mxu0 0
      %1012 = vmatmul.mubr.bf16.gmra.mxu0 %v771
      %v1013 = vpop.f32.mrf.mxu0
      %v1014 = vadd.f32 0.0, %v1013
      %v1015 = vpop.f32.mrf.mxu0
      %v1016 = vpop.f32.mrf.mxu0
      %v1017 = vadd.f32 0.0, %v1016
      %v1018 = vpop.f32.mrf.mxu0
      %1019 = vmatprep.mubr.bf16.mxu0 0
      %1020 = vmatmul.mubr.bf16.gmra.mxu0 %v774
      %v1021 = vpop.f32.mrf.mxu0
      %v1022 = vadd.f32 0.0, %v1021
      %v1023 = vpop.f32.mrf.mxu0
      %v1024 = vpop.f32.mrf.mxu0
      %v1025 = vadd.f32 0.0, %v1024
      %v1026 = vpop.f32.mrf.mxu0
      %1027 = vmatprep.mubr.bf16.mxu0 0
      %1028 = vmatmul.mubr.bf16.gmra.mxu0 %v777
      %v1029 = vpop.f32.mrf.mxu0
      %v1030 = vadd.f32 0.0, %v1029
      %v1031 = vpop.f32.mrf.mxu0
      %v1032 = vpop.f32.mrf.mxu0
      %v1033 = vadd.f32 0.0, %v1032
      %v1034 = vpop.f32.mrf.mxu0
      %1035 = vmatprep.mubr.bf16.mxu0 0
      %1036 = vmatmul.mubr.bf16.gmra.mxu0 %v780
      %v1037 = vpop.f32.mrf.mxu0
      %v1038 = vadd.f32 0.0, %v1037
      %v1039 = vpop.f32.mrf.mxu0
      %v1040 = vpop.f32.mrf.mxu0
      %v1041 = vadd.f32 0.0, %v1040
      %v1042 = vpop.f32.mrf.mxu0
      %1043 = vmatprep.mubr.bf16.mxu0 0
      %1044 = vmatmul.mubr.bf16.gmra.mxu0 %v783
      %v1045 = vpop.f32.mrf.mxu0
      %v1046 = vadd.f32 0.0, %v1045
      %v1047 = vpop.f32.mrf.mxu0
      %v1048 = vpop.f32.mrf.mxu0
      %v1049 = vadd.f32 0.0, %v1048
      %v1050 = vpop.f32.mrf.mxu0
      %1051 = vmatprep.mubr.bf16.mxu0 0
      %1052 = vmatmul.mubr.bf16.gmra.mxu0 %v786
      %v1053 = vpop.f32.mrf.mxu0
      %v1054 = vadd.f32 0.0, %v1053
      %v1055 = vpop.f32.mrf.mxu0
      %v1056 = vpop.f32.mrf.mxu0
      %v1057 = vadd.f32 0.0, %v1056
      %v1058 = vpop.f32.mrf.mxu0
      %1059 = vmatprep.mubr.bf16.mxu0 0
      %1060 = vmatmul.mubr.bf16.gmra.mxu0 %v789
      %v1061 = vpop.f32.mrf.mxu0
      %v1062 = vadd.f32 0.0, %v1061
      %v1063 = vpop.f32.mrf.mxu0
      %v1064 = vpop.f32.mrf.mxu0
      %v1065 = vadd.f32 0.0, %v1064
      %v1066 = vpop.f32.mrf.mxu0
      %1067 = vmatprep.mubr.bf16.mxu0 0
      %1068 = vmatmul.mubr.bf16.gmra.mxu0 %v792
      %v1069 = vpop.f32.mrf.mxu0
      %v1070 = vadd.f32 0.0, %v1069
      %v1071 = vpop.f32.mrf.mxu0
      %v1072 = vpop.f32.mrf.mxu0
      %v1073 = vadd.f32 0.0, %v1072
      %v1074 = vpop.f32.mrf.mxu0
      %1075 = vmatprep.mubr.bf16.mxu0 0
      %1076 = vmatmul.mubr.bf16.gmra.mxu0 %v795
      %v1077 = vpop.f32.mrf.mxu0
      %v1078 = vadd.f32 0.0, %v1077
      %v1079 = vpop.f32.mrf.mxu0
      %v1080 = vpop.f32.mrf.mxu0
      %v1081 = vadd.f32 0.0, %v1080
      %v1082 = vpop.f32.mrf.mxu0
      %1083 = vmatprep.mubr.bf16.mxu0 0
      %1084 = vmatmul.mubr.bf16.gmra.mxu0 %v798
      %v1085 = vpop.f32.mrf.mxu0
      %v1086 = vadd.f32 0.0, %v1085
      %v1087 = vpop.f32.mrf.mxu0
      %v1088 = vpop.f32.mrf.mxu0
      %v1089 = vadd.f32 0.0, %v1088
      %v1090 = vpop.f32.mrf.mxu0
      %1091 = vmatprep.mubr.bf16.mxu0 0
      %1092 = vmatmul.mubr.bf16.gmra.mxu0 %v801
      %v1093 = vpop.f32.mrf.mxu0
      %v1094 = vadd.f32 0.0, %v1093
      %v1095 = vpop.f32.mrf.mxu0
      %v1096 = vpop.f32.mrf.mxu0
      %v1097 = vadd.f32 0.0, %v1096
      %v1098 = vpop.f32.mrf.mxu0
      %1099 = vmatprep.mubr.bf16.mxu0 0
      %1100 = vmatmul.mubr.bf16.gmra.mxu0 %v804
      %v1101 = vpop.f32.mrf.mxu0
      %v1102 = vadd.f32 0.0, %v1101
      %v1103 = vpop.f32.mrf.mxu0
      %v1104 = vpop.f32.mrf.mxu0
      %v1105 = vadd.f32 0.0, %v1104
      %v1106 = vpop.f32.mrf.mxu0
      %1107 = vmatprep.mubr.bf16.mxu0 0
      %1108 = vmatmul.mubr.bf16.gmra.mxu0 %v807
      %v1109 = vpop.f32.mrf.mxu0
      %v1110 = vadd.f32 0.0, %v1109
      %v1111 = vpop.f32.mrf.mxu0
      %v1112 = vpop.f32.mrf.mxu0
      %v1113 = vadd.f32 0.0, %v1112
      %v1114 = vpop.f32.mrf.mxu0
      %1115 = vmatprep.mubr.bf16.mxu0 0
      %1116 = vmatmul.mubr.bf16.gmra.mxu0 %v810
      %v1117 = vpop.f32.mrf.mxu0
      %v1118 = vadd.f32 0.0, %v1117
      %v1119 = vpop.f32.mrf.mxu0
      %v1120 = vpop.f32.mrf.mxu0
      %v1121 = vadd.f32 0.0, %v1120
      %v1122 = vpop.f32.mrf.mxu0
      %1123 = vmatprep.mubr.bf16.mxu0 0
      %1124 = vmatmul.mubr.bf16.gmra.mxu0 %v813
      %v1125 = vpop.f32.mrf.mxu0
      %v1126 = vadd.f32 0.0, %v1125
      %v1127 = vpop.f32.mrf.mxu0
      %v1128 = vpop.f32.mrf.mxu0
      %v1129 = vadd.f32 0.0, %v1128
      %v1130 = vpop.f32.mrf.mxu0
      %1131 = vmatprep.mubr.bf16.mxu0 0
      %1132 = vmatmul.mubr.bf16.gmra.mxu0 %v816
      %v1133 = vpop.f32.mrf.mxu0
      %v1134 = vadd.f32 0.0, %v1133
      %v1135 = vpop.f32.mrf.mxu0
      %v1136 = vpop.f32.mrf.mxu0
      %v1137 = vadd.f32 0.0, %v1136
      %v1138 = vpop.f32.mrf.mxu0
      %1139 = vmatprep.mubr.bf16.mxu0 0
      %1140 = vmatmul.mubr.bf16.gmra.mxu0 %v819
      %v1141 = vpop.f32.mrf.mxu0
      %v1142 = vadd.f32 0.0, %v1141
      %v1143 = vpop.f32.mrf.mxu0
      %v1144 = vpop.f32.mrf.mxu0
      %v1145 = vadd.f32 0.0, %v1144
      %v1146 = vpop.f32.mrf.mxu0
      %1147 = vmatprep.mubr.bf16.mxu0 0
      %1148 = vmatmul.mubr.bf16.gmra.mxu0 %v822
      %v1149 = vpop.f32.mrf.mxu0
      %v1150 = vadd.f32 0.0, %v1149
      %v1151 = vpop.f32.mrf.mxu0
      %v1152 = vpop.f32.mrf.mxu0
      %v1153 = vadd.f32 0.0, %v1152
      %v1154 = vpop.f32.mrf.mxu0
      %1155 = vmatprep.mubr.bf16.mxu0 0
      %1156 = vmatmul.mubr.bf16.gmra.mxu0 %v825
      %v1157 = vpop.f32.mrf.mxu0
      %v1158 = vadd.f32 0.0, %v1157
      %v1159 = vpop.f32.mrf.mxu0
      %v1160 = vpop.f32.mrf.mxu0
      %v1161 = vadd.f32 0.0, %v1160
      %v1162 = vpop.f32.mrf.mxu0
      %1163 = vmatprep.mubr.bf16.mxu0 0
      %1164 = vmatmul.mubr.bf16.gmra.mxu0 %v828
      %v1165 = vpop.f32.mrf.mxu0
      %v1166 = vadd.f32 0.0, %v1165
      %v1167 = vpop.f32.mrf.mxu0
      %v1168 = vpop.f32.mrf.mxu0
      %v1169 = vadd.f32 0.0, %v1168
      %v1170 = vpop.f32.mrf.mxu0
      %1171 = vmatprep.mubr.bf16.mxu0 0
      %1172 = vmatmul.mubr.bf16.gmra.mxu0 %v831
      %v1173 = vpop.f32.mrf.mxu0
      %v1174 = vadd.f32 0.0, %v1173
      %v1175 = vpop.f32.mrf.mxu0
      %v1176 = vpop.f32.mrf.mxu0
      %v1177 = vadd.f32 0.0, %v1176
      %v1178 = vpop.f32.mrf.mxu0
      %1179 = vmatprep.mubr.bf16.mxu0 0
      %1180 = vmatmul.mubr.bf16.gmra.mxu0 %v834
      %v1181 = vpop.f32.mrf.mxu0
      %v1182 = vadd.f32 0.0, %v1181
      %v1183 = vpop.f32.mrf.mxu0
      %v1184 = vpop.f32.mrf.mxu0
      %v1185 = vadd.f32 0.0, %v1184
      %v1186 = vpop.f32.mrf.mxu0
      %1187 = vmatprep.mubr.bf16.mxu0 0
      %1188 = vmatmul.mubr.bf16.gmra.mxu0 %v837
      %v1189 = vpop.f32.mrf.mxu0
      %v1190 = vadd.f32 0.0, %v1189
      %v1191 = vpop.f32.mrf.mxu0
      %v1192 = vpop.f32.mrf.mxu0
      %v1193 = vadd.f32 0.0, %v1192
      %v1194 = vpop.f32.mrf.mxu0
      %1195 = vdwg.mxu0
      %v1196 = vld [vmem:[%s2] sm:$0x1]
      %v1198 = vlaneseq
      %v1199 = vshrl.u32 %v1198, 7
      %v1200 = vsub.s32 0, %v1199
      %v1201 = vrot.slane %v1196, %v1200
      %v1203 = vmul.f32 %v878, %v1201
      %v1204 = vmul.f32 %v881, %v1201
      %v1205 = vmul.f32 %v886, %v1201
      %v1206 = vmul.f32 %v889, %v1201
      %v1207 = vmul.f32 %v894, %v1201
      %v1208 = vmul.f32 %v897, %v1201
      %v1209 = vmul.f32 %v902, %v1201
      %v1210 = vmul.f32 %v905, %v1201
      %v1211 = vmul.f32 %v910, %v1201
      %v1212 = vmul.f32 %v913, %v1201
      %v1213 = vmul.f32 %v918, %v1201
      %v1214 = vmul.f32 %v921, %v1201
      %v1215 = vmul.f32 %v926, %v1201
      %v1216 = vmul.f32 %v929, %v1201
      %v1217 = vmul.f32 %v934, %v1201
      %v1218 = vmul.f32 %v937, %v1201
      %v1219 = vmul.f32 %v942, %v1201
      %v1220 = vmul.f32 %v945, %v1201
      %v1221 = vmul.f32 %v950, %v1201
      %v1222 = vmul.f32 %v953, %v1201
      %v1223 = vmul.f32 %v958, %v1201
      %v1224 = vmul.f32 %v961, %v1201
      %v1225 = vmul.f32 %v966, %v1201
      %v1226 = vmul.f32 %v969, %v1201
      %v1227 = vmul.f32 %v974, %v1201
      %v1228 = vmul.f32 %v977, %v1201
      %v1229 = vmul.f32 %v982, %v1201
      %v1230 = vmul.f32 %v985, %v1201
      %v1231 = vmul.f32 %v990, %v1201
      %v1232 = vmul.f32 %v993, %v1201
      %v1233 = vmul.f32 %v998, %v1201
      %v1234 = vmul.f32 %v1001, %v1201
      %v1235 = vmul.f32 %v1006, %v1201
      %v1236 = vmul.f32 %v1009, %v1201
      %v1237 = vmul.f32 %v1014, %v1201
      %v1238 = vmul.f32 %v1017, %v1201
      %v1239 = vmul.f32 %v1022, %v1201
      %v1240 = vmul.f32 %v1025, %v1201
      %v1241 = vmul.f32 %v1030, %v1201
      %v1242 = vmul.f32 %v1033, %v1201
      %v1243 = vmul.f32 %v1038, %v1201
      %v1244 = vmul.f32 %v1041, %v1201
      %v1245 = vmul.f32 %v1046, %v1201
      %v1246 = vmul.f32 %v1049, %v1201
      %v1247 = vmul.f32 %v1054, %v1201
      %v1248 = vmul.f32 %v1057, %v1201
      %v1249 = vmul.f32 %v1062, %v1201
      %v1250 = vmul.f32 %v1065, %v1201
      %v1251 = vmul.f32 %v1070, %v1201
      %v1252 = vmul.f32 %v1073, %v1201
      %v1253 = vmul.f32 %v1078, %v1201
      %v1254 = vmul.f32 %v1081, %v1201
      %v1255 = vmul.f32 %v1086, %v1201
      %v1256 = vmul.f32 %v1089, %v1201
      %v1257 = vmul.f32 %v1094, %v1201
      %v1258 = vmul.f32 %v1097, %v1201
      %v1259 = vmul.f32 %v1102, %v1201
      %v1260 = vmul.f32 %v1105, %v1201
      %v1261 = vmul.f32 %v1110, %v1201
      %v1262 = vmul.f32 %v1113, %v1201
      %v1263 = vmul.f32 %v1118, %v1201
      %v1264 = vmul.f32 %v1121, %v1201
      %v1265 = vmul.f32 %v1126, %v1201
      %v1266 = vmul.f32 %v1129, %v1201
      %v1267 = vmul.f32 %v1134, %v1201
      %v1268 = vmul.f32 %v1137, %v1201
      %v1269 = vmul.f32 %v1142, %v1201
      %v1270 = vmul.f32 %v1145, %v1201
      %v1271 = vmul.f32 %v1150, %v1201
      %v1272 = vmul.f32 %v1153, %v1201
      %v1273 = vmul.f32 %v1158, %v1201
      %v1274 = vmul.f32 %v1161, %v1201
      %v1275 = vmul.f32 %v1166, %v1201
      %v1276 = vmul.f32 %v1169, %v1201
      %v1277 = vmul.f32 %v1174, %v1201
      %v1278 = vmul.f32 %v1177, %v1201
      %v1279 = vmul.f32 %v1182, %v1201
      %v1280 = vmul.f32 %v1185, %v1201
      %v1281 = vmul.f32 %v1190, %v1201
      %v1282 = vmul.f32 %v1193, %v1201
      %v1283 = vld [vmem:[%s3] sm:$0x1]
      %v1285 = vlaneseq
      %v1286 = vshrl.u32 %v1285, 7
      %v1287 = vsub.s32 0, %v1286
      %v1288 = vrot.slane %v1283, %v1287
      %v1290 = vadd.f32 %v1203, %v1288
      %v1291 = vadd.f32 %v1204, %v1288
      %v1292 = vadd.f32 %v1205, %v1288
      %v1293 = vadd.f32 %v1206, %v1288
      %v1294 = vadd.f32 %v1207, %v1288
      %v1295 = vadd.f32 %v1208, %v1288
      %v1296 = vadd.f32 %v1209, %v1288
      %v1297 = vadd.f32 %v1210, %v1288
      %v1298 = vadd.f32 %v1211, %v1288
      %v1299 = vadd.f32 %v1212, %v1288
      %v1300 = vadd.f32 %v1213, %v1288
      %v1301 = vadd.f32 %v1214, %v1288
      %v1302 = vadd.f32 %v1215, %v1288
      %v1303 = vadd.f32 %v1216, %v1288
      %v1304 = vadd.f32 %v1217, %v1288
      %v1305 = vadd.f32 %v1218, %v1288
      %v1306 = vadd.f32 %v1219, %v1288
      %v1307 = vadd.f32 %v1220, %v1288
      %v1308 = vadd.f32 %v1221, %v1288
      %v1309 = vadd.f32 %v1222, %v1288
      %v1310 = vadd.f32 %v1223, %v1288
      %v1311 = vadd.f32 %v1224, %v1288
      %v1312 = vadd.f32 %v1225, %v1288
      %v1313 = vadd.f32 %v1226, %v1288
      %v1314 = vadd.f32 %v1227, %v1288
      %v1315 = vadd.f32 %v1228, %v1288
      %v1316 = vadd.f32 %v1229, %v1288
      %v1317 = vadd.f32 %v1230, %v1288
      %v1318 = vadd.f32 %v1231, %v1288
      %v1319 = vadd.f32 %v1232, %v1288
      %v1320 = vadd.f32 %v1233, %v1288
      %v1321 = vadd.f32 %v1234, %v1288
      %v1322 = vadd.f32 %v1235, %v1288
      %v1323 = vadd.f32 %v1236, %v1288
      %v1324 = vadd.f32 %v1237, %v1288
      %v1325 = vadd.f32 %v1238, %v1288
      %v1326 = vadd.f32 %v1239, %v1288
      %v1327 = vadd.f32 %v1240, %v1288
      %v1328 = vadd.f32 %v1241, %v1288
      %v1329 = vadd.f32 %v1242, %v1288
      %v1330 = vadd.f32 %v1243, %v1288
      %v1331 = vadd.f32 %v1244, %v1288
      %v1332 = vadd.f32 %v1245, %v1288
      %v1333 = vadd.f32 %v1246, %v1288
      %v1334 = vadd.f32 %v1247, %v1288
      %v1335 = vadd.f32 %v1248, %v1288
      %v1336 = vadd.f32 %v1249, %v1288
      %v1337 = vadd.f32 %v1250, %v1288
      %v1338 = vadd.f32 %v1251, %v1288
      %v1339 = vadd.f32 %v1252, %v1288
      %v1340 = vadd.f32 %v1253, %v1288
      %v1341 = vadd.f32 %v1254, %v1288
      %v1342 = vadd.f32 %v1255, %v1288
      %v1343 = vadd.f32 %v1256, %v1288
      %v1344 = vadd.f32 %v1257, %v1288
      %v1345 = vadd.f32 %v1258, %v1288
      %v1346 = vadd.f32 %v1259, %v1288
      %v1347 = vadd.f32 %v1260, %v1288
      %v1348 = vadd.f32 %v1261, %v1288
      %v1349 = vadd.f32 %v1262, %v1288
      %v1350 = vadd.f32 %v1263, %v1288
      %v1351 = vadd.f32 %v1264, %v1288
      %v1352 = vadd.f32 %v1265, %v1288
      %v1353 = vadd.f32 %v1266, %v1288
      %v1354 = vadd.f32 %v1267, %v1288
      %v1355 = vadd.f32 %v1268, %v1288
      %v1356 = vadd.f32 %v1269, %v1288
      %v1357 = vadd.f32 %v1270, %v1288
      %v1358 = vadd.f32 %v1271, %v1288
      %v1359 = vadd.f32 %v1272, %v1288
      %v1360 = vadd.f32 %v1273, %v1288
      %v1361 = vadd.f32 %v1274, %v1288
      %v1362 = vadd.f32 %v1275, %v1288
      %v1363 = vadd.f32 %v1276, %v1288
      %v1364 = vadd.f32 %v1277, %v1288
      %v1365 = vadd.f32 %v1278, %v1288
      %v1366 = vadd.f32 %v1279, %v1288
      %v1367 = vadd.f32 %v1280, %v1288
      %v1368 = vadd.f32 %v1281, %v1288
      %v1369 = vadd.f32 %v1282, %v1288
      %v1370 = vmax.f32 %v1290, 0.0
      %v1371 = vmax.f32 %v1291, 0.0
      %v1372 = vmax.f32 %v1292, 0.0
      %v1373 = vmax.f32 %v1293, 0.0
      %v1374 = vmax.f32 %v1294, 0.0
      %v1375 = vmax.f32 %v1295, 0.0
      %v1376 = vmax.f32 %v1296, 0.0
      %v1377 = vmax.f32 %v1297, 0.0
      %v1378 = vmax.f32 %v1298, 0.0
      %v1379 = vmax.f32 %v1299, 0.0
      %v1380 = vmax.f32 %v1300, 0.0
      %v1381 = vmax.f32 %v1301, 0.0
      %v1382 = vmax.f32 %v1302, 0.0
      %v1383 = vmax.f32 %v1303, 0.0
      %v1384 = vmax.f32 %v1304, 0.0
      %v1385 = vmax.f32 %v1305, 0.0
      %v1386 = vmax.f32 %v1306, 0.0
      %v1387 = vmax.f32 %v1307, 0.0
      %v1388 = vmax.f32 %v1308, 0.0
      %v1389 = vmax.f32 %v1309, 0.0
      %v1390 = vmax.f32 %v1310, 0.0
      %v1391 = vmax.f32 %v1311, 0.0
      %v1392 = vmax.f32 %v1312, 0.0
      %v1393 = vmax.f32 %v1313, 0.0
      %v1394 = vmax.f32 %v1314, 0.0
      %v1395 = vmax.f32 %v1315, 0.0
      %v1396 = vmax.f32 %v1316, 0.0
      %v1397 = vmax.f32 %v1317, 0.0
      %v1398 = vmax.f32 %v1318, 0.0
      %v1399 = vmax.f32 %v1319, 0.0
      %v1400 = vmax.f32 %v1320, 0.0
      %v1401 = vmax.f32 %v1321, 0.0
      %v1402 = vmax.f32 %v1322, 0.0
      %v1403 = vmax.f32 %v1323, 0.0
      %v1404 = vmax.f32 %v1324, 0.0
      %v1405 = vmax.f32 %v1325, 0.0
      %v1406 = vmax.f32 %v1326, 0.0
      %v1407 = vmax.f32 %v1327, 0.0
      %v1408 = vmax.f32 %v1328, 0.0
      %v1409 = vmax.f32 %v1329, 0.0
      %v1410 = vmax.f32 %v1330, 0.0
      %v1411 = vmax.f32 %v1331, 0.0
      %v1412 = vmax.f32 %v1332, 0.0
      %v1413 = vmax.f32 %v1333, 0.0
      %v1414 = vmax.f32 %v1334, 0.0
      %v1415 = vmax.f32 %v1335, 0.0
      %v1416 = vmax.f32 %v1336, 0.0
      %v1417 = vmax.f32 %v1337, 0.0
      %v1418 = vmax.f32 %v1338, 0.0
      %v1419 = vmax.f32 %v1339, 0.0
      %v1420 = vmax.f32 %v1340, 0.0
      %v1421 = vmax.f32 %v1341, 0.0
      %v1422 = vmax.f32 %v1342, 0.0
      %v1423 = vmax.f32 %v1343, 0.0
      %v1424 = vmax.f32 %v1344, 0.0
      %v1425 = vmax.f32 %v1345, 0.0
      %v1426 = vmax.f32 %v1346, 0.0
      %v1427 = vmax.f32 %v1347, 0.0
      %v1428 = vmax.f32 %v1348, 0.0
      %v1429 = vmax.f32 %v1349, 0.0
      %v1430 = vmax.f32 %v1350, 0.0
      %v1431 = vmax.f32 %v1351, 0.0
      %v1432 = vmax.f32 %v1352, 0.0
      %v1433 = vmax.f32 %v1353, 0.0
      %v1434 = vmax.f32 %v1354, 0.0
      %v1435 = vmax.f32 %v1355, 0.0
      %v1436 = vmax.f32 %v1356, 0.0
      %v1437 = vmax.f32 %v1357, 0.0
      %v1438 = vmax.f32 %v1358, 0.0
      %v1439 = vmax.f32 %v1359, 0.0
      %v1440 = vmax.f32 %v1360, 0.0
      %v1441 = vmax.f32 %v1361, 0.0
      %v1442 = vmax.f32 %v1362, 0.0
      %v1443 = vmax.f32 %v1363, 0.0
      %v1444 = vmax.f32 %v1364, 0.0
      %v1445 = vmax.f32 %v1365, 0.0
      %v1446 = vmax.f32 %v1366, 0.0
      %v1447 = vmax.f32 %v1367, 0.0
      %v1448 = vmax.f32 %v1368, 0.0
      %v1449 = vmax.f32 %v1369, 0.0
      %v1450 = vsel %vm410, %v1370, 0.0
      %v1451 = vsel %vm411, %v1371, 0.0
      %v1452 = vsel %vm412, %v1372, 0.0
      %v1453 = vsel %vm413, %v1373, 0.0
      %v1454 = vsel %vm414, %v1374, 0.0
      %v1455 = vsel %vm410, %v1375, 0.0
      %v1456 = vsel %vm411, %v1376, 0.0
      %v1457 = vsel %vm412, %v1377, 0.0
      %v1458 = vsel %vm413, %v1378, 0.0
      %v1459 = vsel %vm414, %v1379, 0.0
      %v1460 = vsel %vm410, %v1380, 0.0
      %v1461 = vsel %vm411, %v1381, 0.0
      %v1462 = vsel %vm412, %v1382, 0.0
      %v1463 = vsel %vm413, %v1383, 0.0
      %v1464 = vsel %vm414, %v1384, 0.0
      %v1465 = vsel %vm410, %v1385, 0.0
      %v1466 = vsel %vm411, %v1386, 0.0
      %v1467 = vsel %vm412, %v1387, 0.0
      %v1468 = vsel %vm413, %v1388, 0.0
      %v1469 = vsel %vm414, %v1389, 0.0
      %v1470 = vsel %vm410, %v1390, 0.0
      %v1471 = vsel %vm411, %v1391, 0.0
      %v1472 = vsel %vm412, %v1392, 0.0
      %v1473 = vsel %vm413, %v1393, 0.0
      %v1474 = vsel %vm414, %v1394, 0.0
      %v1475 = vsel %vm410, %v1395, 0.0
      %v1476 = vsel %vm411, %v1396, 0.0
      %v1477 = vsel %vm412, %v1397, 0.0
      %v1478 = vsel %vm413, %v1398, 0.0
      %v1479 = vsel %vm414, %v1399, 0.0
      %v1480 = vsel %vm410, %v1400, 0.0
      %v1481 = vsel %vm411, %v1401, 0.0
      %v1482 = vsel %vm412, %v1402, 0.0
      %v1483 = vsel %vm413, %v1403, 0.0
      %v1484 = vsel %vm414, %v1404, 0.0
      %v1485 = vsel %vm410, %v1405, 0.0
      %v1486 = vsel %vm411, %v1406, 0.0
      %v1487 = vsel %vm412, %v1407, 0.0
      %v1488 = vsel %vm413, %v1408, 0.0
      %v1489 = vsel %vm414, %v1409, 0.0
      %v1490 = vsel %vm410, %v1410, 0.0
      %v1491 = vsel %vm411, %v1411, 0.0
      %v1492 = vsel %vm412, %v1412, 0.0
      %v1493 = vsel %vm413, %v1413, 0.0
      %v1494 = vsel %vm414, %v1414, 0.0
      %v1495 = vsel %vm410, %v1415, 0.0
      %v1496 = vsel %vm411, %v1416, 0.0
      %v1497 = vsel %vm412, %v1417, 0.0
      %v1498 = vsel %vm413, %v1418, 0.0
      %v1499 = vsel %vm414, %v1419, 0.0
      %v1500 = vsel %vm410, %v1420, 0.0
      %v1501 = vsel %vm411, %v1421, 0.0
      %v1502 = vsel %vm412, %v1422, 0.0
      %v1503 = vsel %vm413, %v1423, 0.0
      %v1504 = vsel %vm414, %v1424, 0.0
      %v1505 = vsel %vm410, %v1425, 0.0
      %v1506 = vsel %vm411, %v1426, 0.0
      %v1507 = vsel %vm412, %v1427, 0.0
      %v1508 = vsel %vm413, %v1428, 0.0
      %v1509 = vsel %vm414, %v1429, 0.0
      %v1510 = vsel %vm410, %v1430, 0.0
      %v1511 = vsel %vm411, %v1431, 0.0
      %v1512 = vsel %vm412, %v1432, 0.0
      %v1513 = vsel %vm413, %v1433, 0.0
      %v1514 = vsel %vm414, %v1434, 0.0
      %v1515 = vsel %vm410, %v1435, 0.0
      %v1516 = vsel %vm411, %v1436, 0.0
      %v1517 = vsel %vm412, %v1437, 0.0
      %v1518 = vsel %vm413, %v1438, 0.0
      %v1519 = vsel %vm414, %v1439, 0.0
      %v1520 = vsel %vm410, %v1440, 0.0
      %v1521 = vsel %vm411, %v1441, 0.0
      %v1522 = vsel %vm412, %v1442, 0.0
      %v1523 = vsel %vm413, %v1443, 0.0
      %v1524 = vsel %vm414, %v1444, 0.0
      %v1525 = vsel %vm410, %v1445, 0.0
      %v1526 = vsel %vm411, %v1446, 0.0
      %v1527 = vsel %vm412, %v1447, 0.0
      %v1528 = vsel %vm413, %v1448, 0.0
      %v1529 = vsel %vm414, %v1449, 0.0
      %v1530 = vrot.slane %v1450, 7
      %v1531 = vrot.slane %v1451, 7
      %v1532 = vrot.slane %v1452, 7
      %v1533 = vrot.slane %v1453, 7
      %v1534 = vrot.slane %v1454, 7
      %v1535 = vrot.slane %v1455, 7
      %v1536 = vrot.slane %v1456, 7
      %v1537 = vrot.slane %v1457, 7
      %v1538 = vrot.slane %v1458, 7
      %v1539 = vrot.slane %v1459, 7
      %v1540 = vrot.slane %v1460, 7
      %v1541 = vrot.slane %v1461, 7
      %v1542 = vrot.slane %v1462, 7
      %v1543 = vrot.slane %v1463, 7
      %v1544 = vrot.slane %v1464, 7
      %v1545 = vrot.slane %v1465, 7
      %v1546 = vrot.slane %v1466, 7
      %v1547 = vrot.slane %v1467, 7
      %v1548 = vrot.slane %v1468, 7
      %v1549 = vrot.slane %v1469, 7
      %v1550 = vrot.slane %v1470, 7
      %v1551 = vrot.slane %v1471, 7
      %v1552 = vrot.slane %v1472, 7
      %v1553 = vrot.slane %v1473, 7
      %v1554 = vrot.slane %v1474, 7
      %v1555 = vrot.slane %v1475, 7
      %v1556 = vrot.slane %v1476, 7
      %v1557 = vrot.slane %v1477, 7
      %v1558 = vrot.slane %v1478, 7
      %v1559 = vrot.slane %v1479, 7
      %v1560 = vrot.slane %v1480, 7
      %v1561 = vrot.slane %v1481, 7
      %v1562 = vrot.slane %v1482, 7
      %v1563 = vrot.slane %v1483, 7
      %v1564 = vrot.slane %v1484, 7
      %v1565 = vrot.slane %v1485, 7
      %v1566 = vrot.slane %v1486, 7
      %v1567 = vrot.slane %v1487, 7
      %v1568 = vrot.slane %v1488, 7
      %v1569 = vrot.slane %v1489, 7
      %v1570 = vrot.slane %v1490, 7
      %v1571 = vrot.slane %v1491, 7
      %v1572 = vrot.slane %v1492, 7
      %v1573 = vrot.slane %v1493, 7
      %v1574 = vrot.slane %v1494, 7
      %v1575 = vrot.slane %v1495, 7
      %v1576 = vrot.slane %v1496, 7
      %v1577 = vrot.slane %v1497, 7
      %v1578 = vrot.slane %v1498, 7
      %v1579 = vrot.slane %v1499, 7
      %v1580 = vrot.slane %v1500, 7
      %v1581 = vrot.slane %v1501, 7
      %v1582 = vrot.slane %v1502, 7
      %v1583 = vrot.slane %v1503, 7
      %v1584 = vrot.slane %v1504, 7
      %v1585 = vrot.slane %v1505, 7
      %v1586 = vrot.slane %v1506, 7
      %v1587 = vrot.slane %v1507, 7
      %v1588 = vrot.slane %v1508, 7
      %v1589 = vrot.slane %v1509, 7
      %v1590 = vrot.slane %v1510, 7
      %v1591 = vrot.slane %v1511, 7
      %v1592 = vrot.slane %v1512, 7
      %v1593 = vrot.slane %v1513, 7
      %v1594 = vrot.slane %v1514, 7
      %v1595 = vrot.slane %v1515, 7
      %v1596 = vrot.slane %v1516, 7
      %v1597 = vrot.slane %v1517, 7
      %v1598 = vrot.slane %v1518, 7
      %v1599 = vrot.slane %v1519, 7
      %v1600 = vrot.slane %v1520, 7
      %v1601 = vrot.slane %v1521, 7
      %v1602 = vrot.slane %v1522, 7
      %v1603 = vrot.slane %v1523, 7
      %v1604 = vrot.slane %v1524, 7
      %v1605 = vrot.slane %v1525, 7
      %v1606 = vrot.slane %v1526, 7
      %v1607 = vrot.slane %v1527, 7
      %v1608 = vrot.slane %v1528, 7
      %v1609 = vrot.slane %v1529, 7
      %vm1610 = vcmp.lt.s32.totalorder %v395, 1
      %v1611 = vsel %vm1610, %v1608, %v1609
      %v1612 = vsel %vm1610, %v1607, %v1608
      %v1613 = vsel %vm1610, %v1606, %v1607
      %v1614 = vsel %vm1610, %v1605, %v1606
      %v1615 = vsel %vm1610, %v1604, %v1605
      %v1616 = vsel %vm1610, %v1603, %v1604
      %v1617 = vsel %vm1610, %v1602, %v1603
      %v1618 = vsel %vm1610, %v1601, %v1602
      %v1619 = vsel %vm1610, %v1600, %v1601
      %v1620 = vsel %vm1610, %v1599, %v1600
      %v1621 = vsel %vm1610, %v1598, %v1599
      %v1622 = vsel %vm1610, %v1597, %v1598
      %v1623 = vsel %vm1610, %v1596, %v1597
      %v1624 = vsel %vm1610, %v1595, %v1596
      %v1625 = vsel %vm1610, %v1594, %v1595
      %v1626 = vsel %vm1610, %v1593, %v1594
      %v1627 = vsel %vm1610, %v1592, %v1593
      %v1628 = vsel %vm1610, %v1591, %v1592
      %v1629 = vsel %vm1610, %v1590, %v1591
      %v1630 = vsel %vm1610, %v1589, %v1590
      %v1631 = vsel %vm1610, %v1588, %v1589
      %v1632 = vsel %vm1610, %v1587, %v1588
      %v1633 = vsel %vm1610, %v1586, %v1587
      %v1634 = vsel %vm1610, %v1585, %v1586
      %v1635 = vsel %vm1610, %v1584, %v1585
      %v1636 = vsel %vm1610, %v1583, %v1584
      %v1637 = vsel %vm1610, %v1582, %v1583
      %v1638 = vsel %vm1610, %v1581, %v1582
      %v1639 = vsel %vm1610, %v1580, %v1581
      %v1640 = vsel %vm1610, %v1579, %v1580
      %v1641 = vsel %vm1610, %v1578, %v1579
      %v1642 = vsel %vm1610, %v1577, %v1578
      %v1643 = vsel %vm1610, %v1576, %v1577
      %v1644 = vsel %vm1610, %v1575, %v1576
      %v1645 = vsel %vm1610, %v1574, %v1575
      %v1646 = vsel %vm1610, %v1573, %v1574
      %v1647 = vsel %vm1610, %v1572, %v1573
      %v1648 = vsel %vm1610, %v1571, %v1572
      %v1649 = vsel %vm1610, %v1570, %v1571
      %v1650 = vsel %vm1610, %v1569, %v1570
      %v1651 = vsel %vm1610, %v1568, %v1569
      %v1652 = vsel %vm1610, %v1567, %v1568
      %v1653 = vsel %vm1610, %v1566, %v1567
      %v1654 = vsel %vm1610, %v1565, %v1566
      %v1655 = vsel %vm1610, %v1564, %v1565
      %v1656 = vsel %vm1610, %v1563, %v1564
      %v1657 = vsel %vm1610, %v1562, %v1563
      %v1658 = vsel %vm1610, %v1561, %v1562
      %v1659 = vsel %vm1610, %v1560, %v1561
      %v1660 = vsel %vm1610, %v1559, %v1560
      %v1661 = vsel %vm1610, %v1558, %v1559
      %v1662 = vsel %vm1610, %v1557, %v1558
      %v1663 = vsel %vm1610, %v1556, %v1557
      %v1664 = vsel %vm1610, %v1555, %v1556
      %v1665 = vsel %vm1610, %v1554, %v1555
      %v1666 = vsel %vm1610, %v1553, %v1554
      %v1667 = vsel %vm1610, %v1552, %v1553
      %v1668 = vsel %vm1610, %v1551, %v1552
      %v1669 = vsel %vm1610, %v1550, %v1551
      %v1670 = vsel %vm1610, %v1549, %v1550
      %v1671 = vsel %vm1610, %v1548, %v1549
      %v1672 = vsel %vm1610, %v1547, %v1548
      %v1673 = vsel %vm1610, %v1546, %v1547
      %v1674 = vsel %vm1610, %v1545, %v1546
      %v1675 = vsel %vm1610, %v1544, %v1545
      %v1676 = vsel %vm1610, %v1543, %v1544
      %v1677 = vsel %vm1610, %v1542, %v1543
      %v1678 = vsel %vm1610, %v1541, %v1542
      %v1679 = vsel %vm1610, %v1540, %v1541
      %v1680 = vsel %vm1610, %v1539, %v1540
      %v1681 = vsel %vm1610, %v1538, %v1539
      %v1682 = vsel %vm1610, %v1537, %v1538
      %v1683 = vsel %vm1610, %v1536, %v1537
      %v1684 = vsel %vm1610, %v1535, %v1536
      %v1685 = vsel %vm1610, %v1534, %v1535
      %v1686 = vsel %vm1610, %v1533, %v1534
      %v1687 = vsel %vm1610, %v1532, %v1533
      %v1688 = vsel %vm1610, %v1531, %v1532
      %v1689 = vsel %vm1610, %v1530, %v1531
      %v1690 = vsel %vm1610, %v1609, %v1530
      %v1691 = vpack.c.bf16 %v1689, %v1690
      %v1692 = vpack.c.bf16 %v1687, %v1688
      %v1693 = vpack.c.bf16 %v1685, %v1686
      %v1694 = vpack.c.bf16 %v1683, %v1684
      %v1695 = vpack.c.bf16 %v1681, %v1682
      %v1696 = vpack.c.bf16 %v1679, %v1680
      %v1697 = vpack.c.bf16 %v1677, %v1678
      %v1698 = vpack.c.bf16 %v1675, %v1676
      %v1699 = vpack.c.bf16 %v1673, %v1674
      %v1700 = vpack.c.bf16 %v1671, %v1672
      %v1701 = vpack.c.bf16 %v1669, %v1670
      %v1702 = vpack.c.bf16 %v1667, %v1668
      %v1703 = vpack.c.bf16 %v1665, %v1666
      %v1704 = vpack.c.bf16 %v1663, %v1664
      %v1705 = vpack.c.bf16 %v1661, %v1662
      %v1706 = vpack.c.bf16 %v1659, %v1660
      %v1707 = vpack.c.bf16 %v1657, %v1658
      %v1708 = vpack.c.bf16 %v1655, %v1656
      %v1709 = vpack.c.bf16 %v1653, %v1654
      %v1710 = vpack.c.bf16 %v1651, %v1652
      %v1711 = vpack.c.bf16 %v1649, %v1650
      %v1712 = vpack.c.bf16 %v1647, %v1648
      %v1713 = vpack.c.bf16 %v1645, %v1646
      %v1714 = vpack.c.bf16 %v1643, %v1644
      %v1715 = vpack.c.bf16 %v1641, %v1642
      %v1716 = vpack.c.bf16 %v1639, %v1640
      %v1717 = vpack.c.bf16 %v1637, %v1638
      %v1718 = vpack.c.bf16 %v1635, %v1636
      %v1719 = vpack.c.bf16 %v1633, %v1634
      %v1720 = vpack.c.bf16 %v1631, %v1632
      %v1721 = vpack.c.bf16 %v1629, %v1630
      %v1722 = vpack.c.bf16 %v1627, %v1628
      %v1723 = vpack.c.bf16 %v1625, %v1626
      %v1724 = vpack.c.bf16 %v1623, %v1624
      %v1725 = vpack.c.bf16 %v1621, %v1622
      %v1726 = vpack.c.bf16 %v1619, %v1620
      %v1727 = vpack.c.bf16 %v1617, %v1618
      %v1728 = vpack.c.bf16 %v1615, %v1616
      %v1729 = vpack.c.bf16 %v1613, %v1614
      %v1730 = vpack.c.bf16 %v1611, %v1612
      %v1731 = vpack.c.bf16 %v1451, %v1450
      %v1732 = vpack.c.bf16 %v1453, %v1452
      %v1733 = vpack.c.bf16 %v1455, %v1454
      %v1734 = vpack.c.bf16 %v1457, %v1456
      %v1735 = vpack.c.bf16 %v1459, %v1458
      %v1736 = vpack.c.bf16 %v1461, %v1460
      %v1737 = vpack.c.bf16 %v1463, %v1462
      %v1738 = vpack.c.bf16 %v1465, %v1464
      %v1739 = vpack.c.bf16 %v1467, %v1466
      %v1740 = vpack.c.bf16 %v1469, %v1468
      %v1741 = vpack.c.bf16 %v1471, %v1470
      %v1742 = vpack.c.bf16 %v1473, %v1472
      %v1743 = vpack.c.bf16 %v1475, %v1474
      %v1744 = vpack.c.bf16 %v1477, %v1476
      %v1745 = vpack.c.bf16 %v1479, %v1478
      %v1746 = vpack.c.bf16 %v1481, %v1480
      %v1747 = vpack.c.bf16 %v1483, %v1482
      %v1748 = vpack.c.bf16 %v1485, %v1484
      %v1749 = vpack.c.bf16 %v1487, %v1486
      %v1750 = vpack.c.bf16 %v1489, %v1488
      %v1751 = vpack.c.bf16 %v1491, %v1490
      %v1752 = vpack.c.bf16 %v1493, %v1492
      %v1753 = vpack.c.bf16 %v1495, %v1494
      %v1754 = vpack.c.bf16 %v1497, %v1496
      %v1755 = vpack.c.bf16 %v1499, %v1498
      %v1756 = vpack.c.bf16 %v1501, %v1500
      %v1757 = vpack.c.bf16 %v1503, %v1502
      %v1758 = vpack.c.bf16 %v1505, %v1504
      %v1759 = vpack.c.bf16 %v1507, %v1506
      %v1760 = vpack.c.bf16 %v1509, %v1508
      %v1761 = vpack.c.bf16 %v1511, %v1510
      %v1762 = vpack.c.bf16 %v1513, %v1512
      %v1763 = vpack.c.bf16 %v1515, %v1514
      %v1764 = vpack.c.bf16 %v1517, %v1516
      %v1765 = vpack.c.bf16 %v1519, %v1518
      %v1766 = vpack.c.bf16 %v1521, %v1520
      %v1767 = vpack.c.bf16 %v1523, %v1522
      %v1768 = vpack.c.bf16 %v1525, %v1524
      %v1769 = vpack.c.bf16 %v1527, %v1526
      %v1770 = vpack.c.bf16 %v1529, %v1528
      %v1771 = vrot.slane %v1450, 1
      %v1772 = vrot.slane %v1451, 1
      %v1773 = vrot.slane %v1452, 1
      %v1774 = vrot.slane %v1453, 1
      %v1775 = vrot.slane %v1454, 1
      %v1776 = vrot.slane %v1455, 1
      %v1777 = vrot.slane %v1456, 1
      %v1778 = vrot.slane %v1457, 1
      %v1779 = vrot.slane %v1458, 1
      %v1780 = vrot.slane %v1459, 1
      %v1781 = vrot.slane %v1460, 1
      %v1782 = vrot.slane %v1461, 1
      %v1783 = vrot.slane %v1462, 1
      %v1784 = vrot.slane %v1463, 1
      %v1785 = vrot.slane %v1464, 1
      %v1786 = vrot.slane %v1465, 1
      %v1787 = vrot.slane %v1466, 1
      %v1788 = vrot.slane %v1467, 1
      %v1789 = vrot.slane %v1468, 1
      %v1790 = vrot.slane %v1469, 1
      %v1791 = vrot.slane %v1470, 1
      %v1792 = vrot.slane %v1471, 1
      %v1793 = vrot.slane %v1472, 1
      %v1794 = vrot.slane %v1473, 1
      %v1795 = vrot.slane %v1474, 1
      %v1796 = vrot.slane %v1475, 1
      %v1797 = vrot.slane %v1476, 1
      %v1798 = vrot.slane %v1477, 1
      %v1799 = vrot.slane %v1478, 1
      %v1800 = vrot.slane %v1479, 1
      %v1801 = vrot.slane %v1480, 1
      %v1802 = vrot.slane %v1481, 1
      %v1803 = vrot.slane %v1482, 1
      %v1804 = vrot.slane %v1483, 1
      %v1805 = vrot.slane %v1484, 1
      %v1806 = vrot.slane %v1485, 1
      %v1807 = vrot.slane %v1486, 1
      %v1808 = vrot.slane %v1487, 1
      %v1809 = vrot.slane %v1488, 1
      %v1810 = vrot.slane %v1489, 1
      %v1811 = vrot.slane %v1490, 1
      %v1812 = vrot.slane %v1491, 1
      %v1813 = vrot.slane %v1492, 1
      %v1814 = vrot.slane %v1493, 1
      %v1815 = vrot.slane %v1494, 1
      %v1816 = vrot.slane %v1495, 1
      %v1817 = vrot.slane %v1496, 1
      %v1818 = vrot.slane %v1497, 1
      %v1819 = vrot.slane %v1498, 1
      %v1820 = vrot.slane %v1499, 1
      %v1821 = vrot.slane %v1500, 1
      %v1822 = vrot.slane %v1501, 1
      %v1823 = vrot.slane %v1502, 1
      %v1824 = vrot.slane %v1503, 1
      %v1825 = vrot.slane %v1504, 1
      %v1826 = vrot.slane %v1505, 1
      %v1827 = vrot.slane %v1506, 1
      %v1828 = vrot.slane %v1507, 1
      %v1829 = vrot.slane %v1508, 1
      %v1830 = vrot.slane %v1509, 1
      %v1831 = vrot.slane %v1510, 1
      %v1832 = vrot.slane %v1511, 1
      %v1833 = vrot.slane %v1512, 1
      %v1834 = vrot.slane %v1513, 1
      %v1835 = vrot.slane %v1514, 1
      %v1836 = vrot.slane %v1515, 1
      %v1837 = vrot.slane %v1516, 1
      %v1838 = vrot.slane %v1517, 1
      %v1839 = vrot.slane %v1518, 1
      %v1840 = vrot.slane %v1519, 1
      %v1841 = vrot.slane %v1520, 1
      %v1842 = vrot.slane %v1521, 1
      %v1843 = vrot.slane %v1522, 1
      %v1844 = vrot.slane %v1523, 1
      %v1845 = vrot.slane %v1524, 1
      %v1846 = vrot.slane %v1525, 1
      %v1847 = vrot.slane %v1526, 1
      %v1848 = vrot.slane %v1527, 1
      %v1849 = vrot.slane %v1528, 1
      %v1850 = vrot.slane %v1529, 1
      %vm1851 = vcmp.lt.s32.totalorder %v395, 7
      %v1852 = vsel %vm1851, %v1849, %v1850
      %v1853 = vsel %vm1851, %v1848, %v1849
      %v1854 = vsel %vm1851, %v1847, %v1848
      %v1855 = vsel %vm1851, %v1846, %v1847
      %v1856 = vsel %vm1851, %v1845, %v1846
      %v1857 = vsel %vm1851, %v1844, %v1845
      %v1858 = vsel %vm1851, %v1843, %v1844
      %v1859 = vsel %vm1851, %v1842, %v1843
      %v1860 = vsel %vm1851, %v1841, %v1842
      %v1861 = vsel %vm1851, %v1840, %v1841
      %v1862 = vsel %vm1851, %v1839, %v1840
      %v1863 = vsel %vm1851, %v1838, %v1839
      %v1864 = vsel %vm1851, %v1837, %v1838
      %v1865 = vsel %vm1851, %v1836, %v1837
      %v1866 = vsel %vm1851, %v1835, %v1836
      %v1867 = vsel %vm1851, %v1834, %v1835
      %v1868 = vsel %vm1851, %v1833, %v1834
      %v1869 = vsel %vm1851, %v1832, %v1833
      %v1870 = vsel %vm1851, %v1831, %v1832
      %v1871 = vsel %vm1851, %v1830, %v1831
      %v1872 = vsel %vm1851, %v1829, %v1830
      %v1873 = vsel %vm1851, %v1828, %v1829
      %v1874 = vsel %vm1851, %v1827, %v1828
      %v1875 = vsel %vm1851, %v1826, %v1827
      %v1876 = vsel %vm1851, %v1825, %v1826
      %v1877 = vsel %vm1851, %v1824, %v1825
      %v1878 = vsel %vm1851, %v1823, %v1824
      %v1879 = vsel %vm1851, %v1822, %v1823
      %v1880 = vsel %vm1851, %v1821, %v1822
      %v1881 = vsel %vm1851, %v1820, %v1821
      %v1882 = vsel %vm1851, %v1819, %v1820
      %v1883 = vsel %vm1851, %v1818, %v1819
      %v1884 = vsel %vm1851, %v1817, %v1818
      %v1885 = vsel %vm1851, %v1816, %v1817
      %v1886 = vsel %vm1851, %v1815, %v1816
      %v1887 = vsel %vm1851, %v1814, %v1815
      %v1888 = vsel %vm1851, %v1813, %v1814
      %v1889 = vsel %vm1851, %v1812, %v1813
      %v1890 = vsel %vm1851, %v1811, %v1812
      %v1891 = vsel %vm1851, %v1810, %v1811
      %v1892 = vsel %vm1851, %v1809, %v1810
      %v1893 = vsel %vm1851, %v1808, %v1809
      %v1894 = vsel %vm1851, %v1807, %v1808
      %v1895 = vsel %vm1851, %v1806, %v1807
      %v1896 = vsel %vm1851, %v1805, %v1806
      %v1897 = vsel %vm1851, %v1804, %v1805
      %v1898 = vsel %vm1851, %v1803, %v1804
      %v1899 = vsel %vm1851, %v1802, %v1803
      %v1900 = vsel %vm1851, %v1801, %v1802
      %v1901 = vsel %vm1851, %v1800, %v1801
      %v1902 = vsel %vm1851, %v1799, %v1800
      %v1903 = vsel %vm1851, %v1798, %v1799
      %v1904 = vsel %vm1851, %v1797, %v1798
      %v1905 = vsel %vm1851, %v1796, %v1797
      %v1906 = vsel %vm1851, %v1795, %v1796
      %v1907 = vsel %vm1851, %v1794, %v1795
      %v1908 = vsel %vm1851, %v1793, %v1794
      %v1909 = vsel %vm1851, %v1792, %v1793
      %v1910 = vsel %vm1851, %v1791, %v1792
      %v1911 = vsel %vm1851, %v1790, %v1791
      %v1912 = vsel %vm1851, %v1789, %v1790
      %v1913 = vsel %vm1851, %v1788, %v1789
      %v1914 = vsel %vm1851, %v1787, %v1788
      %v1915 = vsel %vm1851, %v1786, %v1787
      %v1916 = vsel %vm1851, %v1785, %v1786
      %v1917 = vsel %vm1851, %v1784, %v1785
      %v1918 = vsel %vm1851, %v1783, %v1784
      %v1919 = vsel %vm1851, %v1782, %v1783
      %v1920 = vsel %vm1851, %v1781, %v1782
      %v1921 = vsel %vm1851, %v1780, %v1781
      %v1922 = vsel %vm1851, %v1779, %v1780
      %v1923 = vsel %vm1851, %v1778, %v1779
      %v1924 = vsel %vm1851, %v1777, %v1778
      %v1925 = vsel %vm1851, %v1776, %v1777
      %v1926 = vsel %vm1851, %v1775, %v1776
      %v1927 = vsel %vm1851, %v1774, %v1775
      %v1928 = vsel %vm1851, %v1773, %v1774
      %v1929 = vsel %vm1851, %v1772, %v1773
      %v1930 = vsel %vm1851, %v1771, %v1772
      %v1931 = vsel %vm1851, %v1850, %v1771
      %v1932 = vpack.c.bf16 %v1929, %v1930
      %v1933 = vpack.c.bf16 %v1927, %v1928
      %v1934 = vpack.c.bf16 %v1925, %v1926
      %v1935 = vpack.c.bf16 %v1923, %v1924
      %v1936 = vpack.c.bf16 %v1921, %v1922
      %v1937 = vpack.c.bf16 %v1919, %v1920
      %v1938 = vpack.c.bf16 %v1917, %v1918
      %v1939 = vpack.c.bf16 %v1915, %v1916
      %v1940 = vpack.c.bf16 %v1913, %v1914
      %v1941 = vpack.c.bf16 %v1911, %v1912
      %v1942 = vpack.c.bf16 %v1909, %v1910
      %v1943 = vpack.c.bf16 %v1907, %v1908
      %v1944 = vpack.c.bf16 %v1905, %v1906
      %v1945 = vpack.c.bf16 %v1903, %v1904
      %v1946 = vpack.c.bf16 %v1901, %v1902
      %v1947 = vpack.c.bf16 %v1899, %v1900
      %v1948 = vpack.c.bf16 %v1897, %v1898
      %v1949 = vpack.c.bf16 %v1895, %v1896
      %v1950 = vpack.c.bf16 %v1893, %v1894
      %v1951 = vpack.c.bf16 %v1891, %v1892
      %v1952 = vpack.c.bf16 %v1889, %v1890
      %v1953 = vpack.c.bf16 %v1887, %v1888
      %v1954 = vpack.c.bf16 %v1885, %v1886
      %v1955 = vpack.c.bf16 %v1883, %v1884
      %v1956 = vpack.c.bf16 %v1881, %v1882
      %v1957 = vpack.c.bf16 %v1879, %v1880
      %v1958 = vpack.c.bf16 %v1877, %v1878
      %v1959 = vpack.c.bf16 %v1875, %v1876
      %v1960 = vpack.c.bf16 %v1873, %v1874
      %v1961 = vpack.c.bf16 %v1871, %v1872
      %v1962 = vpack.c.bf16 %v1869, %v1870
      %v1963 = vpack.c.bf16 %v1867, %v1868
      %v1964 = vpack.c.bf16 %v1865, %v1866
      %v1965 = vpack.c.bf16 %v1863, %v1864
      %v1966 = vpack.c.bf16 %v1861, %v1862
      %v1967 = vpack.c.bf16 %v1859, %v1860
      %v1968 = vpack.c.bf16 %v1857, %v1858
      %v1969 = vpack.c.bf16 %v1855, %v1856
      %v1970 = vpack.c.bf16 %v1853, %v1854
      %v1971 = vpack.c.bf16 %v1931, %v1852
      %v1972 = vld [vmem:[%s4] sm:$0xf]
      %v1973 = vld [vmem:[%s4 + $0x4] sm:$0xf]
      %v1974 = vld [vmem:[%s4 + $0x8] sm:$0xf]
      %v1975 = vld [vmem:[%s4 + $0xc] sm:$0xf]
      %v1976 = vld [vmem:[%s4 + $0x10] sm:$0xf]
      %v1977 = vld [vmem:[%s4 + $0x14] sm:$0xf]
      %v1978 = vld [vmem:[%s4 + $0x18] sm:$0xf]
      %v1979 = vld [vmem:[%s4 + $0x1c] sm:$0xf]
      %v1980 = vld [vmem:[%s4 + $0x20] sm:$0xf]
      %v1981 = vld [vmem:[%s4 + $0x24] sm:$0xf]
      %v1982 = vld [vmem:[%s4 + $0x28] sm:$0xf]
      %v1983 = vld [vmem:[%s4 + $0x2c] sm:$0xf]
      %v1984 = vld [vmem:[%s4 + $0x30] sm:$0xf]
      %v1985 = vld [vmem:[%s4 + $0x34] sm:$0xf]
      %v1986 = vld [vmem:[%s4 + $0x38] sm:$0xf]
      %v1987 = vld [vmem:[%s4 + $0x3c] sm:$0xf]
      %v1988 = vld [vmem:[%s4 + $0x40] sm:$0xf]
      %v1989 = vld [vmem:[%s4 + $0x44] sm:$0xf]
      %v1990 = vld [vmem:[%s4 + $0x48] sm:$0xf]
      %v1991 = vld [vmem:[%s4 + $0x4c] sm:$0xf]
      %v1992 = vld [vmem:[%s4 + $0x50] sm:$0xf]
      %v1993 = vld [vmem:[%s4 + $0x54] sm:$0xf]
      %v1994 = vld [vmem:[%s4 + $0x58] sm:$0xf]
      %v1995 = vld [vmem:[%s4 + $0x5c] sm:$0xf]
      %v1996 = vld [vmem:[%s4 + $0x60] sm:$0xf]
      %v1997 = vld [vmem:[%s4 + $0x64] sm:$0xf]
      %v1998 = vld [vmem:[%s4 + $0x68] sm:$0xf]
      %v1999 = vld [vmem:[%s4 + $0x6c] sm:$0xf]
      %v2000 = vld [vmem:[%s4 + $0x70] sm:$0xf]
      %v2001 = vld [vmem:[%s4 + $0x74] sm:$0xf]
      %v2002 = vld [vmem:[%s4 + $0x78] sm:$0xf]
      %v2003 = vld [vmem:[%s4 + $0x7c] sm:$0xf]
      %v2004 = vld [vmem:[%s4 + $0x80] sm:$0xf]
      %v2005 = vld [vmem:[%s4 + $0x84] sm:$0xf]
      %v2006 = vld [vmem:[%s4 + $0x88] sm:$0xf]
      %v2007 = vld [vmem:[%s4 + $0x8c] sm:$0xf]
      %v2008 = vld [vmem:[%s4 + $0x90] sm:$0xf]
      %v2009 = vld [vmem:[%s4 + $0x94] sm:$0xf]
      %v2010 = vld [vmem:[%s4 + $0x98] sm:$0xf]
      %v2011 = vld [vmem:[%s4 + $0x9c] sm:$0xf]
      %v2012 = vld [vmem:[%s4 + $0xa0] sm:$0xf]
      %v2013 = vld [vmem:[%s4 + $0xa4] sm:$0xf]
      %v2014 = vld [vmem:[%s4 + $0xa8] sm:$0xf]
      %v2015 = vld [vmem:[%s4 + $0xac] sm:$0xf]
      %v2016 = vld [vmem:[%s4 + $0xb0] sm:$0xf]
      %v2017 = vld [vmem:[%s4 + $0xb4] sm:$0xf]
      %v2018 = vld [vmem:[%s4 + $0xb8] sm:$0xf]
      %v2019 = vld [vmem:[%s4 + $0xbc] sm:$0xf]
      %v2068 = vunpack.c.l.b16 %v1972
      %v2069 = vunpack.c.l.b16 %v1973
      %v2070 = vunpack.c.l.b16 %v1974
      %v2071 = vunpack.c.l.b16 %v1975
      %v2072 = vunpack.c.l.b16 %v1976
      %v2073 = vunpack.c.l.b16 %v1977
      %v2074 = vunpack.c.l.b16 %v1978
      %v2075 = vunpack.c.l.b16 %v1979
      %v2076 = vunpack.c.l.b16 %v1980
      %v2077 = vunpack.c.l.b16 %v1981
      %v2078 = vunpack.c.l.b16 %v1982
      %v2079 = vunpack.c.l.b16 %v1983
      %v2080 = vunpack.c.l.b16 %v1984
      %v2081 = vunpack.c.l.b16 %v1985
      %v2082 = vunpack.c.l.b16 %v1986
      %v2083 = vunpack.c.l.b16 %v1987
      %v2084 = vunpack.c.l.b16 %v1988
      %v2085 = vunpack.c.l.b16 %v1989
      %v2086 = vunpack.c.l.b16 %v1990
      %v2087 = vunpack.c.l.b16 %v1991
      %v2088 = vunpack.c.l.b16 %v1992
      %v2089 = vunpack.c.l.b16 %v1993
      %v2090 = vunpack.c.l.b16 %v1994
      %v2091 = vunpack.c.l.b16 %v1995
      %v2092 = vunpack.c.l.b16 %v1996
      %v2093 = vunpack.c.l.b16 %v1997
      %v2094 = vunpack.c.l.b16 %v1998
      %v2095 = vunpack.c.l.b16 %v1999
      %v2096 = vunpack.c.l.b16 %v2000
      %v2097 = vunpack.c.l.b16 %v2001
      %v2098 = vunpack.c.l.b16 %v2002
      %v2099 = vunpack.c.l.b16 %v2003
      %v2100 = vunpack.c.l.b16 %v2004
      %v2101 = vunpack.c.l.b16 %v2005
      %v2102 = vunpack.c.l.b16 %v2006
      %v2103 = vunpack.c.l.b16 %v2007
      %v2104 = vunpack.c.l.b16 %v2008
      %v2105 = vunpack.c.l.b16 %v2009
      %v2106 = vunpack.c.l.b16 %v2010
      %v2107 = vunpack.c.l.b16 %v2011
      %v2108 = vunpack.c.l.b16 %v2012
      %v2109 = vunpack.c.l.b16 %v2013
      %v2110 = vunpack.c.l.b16 %v2014
      %v2111 = vunpack.c.l.b16 %v2015
      %v2112 = vunpack.c.l.b16 %v2016
      %v2113 = vunpack.c.l.b16 %v2017
      %v2114 = vunpack.c.l.b16 %v2018
      %v2115 = vunpack.c.l.b16 %v2019
      %v2116 = vpack.c.b16 %v2069, %v2068
      %v2117 = vpack.c.b16 %v2071, %v2070
      %v2118 = vpack.c.b16 %v2073, %v2072
      %v2119 = vpack.c.b16 %v2075, %v2074
      %v2120 = vpack.c.b16 %v2077, %v2076
      %v2121 = vpack.c.b16 %v2079, %v2078
      %v2122 = vpack.c.b16 %v2081, %v2080
      %v2123 = vpack.c.b16 %v2083, %v2082
      %v2124 = vpack.c.b16 %v2085, %v2084
      %v2125 = vpack.c.b16 %v2087, %v2086
      %v2126 = vpack.c.b16 %v2089, %v2088
      %v2127 = vpack.c.b16 %v2091, %v2090
      %v2128 = vpack.c.b16 %v2093, %v2092
      %v2129 = vpack.c.b16 %v2095, %v2094
      %v2130 = vpack.c.b16 %v2097, %v2096
      %v2131 = vpack.c.b16 %v2099, %v2098
      %v2132 = vpack.c.b16 %v2101, %v2100
      %v2133 = vpack.c.b16 %v2103, %v2102
      %v2134 = vpack.c.b16 %v2105, %v2104
      %v2135 = vpack.c.b16 %v2107, %v2106
      %v2136 = vpack.c.b16 %v2109, %v2108
      %v2137 = vpack.c.b16 %v2111, %v2110
      %v2138 = vpack.c.b16 %v2113, %v2112
      %v2139 = vpack.c.b16 %v2115, %v2114
      %2164 = vmatprep.subr.bf16.mxu0 0
      %2165 = vmatpush1.bf16.msra.mxu0 %v2123
      %2166 = vmatprep.subr.bf16.mxu0 0
      %2167 = vmatpush1.bf16.msra.mxu0 %v2122
      %2168 = vmatprep.subr.bf16.mxu0 0
      %2169 = vmatpush1.bf16.msra.mxu0 %v2121
      %2170 = vmatprep.subr.bf16.mxu0 0
      %2171 = vmatpush1.bf16.msra.mxu0 %v2120
      %2172 = vmatprep.subr.bf16.mxu0 0
      %2173 = vmatpush1.bf16.msra.mxu0 %v2119
      %2174 = vmatprep.subr.bf16.mxu0 0
      %2175 = vmatpush1.bf16.msra.mxu0 %v2118
      %2176 = vmatprep.subr.bf16.mxu0 0
      %2177 = vmatpush1.bf16.msra.mxu0 %v2117
      %2178 = vmatprep.subr.bf16.mxu0 0
      %2179 = vmatpush1.bf16.msra.mxu0 %v2116
      %2180 = vmatprep.subr.bf16.mxu0 0
      %2181 = vmatpush2.bf16.msra.mxu0 %v2131
      %2182 = vmatprep.subr.bf16.mxu0 0
      %2183 = vmatpush2.bf16.msra.mxu0 %v2130
      %2184 = vmatprep.subr.bf16.mxu0 0
      %2185 = vmatpush2.bf16.msra.mxu0 %v2129
      %2186 = vmatprep.subr.bf16.mxu0 0
      %2187 = vmatpush2.bf16.msra.mxu0 %v2128
      %2188 = vmatprep.subr.bf16.mxu0 0
      %2189 = vmatpush2.bf16.msra.mxu0 %v2127
      %2190 = vmatprep.subr.bf16.mxu0 0
      %2191 = vmatpush2.bf16.msra.mxu0 %v2126
      %2192 = vmatprep.subr.bf16.mxu0 0
      %2193 = vmatpush2.bf16.msra.mxu0 %v2125
      %2194 = vmatprep.subr.bf16.mxu0 0
      %2195 = vmatpush2.bf16.msra.mxu0 %v2124
      %2196 = vmatprep.mubr.bf16.mxu0 %v1731
      %2197 = vmatmul.mubr.bf16.gmra.mxu0 %v1691
      %v2198 = vpop.f32.mrf.mxu0
      %v2199 = vadd.f32 0.0, %v2198
      %v2200 = vpop.f32.mrf.mxu0
      %v2201 = vpop.f32.mrf.mxu0
      %v2202 = vadd.f32 0.0, %v2201
      %v2203 = vpop.f32.mrf.mxu0
      %2204 = vmatprep.mubr.bf16.mxu0 %v1732
      %2205 = vmatmul.mubr.bf16.gmra.mxu0 %v1692
      %v2206 = vpop.f32.mrf.mxu0
      %v2207 = vadd.f32 0.0, %v2206
      %v2208 = vpop.f32.mrf.mxu0
      %v2209 = vpop.f32.mrf.mxu0
      %v2210 = vadd.f32 0.0, %v2209
      %v2211 = vpop.f32.mrf.mxu0
      %2212 = vmatprep.mubr.bf16.mxu0 %v1733
      %2213 = vmatmul.mubr.bf16.gmra.mxu0 %v1693
      %v2214 = vpop.f32.mrf.mxu0
      %v2215 = vadd.f32 0.0, %v2214
      %v2216 = vpop.f32.mrf.mxu0
      %v2217 = vpop.f32.mrf.mxu0
      %v2218 = vadd.f32 0.0, %v2217
      %v2219 = vpop.f32.mrf.mxu0
      %2220 = vmatprep.mubr.bf16.mxu0 %v1734
      %2221 = vmatmul.mubr.bf16.gmra.mxu0 %v1694
      %v2222 = vpop.f32.mrf.mxu0
      %v2223 = vadd.f32 0.0, %v2222
      %v2224 = vpop.f32.mrf.mxu0
      %v2225 = vpop.f32.mrf.mxu0
      %v2226 = vadd.f32 0.0, %v2225
      %v2227 = vpop.f32.mrf.mxu0
      %2228 = vmatprep.mubr.bf16.mxu0 %v1735
      %2229 = vmatmul.mubr.bf16.gmra.mxu0 %v1695
      %v2230 = vpop.f32.mrf.mxu0
      %v2231 = vadd.f32 0.0, %v2230
      %v2232 = vpop.f32.mrf.mxu0
      %v2233 = vpop.f32.mrf.mxu0
      %v2234 = vadd.f32 0.0, %v2233
      %v2235 = vpop.f32.mrf.mxu0
      %2236 = vmatprep.mubr.bf16.mxu0 %v1736
      %2237 = vmatmul.mubr.bf16.gmra.mxu0 %v1696
      %v2238 = vpop.f32.mrf.mxu0
      %v2239 = vadd.f32 0.0, %v2238
      %v2240 = vpop.f32.mrf.mxu0
      %v2241 = vpop.f32.mrf.mxu0
      %v2242 = vadd.f32 0.0, %v2241
      %v2243 = vpop.f32.mrf.mxu0
      %2244 = vmatprep.mubr.bf16.mxu0 %v1737
      %2245 = vmatmul.mubr.bf16.gmra.mxu0 %v1697
      %v2246 = vpop.f32.mrf.mxu0
      %v2247 = vadd.f32 0.0, %v2246
      %v2248 = vpop.f32.mrf.mxu0
      %v2249 = vpop.f32.mrf.mxu0
      %v2250 = vadd.f32 0.0, %v2249
      %v2251 = vpop.f32.mrf.mxu0
      %2252 = vmatprep.mubr.bf16.mxu0 %v1738
      %2253 = vmatmul.mubr.bf16.gmra.mxu0 %v1698
      %v2254 = vpop.f32.mrf.mxu0
      %v2255 = vadd.f32 0.0, %v2254
      %v2256 = vpop.f32.mrf.mxu0
      %v2257 = vpop.f32.mrf.mxu0
      %v2258 = vadd.f32 0.0, %v2257
      %v2259 = vpop.f32.mrf.mxu0
      %2260 = vmatprep.mubr.bf16.mxu0 %v1739
      %2261 = vmatmul.mubr.bf16.gmra.mxu0 %v1699
      %v2262 = vpop.f32.mrf.mxu0
      %v2263 = vadd.f32 0.0, %v2262
      %v2264 = vpop.f32.mrf.mxu0
      %v2265 = vpop.f32.mrf.mxu0
      %v2266 = vadd.f32 0.0, %v2265
      %v2267 = vpop.f32.mrf.mxu0
      %2268 = vmatprep.mubr.bf16.mxu0 %v1740
      %2269 = vmatmul.mubr.bf16.gmra.mxu0 %v1700
      %v2270 = vpop.f32.mrf.mxu0
      %v2271 = vadd.f32 0.0, %v2270
      %v2272 = vpop.f32.mrf.mxu0
      %v2273 = vpop.f32.mrf.mxu0
      %v2274 = vadd.f32 0.0, %v2273
      %v2275 = vpop.f32.mrf.mxu0
      %2276 = vmatprep.mubr.bf16.mxu0 %v1741
      %2277 = vmatmul.mubr.bf16.gmra.mxu0 %v1701
      %v2278 = vpop.f32.mrf.mxu0
      %v2279 = vadd.f32 0.0, %v2278
      %v2280 = vpop.f32.mrf.mxu0
      %v2281 = vpop.f32.mrf.mxu0
      %v2282 = vadd.f32 0.0, %v2281
      %v2283 = vpop.f32.mrf.mxu0
      %2284 = vmatprep.mubr.bf16.mxu0 %v1742
      %2285 = vmatmul.mubr.bf16.gmra.mxu0 %v1702
      %v2286 = vpop.f32.mrf.mxu0
      %v2287 = vadd.f32 0.0, %v2286
      %v2288 = vpop.f32.mrf.mxu0
      %v2289 = vpop.f32.mrf.mxu0
      %v2290 = vadd.f32 0.0, %v2289
      %v2291 = vpop.f32.mrf.mxu0
      %2292 = vmatprep.mubr.bf16.mxu0 %v1743
      %2293 = vmatmul.mubr.bf16.gmra.mxu0 %v1703
      %v2294 = vpop.f32.mrf.mxu0
      %v2295 = vadd.f32 0.0, %v2294
      %v2296 = vpop.f32.mrf.mxu0
      %v2297 = vpop.f32.mrf.mxu0
      %v2298 = vadd.f32 0.0, %v2297
      %v2299 = vpop.f32.mrf.mxu0
      %2300 = vmatprep.mubr.bf16.mxu0 %v1744
      %2301 = vmatmul.mubr.bf16.gmra.mxu0 %v1704
      %v2302 = vpop.f32.mrf.mxu0
      %v2303 = vadd.f32 0.0, %v2302
      %v2304 = vpop.f32.mrf.mxu0
      %v2305 = vpop.f32.mrf.mxu0
      %v2306 = vadd.f32 0.0, %v2305
      %v2307 = vpop.f32.mrf.mxu0
      %2308 = vmatprep.mubr.bf16.mxu0 %v1745
      %2309 = vmatmul.mubr.bf16.gmra.mxu0 %v1705
      %v2310 = vpop.f32.mrf.mxu0
      %v2311 = vadd.f32 0.0, %v2310
      %v2312 = vpop.f32.mrf.mxu0
      %v2313 = vpop.f32.mrf.mxu0
      %v2314 = vadd.f32 0.0, %v2313
      %v2315 = vpop.f32.mrf.mxu0
      %2316 = vmatprep.mubr.bf16.mxu0 %v1746
      %2317 = vmatmul.mubr.bf16.gmra.mxu0 %v1706
      %v2318 = vpop.f32.mrf.mxu0
      %v2319 = vadd.f32 0.0, %v2318
      %v2320 = vpop.f32.mrf.mxu0
      %v2321 = vpop.f32.mrf.mxu0
      %v2322 = vadd.f32 0.0, %v2321
      %v2323 = vpop.f32.mrf.mxu0
      %2324 = vmatprep.mubr.bf16.mxu0 %v1747
      %2325 = vmatmul.mubr.bf16.gmra.mxu0 %v1707
      %v2326 = vpop.f32.mrf.mxu0
      %v2327 = vadd.f32 0.0, %v2326
      %v2328 = vpop.f32.mrf.mxu0
      %v2329 = vpop.f32.mrf.mxu0
      %v2330 = vadd.f32 0.0, %v2329
      %v2331 = vpop.f32.mrf.mxu0
      %2332 = vmatprep.mubr.bf16.mxu0 %v1748
      %2333 = vmatmul.mubr.bf16.gmra.mxu0 %v1708
      %v2334 = vpop.f32.mrf.mxu0
      %v2335 = vadd.f32 0.0, %v2334
      %v2336 = vpop.f32.mrf.mxu0
      %v2337 = vpop.f32.mrf.mxu0
      %v2338 = vadd.f32 0.0, %v2337
      %v2339 = vpop.f32.mrf.mxu0
      %2340 = vmatprep.mubr.bf16.mxu0 %v1749
      %2341 = vmatmul.mubr.bf16.gmra.mxu0 %v1709
      %v2342 = vpop.f32.mrf.mxu0
      %v2343 = vadd.f32 0.0, %v2342
      %v2344 = vpop.f32.mrf.mxu0
      %v2345 = vpop.f32.mrf.mxu0
      %v2346 = vadd.f32 0.0, %v2345
      %v2347 = vpop.f32.mrf.mxu0
      %2348 = vmatprep.mubr.bf16.mxu0 %v1750
      %2349 = vmatmul.mubr.bf16.gmra.mxu0 %v1710
      %v2350 = vpop.f32.mrf.mxu0
      %v2351 = vadd.f32 0.0, %v2350
      %v2352 = vpop.f32.mrf.mxu0
      %v2353 = vpop.f32.mrf.mxu0
      %v2354 = vadd.f32 0.0, %v2353
      %v2355 = vpop.f32.mrf.mxu0
      %2356 = vmatprep.mubr.bf16.mxu0 %v1751
      %2357 = vmatmul.mubr.bf16.gmra.mxu0 %v1711
      %v2358 = vpop.f32.mrf.mxu0
      %v2359 = vadd.f32 0.0, %v2358
      %v2360 = vpop.f32.mrf.mxu0
      %v2361 = vpop.f32.mrf.mxu0
      %v2362 = vadd.f32 0.0, %v2361
      %v2363 = vpop.f32.mrf.mxu0
      %2364 = vmatprep.mubr.bf16.mxu0 %v1752
      %2365 = vmatmul.mubr.bf16.gmra.mxu0 %v1712
      %v2366 = vpop.f32.mrf.mxu0
      %v2367 = vadd.f32 0.0, %v2366
      %v2368 = vpop.f32.mrf.mxu0
      %v2369 = vpop.f32.mrf.mxu0
      %v2370 = vadd.f32 0.0, %v2369
      %v2371 = vpop.f32.mrf.mxu0
      %2372 = vmatprep.mubr.bf16.mxu0 %v1753
      %2373 = vmatmul.mubr.bf16.gmra.mxu0 %v1713
      %v2374 = vpop.f32.mrf.mxu0
      %v2375 = vadd.f32 0.0, %v2374
      %v2376 = vpop.f32.mrf.mxu0
      %v2377 = vpop.f32.mrf.mxu0
      %v2378 = vadd.f32 0.0, %v2377
      %v2379 = vpop.f32.mrf.mxu0
      %2380 = vmatprep.mubr.bf16.mxu0 %v1754
      %2381 = vmatmul.mubr.bf16.gmra.mxu0 %v1714
      %v2382 = vpop.f32.mrf.mxu0
      %v2383 = vadd.f32 0.0, %v2382
      %v2384 = vpop.f32.mrf.mxu0
      %v2385 = vpop.f32.mrf.mxu0
      %v2386 = vadd.f32 0.0, %v2385
      %v2387 = vpop.f32.mrf.mxu0
      %2388 = vmatprep.mubr.bf16.mxu0 %v1755
      %2389 = vmatmul.mubr.bf16.gmra.mxu0 %v1715
      %v2390 = vpop.f32.mrf.mxu0
      %v2391 = vadd.f32 0.0, %v2390
      %v2392 = vpop.f32.mrf.mxu0
      %v2393 = vpop.f32.mrf.mxu0
      %v2394 = vadd.f32 0.0, %v2393
      %v2395 = vpop.f32.mrf.mxu0
      %2396 = vmatprep.mubr.bf16.mxu0 %v1756
      %2397 = vmatmul.mubr.bf16.gmra.mxu0 %v1716
      %v2398 = vpop.f32.mrf.mxu0
      %v2399 = vadd.f32 0.0, %v2398
      %v2400 = vpop.f32.mrf.mxu0
      %v2401 = vpop.f32.mrf.mxu0
      %v2402 = vadd.f32 0.0, %v2401
      %v2403 = vpop.f32.mrf.mxu0
      %2404 = vmatprep.mubr.bf16.mxu0 %v1757
      %2405 = vmatmul.mubr.bf16.gmra.mxu0 %v1717
      %v2406 = vpop.f32.mrf.mxu0
      %v2407 = vadd.f32 0.0, %v2406
      %v2408 = vpop.f32.mrf.mxu0
      %v2409 = vpop.f32.mrf.mxu0
      %v2410 = vadd.f32 0.0, %v2409
      %v2411 = vpop.f32.mrf.mxu0
      %2412 = vmatprep.mubr.bf16.mxu0 %v1758
      %2413 = vmatmul.mubr.bf16.gmra.mxu0 %v1718
      %v2414 = vpop.f32.mrf.mxu0
      %v2415 = vadd.f32 0.0, %v2414
      %v2416 = vpop.f32.mrf.mxu0
      %v2417 = vpop.f32.mrf.mxu0
      %v2418 = vadd.f32 0.0, %v2417
      %v2419 = vpop.f32.mrf.mxu0
      %2420 = vmatprep.mubr.bf16.mxu0 %v1759
      %2421 = vmatmul.mubr.bf16.gmra.mxu0 %v1719
      %v2422 = vpop.f32.mrf.mxu0
      %v2423 = vadd.f32 0.0, %v2422
      %v2424 = vpop.f32.mrf.mxu0
      %v2425 = vpop.f32.mrf.mxu0
      %v2426 = vadd.f32 0.0, %v2425
      %v2427 = vpop.f32.mrf.mxu0
      %2428 = vmatprep.mubr.bf16.mxu0 %v1760
      %2429 = vmatmul.mubr.bf16.gmra.mxu0 %v1720
      %v2430 = vpop.f32.mrf.mxu0
      %v2431 = vadd.f32 0.0, %v2430
      %v2432 = vpop.f32.mrf.mxu0
      %v2433 = vpop.f32.mrf.mxu0
      %v2434 = vadd.f32 0.0, %v2433
      %v2435 = vpop.f32.mrf.mxu0
      %2436 = vmatprep.mubr.bf16.mxu0 %v1761
      %2437 = vmatmul.mubr.bf16.gmra.mxu0 %v1721
      %v2438 = vpop.f32.mrf.mxu0
      %v2439 = vadd.f32 0.0, %v2438
      %v2440 = vpop.f32.mrf.mxu0
      %v2441 = vpop.f32.mrf.mxu0
      %v2442 = vadd.f32 0.0, %v2441
      %v2443 = vpop.f32.mrf.mxu0
      %2444 = vmatprep.mubr.bf16.mxu0 %v1762
      %2445 = vmatmul.mubr.bf16.gmra.mxu0 %v1722
      %v2446 = vpop.f32.mrf.mxu0
      %v2447 = vadd.f32 0.0, %v2446
      %v2448 = vpop.f32.mrf.mxu0
      %v2449 = vpop.f32.mrf.mxu0
      %v2450 = vadd.f32 0.0, %v2449
      %v2451 = vpop.f32.mrf.mxu0
      %2452 = vmatprep.mubr.bf16.mxu0 %v1763
      %2453 = vmatmul.mubr.bf16.gmra.mxu0 %v1723
      %v2454 = vpop.f32.mrf.mxu0
      %v2455 = vadd.f32 0.0, %v2454
      %v2456 = vpop.f32.mrf.mxu0
      %v2457 = vpop.f32.mrf.mxu0
      %v2458 = vadd.f32 0.0, %v2457
      %v2459 = vpop.f32.mrf.mxu0
      %2460 = vmatprep.mubr.bf16.mxu0 %v1764
      %2461 = vmatmul.mubr.bf16.gmra.mxu0 %v1724
      %v2462 = vpop.f32.mrf.mxu0
      %v2463 = vadd.f32 0.0, %v2462
      %v2464 = vpop.f32.mrf.mxu0
      %v2465 = vpop.f32.mrf.mxu0
      %v2466 = vadd.f32 0.0, %v2465
      %v2467 = vpop.f32.mrf.mxu0
      %2468 = vmatprep.mubr.bf16.mxu0 %v1765
      %2469 = vmatmul.mubr.bf16.gmra.mxu0 %v1725
      %v2470 = vpop.f32.mrf.mxu0
      %v2471 = vadd.f32 0.0, %v2470
      %v2472 = vpop.f32.mrf.mxu0
      %v2473 = vpop.f32.mrf.mxu0
      %v2474 = vadd.f32 0.0, %v2473
      %v2475 = vpop.f32.mrf.mxu0
      %2476 = vmatprep.mubr.bf16.mxu0 %v1766
      %2477 = vmatmul.mubr.bf16.gmra.mxu0 %v1726
      %v2478 = vpop.f32.mrf.mxu0
      %v2479 = vadd.f32 0.0, %v2478
      %v2480 = vpop.f32.mrf.mxu0
      %v2481 = vpop.f32.mrf.mxu0
      %v2482 = vadd.f32 0.0, %v2481
      %v2483 = vpop.f32.mrf.mxu0
      %2484 = vmatprep.mubr.bf16.mxu0 %v1767
      %2485 = vmatmul.mubr.bf16.gmra.mxu0 %v1727
      %v2486 = vpop.f32.mrf.mxu0
      %v2487 = vadd.f32 0.0, %v2486
      %v2488 = vpop.f32.mrf.mxu0
      %v2489 = vpop.f32.mrf.mxu0
      %v2490 = vadd.f32 0.0, %v2489
      %v2491 = vpop.f32.mrf.mxu0
      %2492 = vmatprep.mubr.bf16.mxu0 %v1768
      %2493 = vmatmul.mubr.bf16.gmra.mxu0 %v1728
      %v2494 = vpop.f32.mrf.mxu0
      %v2495 = vadd.f32 0.0, %v2494
      %v2496 = vpop.f32.mrf.mxu0
      %v2497 = vpop.f32.mrf.mxu0
      %v2498 = vadd.f32 0.0, %v2497
      %v2499 = vpop.f32.mrf.mxu0
      %2500 = vmatprep.mubr.bf16.mxu0 %v1769
      %2501 = vmatmul.mubr.bf16.gmra.mxu0 %v1729
      %v2502 = vpop.f32.mrf.mxu0
      %v2503 = vadd.f32 0.0, %v2502
      %v2504 = vpop.f32.mrf.mxu0
      %v2505 = vpop.f32.mrf.mxu0
      %v2506 = vadd.f32 0.0, %v2505
      %v2507 = vpop.f32.mrf.mxu0
      %2508 = vmatprep.mubr.bf16.mxu0 %v1770
      %2509 = vmatmul.mubr.bf16.gmra.mxu0 %v1730
      %v2510 = vpop.f32.mrf.mxu0
      %v2511 = vadd.f32 0.0, %v2510
      %v2512 = vpop.f32.mrf.mxu0
      %v2513 = vpop.f32.mrf.mxu0
      %v2514 = vadd.f32 0.0, %v2513
      %v2515 = vpop.f32.mrf.mxu0
      %2516 = vdwg.mxu0
      %2517 = vmatprep.subr.bf16.mxu0 0
      %2518 = vmatpush1.bf16.msra.mxu0 %v2139
      %2519 = vmatprep.subr.bf16.mxu0 0
      %2520 = vmatpush1.bf16.msra.mxu0 %v2138
      %2521 = vmatprep.subr.bf16.mxu0 0
      %2522 = vmatpush1.bf16.msra.mxu0 %v2137
      %2523 = vmatprep.subr.bf16.mxu0 0
      %2524 = vmatpush1.bf16.msra.mxu0 %v2136
      %2525 = vmatprep.subr.bf16.mxu0 0
      %2526 = vmatpush1.bf16.msra.mxu0 %v2135
      %2527 = vmatprep.subr.bf16.mxu0 0
      %2528 = vmatpush1.bf16.msra.mxu0 %v2134
      %2529 = vmatprep.subr.bf16.mxu0 0
      %2530 = vmatpush1.bf16.msra.mxu0 %v2133
      %2531 = vmatprep.subr.bf16.mxu0 0
      %2532 = vmatpush1.bf16.msra.mxu0 %v2132
      %2533 = vmatprep.subr.bf16.mxu0 0
      %2534 = vmatpush2.bf16.msra.mxu0 0
      %2535 = vmatprep.subr.bf16.mxu0 0
      %2536 = vmatpush2.bf16.msra.mxu0 0
      %2537 = vmatprep.subr.bf16.mxu0 0
      %2538 = vmatpush2.bf16.msra.mxu0 0
      %2539 = vmatprep.subr.bf16.mxu0 0
      %2540 = vmatpush2.bf16.msra.mxu0 0
      %2541 = vmatprep.subr.bf16.mxu0 0
      %2542 = vmatpush2.bf16.msra.mxu0 0
      %2543 = vmatprep.subr.bf16.mxu0 0
      %2544 = vmatpush2.bf16.msra.mxu0 0
      %2545 = vmatprep.subr.bf16.mxu0 0
      %2546 = vmatpush2.bf16.msra.mxu0 0
      %2547 = vmatprep.subr.bf16.mxu0 0
      %2548 = vmatpush2.bf16.msra.mxu0 0
      %2549 = vmatprep.mubr.bf16.mxu0 0
      %2550 = vmatmul.mubr.bf16.gmra.mxu0 %v1932
      %v2551 = vpop.f32.mrf.mxu0
      %v2552 = vadd.f32 %v2199, %v2551
      %v2553 = vpop.f32.mrf.mxu0
      %v2554 = vpop.f32.mrf.mxu0
      %v2555 = vadd.f32 %v2202, %v2554
      %v2556 = vpop.f32.mrf.mxu0
      %2557 = vmatprep.mubr.bf16.mxu0 0
      %2558 = vmatmul.mubr.bf16.gmra.mxu0 %v1933
      %v2559 = vpop.f32.mrf.mxu0
      %v2560 = vadd.f32 %v2207, %v2559
      %v2561 = vpop.f32.mrf.mxu0
      %v2562 = vpop.f32.mrf.mxu0
      %v2563 = vadd.f32 %v2210, %v2562
      %v2564 = vpop.f32.mrf.mxu0
      %2565 = vmatprep.mubr.bf16.mxu0 0
      %2566 = vmatmul.mubr.bf16.gmra.mxu0 %v1934
      %v2567 = vpop.f32.mrf.mxu0
      %v2568 = vadd.f32 %v2215, %v2567
      %v2569 = vpop.f32.mrf.mxu0
      %v2570 = vpop.f32.mrf.mxu0
      %v2571 = vadd.f32 %v2218, %v2570
      %v2572 = vpop.f32.mrf.mxu0
      %2573 = vmatprep.mubr.bf16.mxu0 0
      %2574 = vmatmul.mubr.bf16.gmra.mxu0 %v1935
      %v2575 = vpop.f32.mrf.mxu0
      %v2576 = vadd.f32 %v2223, %v2575
      %v2577 = vpop.f32.mrf.mxu0
      %v2578 = vpop.f32.mrf.mxu0
      %v2579 = vadd.f32 %v2226, %v2578
      %v2580 = vpop.f32.mrf.mxu0
      %2581 = vmatprep.mubr.bf16.mxu0 0
      %2582 = vmatmul.mubr.bf16.gmra.mxu0 %v1936
      %v2583 = vpop.f32.mrf.mxu0
      %v2584 = vadd.f32 %v2231, %v2583
      %v2585 = vpop.f32.mrf.mxu0
      %v2586 = vpop.f32.mrf.mxu0
      %v2587 = vadd.f32 %v2234, %v2586
      %v2588 = vpop.f32.mrf.mxu0
      %2589 = vmatprep.mubr.bf16.mxu0 0
      %2590 = vmatmul.mubr.bf16.gmra.mxu0 %v1937
      %v2591 = vpop.f32.mrf.mxu0
      %v2592 = vadd.f32 %v2239, %v2591
      %v2593 = vpop.f32.mrf.mxu0
      %v2594 = vpop.f32.mrf.mxu0
      %v2595 = vadd.f32 %v2242, %v2594
      %v2596 = vpop.f32.mrf.mxu0
      %2597 = vmatprep.mubr.bf16.mxu0 0
      %2598 = vmatmul.mubr.bf16.gmra.mxu0 %v1938
      %v2599 = vpop.f32.mrf.mxu0
      %v2600 = vadd.f32 %v2247, %v2599
      %v2601 = vpop.f32.mrf.mxu0
      %v2602 = vpop.f32.mrf.mxu0
      %v2603 = vadd.f32 %v2250, %v2602
      %v2604 = vpop.f32.mrf.mxu0
      %2605 = vmatprep.mubr.bf16.mxu0 0
      %2606 = vmatmul.mubr.bf16.gmra.mxu0 %v1939
      %v2607 = vpop.f32.mrf.mxu0
      %v2608 = vadd.f32 %v2255, %v2607
      %v2609 = vpop.f32.mrf.mxu0
      %v2610 = vpop.f32.mrf.mxu0
      %v2611 = vadd.f32 %v2258, %v2610
      %v2612 = vpop.f32.mrf.mxu0
      %2613 = vmatprep.mubr.bf16.mxu0 0
      %2614 = vmatmul.mubr.bf16.gmra.mxu0 %v1940
      %v2615 = vpop.f32.mrf.mxu0
      %v2616 = vadd.f32 %v2263, %v2615
      %v2617 = vpop.f32.mrf.mxu0
      %v2618 = vpop.f32.mrf.mxu0
      %v2619 = vadd.f32 %v2266, %v2618
      %v2620 = vpop.f32.mrf.mxu0
      %2621 = vmatprep.mubr.bf16.mxu0 0
      %2622 = vmatmul.mubr.bf16.gmra.mxu0 %v1941
      %v2623 = vpop.f32.mrf.mxu0
      %v2624 = vadd.f32 %v2271, %v2623
      %v2625 = vpop.f32.mrf.mxu0
      %v2626 = vpop.f32.mrf.mxu0
      %v2627 = vadd.f32 %v2274, %v2626
      %v2628 = vpop.f32.mrf.mxu0
      %2629 = vmatprep.mubr.bf16.mxu0 0
      %2630 = vmatmul.mubr.bf16.gmra.mxu0 %v1942
      %v2631 = vpop.f32.mrf.mxu0
      %v2632 = vadd.f32 %v2279, %v2631
      %v2633 = vpop.f32.mrf.mxu0
      %v2634 = vpop.f32.mrf.mxu0
      %v2635 = vadd.f32 %v2282, %v2634
      %v2636 = vpop.f32.mrf.mxu0
      %2637 = vmatprep.mubr.bf16.mxu0 0
      %2638 = vmatmul.mubr.bf16.gmra.mxu0 %v1943
      %v2639 = vpop.f32.mrf.mxu0
      %v2640 = vadd.f32 %v2287, %v2639
      %v2641 = vpop.f32.mrf.mxu0
      %v2642 = vpop.f32.mrf.mxu0
      %v2643 = vadd.f32 %v2290, %v2642
      %v2644 = vpop.f32.mrf.mxu0
      %2645 = vmatprep.mubr.bf16.mxu0 0
      %2646 = vmatmul.mubr.bf16.gmra.mxu0 %v1944
      %v2647 = vpop.f32.mrf.mxu0
      %v2648 = vadd.f32 %v2295, %v2647
      %v2649 = vpop.f32.mrf.mxu0
      %v2650 = vpop.f32.mrf.mxu0
      %v2651 = vadd.f32 %v2298, %v2650
      %v2652 = vpop.f32.mrf.mxu0
      %2653 = vmatprep.mubr.bf16.mxu0 0
      %2654 = vmatmul.mubr.bf16.gmra.mxu0 %v1945
      %v2655 = vpop.f32.mrf.mxu0
      %v2656 = vadd.f32 %v2303, %v2655
      %v2657 = vpop.f32.mrf.mxu0
      %v2658 = vpop.f32.mrf.mxu0
      %v2659 = vadd.f32 %v2306, %v2658
      %v2660 = vpop.f32.mrf.mxu0
      %2661 = vmatprep.mubr.bf16.mxu0 0
      %2662 = vmatmul.mubr.bf16.gmra.mxu0 %v1946
      %v2663 = vpop.f32.mrf.mxu0
      %v2664 = vadd.f32 %v2311, %v2663
      %v2665 = vpop.f32.mrf.mxu0
      %v2666 = vpop.f32.mrf.mxu0
      %v2667 = vadd.f32 %v2314, %v2666
      %v2668 = vpop.f32.mrf.mxu0
      %2669 = vmatprep.mubr.bf16.mxu0 0
      %2670 = vmatmul.mubr.bf16.gmra.mxu0 %v1947
      %v2671 = vpop.f32.mrf.mxu0
      %v2672 = vadd.f32 %v2319, %v2671
      %v2673 = vpop.f32.mrf.mxu0
      %v2674 = vpop.f32.mrf.mxu0
      %v2675 = vadd.f32 %v2322, %v2674
      %v2676 = vpop.f32.mrf.mxu0
      %2677 = vmatprep.mubr.bf16.mxu0 0
      %2678 = vmatmul.mubr.bf16.gmra.mxu0 %v1948
      %v2679 = vpop.f32.mrf.mxu0
      %v2680 = vadd.f32 %v2327, %v2679
      %v2681 = vpop.f32.mrf.mxu0
      %v2682 = vpop.f32.mrf.mxu0
      %v2683 = vadd.f32 %v2330, %v2682
      %v2684 = vpop.f32.mrf.mxu0
      %2685 = vmatprep.mubr.bf16.mxu0 0
      %2686 = vmatmul.mubr.bf16.gmra.mxu0 %v1949
      %v2687 = vpop.f32.mrf.mxu0
      %v2688 = vadd.f32 %v2335, %v2687
      %v2689 = vpop.f32.mrf.mxu0
      %v2690 = vpop.f32.mrf.mxu0
      %v2691 = vadd.f32 %v2338, %v2690
      %v2692 = vpop.f32.mrf.mxu0
      %2693 = vmatprep.mubr.bf16.mxu0 0
      %2694 = vmatmul.mubr.bf16.gmra.mxu0 %v1950
      %v2695 = vpop.f32.mrf.mxu0
      %v2696 = vadd.f32 %v2343, %v2695
      %v2697 = vpop.f32.mrf.mxu0
      %v2698 = vpop.f32.mrf.mxu0
      %v2699 = vadd.f32 %v2346, %v2698
      %v2700 = vpop.f32.mrf.mxu0
      %2701 = vmatprep.mubr.bf16.mxu0 0
      %2702 = vmatmul.mubr.bf16.gmra.mxu0 %v1951
      %v2703 = vpop.f32.mrf.mxu0
      %v2704 = vadd.f32 %v2351, %v2703
      %v2705 = vpop.f32.mrf.mxu0
      %v2706 = vpop.f32.mrf.mxu0
      %v2707 = vadd.f32 %v2354, %v2706
      %v2708 = vpop.f32.mrf.mxu0
      %2709 = vmatprep.mubr.bf16.mxu0 0
      %2710 = vmatmul.mubr.bf16.gmra.mxu0 %v1952
      %v2711 = vpop.f32.mrf.mxu0
      %v2712 = vadd.f32 %v2359, %v2711
      %v2713 = vpop.f32.mrf.mxu0
      %v2714 = vpop.f32.mrf.mxu0
      %v2715 = vadd.f32 %v2362, %v2714
      %v2716 = vpop.f32.mrf.mxu0
      %2717 = vmatprep.mubr.bf16.mxu0 0
      %2718 = vmatmul.mubr.bf16.gmra.mxu0 %v1953
      %v2719 = vpop.f32.mrf.mxu0
      %v2720 = vadd.f32 %v2367, %v2719
      %v2721 = vpop.f32.mrf.mxu0
      %v2722 = vpop.f32.mrf.mxu0
      %v2723 = vadd.f32 %v2370, %v2722
      %v2724 = vpop.f32.mrf.mxu0
      %2725 = vmatprep.mubr.bf16.mxu0 0
      %2726 = vmatmul.mubr.bf16.gmra.mxu0 %v1954
      %v2727 = vpop.f32.mrf.mxu0
      %v2728 = vadd.f32 %v2375, %v2727
      %v2729 = vpop.f32.mrf.mxu0
      %v2730 = vpop.f32.mrf.mxu0
      %v2731 = vadd.f32 %v2378, %v2730
      %v2732 = vpop.f32.mrf.mxu0
      %2733 = vmatprep.mubr.bf16.mxu0 0
      %2734 = vmatmul.mubr.bf16.gmra.mxu0 %v1955
      %v2735 = vpop.f32.mrf.mxu0
      %v2736 = vadd.f32 %v2383, %v2735
      %v2737 = vpop.f32.mrf.mxu0
      %v2738 = vpop.f32.mrf.mxu0
      %v2739 = vadd.f32 %v2386, %v2738
      %v2740 = vpop.f32.mrf.mxu0
      %2741 = vmatprep.mubr.bf16.mxu0 0
      %2742 = vmatmul.mubr.bf16.gmra.mxu0 %v1956
      %v2743 = vpop.f32.mrf.mxu0
      %v2744 = vadd.f32 %v2391, %v2743
      %v2745 = vpop.f32.mrf.mxu0
      %v2746 = vpop.f32.mrf.mxu0
      %v2747 = vadd.f32 %v2394, %v2746
      %v2748 = vpop.f32.mrf.mxu0
      %2749 = vmatprep.mubr.bf16.mxu0 0
      %2750 = vmatmul.mubr.bf16.gmra.mxu0 %v1957
      %v2751 = vpop.f32.mrf.mxu0
      %v2752 = vadd.f32 %v2399, %v2751
      %v2753 = vpop.f32.mrf.mxu0
      %v2754 = vpop.f32.mrf.mxu0
      %v2755 = vadd.f32 %v2402, %v2754
      %v2756 = vpop.f32.mrf.mxu0
      %2757 = vmatprep.mubr.bf16.mxu0 0
      %2758 = vmatmul.mubr.bf16.gmra.mxu0 %v1958
      %v2759 = vpop.f32.mrf.mxu0
      %v2760 = vadd.f32 %v2407, %v2759
      %v2761 = vpop.f32.mrf.mxu0
      %v2762 = vpop.f32.mrf.mxu0
      %v2763 = vadd.f32 %v2410, %v2762
      %v2764 = vpop.f32.mrf.mxu0
      %2765 = vmatprep.mubr.bf16.mxu0 0
      %2766 = vmatmul.mubr.bf16.gmra.mxu0 %v1959
      %v2767 = vpop.f32.mrf.mxu0
      %v2768 = vadd.f32 %v2415, %v2767
      %v2769 = vpop.f32.mrf.mxu0
      %v2770 = vpop.f32.mrf.mxu0
      %v2771 = vadd.f32 %v2418, %v2770
      %v2772 = vpop.f32.mrf.mxu0
      %2773 = vmatprep.mubr.bf16.mxu0 0
      %2774 = vmatmul.mubr.bf16.gmra.mxu0 %v1960
      %v2775 = vpop.f32.mrf.mxu0
      %v2776 = vadd.f32 %v2423, %v2775
      %v2777 = vpop.f32.mrf.mxu0
      %v2778 = vpop.f32.mrf.mxu0
      %v2779 = vadd.f32 %v2426, %v2778
      %v2780 = vpop.f32.mrf.mxu0
      %2781 = vmatprep.mubr.bf16.mxu0 0
      %2782 = vmatmul.mubr.bf16.gmra.mxu0 %v1961
      %v2783 = vpop.f32.mrf.mxu0
      %v2784 = vadd.f32 %v2431, %v2783
      %v2785 = vpop.f32.mrf.mxu0
      %v2786 = vpop.f32.mrf.mxu0
      %v2787 = vadd.f32 %v2434, %v2786
      %v2788 = vpop.f32.mrf.mxu0
      %2789 = vmatprep.mubr.bf16.mxu0 0
      %2790 = vmatmul.mubr.bf16.gmra.mxu0 %v1962
      %v2791 = vpop.f32.mrf.mxu0
      %v2792 = vadd.f32 %v2439, %v2791
      %v2793 = vpop.f32.mrf.mxu0
      %v2794 = vpop.f32.mrf.mxu0
      %v2795 = vadd.f32 %v2442, %v2794
      %v2796 = vpop.f32.mrf.mxu0
      %2797 = vmatprep.mubr.bf16.mxu0 0
      %2798 = vmatmul.mubr.bf16.gmra.mxu0 %v1963
      %v2799 = vpop.f32.mrf.mxu0
      %v2800 = vadd.f32 %v2447, %v2799
      %v2801 = vpop.f32.mrf.mxu0
      %v2802 = vpop.f32.mrf.mxu0
      %v2803 = vadd.f32 %v2450, %v2802
      %v2804 = vpop.f32.mrf.mxu0
      %2805 = vmatprep.mubr.bf16.mxu0 0
      %2806 = vmatmul.mubr.bf16.gmra.mxu0 %v1964
      %v2807 = vpop.f32.mrf.mxu0
      %v2808 = vadd.f32 %v2455, %v2807
      %v2809 = vpop.f32.mrf.mxu0
      %v2810 = vpop.f32.mrf.mxu0
      %v2811 = vadd.f32 %v2458, %v2810
      %v2812 = vpop.f32.mrf.mxu0
      %2813 = vmatprep.mubr.bf16.mxu0 0
      %2814 = vmatmul.mubr.bf16.gmra.mxu0 %v1965
      %v2815 = vpop.f32.mrf.mxu0
      %v2816 = vadd.f32 %v2463, %v2815
      %v2817 = vpop.f32.mrf.mxu0
      %v2818 = vpop.f32.mrf.mxu0
      %v2819 = vadd.f32 %v2466, %v2818
      %v2820 = vpop.f32.mrf.mxu0
      %2821 = vmatprep.mubr.bf16.mxu0 0
      %2822 = vmatmul.mubr.bf16.gmra.mxu0 %v1966
      %v2823 = vpop.f32.mrf.mxu0
      %v2824 = vadd.f32 %v2471, %v2823
      %v2825 = vpop.f32.mrf.mxu0
      %v2826 = vpop.f32.mrf.mxu0
      %v2827 = vadd.f32 %v2474, %v2826
      %v2828 = vpop.f32.mrf.mxu0
      %2829 = vmatprep.mubr.bf16.mxu0 0
      %2830 = vmatmul.mubr.bf16.gmra.mxu0 %v1967
      %v2831 = vpop.f32.mrf.mxu0
      %v2832 = vadd.f32 %v2479, %v2831
      %v2833 = vpop.f32.mrf.mxu0
      %v2834 = vpop.f32.mrf.mxu0
      %v2835 = vadd.f32 %v2482, %v2834
      %v2836 = vpop.f32.mrf.mxu0
      %2837 = vmatprep.mubr.bf16.mxu0 0
      %2838 = vmatmul.mubr.bf16.gmra.mxu0 %v1968
      %v2839 = vpop.f32.mrf.mxu0
      %v2840 = vadd.f32 %v2487, %v2839
      %v2841 = vpop.f32.mrf.mxu0
      %v2842 = vpop.f32.mrf.mxu0
      %v2843 = vadd.f32 %v2490, %v2842
      %v2844 = vpop.f32.mrf.mxu0
      %2845 = vmatprep.mubr.bf16.mxu0 0
      %2846 = vmatmul.mubr.bf16.gmra.mxu0 %v1969
      %v2847 = vpop.f32.mrf.mxu0
      %v2848 = vadd.f32 %v2495, %v2847
      %v2849 = vpop.f32.mrf.mxu0
      %v2850 = vpop.f32.mrf.mxu0
      %v2851 = vadd.f32 %v2498, %v2850
      %v2852 = vpop.f32.mrf.mxu0
      %2853 = vmatprep.mubr.bf16.mxu0 0
      %2854 = vmatmul.mubr.bf16.gmra.mxu0 %v1970
      %v2855 = vpop.f32.mrf.mxu0
      %v2856 = vadd.f32 %v2503, %v2855
      %v2857 = vpop.f32.mrf.mxu0
      %v2858 = vpop.f32.mrf.mxu0
      %v2859 = vadd.f32 %v2506, %v2858
      %v2860 = vpop.f32.mrf.mxu0
      %2861 = vmatprep.mubr.bf16.mxu0 0
      %2862 = vmatmul.mubr.bf16.gmra.mxu0 %v1971
      %v2863 = vpop.f32.mrf.mxu0
      %v2864 = vadd.f32 %v2511, %v2863
      %v2865 = vpop.f32.mrf.mxu0
      %v2866 = vpop.f32.mrf.mxu0
      %v2867 = vadd.f32 %v2514, %v2866
      %v2868 = vpop.f32.mrf.mxu0
      %2869 = vdwg.mxu0
      %v2870 = vld [vmem:[%s5] sm:$0x1]
      %v2872 = vlaneseq
      %v2873 = vshrl.u32 %v2872, 7
      %v2874 = vsub.s32 0, %v2873
      %v2875 = vrot.slane %v2870, %v2874
      %v2877 = vmul.f32 %v2552, %v2875
      %v2878 = vmul.f32 %v2555, %v2875
      %v2879 = vmul.f32 %v2560, %v2875
      %v2880 = vmul.f32 %v2563, %v2875
      %v2881 = vmul.f32 %v2568, %v2875
      %v2882 = vmul.f32 %v2571, %v2875
      %v2883 = vmul.f32 %v2576, %v2875
      %v2884 = vmul.f32 %v2579, %v2875
      %v2885 = vmul.f32 %v2584, %v2875
      %v2886 = vmul.f32 %v2587, %v2875
      %v2887 = vmul.f32 %v2592, %v2875
      %v2888 = vmul.f32 %v2595, %v2875
      %v2889 = vmul.f32 %v2600, %v2875
      %v2890 = vmul.f32 %v2603, %v2875
      %v2891 = vmul.f32 %v2608, %v2875
      %v2892 = vmul.f32 %v2611, %v2875
      %v2893 = vmul.f32 %v2616, %v2875
      %v2894 = vmul.f32 %v2619, %v2875
      %v2895 = vmul.f32 %v2624, %v2875
      %v2896 = vmul.f32 %v2627, %v2875
      %v2897 = vmul.f32 %v2632, %v2875
      %v2898 = vmul.f32 %v2635, %v2875
      %v2899 = vmul.f32 %v2640, %v2875
      %v2900 = vmul.f32 %v2643, %v2875
      %v2901 = vmul.f32 %v2648, %v2875
      %v2902 = vmul.f32 %v2651, %v2875
      %v2903 = vmul.f32 %v2656, %v2875
      %v2904 = vmul.f32 %v2659, %v2875
      %v2905 = vmul.f32 %v2664, %v2875
      %v2906 = vmul.f32 %v2667, %v2875
      %v2907 = vmul.f32 %v2672, %v2875
      %v2908 = vmul.f32 %v2675, %v2875
      %v2909 = vmul.f32 %v2680, %v2875
      %v2910 = vmul.f32 %v2683, %v2875
      %v2911 = vmul.f32 %v2688, %v2875
      %v2912 = vmul.f32 %v2691, %v2875
      %v2913 = vmul.f32 %v2696, %v2875
      %v2914 = vmul.f32 %v2699, %v2875
      %v2915 = vmul.f32 %v2704, %v2875
      %v2916 = vmul.f32 %v2707, %v2875
      %v2917 = vmul.f32 %v2712, %v2875
      %v2918 = vmul.f32 %v2715, %v2875
      %v2919 = vmul.f32 %v2720, %v2875
      %v2920 = vmul.f32 %v2723, %v2875
      %v2921 = vmul.f32 %v2728, %v2875
      %v2922 = vmul.f32 %v2731, %v2875
      %v2923 = vmul.f32 %v2736, %v2875
      %v2924 = vmul.f32 %v2739, %v2875
      %v2925 = vmul.f32 %v2744, %v2875
      %v2926 = vmul.f32 %v2747, %v2875
      %v2927 = vmul.f32 %v2752, %v2875
      %v2928 = vmul.f32 %v2755, %v2875
      %v2929 = vmul.f32 %v2760, %v2875
      %v2930 = vmul.f32 %v2763, %v2875
      %v2931 = vmul.f32 %v2768, %v2875
      %v2932 = vmul.f32 %v2771, %v2875
      %v2933 = vmul.f32 %v2776, %v2875
      %v2934 = vmul.f32 %v2779, %v2875
      %v2935 = vmul.f32 %v2784, %v2875
      %v2936 = vmul.f32 %v2787, %v2875
      %v2937 = vmul.f32 %v2792, %v2875
      %v2938 = vmul.f32 %v2795, %v2875
      %v2939 = vmul.f32 %v2800, %v2875
      %v2940 = vmul.f32 %v2803, %v2875
      %v2941 = vmul.f32 %v2808, %v2875
      %v2942 = vmul.f32 %v2811, %v2875
      %v2943 = vmul.f32 %v2816, %v2875
      %v2944 = vmul.f32 %v2819, %v2875
      %v2945 = vmul.f32 %v2824, %v2875
      %v2946 = vmul.f32 %v2827, %v2875
      %v2947 = vmul.f32 %v2832, %v2875
      %v2948 = vmul.f32 %v2835, %v2875
      %v2949 = vmul.f32 %v2840, %v2875
      %v2950 = vmul.f32 %v2843, %v2875
      %v2951 = vmul.f32 %v2848, %v2875
      %v2952 = vmul.f32 %v2851, %v2875
      %v2953 = vmul.f32 %v2856, %v2875
      %v2954 = vmul.f32 %v2859, %v2875
      %v2955 = vmul.f32 %v2864, %v2875
      %v2956 = vmul.f32 %v2867, %v2875
      %v2957 = vld [vmem:[%s6] sm:$0x1]
      %v2959 = vlaneseq
      %v2960 = vshrl.u32 %v2959, 7
      %v2961 = vsub.s32 0, %v2960
      %v2962 = vrot.slane %v2957, %v2961
      %v2964 = vadd.f32 %v2877, %v2962
      %v2965 = vadd.f32 %v2878, %v2962
      %v2966 = vadd.f32 %v2879, %v2962
      %v2967 = vadd.f32 %v2880, %v2962
      %v2968 = vadd.f32 %v2881, %v2962
      %v2969 = vadd.f32 %v2882, %v2962
      %v2970 = vadd.f32 %v2883, %v2962
      %v2971 = vadd.f32 %v2884, %v2962
      %v2972 = vadd.f32 %v2885, %v2962
      %v2973 = vadd.f32 %v2886, %v2962
      %v2974 = vadd.f32 %v2887, %v2962
      %v2975 = vadd.f32 %v2888, %v2962
      %v2976 = vadd.f32 %v2889, %v2962
      %v2977 = vadd.f32 %v2890, %v2962
      %v2978 = vadd.f32 %v2891, %v2962
      %v2979 = vadd.f32 %v2892, %v2962
      %v2980 = vadd.f32 %v2893, %v2962
      %v2981 = vadd.f32 %v2894, %v2962
      %v2982 = vadd.f32 %v2895, %v2962
      %v2983 = vadd.f32 %v2896, %v2962
      %v2984 = vadd.f32 %v2897, %v2962
      %v2985 = vadd.f32 %v2898, %v2962
      %v2986 = vadd.f32 %v2899, %v2962
      %v2987 = vadd.f32 %v2900, %v2962
      %v2988 = vadd.f32 %v2901, %v2962
      %v2989 = vadd.f32 %v2902, %v2962
      %v2990 = vadd.f32 %v2903, %v2962
      %v2991 = vadd.f32 %v2904, %v2962
      %v2992 = vadd.f32 %v2905, %v2962
      %v2993 = vadd.f32 %v2906, %v2962
      %v2994 = vadd.f32 %v2907, %v2962
      %v2995 = vadd.f32 %v2908, %v2962
      %v2996 = vadd.f32 %v2909, %v2962
      %v2997 = vadd.f32 %v2910, %v2962
      %v2998 = vadd.f32 %v2911, %v2962
      %v2999 = vadd.f32 %v2912, %v2962
      %v3000 = vadd.f32 %v2913, %v2962
      %v3001 = vadd.f32 %v2914, %v2962
      %v3002 = vadd.f32 %v2915, %v2962
      %v3003 = vadd.f32 %v2916, %v2962
      %v3004 = vadd.f32 %v2917, %v2962
      %v3005 = vadd.f32 %v2918, %v2962
      %v3006 = vadd.f32 %v2919, %v2962
      %v3007 = vadd.f32 %v2920, %v2962
      %v3008 = vadd.f32 %v2921, %v2962
      %v3009 = vadd.f32 %v2922, %v2962
      %v3010 = vadd.f32 %v2923, %v2962
      %v3011 = vadd.f32 %v2924, %v2962
      %v3012 = vadd.f32 %v2925, %v2962
      %v3013 = vadd.f32 %v2926, %v2962
      %v3014 = vadd.f32 %v2927, %v2962
      %v3015 = vadd.f32 %v2928, %v2962
      %v3016 = vadd.f32 %v2929, %v2962
      %v3017 = vadd.f32 %v2930, %v2962
      %v3018 = vadd.f32 %v2931, %v2962
      %v3019 = vadd.f32 %v2932, %v2962
      %v3020 = vadd.f32 %v2933, %v2962
      %v3021 = vadd.f32 %v2934, %v2962
      %v3022 = vadd.f32 %v2935, %v2962
      %v3023 = vadd.f32 %v2936, %v2962
      %v3024 = vadd.f32 %v2937, %v2962
      %v3025 = vadd.f32 %v2938, %v2962
      %v3026 = vadd.f32 %v2939, %v2962
      %v3027 = vadd.f32 %v2940, %v2962
      %v3028 = vadd.f32 %v2941, %v2962
      %v3029 = vadd.f32 %v2942, %v2962
      %v3030 = vadd.f32 %v2943, %v2962
      %v3031 = vadd.f32 %v2944, %v2962
      %v3032 = vadd.f32 %v2945, %v2962
      %v3033 = vadd.f32 %v2946, %v2962
      %v3034 = vadd.f32 %v2947, %v2962
      %v3035 = vadd.f32 %v2948, %v2962
      %v3036 = vadd.f32 %v2949, %v2962
      %v3037 = vadd.f32 %v2950, %v2962
      %v3038 = vadd.f32 %v2951, %v2962
      %v3039 = vadd.f32 %v2952, %v2962
      %v3040 = vadd.f32 %v2953, %v2962
      %v3041 = vadd.f32 %v2954, %v2962
      %v3042 = vadd.f32 %v2955, %v2962
      %v3043 = vadd.f32 %v2956, %v2962
      %v3044 = vmax.f32 %v2964, 0.0
      %v3045 = vmax.f32 %v2965, 0.0
      %v3046 = vmax.f32 %v2966, 0.0
      %v3047 = vmax.f32 %v2967, 0.0
      %v3048 = vmax.f32 %v2968, 0.0
      %v3049 = vmax.f32 %v2969, 0.0
      %v3050 = vmax.f32 %v2970, 0.0
      %v3051 = vmax.f32 %v2971, 0.0
      %v3052 = vmax.f32 %v2972, 0.0
      %v3053 = vmax.f32 %v2973, 0.0
      %v3054 = vmax.f32 %v2974, 0.0
      %v3055 = vmax.f32 %v2975, 0.0
      %v3056 = vmax.f32 %v2976, 0.0
      %v3057 = vmax.f32 %v2977, 0.0
      %v3058 = vmax.f32 %v2978, 0.0
      %v3059 = vmax.f32 %v2979, 0.0
      %v3060 = vmax.f32 %v2980, 0.0
      %v3061 = vmax.f32 %v2981, 0.0
      %v3062 = vmax.f32 %v2982, 0.0
      %v3063 = vmax.f32 %v2983, 0.0
      %v3064 = vmax.f32 %v2984, 0.0
      %v3065 = vmax.f32 %v2985, 0.0
      %v3066 = vmax.f32 %v2986, 0.0
      %v3067 = vmax.f32 %v2987, 0.0
      %v3068 = vmax.f32 %v2988, 0.0
      %v3069 = vmax.f32 %v2989, 0.0
      %v3070 = vmax.f32 %v2990, 0.0
      %v3071 = vmax.f32 %v2991, 0.0
      %v3072 = vmax.f32 %v2992, 0.0
      %v3073 = vmax.f32 %v2993, 0.0
      %v3074 = vmax.f32 %v2994, 0.0
      %v3075 = vmax.f32 %v2995, 0.0
      %v3076 = vmax.f32 %v2996, 0.0
      %v3077 = vmax.f32 %v2997, 0.0
      %v3078 = vmax.f32 %v2998, 0.0
      %v3079 = vmax.f32 %v2999, 0.0
      %v3080 = vmax.f32 %v3000, 0.0
      %v3081 = vmax.f32 %v3001, 0.0
      %v3082 = vmax.f32 %v3002, 0.0
      %v3083 = vmax.f32 %v3003, 0.0
      %v3084 = vmax.f32 %v3004, 0.0
      %v3085 = vmax.f32 %v3005, 0.0
      %v3086 = vmax.f32 %v3006, 0.0
      %v3087 = vmax.f32 %v3007, 0.0
      %v3088 = vmax.f32 %v3008, 0.0
      %v3089 = vmax.f32 %v3009, 0.0
      %v3090 = vmax.f32 %v3010, 0.0
      %v3091 = vmax.f32 %v3011, 0.0
      %v3092 = vmax.f32 %v3012, 0.0
      %v3093 = vmax.f32 %v3013, 0.0
      %v3094 = vmax.f32 %v3014, 0.0
      %v3095 = vmax.f32 %v3015, 0.0
      %v3096 = vmax.f32 %v3016, 0.0
      %v3097 = vmax.f32 %v3017, 0.0
      %v3098 = vmax.f32 %v3018, 0.0
      %v3099 = vmax.f32 %v3019, 0.0
      %v3100 = vmax.f32 %v3020, 0.0
      %v3101 = vmax.f32 %v3021, 0.0
      %v3102 = vmax.f32 %v3022, 0.0
      %v3103 = vmax.f32 %v3023, 0.0
      %v3104 = vmax.f32 %v3024, 0.0
      %v3105 = vmax.f32 %v3025, 0.0
      %v3106 = vmax.f32 %v3026, 0.0
      %v3107 = vmax.f32 %v3027, 0.0
      %v3108 = vmax.f32 %v3028, 0.0
      %v3109 = vmax.f32 %v3029, 0.0
      %v3110 = vmax.f32 %v3030, 0.0
      %v3111 = vmax.f32 %v3031, 0.0
      %v3112 = vmax.f32 %v3032, 0.0
      %v3113 = vmax.f32 %v3033, 0.0
      %v3114 = vmax.f32 %v3034, 0.0
      %v3115 = vmax.f32 %v3035, 0.0
      %v3116 = vmax.f32 %v3036, 0.0
      %v3117 = vmax.f32 %v3037, 0.0
      %v3118 = vmax.f32 %v3038, 0.0
      %v3119 = vmax.f32 %v3039, 0.0
      %v3120 = vmax.f32 %v3040, 0.0
      %v3121 = vmax.f32 %v3041, 0.0
      %v3122 = vmax.f32 %v3042, 0.0
      %v3123 = vmax.f32 %v3043, 0.0
      %v3124 = vsel %vm410, %v3044, 0.0
      %v3125 = vsel %vm411, %v3045, 0.0
      %v3126 = vsel %vm412, %v3046, 0.0
      %v3127 = vsel %vm413, %v3047, 0.0
      %v3128 = vsel %vm414, %v3048, 0.0
      %v3129 = vsel %vm410, %v3049, 0.0
      %v3130 = vsel %vm411, %v3050, 0.0
      %v3131 = vsel %vm412, %v3051, 0.0
      %v3132 = vsel %vm413, %v3052, 0.0
      %v3133 = vsel %vm414, %v3053, 0.0
      %v3134 = vsel %vm410, %v3054, 0.0
      %v3135 = vsel %vm411, %v3055, 0.0
      %v3136 = vsel %vm412, %v3056, 0.0
      %v3137 = vsel %vm413, %v3057, 0.0
      %v3138 = vsel %vm414, %v3058, 0.0
      %v3139 = vsel %vm410, %v3059, 0.0
      %v3140 = vsel %vm411, %v3060, 0.0
      %v3141 = vsel %vm412, %v3061, 0.0
      %v3142 = vsel %vm413, %v3062, 0.0
      %v3143 = vsel %vm414, %v3063, 0.0
      %v3144 = vsel %vm410, %v3064, 0.0
      %v3145 = vsel %vm411, %v3065, 0.0
      %v3146 = vsel %vm412, %v3066, 0.0
      %v3147 = vsel %vm413, %v3067, 0.0
      %v3148 = vsel %vm414, %v3068, 0.0
      %v3149 = vsel %vm410, %v3069, 0.0
      %v3150 = vsel %vm411, %v3070, 0.0
      %v3151 = vsel %vm412, %v3071, 0.0
      %v3152 = vsel %vm413, %v3072, 0.0
      %v3153 = vsel %vm414, %v3073, 0.0
      %v3154 = vsel %vm410, %v3074, 0.0
      %v3155 = vsel %vm411, %v3075, 0.0
      %v3156 = vsel %vm412, %v3076, 0.0
      %v3157 = vsel %vm413, %v3077, 0.0
      %v3158 = vsel %vm414, %v3078, 0.0
      %v3159 = vsel %vm410, %v3079, 0.0
      %v3160 = vsel %vm411, %v3080, 0.0
      %v3161 = vsel %vm412, %v3081, 0.0
      %v3162 = vsel %vm413, %v3082, 0.0
      %v3163 = vsel %vm414, %v3083, 0.0
      %v3164 = vsel %vm410, %v3084, 0.0
      %v3165 = vsel %vm411, %v3085, 0.0
      %v3166 = vsel %vm412, %v3086, 0.0
      %v3167 = vsel %vm413, %v3087, 0.0
      %v3168 = vsel %vm414, %v3088, 0.0
      %v3169 = vsel %vm410, %v3089, 0.0
      %v3170 = vsel %vm411, %v3090, 0.0
      %v3171 = vsel %vm412, %v3091, 0.0
      %v3172 = vsel %vm413, %v3092, 0.0
      %v3173 = vsel %vm414, %v3093, 0.0
      %v3174 = vsel %vm410, %v3094, 0.0
      %v3175 = vsel %vm411, %v3095, 0.0
      %v3176 = vsel %vm412, %v3096, 0.0
      %v3177 = vsel %vm413, %v3097, 0.0
      %v3178 = vsel %vm414, %v3098, 0.0
      %v3179 = vsel %vm410, %v3099, 0.0
      %v3180 = vsel %vm411, %v3100, 0.0
      %v3181 = vsel %vm412, %v3101, 0.0
      %v3182 = vsel %vm413, %v3102, 0.0
      %v3183 = vsel %vm414, %v3103, 0.0
      %v3184 = vsel %vm410, %v3104, 0.0
      %v3185 = vsel %vm411, %v3105, 0.0
      %v3186 = vsel %vm412, %v3106, 0.0
      %v3187 = vsel %vm413, %v3107, 0.0
      %v3188 = vsel %vm414, %v3108, 0.0
      %v3189 = vsel %vm410, %v3109, 0.0
      %v3190 = vsel %vm411, %v3110, 0.0
      %v3191 = vsel %vm412, %v3111, 0.0
      %v3192 = vsel %vm413, %v3112, 0.0
      %v3193 = vsel %vm414, %v3113, 0.0
      %v3194 = vsel %vm410, %v3114, 0.0
      %v3195 = vsel %vm411, %v3115, 0.0
      %v3196 = vsel %vm412, %v3116, 0.0
      %v3197 = vsel %vm413, %v3117, 0.0
      %v3198 = vsel %vm414, %v3118, 0.0
      %v3199 = vsel %vm410, %v3119, 0.0
      %v3200 = vsel %vm411, %v3120, 0.0
      %v3201 = vsel %vm412, %v3121, 0.0
      %v3202 = vsel %vm413, %v3122, 0.0
      %v3203 = vsel %vm414, %v3123, 0.0
      %v3204 = vrot.slane %v3124, 6
      %v3205 = vrot.slane %v3125, 6
      %v3206 = vrot.slane %v3126, 6
      %v3207 = vrot.slane %v3127, 6
      %v3208 = vrot.slane %v3128, 6
      %v3209 = vrot.slane %v3129, 6
      %v3210 = vrot.slane %v3130, 6
      %v3211 = vrot.slane %v3131, 6
      %v3212 = vrot.slane %v3132, 6
      %v3213 = vrot.slane %v3133, 6
      %v3214 = vrot.slane %v3134, 6
      %v3215 = vrot.slane %v3135, 6
      %v3216 = vrot.slane %v3136, 6
      %v3217 = vrot.slane %v3137, 6
      %v3218 = vrot.slane %v3138, 6
      %v3219 = vrot.slane %v3139, 6
      %v3220 = vrot.slane %v3140, 6
      %v3221 = vrot.slane %v3141, 6
      %v3222 = vrot.slane %v3142, 6
      %v3223 = vrot.slane %v3143, 6
      %v3224 = vrot.slane %v3144, 6
      %v3225 = vrot.slane %v3145, 6
      %v3226 = vrot.slane %v3146, 6
      %v3227 = vrot.slane %v3147, 6
      %v3228 = vrot.slane %v3148, 6
      %v3229 = vrot.slane %v3149, 6
      %v3230 = vrot.slane %v3150, 6
      %v3231 = vrot.slane %v3151, 6
      %v3232 = vrot.slane %v3152, 6
      %v3233 = vrot.slane %v3153, 6
      %v3234 = vrot.slane %v3154, 6
      %v3235 = vrot.slane %v3155, 6
      %v3236 = vrot.slane %v3156, 6
      %v3237 = vrot.slane %v3157, 6
      %v3238 = vrot.slane %v3158, 6
      %v3239 = vrot.slane %v3159, 6
      %v3240 = vrot.slane %v3160, 6
      %v3241 = vrot.slane %v3161, 6
      %v3242 = vrot.slane %v3162, 6
      %v3243 = vrot.slane %v3163, 6
      %v3244 = vrot.slane %v3164, 6
      %v3245 = vrot.slane %v3165, 6
      %v3246 = vrot.slane %v3166, 6
      %v3247 = vrot.slane %v3167, 6
      %v3248 = vrot.slane %v3168, 6
      %v3249 = vrot.slane %v3169, 6
      %v3250 = vrot.slane %v3170, 6
      %v3251 = vrot.slane %v3171, 6
      %v3252 = vrot.slane %v3172, 6
      %v3253 = vrot.slane %v3173, 6
      %v3254 = vrot.slane %v3174, 6
      %v3255 = vrot.slane %v3175, 6
      %v3256 = vrot.slane %v3176, 6
      %v3257 = vrot.slane %v3177, 6
      %v3258 = vrot.slane %v3178, 6
      %v3259 = vrot.slane %v3179, 6
      %v3260 = vrot.slane %v3180, 6
      %v3261 = vrot.slane %v3181, 6
      %v3262 = vrot.slane %v3182, 6
      %v3263 = vrot.slane %v3183, 6
      %v3264 = vrot.slane %v3184, 6
      %v3265 = vrot.slane %v3185, 6
      %v3266 = vrot.slane %v3186, 6
      %v3267 = vrot.slane %v3187, 6
      %v3268 = vrot.slane %v3188, 6
      %v3269 = vrot.slane %v3189, 6
      %v3270 = vrot.slane %v3190, 6
      %v3271 = vrot.slane %v3191, 6
      %v3272 = vrot.slane %v3192, 6
      %v3273 = vrot.slane %v3193, 6
      %v3274 = vrot.slane %v3194, 6
      %v3275 = vrot.slane %v3195, 6
      %v3276 = vrot.slane %v3196, 6
      %v3277 = vrot.slane %v3197, 6
      %v3278 = vrot.slane %v3198, 6
      %v3279 = vrot.slane %v3199, 6
      %v3280 = vrot.slane %v3200, 6
      %v3281 = vrot.slane %v3201, 6
      %v3282 = vrot.slane %v3202, 6
      %v3283 = vrot.slane %v3203, 6
      %vm3284 = vcmp.lt.s32.totalorder %v395, 2
      %v3285 = vsel %vm3284, %v3282, %v3283
      %v3286 = vsel %vm3284, %v3281, %v3282
      %v3287 = vsel %vm3284, %v3280, %v3281
      %v3288 = vsel %vm3284, %v3279, %v3280
      %v3289 = vsel %vm3284, %v3278, %v3279
      %v3290 = vsel %vm3284, %v3277, %v3278
      %v3291 = vsel %vm3284, %v3276, %v3277
      %v3292 = vsel %vm3284, %v3275, %v3276
      %v3293 = vsel %vm3284, %v3274, %v3275
      %v3294 = vsel %vm3284, %v3273, %v3274
      %v3295 = vsel %vm3284, %v3272, %v3273
      %v3296 = vsel %vm3284, %v3271, %v3272
      %v3297 = vsel %vm3284, %v3270, %v3271
      %v3298 = vsel %vm3284, %v3269, %v3270
      %v3299 = vsel %vm3284, %v3268, %v3269
      %v3300 = vsel %vm3284, %v3267, %v3268
      %v3301 = vsel %vm3284, %v3266, %v3267
      %v3302 = vsel %vm3284, %v3265, %v3266
      %v3303 = vsel %vm3284, %v3264, %v3265
      %v3304 = vsel %vm3284, %v3263, %v3264
      %v3305 = vsel %vm3284, %v3262, %v3263
      %v3306 = vsel %vm3284, %v3261, %v3262
      %v3307 = vsel %vm3284, %v3260, %v3261
      %v3308 = vsel %vm3284, %v3259, %v3260
      %v3309 = vsel %vm3284, %v3258, %v3259
      %v3310 = vsel %vm3284, %v3257, %v3258
      %v3311 = vsel %vm3284, %v3256, %v3257
      %v3312 = vsel %vm3284, %v3255, %v3256
      %v3313 = vsel %vm3284, %v3254, %v3255
      %v3314 = vsel %vm3284, %v3253, %v3254
      %v3315 = vsel %vm3284, %v3252, %v3253
      %v3316 = vsel %vm3284, %v3251, %v3252
      %v3317 = vsel %vm3284, %v3250, %v3251
      %v3318 = vsel %vm3284, %v3249, %v3250
      %v3319 = vsel %vm3284, %v3248, %v3249
      %v3320 = vsel %vm3284, %v3247, %v3248
      %v3321 = vsel %vm3284, %v3246, %v3247
      %v3322 = vsel %vm3284, %v3245, %v3246
      %v3323 = vsel %vm3284, %v3244, %v3245
      %v3324 = vsel %vm3284, %v3243, %v3244
      %v3325 = vsel %vm3284, %v3242, %v3243
      %v3326 = vsel %vm3284, %v3241, %v3242
      %v3327 = vsel %vm3284, %v3240, %v3241
      %v3328 = vsel %vm3284, %v3239, %v3240
      %v3329 = vsel %vm3284, %v3238, %v3239
      %v3330 = vsel %vm3284, %v3237, %v3238
      %v3331 = vsel %vm3284, %v3236, %v3237
      %v3332 = vsel %vm3284, %v3235, %v3236
      %v3333 = vsel %vm3284, %v3234, %v3235
      %v3334 = vsel %vm3284, %v3233, %v3234
      %v3335 = vsel %vm3284, %v3232, %v3233
      %v3336 = vsel %vm3284, %v3231, %v3232
      %v3337 = vsel %vm3284, %v3230, %v3231
      %v3338 = vsel %vm3284, %v3229, %v3230
      %v3339 = vsel %vm3284, %v3228, %v3229
      %v3340 = vsel %vm3284, %v3227, %v3228
      %v3341 = vsel %vm3284, %v3226, %v3227
      %v3342 = vsel %vm3284, %v3225, %v3226
      %v3343 = vsel %vm3284, %v3224, %v3225
      %v3344 = vsel %vm3284, %v3223, %v3224
      %v3345 = vsel %vm3284, %v3222, %v3223
      %v3346 = vsel %vm3284, %v3221, %v3222
      %v3347 = vsel %vm3284, %v3220, %v3221
      %v3348 = vsel %vm3284, %v3219, %v3220
      %v3349 = vsel %vm3284, %v3218, %v3219
      %v3350 = vsel %vm3284, %v3217, %v3218
      %v3351 = vsel %vm3284, %v3216, %v3217
      %v3352 = vsel %vm3284, %v3215, %v3216
      %v3353 = vsel %vm3284, %v3214, %v3215
      %v3354 = vsel %vm3284, %v3213, %v3214
      %v3355 = vsel %vm3284, %v3212, %v3213
      %v3356 = vsel %vm3284, %v3211, %v3212
      %v3357 = vsel %vm3284, %v3210, %v3211
      %v3358 = vsel %vm3284, %v3209, %v3210
      %v3359 = vsel %vm3284, %v3208, %v3209
      %v3360 = vsel %vm3284, %v3207, %v3208
      %v3361 = vsel %vm3284, %v3206, %v3207
      %v3362 = vsel %vm3284, %v3205, %v3206
      %v3363 = vsel %vm3284, %v3204, %v3205
      %v3364 = vsel %vm3284, %v3283, %v3204
      %v3365 = vpack.c.bf16 %v3363, %v3364
      %v3366 = vpack.c.bf16 %v3361, %v3362
      %v3367 = vpack.c.bf16 %v3359, %v3360
      %v3368 = vpack.c.bf16 %v3357, %v3358
      %v3369 = vpack.c.bf16 %v3355, %v3356
      %v3370 = vpack.c.bf16 %v3353, %v3354
      %v3371 = vpack.c.bf16 %v3351, %v3352
      %v3372 = vpack.c.bf16 %v3349, %v3350
      %v3373 = vpack.c.bf16 %v3347, %v3348
      %v3374 = vpack.c.bf16 %v3345, %v3346
      %v3375 = vpack.c.bf16 %v3343, %v3344
      %v3376 = vpack.c.bf16 %v3341, %v3342
      %v3377 = vpack.c.bf16 %v3339, %v3340
      %v3378 = vpack.c.bf16 %v3337, %v3338
      %v3379 = vpack.c.bf16 %v3335, %v3336
      %v3380 = vpack.c.bf16 %v3333, %v3334
      %v3381 = vpack.c.bf16 %v3331, %v3332
      %v3382 = vpack.c.bf16 %v3329, %v3330
      %v3383 = vpack.c.bf16 %v3327, %v3328
      %v3384 = vpack.c.bf16 %v3325, %v3326
      %v3385 = vpack.c.bf16 %v3323, %v3324
      %v3386 = vpack.c.bf16 %v3321, %v3322
      %v3387 = vpack.c.bf16 %v3319, %v3320
      %v3388 = vpack.c.bf16 %v3317, %v3318
      %v3389 = vpack.c.bf16 %v3315, %v3316
      %v3390 = vpack.c.bf16 %v3313, %v3314
      %v3391 = vpack.c.bf16 %v3311, %v3312
      %v3392 = vpack.c.bf16 %v3309, %v3310
      %v3393 = vpack.c.bf16 %v3307, %v3308
      %v3394 = vpack.c.bf16 %v3305, %v3306
      %v3395 = vpack.c.bf16 %v3303, %v3304
      %v3396 = vpack.c.bf16 %v3301, %v3302
      %v3397 = vpack.c.bf16 %v3299, %v3300
      %v3398 = vpack.c.bf16 %v3297, %v3298
      %v3399 = vpack.c.bf16 %v3295, %v3296
      %v3400 = vpack.c.bf16 %v3293, %v3294
      %v3401 = vpack.c.bf16 %v3291, %v3292
      %v3402 = vpack.c.bf16 %v3289, %v3290
      %v3403 = vpack.c.bf16 %v3287, %v3288
      %v3404 = vpack.c.bf16 %v3285, %v3286
      %v3405 = vpack.c.bf16 %v3125, %v3124
      %v3406 = vpack.c.bf16 %v3127, %v3126
      %v3407 = vpack.c.bf16 %v3129, %v3128
      %v3408 = vpack.c.bf16 %v3131, %v3130
      %v3409 = vpack.c.bf16 %v3133, %v3132
      %v3410 = vpack.c.bf16 %v3135, %v3134
      %v3411 = vpack.c.bf16 %v3137, %v3136
      %v3412 = vpack.c.bf16 %v3139, %v3138
      %v3413 = vpack.c.bf16 %v3141, %v3140
      %v3414 = vpack.c.bf16 %v3143, %v3142
      %v3415 = vpack.c.bf16 %v3145, %v3144
      %v3416 = vpack.c.bf16 %v3147, %v3146
      %v3417 = vpack.c.bf16 %v3149, %v3148
      %v3418 = vpack.c.bf16 %v3151, %v3150
      %v3419 = vpack.c.bf16 %v3153, %v3152
      %v3420 = vpack.c.bf16 %v3155, %v3154
      %v3421 = vpack.c.bf16 %v3157, %v3156
      %v3422 = vpack.c.bf16 %v3159, %v3158
      %v3423 = vpack.c.bf16 %v3161, %v3160
      %v3424 = vpack.c.bf16 %v3163, %v3162
      %v3425 = vpack.c.bf16 %v3165, %v3164
      %v3426 = vpack.c.bf16 %v3167, %v3166
      %v3427 = vpack.c.bf16 %v3169, %v3168
      %v3428 = vpack.c.bf16 %v3171, %v3170
      %v3429 = vpack.c.bf16 %v3173, %v3172
      %v3430 = vpack.c.bf16 %v3175, %v3174
      %v3431 = vpack.c.bf16 %v3177, %v3176
      %v3432 = vpack.c.bf16 %v3179, %v3178
      %v3433 = vpack.c.bf16 %v3181, %v3180
      %v3434 = vpack.c.bf16 %v3183, %v3182
      %v3435 = vpack.c.bf16 %v3185, %v3184
      %v3436 = vpack.c.bf16 %v3187, %v3186
      %v3437 = vpack.c.bf16 %v3189, %v3188
      %v3438 = vpack.c.bf16 %v3191, %v3190
      %v3439 = vpack.c.bf16 %v3193, %v3192
      %v3440 = vpack.c.bf16 %v3195, %v3194
      %v3441 = vpack.c.bf16 %v3197, %v3196
      %v3442 = vpack.c.bf16 %v3199, %v3198
      %v3443 = vpack.c.bf16 %v3201, %v3200
      %v3444 = vpack.c.bf16 %v3203, %v3202
      %v3445 = vrot.slane %v3124, 2
      %v3446 = vrot.slane %v3125, 2
      %v3447 = vrot.slane %v3126, 2
      %v3448 = vrot.slane %v3127, 2
      %v3449 = vrot.slane %v3128, 2
      %v3450 = vrot.slane %v3129, 2
      %v3451 = vrot.slane %v3130, 2
      %v3452 = vrot.slane %v3131, 2
      %v3453 = vrot.slane %v3132, 2
      %v3454 = vrot.slane %v3133, 2
      %v3455 = vrot.slane %v3134, 2
      %v3456 = vrot.slane %v3135, 2
      %v3457 = vrot.slane %v3136, 2
      %v3458 = vrot.slane %v3137, 2
      %v3459 = vrot.slane %v3138, 2
      %v3460 = vrot.slane %v3139, 2
      %v3461 = vrot.slane %v3140, 2
      %v3462 = vrot.slane %v3141, 2
      %v3463 = vrot.slane %v3142, 2
      %v3464 = vrot.slane %v3143, 2
      %v3465 = vrot.slane %v3144, 2
      %v3466 = vrot.slane %v3145, 2
      %v3467 = vrot.slane %v3146, 2
      %v3468 = vrot.slane %v3147, 2
      %v3469 = vrot.slane %v3148, 2
      %v3470 = vrot.slane %v3149, 2
      %v3471 = vrot.slane %v3150, 2
      %v3472 = vrot.slane %v3151, 2
      %v3473 = vrot.slane %v3152, 2
      %v3474 = vrot.slane %v3153, 2
      %v3475 = vrot.slane %v3154, 2
      %v3476 = vrot.slane %v3155, 2
      %v3477 = vrot.slane %v3156, 2
      %v3478 = vrot.slane %v3157, 2
      %v3479 = vrot.slane %v3158, 2
      %v3480 = vrot.slane %v3159, 2
      %v3481 = vrot.slane %v3160, 2
      %v3482 = vrot.slane %v3161, 2
      %v3483 = vrot.slane %v3162, 2
      %v3484 = vrot.slane %v3163, 2
      %v3485 = vrot.slane %v3164, 2
      %v3486 = vrot.slane %v3165, 2
      %v3487 = vrot.slane %v3166, 2
      %v3488 = vrot.slane %v3167, 2
      %v3489 = vrot.slane %v3168, 2
      %v3490 = vrot.slane %v3169, 2
      %v3491 = vrot.slane %v3170, 2
      %v3492 = vrot.slane %v3171, 2
      %v3493 = vrot.slane %v3172, 2
      %v3494 = vrot.slane %v3173, 2
      %v3495 = vrot.slane %v3174, 2
      %v3496 = vrot.slane %v3175, 2
      %v3497 = vrot.slane %v3176, 2
      %v3498 = vrot.slane %v3177, 2
      %v3499 = vrot.slane %v3178, 2
      %v3500 = vrot.slane %v3179, 2
      %v3501 = vrot.slane %v3180, 2
      %v3502 = vrot.slane %v3181, 2
      %v3503 = vrot.slane %v3182, 2
      %v3504 = vrot.slane %v3183, 2
      %v3505 = vrot.slane %v3184, 2
      %v3506 = vrot.slane %v3185, 2
      %v3507 = vrot.slane %v3186, 2
      %v3508 = vrot.slane %v3187, 2
      %v3509 = vrot.slane %v3188, 2
      %v3510 = vrot.slane %v3189, 2
      %v3511 = vrot.slane %v3190, 2
      %v3512 = vrot.slane %v3191, 2
      %v3513 = vrot.slane %v3192, 2
      %v3514 = vrot.slane %v3193, 2
      %v3515 = vrot.slane %v3194, 2
      %v3516 = vrot.slane %v3195, 2
      %v3517 = vrot.slane %v3196, 2
      %v3518 = vrot.slane %v3197, 2
      %v3519 = vrot.slane %v3198, 2
      %v3520 = vrot.slane %v3199, 2
      %v3521 = vrot.slane %v3200, 2
      %v3522 = vrot.slane %v3201, 2
      %v3523 = vrot.slane %v3202, 2
      %v3524 = vrot.slane %v3203, 2
      %vm3525 = vcmp.lt.s32.totalorder %v395, 6
      %v3526 = vsel %vm3525, %v3523, %v3524
      %v3527 = vsel %vm3525, %v3522, %v3523
      %v3528 = vsel %vm3525, %v3521, %v3522
      %v3529 = vsel %vm3525, %v3520, %v3521
      %v3530 = vsel %vm3525, %v3519, %v3520
      %v3531 = vsel %vm3525, %v3518, %v3519
      %v3532 = vsel %vm3525, %v3517, %v3518
      %v3533 = vsel %vm3525, %v3516, %v3517
      %v3534 = vsel %vm3525, %v3515, %v3516
      %v3535 = vsel %vm3525, %v3514, %v3515
      %v3536 = vsel %vm3525, %v3513, %v3514
      %v3537 = vsel %vm3525, %v3512, %v3513
      %v3538 = vsel %vm3525, %v3511, %v3512
      %v3539 = vsel %vm3525, %v3510, %v3511
      %v3540 = vsel %vm3525, %v3509, %v3510
      %v3541 = vsel %vm3525, %v3508, %v3509
      %v3542 = vsel %vm3525, %v3507, %v3508
      %v3543 = vsel %vm3525, %v3506, %v3507
      %v3544 = vsel %vm3525, %v3505, %v3506
      %v3545 = vsel %vm3525, %v3504, %v3505
      %v3546 = vsel %vm3525, %v3503, %v3504
      %v3547 = vsel %vm3525, %v3502, %v3503
      %v3548 = vsel %vm3525, %v3501, %v3502
      %v3549 = vsel %vm3525, %v3500, %v3501
      %v3550 = vsel %vm3525, %v3499, %v3500
      %v3551 = vsel %vm3525, %v3498, %v3499
      %v3552 = vsel %vm3525, %v3497, %v3498
      %v3553 = vsel %vm3525, %v3496, %v3497
      %v3554 = vsel %vm3525, %v3495, %v3496
      %v3555 = vsel %vm3525, %v3494, %v3495
      %v3556 = vsel %vm3525, %v3493, %v3494
      %v3557 = vsel %vm3525, %v3492, %v3493
      %v3558 = vsel %vm3525, %v3491, %v3492
      %v3559 = vsel %vm3525, %v3490, %v3491
      %v3560 = vsel %vm3525, %v3489, %v3490
      %v3561 = vsel %vm3525, %v3488, %v3489
      %v3562 = vsel %vm3525, %v3487, %v3488
      %v3563 = vsel %vm3525, %v3486, %v3487
      %v3564 = vsel %vm3525, %v3485, %v3486
      %v3565 = vsel %vm3525, %v3484, %v3485
      %v3566 = vsel %vm3525, %v3483, %v3484
      %v3567 = vsel %vm3525, %v3482, %v3483
      %v3568 = vsel %vm3525, %v3481, %v3482
      %v3569 = vsel %vm3525, %v3480, %v3481
      %v3570 = vsel %vm3525, %v3479, %v3480
      %v3571 = vsel %vm3525, %v3478, %v3479
      %v3572 = vsel %vm3525, %v3477, %v3478
      %v3573 = vsel %vm3525, %v3476, %v3477
      %v3574 = vsel %vm3525, %v3475, %v3476
      %v3575 = vsel %vm3525, %v3474, %v3475
      %v3576 = vsel %vm3525, %v3473, %v3474
      %v3577 = vsel %vm3525, %v3472, %v3473
      %v3578 = vsel %vm3525, %v3471, %v3472
      %v3579 = vsel %vm3525, %v3470, %v3471
      %v3580 = vsel %vm3525, %v3469, %v3470
      %v3581 = vsel %vm3525, %v3468, %v3469
      %v3582 = vsel %vm3525, %v3467, %v3468
      %v3583 = vsel %vm3525, %v3466, %v3467
      %v3584 = vsel %vm3525, %v3465, %v3466
      %v3585 = vsel %vm3525, %v3464, %v3465
      %v3586 = vsel %vm3525, %v3463, %v3464
      %v3587 = vsel %vm3525, %v3462, %v3463
      %v3588 = vsel %vm3525, %v3461, %v3462
      %v3589 = vsel %vm3525, %v3460, %v3461
      %v3590 = vsel %vm3525, %v3459, %v3460
      %v3591 = vsel %vm3525, %v3458, %v3459
      %v3592 = vsel %vm3525, %v3457, %v3458
      %v3593 = vsel %vm3525, %v3456, %v3457
      %v3594 = vsel %vm3525, %v3455, %v3456
      %v3595 = vsel %vm3525, %v3454, %v3455
      %v3596 = vsel %vm3525, %v3453, %v3454
      %v3597 = vsel %vm3525, %v3452, %v3453
      %v3598 = vsel %vm3525, %v3451, %v3452
      %v3599 = vsel %vm3525, %v3450, %v3451
      %v3600 = vsel %vm3525, %v3449, %v3450
      %v3601 = vsel %vm3525, %v3448, %v3449
      %v3602 = vsel %vm3525, %v3447, %v3448
      %v3603 = vsel %vm3525, %v3446, %v3447
      %v3604 = vsel %vm3525, %v3445, %v3446
      %v3605 = vsel %vm3525, %v3524, %v3445
      %v3606 = vpack.c.bf16 %v3603, %v3604
      %v3607 = vpack.c.bf16 %v3601, %v3602
      %v3608 = vpack.c.bf16 %v3599, %v3600
      %v3609 = vpack.c.bf16 %v3597, %v3598
      %v3610 = vpack.c.bf16 %v3595, %v3596
      %v3611 = vpack.c.bf16 %v3593, %v3594
      %v3612 = vpack.c.bf16 %v3591, %v3592
      %v3613 = vpack.c.bf16 %v3589, %v3590
      %v3614 = vpack.c.bf16 %v3587, %v3588
      %v3615 = vpack.c.bf16 %v3585, %v3586
      %v3616 = vpack.c.bf16 %v3583, %v3584
      %v3617 = vpack.c.bf16 %v3581, %v3582
      %v3618 = vpack.c.bf16 %v3579, %v3580
      %v3619 = vpack.c.bf16 %v3577, %v3578
      %v3620 = vpack.c.bf16 %v3575, %v3576
      %v3621 = vpack.c.bf16 %v3573, %v3574
      %v3622 = vpack.c.bf16 %v3571, %v3572
      %v3623 = vpack.c.bf16 %v3569, %v3570
      %v3624 = vpack.c.bf16 %v3567, %v3568
      %v3625 = vpack.c.bf16 %v3565, %v3566
      %v3626 = vpack.c.bf16 %v3563, %v3564
      %v3627 = vpack.c.bf16 %v3561, %v3562
      %v3628 = vpack.c.bf16 %v3559, %v3560
      %v3629 = vpack.c.bf16 %v3557, %v3558
      %v3630 = vpack.c.bf16 %v3555, %v3556
      %v3631 = vpack.c.bf16 %v3553, %v3554
      %v3632 = vpack.c.bf16 %v3551, %v3552
      %v3633 = vpack.c.bf16 %v3549, %v3550
      %v3634 = vpack.c.bf16 %v3547, %v3548
      %v3635 = vpack.c.bf16 %v3545, %v3546
      %v3636 = vpack.c.bf16 %v3543, %v3544
      %v3637 = vpack.c.bf16 %v3541, %v3542
      %v3638 = vpack.c.bf16 %v3539, %v3540
      %v3639 = vpack.c.bf16 %v3537, %v3538
      %v3640 = vpack.c.bf16 %v3535, %v3536
      %v3641 = vpack.c.bf16 %v3533, %v3534
      %v3642 = vpack.c.bf16 %v3531, %v3532
      %v3643 = vpack.c.bf16 %v3529, %v3530
      %v3644 = vpack.c.bf16 %v3527, %v3528
      %v3645 = vpack.c.bf16 %v3605, %v3526
      %s3646 = scalar_lea.vmem %s4, 192
      %v3647 = vld [vmem:[%s3646] sm:$0xf]
      %v3648 = vld [vmem:[%s3646 + $0x4] sm:$0xf]
      %v3649 = vld [vmem:[%s3646 + $0x8] sm:$0xf]
      %v3650 = vld [vmem:[%s3646 + $0xc] sm:$0xf]
      %v3651 = vld [vmem:[%s3646 + $0x10] sm:$0xf]
      %v3652 = vld [vmem:[%s3646 + $0x14] sm:$0xf]
      %v3653 = vld [vmem:[%s3646 + $0x18] sm:$0xf]
      %v3654 = vld [vmem:[%s3646 + $0x1c] sm:$0xf]
      %v3655 = vld [vmem:[%s3646 + $0x20] sm:$0xf]
      %v3656 = vld [vmem:[%s3646 + $0x24] sm:$0xf]
      %v3657 = vld [vmem:[%s3646 + $0x28] sm:$0xf]
      %v3658 = vld [vmem:[%s3646 + $0x2c] sm:$0xf]
      %v3659 = vld [vmem:[%s3646 + $0x30] sm:$0xf]
      %v3660 = vld [vmem:[%s3646 + $0x34] sm:$0xf]
      %v3661 = vld [vmem:[%s3646 + $0x38] sm:$0xf]
      %v3662 = vld [vmem:[%s3646 + $0x3c] sm:$0xf]
      %v3663 = vld [vmem:[%s3646 + $0x40] sm:$0xf]
      %v3664 = vld [vmem:[%s3646 + $0x44] sm:$0xf]
      %v3665 = vld [vmem:[%s3646 + $0x48] sm:$0xf]
      %v3666 = vld [vmem:[%s3646 + $0x4c] sm:$0xf]
      %v3667 = vld [vmem:[%s3646 + $0x50] sm:$0xf]
      %v3668 = vld [vmem:[%s3646 + $0x54] sm:$0xf]
      %v3669 = vld [vmem:[%s3646 + $0x58] sm:$0xf]
      %v3670 = vld [vmem:[%s3646 + $0x5c] sm:$0xf]
      %v3671 = vld [vmem:[%s3646 + $0x60] sm:$0xf]
      %v3672 = vld [vmem:[%s3646 + $0x64] sm:$0xf]
      %v3673 = vld [vmem:[%s3646 + $0x68] sm:$0xf]
      %v3674 = vld [vmem:[%s3646 + $0x6c] sm:$0xf]
      %v3675 = vld [vmem:[%s3646 + $0x70] sm:$0xf]
      %v3676 = vld [vmem:[%s3646 + $0x74] sm:$0xf]
      %v3677 = vld [vmem:[%s3646 + $0x78] sm:$0xf]
      %v3678 = vld [vmem:[%s3646 + $0x7c] sm:$0xf]
      %v3679 = vld [vmem:[%s3646 + $0x80] sm:$0xf]
      %v3680 = vld [vmem:[%s3646 + $0x84] sm:$0xf]
      %v3681 = vld [vmem:[%s3646 + $0x88] sm:$0xf]
      %v3682 = vld [vmem:[%s3646 + $0x8c] sm:$0xf]
      %v3683 = vld [vmem:[%s3646 + $0x90] sm:$0xf]
      %v3684 = vld [vmem:[%s3646 + $0x94] sm:$0xf]
      %v3685 = vld [vmem:[%s3646 + $0x98] sm:$0xf]
      %v3686 = vld [vmem:[%s3646 + $0x9c] sm:$0xf]
      %v3687 = vld [vmem:[%s3646 + $0xa0] sm:$0xf]
      %v3688 = vld [vmem:[%s3646 + $0xa4] sm:$0xf]
      %v3689 = vld [vmem:[%s3646 + $0xa8] sm:$0xf]
      %v3690 = vld [vmem:[%s3646 + $0xac] sm:$0xf]
      %v3691 = vld [vmem:[%s3646 + $0xb0] sm:$0xf]
      %v3692 = vld [vmem:[%s3646 + $0xb4] sm:$0xf]
      %v3693 = vld [vmem:[%s3646 + $0xb8] sm:$0xf]
      %v3694 = vld [vmem:[%s3646 + $0xbc] sm:$0xf]
      %v3743 = vunpack.c.l.b16 %v3647
      %v3744 = vunpack.c.l.b16 %v3648
      %v3745 = vunpack.c.l.b16 %v3649
      %v3746 = vunpack.c.l.b16 %v3650
      %v3747 = vunpack.c.l.b16 %v3651
      %v3748 = vunpack.c.l.b16 %v3652
      %v3749 = vunpack.c.l.b16 %v3653
      %v3750 = vunpack.c.l.b16 %v3654
      %v3751 = vunpack.c.l.b16 %v3655
      %v3752 = vunpack.c.l.b16 %v3656
      %v3753 = vunpack.c.l.b16 %v3657
      %v3754 = vunpack.c.l.b16 %v3658
      %v3755 = vunpack.c.l.b16 %v3659
      %v3756 = vunpack.c.l.b16 %v3660
      %v3757 = vunpack.c.l.b16 %v3661
      %v3758 = vunpack.c.l.b16 %v3662
      %v3759 = vunpack.c.l.b16 %v3663
      %v3760 = vunpack.c.l.b16 %v3664
      %v3761 = vunpack.c.l.b16 %v3665
      %v3762 = vunpack.c.l.b16 %v3666
      %v3763 = vunpack.c.l.b16 %v3667
      %v3764 = vunpack.c.l.b16 %v3668
      %v3765 = vunpack.c.l.b16 %v3669
      %v3766 = vunpack.c.l.b16 %v3670
      %v3767 = vunpack.c.l.b16 %v3671
      %v3768 = vunpack.c.l.b16 %v3672
      %v3769 = vunpack.c.l.b16 %v3673
      %v3770 = vunpack.c.l.b16 %v3674
      %v3771 = vunpack.c.l.b16 %v3675
      %v3772 = vunpack.c.l.b16 %v3676
      %v3773 = vunpack.c.l.b16 %v3677
      %v3774 = vunpack.c.l.b16 %v3678
      %v3775 = vunpack.c.l.b16 %v3679
      %v3776 = vunpack.c.l.b16 %v3680
      %v3777 = vunpack.c.l.b16 %v3681
      %v3778 = vunpack.c.l.b16 %v3682
      %v3779 = vunpack.c.l.b16 %v3683
      %v3780 = vunpack.c.l.b16 %v3684
      %v3781 = vunpack.c.l.b16 %v3685
      %v3782 = vunpack.c.l.b16 %v3686
      %v3783 = vunpack.c.l.b16 %v3687
      %v3784 = vunpack.c.l.b16 %v3688
      %v3785 = vunpack.c.l.b16 %v3689
      %v3786 = vunpack.c.l.b16 %v3690
      %v3787 = vunpack.c.l.b16 %v3691
      %v3788 = vunpack.c.l.b16 %v3692
      %v3789 = vunpack.c.l.b16 %v3693
      %v3790 = vunpack.c.l.b16 %v3694
      %v3791 = vpack.c.b16 %v3744, %v3743
      %v3792 = vpack.c.b16 %v3746, %v3745
      %v3793 = vpack.c.b16 %v3748, %v3747
      %v3794 = vpack.c.b16 %v3750, %v3749
      %v3795 = vpack.c.b16 %v3752, %v3751
      %v3796 = vpack.c.b16 %v3754, %v3753
      %v3797 = vpack.c.b16 %v3756, %v3755
      %v3798 = vpack.c.b16 %v3758, %v3757
      %v3799 = vpack.c.b16 %v3760, %v3759
      %v3800 = vpack.c.b16 %v3762, %v3761
      %v3801 = vpack.c.b16 %v3764, %v3763
      %v3802 = vpack.c.b16 %v3766, %v3765
      %v3803 = vpack.c.b16 %v3768, %v3767
      %v3804 = vpack.c.b16 %v3770, %v3769
      %v3805 = vpack.c.b16 %v3772, %v3771
      %v3806 = vpack.c.b16 %v3774, %v3773
      %v3807 = vpack.c.b16 %v3776, %v3775
      %v3808 = vpack.c.b16 %v3778, %v3777
      %v3809 = vpack.c.b16 %v3780, %v3779
      %v3810 = vpack.c.b16 %v3782, %v3781
      %v3811 = vpack.c.b16 %v3784, %v3783
      %v3812 = vpack.c.b16 %v3786, %v3785
      %v3813 = vpack.c.b16 %v3788, %v3787
      %v3814 = vpack.c.b16 %v3790, %v3789
      %3839 = vmatprep.subr.bf16.mxu0 0
      %3840 = vmatpush1.bf16.msra.mxu0 %v3798
      %3841 = vmatprep.subr.bf16.mxu0 0
      %3842 = vmatpush1.bf16.msra.mxu0 %v3797
      %3843 = vmatprep.subr.bf16.mxu0 0
      %3844 = vmatpush1.bf16.msra.mxu0 %v3796
      %3845 = vmatprep.subr.bf16.mxu0 0
      %3846 = vmatpush1.bf16.msra.mxu0 %v3795
      %3847 = vmatprep.subr.bf16.mxu0 0
      %3848 = vmatpush1.bf16.msra.mxu0 %v3794
      %3849 = vmatprep.subr.bf16.mxu0 0
      %3850 = vmatpush1.bf16.msra.mxu0 %v3793
      %3851 = vmatprep.subr.bf16.mxu0 0
      %3852 = vmatpush1.bf16.msra.mxu0 %v3792
      %3853 = vmatprep.subr.bf16.mxu0 0
      %3854 = vmatpush1.bf16.msra.mxu0 %v3791
      %3855 = vmatprep.subr.bf16.mxu0 0
      %3856 = vmatpush2.bf16.msra.mxu0 %v3806
      %3857 = vmatprep.subr.bf16.mxu0 0
      %3858 = vmatpush2.bf16.msra.mxu0 %v3805
      %3859 = vmatprep.subr.bf16.mxu0 0
      %3860 = vmatpush2.bf16.msra.mxu0 %v3804
      %3861 = vmatprep.subr.bf16.mxu0 0
      %3862 = vmatpush2.bf16.msra.mxu0 %v3803
      %3863 = vmatprep.subr.bf16.mxu0 0
      %3864 = vmatpush2.bf16.msra.mxu0 %v3802
      %3865 = vmatprep.subr.bf16.mxu0 0
      %3866 = vmatpush2.bf16.msra.mxu0 %v3801
      %3867 = vmatprep.subr.bf16.mxu0 0
      %3868 = vmatpush2.bf16.msra.mxu0 %v3800
      %3869 = vmatprep.subr.bf16.mxu0 0
      %3870 = vmatpush2.bf16.msra.mxu0 %v3799
      %3871 = vmatprep.mubr.bf16.mxu0 %v3405
      %3872 = vmatmul.mubr.bf16.gmra.mxu0 %v3365
      %v3873 = vpop.f32.mrf.mxu0
      %v3874 = vadd.f32 0.0, %v3873
      %v3875 = vpop.f32.mrf.mxu0
      %v3876 = vpop.f32.mrf.mxu0
      %v3877 = vadd.f32 0.0, %v3876
      %v3878 = vpop.f32.mrf.mxu0
      %3879 = vmatprep.mubr.bf16.mxu0 %v3406
      %3880 = vmatmul.mubr.bf16.gmra.mxu0 %v3366
      %v3881 = vpop.f32.mrf.mxu0
      %v3882 = vadd.f32 0.0, %v3881
      %v3883 = vpop.f32.mrf.mxu0
      %v3884 = vpop.f32.mrf.mxu0
      %v3885 = vadd.f32 0.0, %v3884
      %v3886 = vpop.f32.mrf.mxu0
      %3887 = vmatprep.mubr.bf16.mxu0 %v3407
      %3888 = vmatmul.mubr.bf16.gmra.mxu0 %v3367
      %v3889 = vpop.f32.mrf.mxu0
      %v3890 = vadd.f32 0.0, %v3889
      %v3891 = vpop.f32.mrf.mxu0
      %v3892 = vpop.f32.mrf.mxu0
      %v3893 = vadd.f32 0.0, %v3892
      %v3894 = vpop.f32.mrf.mxu0
      %3895 = vmatprep.mubr.bf16.mxu0 %v3408
      %3896 = vmatmul.mubr.bf16.gmra.mxu0 %v3368
      %v3897 = vpop.f32.mrf.mxu0
      %v3898 = vadd.f32 0.0, %v3897
      %v3899 = vpop.f32.mrf.mxu0
      %v3900 = vpop.f32.mrf.mxu0
      %v3901 = vadd.f32 0.0, %v3900
      %v3902 = vpop.f32.mrf.mxu0
      %3903 = vmatprep.mubr.bf16.mxu0 %v3409
      %3904 = vmatmul.mubr.bf16.gmra.mxu0 %v3369
      %v3905 = vpop.f32.mrf.mxu0
      %v3906 = vadd.f32 0.0, %v3905
      %v3907 = vpop.f32.mrf.mxu0
      %v3908 = vpop.f32.mrf.mxu0
      %v3909 = vadd.f32 0.0, %v3908
      %v3910 = vpop.f32.mrf.mxu0
      %3911 = vmatprep.mubr.bf16.mxu0 %v3410
      %3912 = vmatmul.mubr.bf16.gmra.mxu0 %v3370
      %v3913 = vpop.f32.mrf.mxu0
      %v3914 = vadd.f32 0.0, %v3913
      %v3915 = vpop.f32.mrf.mxu0
      %v3916 = vpop.f32.mrf.mxu0
      %v3917 = vadd.f32 0.0, %v3916
      %v3918 = vpop.f32.mrf.mxu0
      %3919 = vmatprep.mubr.bf16.mxu0 %v3411
      %3920 = vmatmul.mubr.bf16.gmra.mxu0 %v3371
      %v3921 = vpop.f32.mrf.mxu0
      %v3922 = vadd.f32 0.0, %v3921
      %v3923 = vpop.f32.mrf.mxu0
      %v3924 = vpop.f32.mrf.mxu0
      %v3925 = vadd.f32 0.0, %v3924
      %v3926 = vpop.f32.mrf.mxu0
      %3927 = vmatprep.mubr.bf16.mxu0 %v3412
      %3928 = vmatmul.mubr.bf16.gmra.mxu0 %v3372
      %v3929 = vpop.f32.mrf.mxu0
      %v3930 = vadd.f32 0.0, %v3929
      %v3931 = vpop.f32.mrf.mxu0
      %v3932 = vpop.f32.mrf.mxu0
      %v3933 = vadd.f32 0.0, %v3932
      %v3934 = vpop.f32.mrf.mxu0
      %3935 = vmatprep.mubr.bf16.mxu0 %v3413
      %3936 = vmatmul.mubr.bf16.gmra.mxu0 %v3373
      %v3937 = vpop.f32.mrf.mxu0
      %v3938 = vadd.f32 0.0, %v3937
      %v3939 = vpop.f32.mrf.mxu0
      %v3940 = vpop.f32.mrf.mxu0
      %v3941 = vadd.f32 0.0, %v3940
      %v3942 = vpop.f32.mrf.mxu0
      %3943 = vmatprep.mubr.bf16.mxu0 %v3414
      %3944 = vmatmul.mubr.bf16.gmra.mxu0 %v3374
      %v3945 = vpop.f32.mrf.mxu0
      %v3946 = vadd.f32 0.0, %v3945
      %v3947 = vpop.f32.mrf.mxu0
      %v3948 = vpop.f32.mrf.mxu0
      %v3949 = vadd.f32 0.0, %v3948
      %v3950 = vpop.f32.mrf.mxu0
      %3951 = vmatprep.mubr.bf16.mxu0 %v3415
      %3952 = vmatmul.mubr.bf16.gmra.mxu0 %v3375
      %v3953 = vpop.f32.mrf.mxu0
      %v3954 = vadd.f32 0.0, %v3953
      %v3955 = vpop.f32.mrf.mxu0
      %v3956 = vpop.f32.mrf.mxu0
      %v3957 = vadd.f32 0.0, %v3956
      %v3958 = vpop.f32.mrf.mxu0
      %3959 = vmatprep.mubr.bf16.mxu0 %v3416
      %3960 = vmatmul.mubr.bf16.gmra.mxu0 %v3376
      %v3961 = vpop.f32.mrf.mxu0
      %v3962 = vadd.f32 0.0, %v3961
      %v3963 = vpop.f32.mrf.mxu0
      %v3964 = vpop.f32.mrf.mxu0
      %v3965 = vadd.f32 0.0, %v3964
      %v3966 = vpop.f32.mrf.mxu0
      %3967 = vmatprep.mubr.bf16.mxu0 %v3417
      %3968 = vmatmul.mubr.bf16.gmra.mxu0 %v3377
      %v3969 = vpop.f32.mrf.mxu0
      %v3970 = vadd.f32 0.0, %v3969
      %v3971 = vpop.f32.mrf.mxu0
      %v3972 = vpop.f32.mrf.mxu0
      %v3973 = vadd.f32 0.0, %v3972
      %v3974 = vpop.f32.mrf.mxu0
      %3975 = vmatprep.mubr.bf16.mxu0 %v3418
      %3976 = vmatmul.mubr.bf16.gmra.mxu0 %v3378
      %v3977 = vpop.f32.mrf.mxu0
      %v3978 = vadd.f32 0.0, %v3977
      %v3979 = vpop.f32.mrf.mxu0
      %v3980 = vpop.f32.mrf.mxu0
      %v3981 = vadd.f32 0.0, %v3980
      %v3982 = vpop.f32.mrf.mxu0
      %3983 = vmatprep.mubr.bf16.mxu0 %v3419
      %3984 = vmatmul.mubr.bf16.gmra.mxu0 %v3379
      %v3985 = vpop.f32.mrf.mxu0
      %v3986 = vadd.f32 0.0, %v3985
      %v3987 = vpop.f32.mrf.mxu0
      %v3988 = vpop.f32.mrf.mxu0
      %v3989 = vadd.f32 0.0, %v3988
      %v3990 = vpop.f32.mrf.mxu0
      %3991 = vmatprep.mubr.bf16.mxu0 %v3420
      %3992 = vmatmul.mubr.bf16.gmra.mxu0 %v3380
      %v3993 = vpop.f32.mrf.mxu0
      %v3994 = vadd.f32 0.0, %v3993
      %v3995 = vpop.f32.mrf.mxu0
      %v3996 = vpop.f32.mrf.mxu0
      %v3997 = vadd.f32 0.0, %v3996
      %v3998 = vpop.f32.mrf.mxu0
      %3999 = vmatprep.mubr.bf16.mxu0 %v3421
      %4000 = vmatmul.mubr.bf16.gmra.mxu0 %v3381
      %v4001 = vpop.f32.mrf.mxu0
      %v4002 = vadd.f32 0.0, %v4001
      %v4003 = vpop.f32.mrf.mxu0
      %v4004 = vpop.f32.mrf.mxu0
      %v4005 = vadd.f32 0.0, %v4004
      %v4006 = vpop.f32.mrf.mxu0
      %4007 = vmatprep.mubr.bf16.mxu0 %v3422
      %4008 = vmatmul.mubr.bf16.gmra.mxu0 %v3382
      %v4009 = vpop.f32.mrf.mxu0
      %v4010 = vadd.f32 0.0, %v4009
      %v4011 = vpop.f32.mrf.mxu0
      %v4012 = vpop.f32.mrf.mxu0
      %v4013 = vadd.f32 0.0, %v4012
      %v4014 = vpop.f32.mrf.mxu0
      %4015 = vmatprep.mubr.bf16.mxu0 %v3423
      %4016 = vmatmul.mubr.bf16.gmra.mxu0 %v3383
      %v4017 = vpop.f32.mrf.mxu0
      %v4018 = vadd.f32 0.0, %v4017
      %v4019 = vpop.f32.mrf.mxu0
      %v4020 = vpop.f32.mrf.mxu0
      %v4021 = vadd.f32 0.0, %v4020
      %v4022 = vpop.f32.mrf.mxu0
      %4023 = vmatprep.mubr.bf16.mxu0 %v3424
      %4024 = vmatmul.mubr.bf16.gmra.mxu0 %v3384
      %v4025 = vpop.f32.mrf.mxu0
      %v4026 = vadd.f32 0.0, %v4025
      %v4027 = vpop.f32.mrf.mxu0
      %v4028 = vpop.f32.mrf.mxu0
      %v4029 = vadd.f32 0.0, %v4028
      %v4030 = vpop.f32.mrf.mxu0
      %4031 = vmatprep.mubr.bf16.mxu0 %v3425
      %4032 = vmatmul.mubr.bf16.gmra.mxu0 %v3385
      %v4033 = vpop.f32.mrf.mxu0
      %v4034 = vadd.f32 0.0, %v4033
      %v4035 = vpop.f32.mrf.mxu0
      %v4036 = vpop.f32.mrf.mxu0
      %v4037 = vadd.f32 0.0, %v4036
      %v4038 = vpop.f32.mrf.mxu0
      %4039 = vmatprep.mubr.bf16.mxu0 %v3426
      %4040 = vmatmul.mubr.bf16.gmra.mxu0 %v3386
      %v4041 = vpop.f32.mrf.mxu0
      %v4042 = vadd.f32 0.0, %v4041
      %v4043 = vpop.f32.mrf.mxu0
      %v4044 = vpop.f32.mrf.mxu0
      %v4045 = vadd.f32 0.0, %v4044
      %v4046 = vpop.f32.mrf.mxu0
      %4047 = vmatprep.mubr.bf16.mxu0 %v3427
      %4048 = vmatmul.mubr.bf16.gmra.mxu0 %v3387
      %v4049 = vpop.f32.mrf.mxu0
      %v4050 = vadd.f32 0.0, %v4049
      %v4051 = vpop.f32.mrf.mxu0
      %v4052 = vpop.f32.mrf.mxu0
      %v4053 = vadd.f32 0.0, %v4052
      %v4054 = vpop.f32.mrf.mxu0
      %4055 = vmatprep.mubr.bf16.mxu0 %v3428
      %4056 = vmatmul.mubr.bf16.gmra.mxu0 %v3388
      %v4057 = vpop.f32.mrf.mxu0
      %v4058 = vadd.f32 0.0, %v4057
      %v4059 = vpop.f32.mrf.mxu0
      %v4060 = vpop.f32.mrf.mxu0
      %v4061 = vadd.f32 0.0, %v4060
      %v4062 = vpop.f32.mrf.mxu0
      %4063 = vmatprep.mubr.bf16.mxu0 %v3429
      %4064 = vmatmul.mubr.bf16.gmra.mxu0 %v3389
      %v4065 = vpop.f32.mrf.mxu0
      %v4066 = vadd.f32 0.0, %v4065
      %v4067 = vpop.f32.mrf.mxu0
      %v4068 = vpop.f32.mrf.mxu0
      %v4069 = vadd.f32 0.0, %v4068
      %v4070 = vpop.f32.mrf.mxu0
      %4071 = vmatprep.mubr.bf16.mxu0 %v3430
      %4072 = vmatmul.mubr.bf16.gmra.mxu0 %v3390
      %v4073 = vpop.f32.mrf.mxu0
      %v4074 = vadd.f32 0.0, %v4073
      %v4075 = vpop.f32.mrf.mxu0
      %v4076 = vpop.f32.mrf.mxu0
      %v4077 = vadd.f32 0.0, %v4076
      %v4078 = vpop.f32.mrf.mxu0
      %4079 = vmatprep.mubr.bf16.mxu0 %v3431
      %4080 = vmatmul.mubr.bf16.gmra.mxu0 %v3391
      %v4081 = vpop.f32.mrf.mxu0
      %v4082 = vadd.f32 0.0, %v4081
      %v4083 = vpop.f32.mrf.mxu0
      %v4084 = vpop.f32.mrf.mxu0
      %v4085 = vadd.f32 0.0, %v4084
      %v4086 = vpop.f32.mrf.mxu0
      %4087 = vmatprep.mubr.bf16.mxu0 %v3432
      %4088 = vmatmul.mubr.bf16.gmra.mxu0 %v3392
      %v4089 = vpop.f32.mrf.mxu0
      %v4090 = vadd.f32 0.0, %v4089
      %v4091 = vpop.f32.mrf.mxu0
      %v4092 = vpop.f32.mrf.mxu0
      %v4093 = vadd.f32 0.0, %v4092
      %v4094 = vpop.f32.mrf.mxu0
      %4095 = vmatprep.mubr.bf16.mxu0 %v3433
      %4096 = vmatmul.mubr.bf16.gmra.mxu0 %v3393
      %v4097 = vpop.f32.mrf.mxu0
      %v4098 = vadd.f32 0.0, %v4097
      %v4099 = vpop.f32.mrf.mxu0
      %v4100 = vpop.f32.mrf.mxu0
      %v4101 = vadd.f32 0.0, %v4100
      %v4102 = vpop.f32.mrf.mxu0
      %4103 = vmatprep.mubr.bf16.mxu0 %v3434
      %4104 = vmatmul.mubr.bf16.gmra.mxu0 %v3394
      %v4105 = vpop.f32.mrf.mxu0
      %v4106 = vadd.f32 0.0, %v4105
      %v4107 = vpop.f32.mrf.mxu0
      %v4108 = vpop.f32.mrf.mxu0
      %v4109 = vadd.f32 0.0, %v4108
      %v4110 = vpop.f32.mrf.mxu0
      %4111 = vmatprep.mubr.bf16.mxu0 %v3435
      %4112 = vmatmul.mubr.bf16.gmra.mxu0 %v3395
      %v4113 = vpop.f32.mrf.mxu0
      %v4114 = vadd.f32 0.0, %v4113
      %v4115 = vpop.f32.mrf.mxu0
      %v4116 = vpop.f32.mrf.mxu0
      %v4117 = vadd.f32 0.0, %v4116
      %v4118 = vpop.f32.mrf.mxu0
      %4119 = vmatprep.mubr.bf16.mxu0 %v3436
      %4120 = vmatmul.mubr.bf16.gmra.mxu0 %v3396
      %v4121 = vpop.f32.mrf.mxu0
      %v4122 = vadd.f32 0.0, %v4121
      %v4123 = vpop.f32.mrf.mxu0
      %v4124 = vpop.f32.mrf.mxu0
      %v4125 = vadd.f32 0.0, %v4124
      %v4126 = vpop.f32.mrf.mxu0
      %4127 = vmatprep.mubr.bf16.mxu0 %v3437
      %4128 = vmatmul.mubr.bf16.gmra.mxu0 %v3397
      %v4129 = vpop.f32.mrf.mxu0
      %v4130 = vadd.f32 0.0, %v4129
      %v4131 = vpop.f32.mrf.mxu0
      %v4132 = vpop.f32.mrf.mxu0
      %v4133 = vadd.f32 0.0, %v4132
      %v4134 = vpop.f32.mrf.mxu0
      %4135 = vmatprep.mubr.bf16.mxu0 %v3438
      %4136 = vmatmul.mubr.bf16.gmra.mxu0 %v3398
      %v4137 = vpop.f32.mrf.mxu0
      %v4138 = vadd.f32 0.0, %v4137
      %v4139 = vpop.f32.mrf.mxu0
      %v4140 = vpop.f32.mrf.mxu0
      %v4141 = vadd.f32 0.0, %v4140
      %v4142 = vpop.f32.mrf.mxu0
      %4143 = vmatprep.mubr.bf16.mxu0 %v3439
      %4144 = vmatmul.mubr.bf16.gmra.mxu0 %v3399
      %v4145 = vpop.f32.mrf.mxu0
      %v4146 = vadd.f32 0.0, %v4145
      %v4147 = vpop.f32.mrf.mxu0
      %v4148 = vpop.f32.mrf.mxu0
      %v4149 = vadd.f32 0.0, %v4148
      %v4150 = vpop.f32.mrf.mxu0
      %4151 = vmatprep.mubr.bf16.mxu0 %v3440
      %4152 = vmatmul.mubr.bf16.gmra.mxu0 %v3400
      %v4153 = vpop.f32.mrf.mxu0
      %v4154 = vadd.f32 0.0, %v4153
      %v4155 = vpop.f32.mrf.mxu0
      %v4156 = vpop.f32.mrf.mxu0
      %v4157 = vadd.f32 0.0, %v4156
      %v4158 = vpop.f32.mrf.mxu0
      %4159 = vmatprep.mubr.bf16.mxu0 %v3441
      %4160 = vmatmul.mubr.bf16.gmra.mxu0 %v3401
      %v4161 = vpop.f32.mrf.mxu0
      %v4162 = vadd.f32 0.0, %v4161
      %v4163 = vpop.f32.mrf.mxu0
      %v4164 = vpop.f32.mrf.mxu0
      %v4165 = vadd.f32 0.0, %v4164
      %v4166 = vpop.f32.mrf.mxu0
      %4167 = vmatprep.mubr.bf16.mxu0 %v3442
      %4168 = vmatmul.mubr.bf16.gmra.mxu0 %v3402
      %v4169 = vpop.f32.mrf.mxu0
      %v4170 = vadd.f32 0.0, %v4169
      %v4171 = vpop.f32.mrf.mxu0
      %v4172 = vpop.f32.mrf.mxu0
      %v4173 = vadd.f32 0.0, %v4172
      %v4174 = vpop.f32.mrf.mxu0
      %4175 = vmatprep.mubr.bf16.mxu0 %v3443
      %4176 = vmatmul.mubr.bf16.gmra.mxu0 %v3403
      %v4177 = vpop.f32.mrf.mxu0
      %v4178 = vadd.f32 0.0, %v4177
      %v4179 = vpop.f32.mrf.mxu0
      %v4180 = vpop.f32.mrf.mxu0
      %v4181 = vadd.f32 0.0, %v4180
      %v4182 = vpop.f32.mrf.mxu0
      %4183 = vmatprep.mubr.bf16.mxu0 %v3444
      %4184 = vmatmul.mubr.bf16.gmra.mxu0 %v3404
      %v4185 = vpop.f32.mrf.mxu0
      %v4186 = vadd.f32 0.0, %v4185
      %v4187 = vpop.f32.mrf.mxu0
      %v4188 = vpop.f32.mrf.mxu0
      %v4189 = vadd.f32 0.0, %v4188
      %v4190 = vpop.f32.mrf.mxu0
      %4191 = vdwg.mxu0
      %4192 = vmatprep.subr.bf16.mxu0 0
      %4193 = vmatpush1.bf16.msra.mxu0 %v3814
      %4194 = vmatprep.subr.bf16.mxu0 0
      %4195 = vmatpush1.bf16.msra.mxu0 %v3813
      %4196 = vmatprep.subr.bf16.mxu0 0
      %4197 = vmatpush1.bf16.msra.mxu0 %v3812
      %4198 = vmatprep.subr.bf16.mxu0 0
      %4199 = vmatpush1.bf16.msra.mxu0 %v3811
      %4200 = vmatprep.subr.bf16.mxu0 0
      %4201 = vmatpush1.bf16.msra.mxu0 %v3810
      %4202 = vmatprep.subr.bf16.mxu0 0
      %4203 = vmatpush1.bf16.msra.mxu0 %v3809
      %4204 = vmatprep.subr.bf16.mxu0 0
      %4205 = vmatpush1.bf16.msra.mxu0 %v3808
      %4206 = vmatprep.subr.bf16.mxu0 0
      %4207 = vmatpush1.bf16.msra.mxu0 %v3807
      %4208 = vmatprep.subr.bf16.mxu0 0
      %4209 = vmatpush2.bf16.msra.mxu0 0
      %4210 = vmatprep.subr.bf16.mxu0 0
      %4211 = vmatpush2.bf16.msra.mxu0 0
      %4212 = vmatprep.subr.bf16.mxu0 0
      %4213 = vmatpush2.bf16.msra.mxu0 0
      %4214 = vmatprep.subr.bf16.mxu0 0
      %4215 = vmatpush2.bf16.msra.mxu0 0
      %4216 = vmatprep.subr.bf16.mxu0 0
      %4217 = vmatpush2.bf16.msra.mxu0 0
      %4218 = vmatprep.subr.bf16.mxu0 0
      %4219 = vmatpush2.bf16.msra.mxu0 0
      %4220 = vmatprep.subr.bf16.mxu0 0
      %4221 = vmatpush2.bf16.msra.mxu0 0
      %4222 = vmatprep.subr.bf16.mxu0 0
      %4223 = vmatpush2.bf16.msra.mxu0 0
      %4224 = vmatprep.mubr.bf16.mxu0 0
      %4225 = vmatmul.mubr.bf16.gmra.mxu0 %v3606
      %v4226 = vpop.f32.mrf.mxu0
      %v4227 = vadd.f32 %v3874, %v4226
      %v4228 = vpop.f32.mrf.mxu0
      %v4229 = vpop.f32.mrf.mxu0
      %v4230 = vadd.f32 %v3877, %v4229
      %v4231 = vpop.f32.mrf.mxu0
      %4232 = vmatprep.mubr.bf16.mxu0 0
      %4233 = vmatmul.mubr.bf16.gmra.mxu0 %v3607
      %v4234 = vpop.f32.mrf.mxu0
      %v4235 = vadd.f32 %v3882, %v4234
      %v4236 = vpop.f32.mrf.mxu0
      %v4237 = vpop.f32.mrf.mxu0
      %v4238 = vadd.f32 %v3885, %v4237
      %v4239 = vpop.f32.mrf.mxu0
      %4240 = vmatprep.mubr.bf16.mxu0 0
      %4241 = vmatmul.mubr.bf16.gmra.mxu0 %v3608
      %v4242 = vpop.f32.mrf.mxu0
      %v4243 = vadd.f32 %v3890, %v4242
      %v4244 = vpop.f32.mrf.mxu0
      %v4245 = vpop.f32.mrf.mxu0
      %v4246 = vadd.f32 %v3893, %v4245
      %v4247 = vpop.f32.mrf.mxu0
      %4248 = vmatprep.mubr.bf16.mxu0 0
      %4249 = vmatmul.mubr.bf16.gmra.mxu0 %v3609
      %v4250 = vpop.f32.mrf.mxu0
      %v4251 = vadd.f32 %v3898, %v4250
      %v4252 = vpop.f32.mrf.mxu0
      %v4253 = vpop.f32.mrf.mxu0
      %v4254 = vadd.f32 %v3901, %v4253
      %v4255 = vpop.f32.mrf.mxu0
      %4256 = vmatprep.mubr.bf16.mxu0 0
      %4257 = vmatmul.mubr.bf16.gmra.mxu0 %v3610
      %v4258 = vpop.f32.mrf.mxu0
      %v4259 = vadd.f32 %v3906, %v4258
      %v4260 = vpop.f32.mrf.mxu0
      %v4261 = vpop.f32.mrf.mxu0
      %v4262 = vadd.f32 %v3909, %v4261
      %v4263 = vpop.f32.mrf.mxu0
      %4264 = vmatprep.mubr.bf16.mxu0 0
      %4265 = vmatmul.mubr.bf16.gmra.mxu0 %v3611
      %v4266 = vpop.f32.mrf.mxu0
      %v4267 = vadd.f32 %v3914, %v4266
      %v4268 = vpop.f32.mrf.mxu0
      %v4269 = vpop.f32.mrf.mxu0
      %v4270 = vadd.f32 %v3917, %v4269
      %v4271 = vpop.f32.mrf.mxu0
      %4272 = vmatprep.mubr.bf16.mxu0 0
      %4273 = vmatmul.mubr.bf16.gmra.mxu0 %v3612
      %v4274 = vpop.f32.mrf.mxu0
      %v4275 = vadd.f32 %v3922, %v4274
      %v4276 = vpop.f32.mrf.mxu0
      %v4277 = vpop.f32.mrf.mxu0
      %v4278 = vadd.f32 %v3925, %v4277
      %v4279 = vpop.f32.mrf.mxu0
      %4280 = vmatprep.mubr.bf16.mxu0 0
      %4281 = vmatmul.mubr.bf16.gmra.mxu0 %v3613
      %v4282 = vpop.f32.mrf.mxu0
      %v4283 = vadd.f32 %v3930, %v4282
      %v4284 = vpop.f32.mrf.mxu0
      %v4285 = vpop.f32.mrf.mxu0
      %v4286 = vadd.f32 %v3933, %v4285
      %v4287 = vpop.f32.mrf.mxu0
      %4288 = vmatprep.mubr.bf16.mxu0 0
      %4289 = vmatmul.mubr.bf16.gmra.mxu0 %v3614
      %v4290 = vpop.f32.mrf.mxu0
      %v4291 = vadd.f32 %v3938, %v4290
      %v4292 = vpop.f32.mrf.mxu0
      %v4293 = vpop.f32.mrf.mxu0
      %v4294 = vadd.f32 %v3941, %v4293
      %v4295 = vpop.f32.mrf.mxu0
      %4296 = vmatprep.mubr.bf16.mxu0 0
      %4297 = vmatmul.mubr.bf16.gmra.mxu0 %v3615
      %v4298 = vpop.f32.mrf.mxu0
      %v4299 = vadd.f32 %v3946, %v4298
      %v4300 = vpop.f32.mrf.mxu0
      %v4301 = vpop.f32.mrf.mxu0
      %v4302 = vadd.f32 %v3949, %v4301
      %v4303 = vpop.f32.mrf.mxu0
      %4304 = vmatprep.mubr.bf16.mxu0 0
      %4305 = vmatmul.mubr.bf16.gmra.mxu0 %v3616
      %v4306 = vpop.f32.mrf.mxu0
      %v4307 = vadd.f32 %v3954, %v4306
      %v4308 = vpop.f32.mrf.mxu0
      %v4309 = vpop.f32.mrf.mxu0
      %v4310 = vadd.f32 %v3957, %v4309
      %v4311 = vpop.f32.mrf.mxu0
      %4312 = vmatprep.mubr.bf16.mxu0 0
      %4313 = vmatmul.mubr.bf16.gmra.mxu0 %v3617
      %v4314 = vpop.f32.mrf.mxu0
      %v4315 = vadd.f32 %v3962, %v4314
      %v4316 = vpop.f32.mrf.mxu0
      %v4317 = vpop.f32.mrf.mxu0
      %v4318 = vadd.f32 %v3965, %v4317
      %v4319 = vpop.f32.mrf.mxu0
      %4320 = vmatprep.mubr.bf16.mxu0 0
      %4321 = vmatmul.mubr.bf16.gmra.mxu0 %v3618
      %v4322 = vpop.f32.mrf.mxu0
      %v4323 = vadd.f32 %v3970, %v4322
      %v4324 = vpop.f32.mrf.mxu0
      %v4325 = vpop.f32.mrf.mxu0
      %v4326 = vadd.f32 %v3973, %v4325
      %v4327 = vpop.f32.mrf.mxu0
      %4328 = vmatprep.mubr.bf16.mxu0 0
      %4329 = vmatmul.mubr.bf16.gmra.mxu0 %v3619
      %v4330 = vpop.f32.mrf.mxu0
      %v4331 = vadd.f32 %v3978, %v4330
      %v4332 = vpop.f32.mrf.mxu0
      %v4333 = vpop.f32.mrf.mxu0
      %v4334 = vadd.f32 %v3981, %v4333
      %v4335 = vpop.f32.mrf.mxu0
      %4336 = vmatprep.mubr.bf16.mxu0 0
      %4337 = vmatmul.mubr.bf16.gmra.mxu0 %v3620
      %v4338 = vpop.f32.mrf.mxu0
      %v4339 = vadd.f32 %v3986, %v4338
      %v4340 = vpop.f32.mrf.mxu0
      %v4341 = vpop.f32.mrf.mxu0
      %v4342 = vadd.f32 %v3989, %v4341
      %v4343 = vpop.f32.mrf.mxu0
      %4344 = vmatprep.mubr.bf16.mxu0 0
      %4345 = vmatmul.mubr.bf16.gmra.mxu0 %v3621
      %v4346 = vpop.f32.mrf.mxu0
      %v4347 = vadd.f32 %v3994, %v4346
      %v4348 = vpop.f32.mrf.mxu0
      %v4349 = vpop.f32.mrf.mxu0
      %v4350 = vadd.f32 %v3997, %v4349
      %v4351 = vpop.f32.mrf.mxu0
      %4352 = vmatprep.mubr.bf16.mxu0 0
      %4353 = vmatmul.mubr.bf16.gmra.mxu0 %v3622
      %v4354 = vpop.f32.mrf.mxu0
      %v4355 = vadd.f32 %v4002, %v4354
      %v4356 = vpop.f32.mrf.mxu0
      %v4357 = vpop.f32.mrf.mxu0
      %v4358 = vadd.f32 %v4005, %v4357
      %v4359 = vpop.f32.mrf.mxu0
      %4360 = vmatprep.mubr.bf16.mxu0 0
      %4361 = vmatmul.mubr.bf16.gmra.mxu0 %v3623
      %v4362 = vpop.f32.mrf.mxu0
      %v4363 = vadd.f32 %v4010, %v4362
      %v4364 = vpop.f32.mrf.mxu0
      %v4365 = vpop.f32.mrf.mxu0
      %v4366 = vadd.f32 %v4013, %v4365
      %v4367 = vpop.f32.mrf.mxu0
      %4368 = vmatprep.mubr.bf16.mxu0 0
      %4369 = vmatmul.mubr.bf16.gmra.mxu0 %v3624
      %v4370 = vpop.f32.mrf.mxu0
      %v4371 = vadd.f32 %v4018, %v4370
      %v4372 = vpop.f32.mrf.mxu0
      %v4373 = vpop.f32.mrf.mxu0
      %v4374 = vadd.f32 %v4021, %v4373
      %v4375 = vpop.f32.mrf.mxu0
      %4376 = vmatprep.mubr.bf16.mxu0 0
      %4377 = vmatmul.mubr.bf16.gmra.mxu0 %v3625
      %v4378 = vpop.f32.mrf.mxu0
      %v4379 = vadd.f32 %v4026, %v4378
      %v4380 = vpop.f32.mrf.mxu0
      %v4381 = vpop.f32.mrf.mxu0
      %v4382 = vadd.f32 %v4029, %v4381
      %v4383 = vpop.f32.mrf.mxu0
      %4384 = vmatprep.mubr.bf16.mxu0 0
      %4385 = vmatmul.mubr.bf16.gmra.mxu0 %v3626
      %v4386 = vpop.f32.mrf.mxu0
      %v4387 = vadd.f32 %v4034, %v4386
      %v4388 = vpop.f32.mrf.mxu0
      %v4389 = vpop.f32.mrf.mxu0
      %v4390 = vadd.f32 %v4037, %v4389
      %v4391 = vpop.f32.mrf.mxu0
      %4392 = vmatprep.mubr.bf16.mxu0 0
      %4393 = vmatmul.mubr.bf16.gmra.mxu0 %v3627
      %v4394 = vpop.f32.mrf.mxu0
      %v4395 = vadd.f32 %v4042, %v4394
      %v4396 = vpop.f32.mrf.mxu0
      %v4397 = vpop.f32.mrf.mxu0
      %v4398 = vadd.f32 %v4045, %v4397
      %v4399 = vpop.f32.mrf.mxu0
      %4400 = vmatprep.mubr.bf16.mxu0 0
      %4401 = vmatmul.mubr.bf16.gmra.mxu0 %v3628
      %v4402 = vpop.f32.mrf.mxu0
      %v4403 = vadd.f32 %v4050, %v4402
      %v4404 = vpop.f32.mrf.mxu0
      %v4405 = vpop.f32.mrf.mxu0
      %v4406 = vadd.f32 %v4053, %v4405
      %v4407 = vpop.f32.mrf.mxu0
      %4408 = vmatprep.mubr.bf16.mxu0 0
      %4409 = vmatmul.mubr.bf16.gmra.mxu0 %v3629
      %v4410 = vpop.f32.mrf.mxu0
      %v4411 = vadd.f32 %v4058, %v4410
      %v4412 = vpop.f32.mrf.mxu0
      %v4413 = vpop.f32.mrf.mxu0
      %v4414 = vadd.f32 %v4061, %v4413
      %v4415 = vpop.f32.mrf.mxu0
      %4416 = vmatprep.mubr.bf16.mxu0 0
      %4417 = vmatmul.mubr.bf16.gmra.mxu0 %v3630
      %v4418 = vpop.f32.mrf.mxu0
      %v4419 = vadd.f32 %v4066, %v4418
      %v4420 = vpop.f32.mrf.mxu0
      %v4421 = vpop.f32.mrf.mxu0
      %v4422 = vadd.f32 %v4069, %v4421
      %v4423 = vpop.f32.mrf.mxu0
      %4424 = vmatprep.mubr.bf16.mxu0 0
      %4425 = vmatmul.mubr.bf16.gmra.mxu0 %v3631
      %v4426 = vpop.f32.mrf.mxu0
      %v4427 = vadd.f32 %v4074, %v4426
      %v4428 = vpop.f32.mrf.mxu0
      %v4429 = vpop.f32.mrf.mxu0
      %v4430 = vadd.f32 %v4077, %v4429
      %v4431 = vpop.f32.mrf.mxu0
      %4432 = vmatprep.mubr.bf16.mxu0 0
      %4433 = vmatmul.mubr.bf16.gmra.mxu0 %v3632
      %v4434 = vpop.f32.mrf.mxu0
      %v4435 = vadd.f32 %v4082, %v4434
      %v4436 = vpop.f32.mrf.mxu0
      %v4437 = vpop.f32.mrf.mxu0
      %v4438 = vadd.f32 %v4085, %v4437
      %v4439 = vpop.f32.mrf.mxu0
      %4440 = vmatprep.mubr.bf16.mxu0 0
      %4441 = vmatmul.mubr.bf16.gmra.mxu0 %v3633
      %v4442 = vpop.f32.mrf.mxu0
      %v4443 = vadd.f32 %v4090, %v4442
      %v4444 = vpop.f32.mrf.mxu0
      %v4445 = vpop.f32.mrf.mxu0
      %v4446 = vadd.f32 %v4093, %v4445
      %v4447 = vpop.f32.mrf.mxu0
      %4448 = vmatprep.mubr.bf16.mxu0 0
      %4449 = vmatmul.mubr.bf16.gmra.mxu0 %v3634
      %v4450 = vpop.f32.mrf.mxu0
      %v4451 = vadd.f32 %v4098, %v4450
      %v4452 = vpop.f32.mrf.mxu0
      %v4453 = vpop.f32.mrf.mxu0
      %v4454 = vadd.f32 %v4101, %v4453
      %v4455 = vpop.f32.mrf.mxu0
      %4456 = vmatprep.mubr.bf16.mxu0 0
      %4457 = vmatmul.mubr.bf16.gmra.mxu0 %v3635
      %v4458 = vpop.f32.mrf.mxu0
      %v4459 = vadd.f32 %v4106, %v4458
      %v4460 = vpop.f32.mrf.mxu0
      %v4461 = vpop.f32.mrf.mxu0
      %v4462 = vadd.f32 %v4109, %v4461
      %v4463 = vpop.f32.mrf.mxu0
      %4464 = vmatprep.mubr.bf16.mxu0 0
      %4465 = vmatmul.mubr.bf16.gmra.mxu0 %v3636
      %v4466 = vpop.f32.mrf.mxu0
      %v4467 = vadd.f32 %v4114, %v4466
      %v4468 = vpop.f32.mrf.mxu0
      %v4469 = vpop.f32.mrf.mxu0
      %v4470 = vadd.f32 %v4117, %v4469
      %v4471 = vpop.f32.mrf.mxu0
      %4472 = vmatprep.mubr.bf16.mxu0 0
      %4473 = vmatmul.mubr.bf16.gmra.mxu0 %v3637
      %v4474 = vpop.f32.mrf.mxu0
      %v4475 = vadd.f32 %v4122, %v4474
      %v4476 = vpop.f32.mrf.mxu0
      %v4477 = vpop.f32.mrf.mxu0
      %v4478 = vadd.f32 %v4125, %v4477
      %v4479 = vpop.f32.mrf.mxu0
      %4480 = vmatprep.mubr.bf16.mxu0 0
      %4481 = vmatmul.mubr.bf16.gmra.mxu0 %v3638
      %v4482 = vpop.f32.mrf.mxu0
      %v4483 = vadd.f32 %v4130, %v4482
      %v4484 = vpop.f32.mrf.mxu0
      %v4485 = vpop.f32.mrf.mxu0
      %v4486 = vadd.f32 %v4133, %v4485
      %v4487 = vpop.f32.mrf.mxu0
      %4488 = vmatprep.mubr.bf16.mxu0 0
      %4489 = vmatmul.mubr.bf16.gmra.mxu0 %v3639
      %v4490 = vpop.f32.mrf.mxu0
      %v4491 = vadd.f32 %v4138, %v4490
      %v4492 = vpop.f32.mrf.mxu0
      %v4493 = vpop.f32.mrf.mxu0
      %v4494 = vadd.f32 %v4141, %v4493
      %v4495 = vpop.f32.mrf.mxu0
      %4496 = vmatprep.mubr.bf16.mxu0 0
      %4497 = vmatmul.mubr.bf16.gmra.mxu0 %v3640
      %v4498 = vpop.f32.mrf.mxu0
      %v4499 = vadd.f32 %v4146, %v4498
      %v4500 = vpop.f32.mrf.mxu0
      %v4501 = vpop.f32.mrf.mxu0
      %v4502 = vadd.f32 %v4149, %v4501
      %v4503 = vpop.f32.mrf.mxu0
      %4504 = vmatprep.mubr.bf16.mxu0 0
      %4505 = vmatmul.mubr.bf16.gmra.mxu0 %v3641
      %v4506 = vpop.f32.mrf.mxu0
      %v4507 = vadd.f32 %v4154, %v4506
      %v4508 = vpop.f32.mrf.mxu0
      %v4509 = vpop.f32.mrf.mxu0
      %v4510 = vadd.f32 %v4157, %v4509
      %v4511 = vpop.f32.mrf.mxu0
      %4512 = vmatprep.mubr.bf16.mxu0 0
      %4513 = vmatmul.mubr.bf16.gmra.mxu0 %v3642
      %v4514 = vpop.f32.mrf.mxu0
      %v4515 = vadd.f32 %v4162, %v4514
      %v4516 = vpop.f32.mrf.mxu0
      %v4517 = vpop.f32.mrf.mxu0
      %v4518 = vadd.f32 %v4165, %v4517
      %v4519 = vpop.f32.mrf.mxu0
      %4520 = vmatprep.mubr.bf16.mxu0 0
      %4521 = vmatmul.mubr.bf16.gmra.mxu0 %v3643
      %v4522 = vpop.f32.mrf.mxu0
      %v4523 = vadd.f32 %v4170, %v4522
      %v4524 = vpop.f32.mrf.mxu0
      %v4525 = vpop.f32.mrf.mxu0
      %v4526 = vadd.f32 %v4173, %v4525
      %v4527 = vpop.f32.mrf.mxu0
      %4528 = vmatprep.mubr.bf16.mxu0 0
      %4529 = vmatmul.mubr.bf16.gmra.mxu0 %v3644
      %v4530 = vpop.f32.mrf.mxu0
      %v4531 = vadd.f32 %v4178, %v4530
      %v4532 = vpop.f32.mrf.mxu0
      %v4533 = vpop.f32.mrf.mxu0
      %v4534 = vadd.f32 %v4181, %v4533
      %v4535 = vpop.f32.mrf.mxu0
      %4536 = vmatprep.mubr.bf16.mxu0 0
      %4537 = vmatmul.mubr.bf16.gmra.mxu0 %v3645
      %v4538 = vpop.f32.mrf.mxu0
      %v4539 = vadd.f32 %v4186, %v4538
      %v4540 = vpop.f32.mrf.mxu0
      %v4541 = vpop.f32.mrf.mxu0
      %v4542 = vadd.f32 %v4189, %v4541
      %v4543 = vpop.f32.mrf.mxu0
      %4544 = vdwg.mxu0
      %s4545 = scalar_lea.vmem %s5, 1
      %v4546 = vld [vmem:[%s4545] sm:$0x1]
      %v4548 = vlaneseq
      %v4549 = vshrl.u32 %v4548, 7
      %v4550 = vsub.s32 0, %v4549
      %v4551 = vrot.slane %v4546, %v4550
      %v4553 = vmul.f32 %v4227, %v4551
      %v4554 = vmul.f32 %v4230, %v4551
      %v4555 = vmul.f32 %v4235, %v4551
      %v4556 = vmul.f32 %v4238, %v4551
      %v4557 = vmul.f32 %v4243, %v4551
      %v4558 = vmul.f32 %v4246, %v4551
      %v4559 = vmul.f32 %v4251, %v4551
      %v4560 = vmul.f32 %v4254, %v4551
      %v4561 = vmul.f32 %v4259, %v4551
      %v4562 = vmul.f32 %v4262, %v4551
      %v4563 = vmul.f32 %v4267, %v4551
      %v4564 = vmul.f32 %v4270, %v4551
      %v4565 = vmul.f32 %v4275, %v4551
      %v4566 = vmul.f32 %v4278, %v4551
      %v4567 = vmul.f32 %v4283, %v4551
      %v4568 = vmul.f32 %v4286, %v4551
      %v4569 = vmul.f32 %v4291, %v4551
      %v4570 = vmul.f32 %v4294, %v4551
      %v4571 = vmul.f32 %v4299, %v4551
      %v4572 = vmul.f32 %v4302, %v4551
      %v4573 = vmul.f32 %v4307, %v4551
      %v4574 = vmul.f32 %v4310, %v4551
      %v4575 = vmul.f32 %v4315, %v4551
      %v4576 = vmul.f32 %v4318, %v4551
      %v4577 = vmul.f32 %v4323, %v4551
      %v4578 = vmul.f32 %v4326, %v4551
      %v4579 = vmul.f32 %v4331, %v4551
      %v4580 = vmul.f32 %v4334, %v4551
      %v4581 = vmul.f32 %v4339, %v4551
      %v4582 = vmul.f32 %v4342, %v4551
      %v4583 = vmul.f32 %v4347, %v4551
      %v4584 = vmul.f32 %v4350, %v4551
      %v4585 = vmul.f32 %v4355, %v4551
      %v4586 = vmul.f32 %v4358, %v4551
      %v4587 = vmul.f32 %v4363, %v4551
      %v4588 = vmul.f32 %v4366, %v4551
      %v4589 = vmul.f32 %v4371, %v4551
      %v4590 = vmul.f32 %v4374, %v4551
      %v4591 = vmul.f32 %v4379, %v4551
      %v4592 = vmul.f32 %v4382, %v4551
      %v4593 = vmul.f32 %v4387, %v4551
      %v4594 = vmul.f32 %v4390, %v4551
      %v4595 = vmul.f32 %v4395, %v4551
      %v4596 = vmul.f32 %v4398, %v4551
      %v4597 = vmul.f32 %v4403, %v4551
      %v4598 = vmul.f32 %v4406, %v4551
      %v4599 = vmul.f32 %v4411, %v4551
      %v4600 = vmul.f32 %v4414, %v4551
      %v4601 = vmul.f32 %v4419, %v4551
      %v4602 = vmul.f32 %v4422, %v4551
      %v4603 = vmul.f32 %v4427, %v4551
      %v4604 = vmul.f32 %v4430, %v4551
      %v4605 = vmul.f32 %v4435, %v4551
      %v4606 = vmul.f32 %v4438, %v4551
      %v4607 = vmul.f32 %v4443, %v4551
      %v4608 = vmul.f32 %v4446, %v4551
      %v4609 = vmul.f32 %v4451, %v4551
      %v4610 = vmul.f32 %v4454, %v4551
      %v4611 = vmul.f32 %v4459, %v4551
      %v4612 = vmul.f32 %v4462, %v4551
      %v4613 = vmul.f32 %v4467, %v4551
      %v4614 = vmul.f32 %v4470, %v4551
      %v4615 = vmul.f32 %v4475, %v4551
      %v4616 = vmul.f32 %v4478, %v4551
      %v4617 = vmul.f32 %v4483, %v4551
      %v4618 = vmul.f32 %v4486, %v4551
      %v4619 = vmul.f32 %v4491, %v4551
      %v4620 = vmul.f32 %v4494, %v4551
      %v4621 = vmul.f32 %v4499, %v4551
      %v4622 = vmul.f32 %v4502, %v4551
      %v4623 = vmul.f32 %v4507, %v4551
      %v4624 = vmul.f32 %v4510, %v4551
      %v4625 = vmul.f32 %v4515, %v4551
      %v4626 = vmul.f32 %v4518, %v4551
      %v4627 = vmul.f32 %v4523, %v4551
      %v4628 = vmul.f32 %v4526, %v4551
      %v4629 = vmul.f32 %v4531, %v4551
      %v4630 = vmul.f32 %v4534, %v4551
      %v4631 = vmul.f32 %v4539, %v4551
      %v4632 = vmul.f32 %v4542, %v4551
      %s4633 = scalar_lea.vmem %s6, 1
      %v4634 = vld [vmem:[%s4633] sm:$0x1]
      %v4636 = vlaneseq
      %v4637 = vshrl.u32 %v4636, 7
      %v4638 = vsub.s32 0, %v4637
      %v4639 = vrot.slane %v4634, %v4638
      %v4641 = vadd.f32 %v4553, %v4639
      %v4642 = vadd.f32 %v4554, %v4639
      %v4643 = vadd.f32 %v4555, %v4639
      %v4644 = vadd.f32 %v4556, %v4639
      %v4645 = vadd.f32 %v4557, %v4639
      %v4646 = vadd.f32 %v4558, %v4639
      %v4647 = vadd.f32 %v4559, %v4639
      %v4648 = vadd.f32 %v4560, %v4639
      %v4649 = vadd.f32 %v4561, %v4639
      %v4650 = vadd.f32 %v4562, %v4639
      %v4651 = vadd.f32 %v4563, %v4639
      %v4652 = vadd.f32 %v4564, %v4639
      %v4653 = vadd.f32 %v4565, %v4639
      %v4654 = vadd.f32 %v4566, %v4639
      %v4655 = vadd.f32 %v4567, %v4639
      %v4656 = vadd.f32 %v4568, %v4639
      %v4657 = vadd.f32 %v4569, %v4639
      %v4658 = vadd.f32 %v4570, %v4639
      %v4659 = vadd.f32 %v4571, %v4639
      %v4660 = vadd.f32 %v4572, %v4639
      %v4661 = vadd.f32 %v4573, %v4639
      %v4662 = vadd.f32 %v4574, %v4639
      %v4663 = vadd.f32 %v4575, %v4639
      %v4664 = vadd.f32 %v4576, %v4639
      %v4665 = vadd.f32 %v4577, %v4639
      %v4666 = vadd.f32 %v4578, %v4639
      %v4667 = vadd.f32 %v4579, %v4639
      %v4668 = vadd.f32 %v4580, %v4639
      %v4669 = vadd.f32 %v4581, %v4639
      %v4670 = vadd.f32 %v4582, %v4639
      %v4671 = vadd.f32 %v4583, %v4639
      %v4672 = vadd.f32 %v4584, %v4639
      %v4673 = vadd.f32 %v4585, %v4639
      %v4674 = vadd.f32 %v4586, %v4639
      %v4675 = vadd.f32 %v4587, %v4639
      %v4676 = vadd.f32 %v4588, %v4639
      %v4677 = vadd.f32 %v4589, %v4639
      %v4678 = vadd.f32 %v4590, %v4639
      %v4679 = vadd.f32 %v4591, %v4639
      %v4680 = vadd.f32 %v4592, %v4639
      %v4681 = vadd.f32 %v4593, %v4639
      %v4682 = vadd.f32 %v4594, %v4639
      %v4683 = vadd.f32 %v4595, %v4639
      %v4684 = vadd.f32 %v4596, %v4639
      %v4685 = vadd.f32 %v4597, %v4639
      %v4686 = vadd.f32 %v4598, %v4639
      %v4687 = vadd.f32 %v4599, %v4639
      %v4688 = vadd.f32 %v4600, %v4639
      %v4689 = vadd.f32 %v4601, %v4639
      %v4690 = vadd.f32 %v4602, %v4639
      %v4691 = vadd.f32 %v4603, %v4639
      %v4692 = vadd.f32 %v4604, %v4639
      %v4693 = vadd.f32 %v4605, %v4639
      %v4694 = vadd.f32 %v4606, %v4639
      %v4695 = vadd.f32 %v4607, %v4639
      %v4696 = vadd.f32 %v4608, %v4639
      %v4697 = vadd.f32 %v4609, %v4639
      %v4698 = vadd.f32 %v4610, %v4639
      %v4699 = vadd.f32 %v4611, %v4639
      %v4700 = vadd.f32 %v4612, %v4639
      %v4701 = vadd.f32 %v4613, %v4639
      %v4702 = vadd.f32 %v4614, %v4639
      %v4703 = vadd.f32 %v4615, %v4639
      %v4704 = vadd.f32 %v4616, %v4639
      %v4705 = vadd.f32 %v4617, %v4639
      %v4706 = vadd.f32 %v4618, %v4639
      %v4707 = vadd.f32 %v4619, %v4639
      %v4708 = vadd.f32 %v4620, %v4639
      %v4709 = vadd.f32 %v4621, %v4639
      %v4710 = vadd.f32 %v4622, %v4639
      %v4711 = vadd.f32 %v4623, %v4639
      %v4712 = vadd.f32 %v4624, %v4639
      %v4713 = vadd.f32 %v4625, %v4639
      %v4714 = vadd.f32 %v4626, %v4639
      %v4715 = vadd.f32 %v4627, %v4639
      %v4716 = vadd.f32 %v4628, %v4639
      %v4717 = vadd.f32 %v4629, %v4639
      %v4718 = vadd.f32 %v4630, %v4639
      %v4719 = vadd.f32 %v4631, %v4639
      %v4720 = vadd.f32 %v4632, %v4639
      %v4721 = vmax.f32 %v4641, 0.0
      %v4722 = vmax.f32 %v4642, 0.0
      %v4723 = vmax.f32 %v4643, 0.0
      %v4724 = vmax.f32 %v4644, 0.0
      %v4725 = vmax.f32 %v4645, 0.0
      %v4726 = vmax.f32 %v4646, 0.0
      %v4727 = vmax.f32 %v4647, 0.0
      %v4728 = vmax.f32 %v4648, 0.0
      %v4729 = vmax.f32 %v4649, 0.0
      %v4730 = vmax.f32 %v4650, 0.0
      %v4731 = vmax.f32 %v4651, 0.0
      %v4732 = vmax.f32 %v4652, 0.0
      %v4733 = vmax.f32 %v4653, 0.0
      %v4734 = vmax.f32 %v4654, 0.0
      %v4735 = vmax.f32 %v4655, 0.0
      %v4736 = vmax.f32 %v4656, 0.0
      %v4737 = vmax.f32 %v4657, 0.0
      %v4738 = vmax.f32 %v4658, 0.0
      %v4739 = vmax.f32 %v4659, 0.0
      %v4740 = vmax.f32 %v4660, 0.0
      %v4741 = vmax.f32 %v4661, 0.0
      %v4742 = vmax.f32 %v4662, 0.0
      %v4743 = vmax.f32 %v4663, 0.0
      %v4744 = vmax.f32 %v4664, 0.0
      %v4745 = vmax.f32 %v4665, 0.0
      %v4746 = vmax.f32 %v4666, 0.0
      %v4747 = vmax.f32 %v4667, 0.0
      %v4748 = vmax.f32 %v4668, 0.0
      %v4749 = vmax.f32 %v4669, 0.0
      %v4750 = vmax.f32 %v4670, 0.0
      %v4751 = vmax.f32 %v4671, 0.0
      %v4752 = vmax.f32 %v4672, 0.0
      %v4753 = vmax.f32 %v4673, 0.0
      %v4754 = vmax.f32 %v4674, 0.0
      %v4755 = vmax.f32 %v4675, 0.0
      %v4756 = vmax.f32 %v4676, 0.0
      %v4757 = vmax.f32 %v4677, 0.0
      %v4758 = vmax.f32 %v4678, 0.0
      %v4759 = vmax.f32 %v4679, 0.0
      %v4760 = vmax.f32 %v4680, 0.0
      %v4761 = vmax.f32 %v4681, 0.0
      %v4762 = vmax.f32 %v4682, 0.0
      %v4763 = vmax.f32 %v4683, 0.0
      %v4764 = vmax.f32 %v4684, 0.0
      %v4765 = vmax.f32 %v4685, 0.0
      %v4766 = vmax.f32 %v4686, 0.0
      %v4767 = vmax.f32 %v4687, 0.0
      %v4768 = vmax.f32 %v4688, 0.0
      %v4769 = vmax.f32 %v4689, 0.0
      %v4770 = vmax.f32 %v4690, 0.0
      %v4771 = vmax.f32 %v4691, 0.0
      %v4772 = vmax.f32 %v4692, 0.0
      %v4773 = vmax.f32 %v4693, 0.0
      %v4774 = vmax.f32 %v4694, 0.0
      %v4775 = vmax.f32 %v4695, 0.0
      %v4776 = vmax.f32 %v4696, 0.0
      %v4777 = vmax.f32 %v4697, 0.0
      %v4778 = vmax.f32 %v4698, 0.0
      %v4779 = vmax.f32 %v4699, 0.0
      %v4780 = vmax.f32 %v4700, 0.0
      %v4781 = vmax.f32 %v4701, 0.0
      %v4782 = vmax.f32 %v4702, 0.0
      %v4783 = vmax.f32 %v4703, 0.0
      %v4784 = vmax.f32 %v4704, 0.0
      %v4785 = vmax.f32 %v4705, 0.0
      %v4786 = vmax.f32 %v4706, 0.0
      %v4787 = vmax.f32 %v4707, 0.0
      %v4788 = vmax.f32 %v4708, 0.0
      %v4789 = vmax.f32 %v4709, 0.0
      %v4790 = vmax.f32 %v4710, 0.0
      %v4791 = vmax.f32 %v4711, 0.0
      %v4792 = vmax.f32 %v4712, 0.0
      %v4793 = vmax.f32 %v4713, 0.0
      %v4794 = vmax.f32 %v4714, 0.0
      %v4795 = vmax.f32 %v4715, 0.0
      %v4796 = vmax.f32 %v4716, 0.0
      %v4797 = vmax.f32 %v4717, 0.0
      %v4798 = vmax.f32 %v4718, 0.0
      %v4799 = vmax.f32 %v4719, 0.0
      %v4800 = vmax.f32 %v4720, 0.0
      %v4801 = vsel %vm410, %v4721, 0.0
      %v4802 = vsel %vm411, %v4722, 0.0
      %v4803 = vsel %vm412, %v4723, 0.0
      %v4804 = vsel %vm413, %v4724, 0.0
      %v4805 = vsel %vm414, %v4725, 0.0
      %v4806 = vsel %vm410, %v4726, 0.0
      %v4807 = vsel %vm411, %v4727, 0.0
      %v4808 = vsel %vm412, %v4728, 0.0
      %v4809 = vsel %vm413, %v4729, 0.0
      %v4810 = vsel %vm414, %v4730, 0.0
      %v4811 = vsel %vm410, %v4731, 0.0
      %v4812 = vsel %vm411, %v4732, 0.0
      %v4813 = vsel %vm412, %v4733, 0.0
      %v4814 = vsel %vm413, %v4734, 0.0
      %v4815 = vsel %vm414, %v4735, 0.0
      %v4816 = vsel %vm410, %v4736, 0.0
      %v4817 = vsel %vm411, %v4737, 0.0
      %v4818 = vsel %vm412, %v4738, 0.0
      %v4819 = vsel %vm413, %v4739, 0.0
      %v4820 = vsel %vm414, %v4740, 0.0
      %v4821 = vsel %vm410, %v4741, 0.0
      %v4822 = vsel %vm411, %v4742, 0.0
      %v4823 = vsel %vm412, %v4743, 0.0
      %v4824 = vsel %vm413, %v4744, 0.0
      %v4825 = vsel %vm414, %v4745, 0.0
      %v4826 = vsel %vm410, %v4746, 0.0
      %v4827 = vsel %vm411, %v4747, 0.0
      %v4828 = vsel %vm412, %v4748, 0.0
      %v4829 = vsel %vm413, %v4749, 0.0
      %v4830 = vsel %vm414, %v4750, 0.0
      %v4831 = vsel %vm410, %v4751, 0.0
      %v4832 = vsel %vm411, %v4752, 0.0
      %v4833 = vsel %vm412, %v4753, 0.0
      %v4834 = vsel %vm413, %v4754, 0.0
      %v4835 = vsel %vm414, %v4755, 0.0
      %v4836 = vsel %vm410, %v4756, 0.0
      %v4837 = vsel %vm411, %v4757, 0.0
      %v4838 = vsel %vm412, %v4758, 0.0
      %v4839 = vsel %vm413, %v4759, 0.0
      %v4840 = vsel %vm414, %v4760, 0.0
      %v4841 = vsel %vm410, %v4761, 0.0
      %v4842 = vsel %vm411, %v4762, 0.0
      %v4843 = vsel %vm412, %v4763, 0.0
      %v4844 = vsel %vm413, %v4764, 0.0
      %v4845 = vsel %vm414, %v4765, 0.0
      %v4846 = vsel %vm410, %v4766, 0.0
      %v4847 = vsel %vm411, %v4767, 0.0
      %v4848 = vsel %vm412, %v4768, 0.0
      %v4849 = vsel %vm413, %v4769, 0.0
      %v4850 = vsel %vm414, %v4770, 0.0
      %v4851 = vsel %vm410, %v4771, 0.0
      %v4852 = vsel %vm411, %v4772, 0.0
      %v4853 = vsel %vm412, %v4773, 0.0
      %v4854 = vsel %vm413, %v4774, 0.0
      %v4855 = vsel %vm414, %v4775, 0.0
      %v4856 = vsel %vm410, %v4776, 0.0
      %v4857 = vsel %vm411, %v4777, 0.0
      %v4858 = vsel %vm412, %v4778, 0.0
      %v4859 = vsel %vm413, %v4779, 0.0
      %v4860 = vsel %vm414, %v4780, 0.0
      %v4861 = vsel %vm410, %v4781, 0.0
      %v4862 = vsel %vm411, %v4782, 0.0
      %v4863 = vsel %vm412, %v4783, 0.0
      %v4864 = vsel %vm413, %v4784, 0.0
      %v4865 = vsel %vm414, %v4785, 0.0
      %v4866 = vsel %vm410, %v4786, 0.0
      %v4867 = vsel %vm411, %v4787, 0.0
      %v4868 = vsel %vm412, %v4788, 0.0
      %v4869 = vsel %vm413, %v4789, 0.0
      %v4870 = vsel %vm414, %v4790, 0.0
      %v4871 = vsel %vm410, %v4791, 0.0
      %v4872 = vsel %vm411, %v4792, 0.0
      %v4873 = vsel %vm412, %v4793, 0.0
      %v4874 = vsel %vm413, %v4794, 0.0
      %v4875 = vsel %vm414, %v4795, 0.0
      %v4876 = vsel %vm410, %v4796, 0.0
      %v4877 = vsel %vm411, %v4797, 0.0
      %v4878 = vsel %vm412, %v4798, 0.0
      %v4879 = vsel %vm413, %v4799, 0.0
      %v4880 = vsel %vm414, %v4800, 0.0
      %v4881 = vrot.slane %v4801, 4
      %v4882 = vrot.slane %v4802, 4
      %v4883 = vrot.slane %v4803, 4
      %v4884 = vrot.slane %v4804, 4
      %v4885 = vrot.slane %v4805, 4
      %v4886 = vrot.slane %v4806, 4
      %v4887 = vrot.slane %v4807, 4
      %v4888 = vrot.slane %v4808, 4
      %v4889 = vrot.slane %v4809, 4
      %v4890 = vrot.slane %v4810, 4
      %v4891 = vrot.slane %v4811, 4
      %v4892 = vrot.slane %v4812, 4
      %v4893 = vrot.slane %v4813, 4
      %v4894 = vrot.slane %v4814, 4
      %v4895 = vrot.slane %v4815, 4
      %v4896 = vrot.slane %v4816, 4
      %v4897 = vrot.slane %v4817, 4
      %v4898 = vrot.slane %v4818, 4
      %v4899 = vrot.slane %v4819, 4
      %v4900 = vrot.slane %v4820, 4
      %v4901 = vrot.slane %v4821, 4
      %v4902 = vrot.slane %v4822, 4
      %v4903 = vrot.slane %v4823, 4
      %v4904 = vrot.slane %v4824, 4
      %v4905 = vrot.slane %v4825, 4
      %v4906 = vrot.slane %v4826, 4
      %v4907 = vrot.slane %v4827, 4
      %v4908 = vrot.slane %v4828, 4
      %v4909 = vrot.slane %v4829, 4
      %v4910 = vrot.slane %v4830, 4
      %v4911 = vrot.slane %v4831, 4
      %v4912 = vrot.slane %v4832, 4
      %v4913 = vrot.slane %v4833, 4
      %v4914 = vrot.slane %v4834, 4
      %v4915 = vrot.slane %v4835, 4
      %v4916 = vrot.slane %v4836, 4
      %v4917 = vrot.slane %v4837, 4
      %v4918 = vrot.slane %v4838, 4
      %v4919 = vrot.slane %v4839, 4
      %v4920 = vrot.slane %v4840, 4
      %v4921 = vrot.slane %v4841, 4
      %v4922 = vrot.slane %v4842, 4
      %v4923 = vrot.slane %v4843, 4
      %v4924 = vrot.slane %v4844, 4
      %v4925 = vrot.slane %v4845, 4
      %v4926 = vrot.slane %v4846, 4
      %v4927 = vrot.slane %v4847, 4
      %v4928 = vrot.slane %v4848, 4
      %v4929 = vrot.slane %v4849, 4
      %v4930 = vrot.slane %v4850, 4
      %v4931 = vrot.slane %v4851, 4
      %v4932 = vrot.slane %v4852, 4
      %v4933 = vrot.slane %v4853, 4
      %v4934 = vrot.slane %v4854, 4
      %v4935 = vrot.slane %v4855, 4
      %v4936 = vrot.slane %v4856, 4
      %v4937 = vrot.slane %v4857, 4
      %v4938 = vrot.slane %v4858, 4
      %v4939 = vrot.slane %v4859, 4
      %v4940 = vrot.slane %v4860, 4
      %v4941 = vrot.slane %v4861, 4
      %v4942 = vrot.slane %v4862, 4
      %v4943 = vrot.slane %v4863, 4
      %v4944 = vrot.slane %v4864, 4
      %v4945 = vrot.slane %v4865, 4
      %v4946 = vrot.slane %v4866, 4
      %v4947 = vrot.slane %v4867, 4
      %v4948 = vrot.slane %v4868, 4
      %v4949 = vrot.slane %v4869, 4
      %v4950 = vrot.slane %v4870, 4
      %v4951 = vrot.slane %v4871, 4
      %v4952 = vrot.slane %v4872, 4
      %v4953 = vrot.slane %v4873, 4
      %v4954 = vrot.slane %v4874, 4
      %v4955 = vrot.slane %v4875, 4
      %v4956 = vrot.slane %v4876, 4
      %v4957 = vrot.slane %v4877, 4
      %v4958 = vrot.slane %v4878, 4
      %v4959 = vrot.slane %v4879, 4
      %v4960 = vrot.slane %v4880, 4
      %vm4961 = vcmp.lt.s32.totalorder %v395, 4
      %v4962 = vsel %vm4961, %v4959, %v4960
      %v4963 = vsel %vm4961, %v4958, %v4959
      %v4964 = vsel %vm4961, %v4957, %v4958
      %v4965 = vsel %vm4961, %v4956, %v4957
      %v4966 = vsel %vm4961, %v4955, %v4956
      %v4967 = vsel %vm4961, %v4954, %v4955
      %v4968 = vsel %vm4961, %v4953, %v4954
      %v4969 = vsel %vm4961, %v4952, %v4953
      %v4970 = vsel %vm4961, %v4951, %v4952
      %v4971 = vsel %vm4961, %v4950, %v4951
      %v4972 = vsel %vm4961, %v4949, %v4950
      %v4973 = vsel %vm4961, %v4948, %v4949
      %v4974 = vsel %vm4961, %v4947, %v4948
      %v4975 = vsel %vm4961, %v4946, %v4947
      %v4976 = vsel %vm4961, %v4945, %v4946
      %v4977 = vsel %vm4961, %v4944, %v4945
      %v4978 = vsel %vm4961, %v4943, %v4944
      %v4979 = vsel %vm4961, %v4942, %v4943
      %v4980 = vsel %vm4961, %v4941, %v4942
      %v4981 = vsel %vm4961, %v4940, %v4941
      %v4982 = vsel %vm4961, %v4939, %v4940
      %v4983 = vsel %vm4961, %v4938, %v4939
      %v4984 = vsel %vm4961, %v4937, %v4938
      %v4985 = vsel %vm4961, %v4936, %v4937
      %v4986 = vsel %vm4961, %v4935, %v4936
      %v4987 = vsel %vm4961, %v4934, %v4935
      %v4988 = vsel %vm4961, %v4933, %v4934
      %v4989 = vsel %vm4961, %v4932, %v4933
      %v4990 = vsel %vm4961, %v4931, %v4932
      %v4991 = vsel %vm4961, %v4930, %v4931
      %v4992 = vsel %vm4961, %v4929, %v4930
      %v4993 = vsel %vm4961, %v4928, %v4929
      %v4994 = vsel %vm4961, %v4927, %v4928
      %v4995 = vsel %vm4961, %v4926, %v4927
      %v4996 = vsel %vm4961, %v4925, %v4926
      %v4997 = vsel %vm4961, %v4924, %v4925
      %v4998 = vsel %vm4961, %v4923, %v4924
      %v4999 = vsel %vm4961, %v4922, %v4923
      %v5000 = vsel %vm4961, %v4921, %v4922
      %v5001 = vsel %vm4961, %v4920, %v4921
      %v5002 = vsel %vm4961, %v4919, %v4920
      %v5003 = vsel %vm4961, %v4918, %v4919
      %v5004 = vsel %vm4961, %v4917, %v4918
      %v5005 = vsel %vm4961, %v4916, %v4917
      %v5006 = vsel %vm4961, %v4915, %v4916
      %v5007 = vsel %vm4961, %v4914, %v4915
      %v5008 = vsel %vm4961, %v4913, %v4914
      %v5009 = vsel %vm4961, %v4912, %v4913
      %v5010 = vsel %vm4961, %v4911, %v4912
      %v5011 = vsel %vm4961, %v4910, %v4911
      %v5012 = vsel %vm4961, %v4909, %v4910
      %v5013 = vsel %vm4961, %v4908, %v4909
      %v5014 = vsel %vm4961, %v4907, %v4908
      %v5015 = vsel %vm4961, %v4906, %v4907
      %v5016 = vsel %vm4961, %v4905, %v4906
      %v5017 = vsel %vm4961, %v4904, %v4905
      %v5018 = vsel %vm4961, %v4903, %v4904
      %v5019 = vsel %vm4961, %v4902, %v4903
      %v5020 = vsel %vm4961, %v4901, %v4902
      %v5021 = vsel %vm4961, %v4900, %v4901
      %v5022 = vsel %vm4961, %v4899, %v4900
      %v5023 = vsel %vm4961, %v4898, %v4899
      %v5024 = vsel %vm4961, %v4897, %v4898
      %v5025 = vsel %vm4961, %v4896, %v4897
      %v5026 = vsel %vm4961, %v4895, %v4896
      %v5027 = vsel %vm4961, %v4894, %v4895
      %v5028 = vsel %vm4961, %v4893, %v4894
      %v5029 = vsel %vm4961, %v4892, %v4893
      %v5030 = vsel %vm4961, %v4891, %v4892
      %v5031 = vsel %vm4961, %v4890, %v4891
      %v5032 = vsel %vm4961, %v4889, %v4890
      %v5033 = vsel %vm4961, %v4888, %v4889
      %v5034 = vsel %vm4961, %v4887, %v4888
      %v5035 = vsel %vm4961, %v4886, %v4887
      %v5036 = vsel %vm4961, %v4885, %v4886
      %v5037 = vsel %vm4961, %v4884, %v4885
      %v5038 = vsel %vm4961, %v4883, %v4884
      %v5039 = vsel %vm4961, %v4882, %v4883
      %v5040 = vsel %vm4961, %v4881, %v4882
      %v5041 = vsel %vm4961, %v4960, %v4881
      %v5042 = vpack.c.bf16 %v5040, %v5041
      %v5043 = vpack.c.bf16 %v5038, %v5039
      %v5044 = vpack.c.bf16 %v5036, %v5037
      %v5045 = vpack.c.bf16 %v5034, %v5035
      %v5046 = vpack.c.bf16 %v5032, %v5033
      %v5047 = vpack.c.bf16 %v5030, %v5031
      %v5048 = vpack.c.bf16 %v5028, %v5029
      %v5049 = vpack.c.bf16 %v5026, %v5027
      %v5050 = vpack.c.bf16 %v5024, %v5025
      %v5051 = vpack.c.bf16 %v5022, %v5023
      %v5052 = vpack.c.bf16 %v5020, %v5021
      %v5053 = vpack.c.bf16 %v5018, %v5019
      %v5054 = vpack.c.bf16 %v5016, %v5017
      %v5055 = vpack.c.bf16 %v5014, %v5015
      %v5056 = vpack.c.bf16 %v5012, %v5013
      %v5057 = vpack.c.bf16 %v5010, %v5011
      %v5058 = vpack.c.bf16 %v5008, %v5009
      %v5059 = vpack.c.bf16 %v5006, %v5007
      %v5060 = vpack.c.bf16 %v5004, %v5005
      %v5061 = vpack.c.bf16 %v5002, %v5003
      %v5062 = vpack.c.bf16 %v5000, %v5001
      %v5063 = vpack.c.bf16 %v4998, %v4999
      %v5064 = vpack.c.bf16 %v4996, %v4997
      %v5065 = vpack.c.bf16 %v4994, %v4995
      %v5066 = vpack.c.bf16 %v4992, %v4993
      %v5067 = vpack.c.bf16 %v4990, %v4991
      %v5068 = vpack.c.bf16 %v4988, %v4989
      %v5069 = vpack.c.bf16 %v4986, %v4987
      %v5070 = vpack.c.bf16 %v4984, %v4985
      %v5071 = vpack.c.bf16 %v4982, %v4983
      %v5072 = vpack.c.bf16 %v4980, %v4981
      %v5073 = vpack.c.bf16 %v4978, %v4979
      %v5074 = vpack.c.bf16 %v4976, %v4977
      %v5075 = vpack.c.bf16 %v4974, %v4975
      %v5076 = vpack.c.bf16 %v4972, %v4973
      %v5077 = vpack.c.bf16 %v4970, %v4971
      %v5078 = vpack.c.bf16 %v4968, %v4969
      %v5079 = vpack.c.bf16 %v4966, %v4967
      %v5080 = vpack.c.bf16 %v4964, %v4965
      %v5081 = vpack.c.bf16 %v4962, %v4963
      %v5082 = vpack.c.bf16 %v4802, %v4801
      %v5083 = vpack.c.bf16 %v4804, %v4803
      %v5084 = vpack.c.bf16 %v4806, %v4805
      %v5085 = vpack.c.bf16 %v4808, %v4807
      %v5086 = vpack.c.bf16 %v4810, %v4809
      %v5087 = vpack.c.bf16 %v4812, %v4811
      %v5088 = vpack.c.bf16 %v4814, %v4813
      %v5089 = vpack.c.bf16 %v4816, %v4815
      %v5090 = vpack.c.bf16 %v4818, %v4817
      %v5091 = vpack.c.bf16 %v4820, %v4819
      %v5092 = vpack.c.bf16 %v4822, %v4821
      %v5093 = vpack.c.bf16 %v4824, %v4823
      %v5094 = vpack.c.bf16 %v4826, %v4825
      %v5095 = vpack.c.bf16 %v4828, %v4827
      %v5096 = vpack.c.bf16 %v4830, %v4829
      %v5097 = vpack.c.bf16 %v4832, %v4831
      %v5098 = vpack.c.bf16 %v4834, %v4833
      %v5099 = vpack.c.bf16 %v4836, %v4835
      %v5100 = vpack.c.bf16 %v4838, %v4837
      %v5101 = vpack.c.bf16 %v4840, %v4839
      %v5102 = vpack.c.bf16 %v4842, %v4841
      %v5103 = vpack.c.bf16 %v4844, %v4843
      %v5104 = vpack.c.bf16 %v4846, %v4845
      %v5105 = vpack.c.bf16 %v4848, %v4847
      %v5106 = vpack.c.bf16 %v4850, %v4849
      %v5107 = vpack.c.bf16 %v4852, %v4851
      %v5108 = vpack.c.bf16 %v4854, %v4853
      %v5109 = vpack.c.bf16 %v4856, %v4855
      %v5110 = vpack.c.bf16 %v4858, %v4857
      %v5111 = vpack.c.bf16 %v4860, %v4859
      %v5112 = vpack.c.bf16 %v4862, %v4861
      %v5113 = vpack.c.bf16 %v4864, %v4863
      %v5114 = vpack.c.bf16 %v4866, %v4865
      %v5115 = vpack.c.bf16 %v4868, %v4867
      %v5116 = vpack.c.bf16 %v4870, %v4869
      %v5117 = vpack.c.bf16 %v4872, %v4871
      %v5118 = vpack.c.bf16 %v4874, %v4873
      %v5119 = vpack.c.bf16 %v4876, %v4875
      %v5120 = vpack.c.bf16 %v4878, %v4877
      %v5121 = vpack.c.bf16 %v4880, %v4879
      %v5122 = vpack.c.bf16 %v5039, %v5040
      %v5123 = vpack.c.bf16 %v5037, %v5038
      %v5124 = vpack.c.bf16 %v5035, %v5036
      %v5125 = vpack.c.bf16 %v5033, %v5034
      %v5126 = vpack.c.bf16 %v5031, %v5032
      %v5127 = vpack.c.bf16 %v5029, %v5030
      %v5128 = vpack.c.bf16 %v5027, %v5028
      %v5129 = vpack.c.bf16 %v5025, %v5026
      %v5130 = vpack.c.bf16 %v5023, %v5024
      %v5131 = vpack.c.bf16 %v5021, %v5022
      %v5132 = vpack.c.bf16 %v5019, %v5020
      %v5133 = vpack.c.bf16 %v5017, %v5018
      %v5134 = vpack.c.bf16 %v5015, %v5016
      %v5135 = vpack.c.bf16 %v5013, %v5014
      %v5136 = vpack.c.bf16 %v5011, %v5012
      %v5137 = vpack.c.bf16 %v5009, %v5010
      %v5138 = vpack.c.bf16 %v5007, %v5008
      %v5139 = vpack.c.bf16 %v5005, %v5006
      %v5140 = vpack.c.bf16 %v5003, %v5004
      %v5141 = vpack.c.bf16 %v5001, %v5002
      %v5142 = vpack.c.bf16 %v4999, %v5000
      %v5143 = vpack.c.bf16 %v4997, %v4998
      %v5144 = vpack.c.bf16 %v4995, %v4996
      %v5145 = vpack.c.bf16 %v4993, %v4994
      %v5146 = vpack.c.bf16 %v4991, %v4992
      %v5147 = vpack.c.bf16 %v4989, %v4990
      %v5148 = vpack.c.bf16 %v4987, %v4988
      %v5149 = vpack.c.bf16 %v4985, %v4986
      %v5150 = vpack.c.bf16 %v4983, %v4984
      %v5151 = vpack.c.bf16 %v4981, %v4982
      %v5152 = vpack.c.bf16 %v4979, %v4980
      %v5153 = vpack.c.bf16 %v4977, %v4978
      %v5154 = vpack.c.bf16 %v4975, %v4976
      %v5155 = vpack.c.bf16 %v4973, %v4974
      %v5156 = vpack.c.bf16 %v4971, %v4972
      %v5157 = vpack.c.bf16 %v4969, %v4970
      %v5158 = vpack.c.bf16 %v4967, %v4968
      %v5159 = vpack.c.bf16 %v4965, %v4966
      %v5160 = vpack.c.bf16 %v4963, %v4964
      %v5161 = vpack.c.bf16 %v5041, %v4962
      %s5162 = scalar_lea.vmem %s4, 384
      %v5163 = vld [vmem:[%s5162] sm:$0xf]
      %v5164 = vld [vmem:[%s5162 + $0x4] sm:$0xf]
      %v5165 = vld [vmem:[%s5162 + $0x8] sm:$0xf]
      %v5166 = vld [vmem:[%s5162 + $0xc] sm:$0xf]
      %v5167 = vld [vmem:[%s5162 + $0x10] sm:$0xf]
      %v5168 = vld [vmem:[%s5162 + $0x14] sm:$0xf]
      %v5169 = vld [vmem:[%s5162 + $0x18] sm:$0xf]
      %v5170 = vld [vmem:[%s5162 + $0x1c] sm:$0xf]
      %v5171 = vld [vmem:[%s5162 + $0x20] sm:$0xf]
      %v5172 = vld [vmem:[%s5162 + $0x24] sm:$0xf]
      %v5173 = vld [vmem:[%s5162 + $0x28] sm:$0xf]
      %v5174 = vld [vmem:[%s5162 + $0x2c] sm:$0xf]
      %v5175 = vld [vmem:[%s5162 + $0x30] sm:$0xf]
      %v5176 = vld [vmem:[%s5162 + $0x34] sm:$0xf]
      %v5177 = vld [vmem:[%s5162 + $0x38] sm:$0xf]
      %v5178 = vld [vmem:[%s5162 + $0x3c] sm:$0xf]
      %v5179 = vld [vmem:[%s5162 + $0x40] sm:$0xf]
      %v5180 = vld [vmem:[%s5162 + $0x44] sm:$0xf]
      %v5181 = vld [vmem:[%s5162 + $0x48] sm:$0xf]
      %v5182 = vld [vmem:[%s5162 + $0x4c] sm:$0xf]
      %v5183 = vld [vmem:[%s5162 + $0x50] sm:$0xf]
      %v5184 = vld [vmem:[%s5162 + $0x54] sm:$0xf]
      %v5185 = vld [vmem:[%s5162 + $0x58] sm:$0xf]
      %v5186 = vld [vmem:[%s5162 + $0x5c] sm:$0xf]
      %v5187 = vld [vmem:[%s5162 + $0x60] sm:$0xf]
      %v5188 = vld [vmem:[%s5162 + $0x64] sm:$0xf]
      %v5189 = vld [vmem:[%s5162 + $0x68] sm:$0xf]
      %v5190 = vld [vmem:[%s5162 + $0x6c] sm:$0xf]
      %v5191 = vld [vmem:[%s5162 + $0x70] sm:$0xf]
      %v5192 = vld [vmem:[%s5162 + $0x74] sm:$0xf]
      %v5193 = vld [vmem:[%s5162 + $0x78] sm:$0xf]
      %v5194 = vld [vmem:[%s5162 + $0x7c] sm:$0xf]
      %v5195 = vld [vmem:[%s5162 + $0x80] sm:$0xf]
      %v5196 = vld [vmem:[%s5162 + $0x84] sm:$0xf]
      %v5197 = vld [vmem:[%s5162 + $0x88] sm:$0xf]
      %v5198 = vld [vmem:[%s5162 + $0x8c] sm:$0xf]
      %v5199 = vld [vmem:[%s5162 + $0x90] sm:$0xf]
      %v5200 = vld [vmem:[%s5162 + $0x94] sm:$0xf]
      %v5201 = vld [vmem:[%s5162 + $0x98] sm:$0xf]
      %v5202 = vld [vmem:[%s5162 + $0x9c] sm:$0xf]
      %v5203 = vld [vmem:[%s5162 + $0xa0] sm:$0xf]
      %v5204 = vld [vmem:[%s5162 + $0xa4] sm:$0xf]
      %v5205 = vld [vmem:[%s5162 + $0xa8] sm:$0xf]
      %v5206 = vld [vmem:[%s5162 + $0xac] sm:$0xf]
      %v5207 = vld [vmem:[%s5162 + $0xb0] sm:$0xf]
      %v5208 = vld [vmem:[%s5162 + $0xb4] sm:$0xf]
      %v5209 = vld [vmem:[%s5162 + $0xb8] sm:$0xf]
      %v5210 = vld [vmem:[%s5162 + $0xbc] sm:$0xf]
      %v5259 = vunpack.c.l.b16 %v5163
      %v5260 = vunpack.c.l.b16 %v5164
      %v5261 = vunpack.c.l.b16 %v5165
      %v5262 = vunpack.c.l.b16 %v5166
      %v5263 = vunpack.c.l.b16 %v5167
      %v5264 = vunpack.c.l.b16 %v5168
      %v5265 = vunpack.c.l.b16 %v5169
      %v5266 = vunpack.c.l.b16 %v5170
      %v5267 = vunpack.c.l.b16 %v5171
      %v5268 = vunpack.c.l.b16 %v5172
      %v5269 = vunpack.c.l.b16 %v5173
      %v5270 = vunpack.c.l.b16 %v5174
      %v5271 = vunpack.c.l.b16 %v5175
      %v5272 = vunpack.c.l.b16 %v5176
      %v5273 = vunpack.c.l.b16 %v5177
      %v5274 = vunpack.c.l.b16 %v5178
      %v5275 = vunpack.c.l.b16 %v5179
      %v5276 = vunpack.c.l.b16 %v5180
      %v5277 = vunpack.c.l.b16 %v5181
      %v5278 = vunpack.c.l.b16 %v5182
      %v5279 = vunpack.c.l.b16 %v5183
      %v5280 = vunpack.c.l.b16 %v5184
      %v5281 = vunpack.c.l.b16 %v5185
      %v5282 = vunpack.c.l.b16 %v5186
      %v5283 = vunpack.c.l.b16 %v5187
      %v5284 = vunpack.c.l.b16 %v5188
      %v5285 = vunpack.c.l.b16 %v5189
      %v5286 = vunpack.c.l.b16 %v5190
      %v5287 = vunpack.c.l.b16 %v5191
      %v5288 = vunpack.c.l.b16 %v5192
      %v5289 = vunpack.c.l.b16 %v5193
      %v5290 = vunpack.c.l.b16 %v5194
      %v5291 = vunpack.c.l.b16 %v5195
      %v5292 = vunpack.c.l.b16 %v5196
      %v5293 = vunpack.c.l.b16 %v5197
      %v5294 = vunpack.c.l.b16 %v5198
      %v5295 = vunpack.c.l.b16 %v5199
      %v5296 = vunpack.c.l.b16 %v5200
      %v5297 = vunpack.c.l.b16 %v5201
      %v5298 = vunpack.c.l.b16 %v5202
      %v5299 = vunpack.c.l.b16 %v5203
      %v5300 = vunpack.c.l.b16 %v5204
      %v5301 = vunpack.c.l.b16 %v5205
      %v5302 = vunpack.c.l.b16 %v5206
      %v5303 = vunpack.c.l.b16 %v5207
      %v5304 = vunpack.c.l.b16 %v5208
      %v5305 = vunpack.c.l.b16 %v5209
      %v5306 = vunpack.c.l.b16 %v5210
      %v5307 = vpack.c.b16 %v5260, %v5259
      %v5308 = vpack.c.b16 %v5262, %v5261
      %v5309 = vpack.c.b16 %v5264, %v5263
      %v5310 = vpack.c.b16 %v5266, %v5265
      %v5311 = vpack.c.b16 %v5268, %v5267
      %v5312 = vpack.c.b16 %v5270, %v5269
      %v5313 = vpack.c.b16 %v5272, %v5271
      %v5314 = vpack.c.b16 %v5274, %v5273
      %v5315 = vpack.c.b16 %v5276, %v5275
      %v5316 = vpack.c.b16 %v5278, %v5277
      %v5317 = vpack.c.b16 %v5280, %v5279
      %v5318 = vpack.c.b16 %v5282, %v5281
      %v5319 = vpack.c.b16 %v5284, %v5283
      %v5320 = vpack.c.b16 %v5286, %v5285
      %v5321 = vpack.c.b16 %v5288, %v5287
      %v5322 = vpack.c.b16 %v5290, %v5289
      %v5323 = vpack.c.b16 %v5292, %v5291
      %v5324 = vpack.c.b16 %v5294, %v5293
      %v5325 = vpack.c.b16 %v5296, %v5295
      %v5326 = vpack.c.b16 %v5298, %v5297
      %v5327 = vpack.c.b16 %v5300, %v5299
      %v5328 = vpack.c.b16 %v5302, %v5301
      %v5329 = vpack.c.b16 %v5304, %v5303
      %v5330 = vpack.c.b16 %v5306, %v5305
      %5355 = vmatprep.subr.bf16.mxu0 0
      %5356 = vmatpush1.bf16.msra.mxu0 %v5314
      %5357 = vmatprep.subr.bf16.mxu0 0
      %5358 = vmatpush1.bf16.msra.mxu0 %v5313
      %5359 = vmatprep.subr.bf16.mxu0 0
      %5360 = vmatpush1.bf16.msra.mxu0 %v5312
      %5361 = vmatprep.subr.bf16.mxu0 0
      %5362 = vmatpush1.bf16.msra.mxu0 %v5311
      %5363 = vmatprep.subr.bf16.mxu0 0
      %5364 = vmatpush1.bf16.msra.mxu0 %v5310
      %5365 = vmatprep.subr.bf16.mxu0 0
      %5366 = vmatpush1.bf16.msra.mxu0 %v5309
      %5367 = vmatprep.subr.bf16.mxu0 0
      %5368 = vmatpush1.bf16.msra.mxu0 %v5308
      %5369 = vmatprep.subr.bf16.mxu0 0
      %5370 = vmatpush1.bf16.msra.mxu0 %v5307
      %5371 = vmatprep.subr.bf16.mxu0 0
      %5372 = vmatpush2.bf16.msra.mxu0 %v5322
      %5373 = vmatprep.subr.bf16.mxu0 0
      %5374 = vmatpush2.bf16.msra.mxu0 %v5321
      %5375 = vmatprep.subr.bf16.mxu0 0
      %5376 = vmatpush2.bf16.msra.mxu0 %v5320
      %5377 = vmatprep.subr.bf16.mxu0 0
      %5378 = vmatpush2.bf16.msra.mxu0 %v5319
      %5379 = vmatprep.subr.bf16.mxu0 0
      %5380 = vmatpush2.bf16.msra.mxu0 %v5318
      %5381 = vmatprep.subr.bf16.mxu0 0
      %5382 = vmatpush2.bf16.msra.mxu0 %v5317
      %5383 = vmatprep.subr.bf16.mxu0 0
      %5384 = vmatpush2.bf16.msra.mxu0 %v5316
      %5385 = vmatprep.subr.bf16.mxu0 0
      %5386 = vmatpush2.bf16.msra.mxu0 %v5315
      %5387 = vmatprep.mubr.bf16.mxu0 %v5082
      %5388 = vmatmul.mubr.bf16.gmra.mxu0 %v5042
      %v5389 = vpop.f32.mrf.mxu0
      %v5390 = vpop.f32.mrf.mxu0
      %v5391 = vpop.f32.mrf.mxu0
      %v5392 = vadd.f32 0.0, %v5391
      %v5393 = vpop.f32.mrf.mxu0
      %5394 = vmatprep.mubr.bf16.mxu0 %v5083
      %5395 = vmatmul.mubr.bf16.gmra.mxu0 %v5043
      %v5396 = vpop.f32.mrf.mxu0
      %v5397 = vadd.f32 0.0, %v5396
      %v5398 = vpop.f32.mrf.mxu0
      %v5399 = vpop.f32.mrf.mxu0
      %v5400 = vadd.f32 0.0, %v5399
      %v5401 = vpop.f32.mrf.mxu0
      %5402 = vmatprep.mubr.bf16.mxu0 %v5084
      %5403 = vmatmul.mubr.bf16.gmra.mxu0 %v5044
      %v5404 = vpop.f32.mrf.mxu0
      %v5405 = vadd.f32 0.0, %v5404
      %v5406 = vpop.f32.mrf.mxu0
      %v5407 = vpop.f32.mrf.mxu0
      %v5408 = vpop.f32.mrf.mxu0
      %5409 = vmatprep.mubr.bf16.mxu0 %v5085
      %5410 = vmatmul.mubr.bf16.gmra.mxu0 %v5045
      %v5411 = vpop.f32.mrf.mxu0
      %v5412 = vadd.f32 0.0, %v5411
      %v5413 = vpop.f32.mrf.mxu0
      %v5414 = vpop.f32.mrf.mxu0
      %v5415 = vadd.f32 0.0, %v5414
      %v5416 = vpop.f32.mrf.mxu0
      %5417 = vmatprep.mubr.bf16.mxu0 %v5086
      %5418 = vmatmul.mubr.bf16.gmra.mxu0 %v5046
      %v5419 = vpop.f32.mrf.mxu0
      %v5420 = vadd.f32 0.0, %v5419
      %v5421 = vpop.f32.mrf.mxu0
      %v5422 = vpop.f32.mrf.mxu0
      %v5423 = vadd.f32 0.0, %v5422
      %v5424 = vpop.f32.mrf.mxu0
      %5425 = vmatprep.mubr.bf16.mxu0 %v5087
      %5426 = vmatmul.mubr.bf16.gmra.mxu0 %v5047
      %v5427 = vpop.f32.mrf.mxu0
      %v5428 = vpop.f32.mrf.mxu0
      %v5429 = vpop.f32.mrf.mxu0
      %v5430 = vadd.f32 0.0, %v5429
      %v5431 = vpop.f32.mrf.mxu0
      %5432 = vmatprep.mubr.bf16.mxu0 %v5088
      %5433 = vmatmul.mubr.bf16.gmra.mxu0 %v5048
      %v5434 = vpop.f32.mrf.mxu0
      %v5435 = vadd.f32 0.0, %v5434
      %v5436 = vpop.f32.mrf.mxu0
      %v5437 = vpop.f32.mrf.mxu0
      %v5438 = vadd.f32 0.0, %v5437
      %v5439 = vpop.f32.mrf.mxu0
      %5440 = vmatprep.mubr.bf16.mxu0 %v5089
      %5441 = vmatmul.mubr.bf16.gmra.mxu0 %v5049
      %v5442 = vpop.f32.mrf.mxu0
      %v5443 = vadd.f32 0.0, %v5442
      %v5444 = vpop.f32.mrf.mxu0
      %v5445 = vpop.f32.mrf.mxu0
      %v5446 = vpop.f32.mrf.mxu0
      %5447 = vmatprep.mubr.bf16.mxu0 %v5090
      %5448 = vmatmul.mubr.bf16.gmra.mxu0 %v5050
      %v5449 = vpop.f32.mrf.mxu0
      %v5450 = vadd.f32 0.0, %v5449
      %v5451 = vpop.f32.mrf.mxu0
      %v5452 = vpop.f32.mrf.mxu0
      %v5453 = vadd.f32 0.0, %v5452
      %v5454 = vpop.f32.mrf.mxu0
      %5455 = vmatprep.mubr.bf16.mxu0 %v5091
      %5456 = vmatmul.mubr.bf16.gmra.mxu0 %v5051
      %v5457 = vpop.f32.mrf.mxu0
      %v5458 = vadd.f32 0.0, %v5457
      %v5459 = vpop.f32.mrf.mxu0
      %v5460 = vpop.f32.mrf.mxu0
      %v5461 = vadd.f32 0.0, %v5460
      %v5462 = vpop.f32.mrf.mxu0
      %5463 = vmatprep.mubr.bf16.mxu0 %v5092
      %5464 = vmatmul.mubr.bf16.gmra.mxu0 %v5052
      %v5465 = vpop.f32.mrf.mxu0
      %v5466 = vpop.f32.mrf.mxu0
      %v5467 = vpop.f32.mrf.mxu0
      %v5468 = vadd.f32 0.0, %v5467
      %v5469 = vpop.f32.mrf.mxu0
      %5470 = vmatprep.mubr.bf16.mxu0 %v5093
      %5471 = vmatmul.mubr.bf16.gmra.mxu0 %v5053
      %v5472 = vpop.f32.mrf.mxu0
      %v5473 = vadd.f32 0.0, %v5472
      %v5474 = vpop.f32.mrf.mxu0
      %v5475 = vpop.f32.mrf.mxu0
      %v5476 = vadd.f32 0.0, %v5475
      %v5477 = vpop.f32.mrf.mxu0
      %5478 = vmatprep.mubr.bf16.mxu0 %v5094
      %5479 = vmatmul.mubr.bf16.gmra.mxu0 %v5054
      %v5480 = vpop.f32.mrf.mxu0
      %v5481 = vadd.f32 0.0, %v5480
      %v5482 = vpop.f32.mrf.mxu0
      %v5483 = vpop.f32.mrf.mxu0
      %v5484 = vpop.f32.mrf.mxu0
      %5485 = vmatprep.mubr.bf16.mxu0 %v5095
      %5486 = vmatmul.mubr.bf16.gmra.mxu0 %v5055
      %v5487 = vpop.f32.mrf.mxu0
      %v5488 = vadd.f32 0.0, %v5487
      %v5489 = vpop.f32.mrf.mxu0
      %v5490 = vpop.f32.mrf.mxu0
      %v5491 = vadd.f32 0.0, %v5490
      %v5492 = vpop.f32.mrf.mxu0
      %5493 = vmatprep.mubr.bf16.mxu0 %v5096
      %5494 = vmatmul.mubr.bf16.gmra.mxu0 %v5056
      %v5495 = vpop.f32.mrf.mxu0
      %v5496 = vadd.f32 0.0, %v5495
      %v5497 = vpop.f32.mrf.mxu0
      %v5498 = vpop.f32.mrf.mxu0
      %v5499 = vadd.f32 0.0, %v5498
      %v5500 = vpop.f32.mrf.mxu0
      %5501 = vmatprep.mubr.bf16.mxu0 %v5097
      %5502 = vmatmul.mubr.bf16.gmra.mxu0 %v5057
      %v5503 = vpop.f32.mrf.mxu0
      %v5504 = vpop.f32.mrf.mxu0
      %v5505 = vpop.f32.mrf.mxu0
      %v5506 = vadd.f32 0.0, %v5505
      %v5507 = vpop.f32.mrf.mxu0
      %5508 = vmatprep.mubr.bf16.mxu0 %v5098
      %5509 = vmatmul.mubr.bf16.gmra.mxu0 %v5058
      %v5510 = vpop.f32.mrf.mxu0
      %v5511 = vadd.f32 0.0, %v5510
      %v5512 = vpop.f32.mrf.mxu0
      %v5513 = vpop.f32.mrf.mxu0
      %v5514 = vadd.f32 0.0, %v5513
      %v5515 = vpop.f32.mrf.mxu0
      %5516 = vmatprep.mubr.bf16.mxu0 %v5099
      %5517 = vmatmul.mubr.bf16.gmra.mxu0 %v5059
      %v5518 = vpop.f32.mrf.mxu0
      %v5519 = vadd.f32 0.0, %v5518
      %v5520 = vpop.f32.mrf.mxu0
      %v5521 = vpop.f32.mrf.mxu0
      %v5522 = vpop.f32.mrf.mxu0
      %5523 = vmatprep.mubr.bf16.mxu0 %v5100
      %5524 = vmatmul.mubr.bf16.gmra.mxu0 %v5060
      %v5525 = vpop.f32.mrf.mxu0
      %v5526 = vadd.f32 0.0, %v5525
      %v5527 = vpop.f32.mrf.mxu0
      %v5528 = vpop.f32.mrf.mxu0
      %v5529 = vadd.f32 0.0, %v5528
      %v5530 = vpop.f32.mrf.mxu0
      %5531 = vmatprep.mubr.bf16.mxu0 %v5101
      %5532 = vmatmul.mubr.bf16.gmra.mxu0 %v5061
      %v5533 = vpop.f32.mrf.mxu0
      %v5534 = vadd.f32 0.0, %v5533
      %v5535 = vpop.f32.mrf.mxu0
      %v5536 = vpop.f32.mrf.mxu0
      %v5537 = vadd.f32 0.0, %v5536
      %v5538 = vpop.f32.mrf.mxu0
      %5539 = vmatprep.mubr.bf16.mxu0 %v5102
      %5540 = vmatmul.mubr.bf16.gmra.mxu0 %v5062
      %v5541 = vpop.f32.mrf.mxu0
      %v5542 = vpop.f32.mrf.mxu0
      %v5543 = vpop.f32.mrf.mxu0
      %v5544 = vadd.f32 0.0, %v5543
      %v5545 = vpop.f32.mrf.mxu0
      %5546 = vmatprep.mubr.bf16.mxu0 %v5103
      %5547 = vmatmul.mubr.bf16.gmra.mxu0 %v5063
      %v5548 = vpop.f32.mrf.mxu0
      %v5549 = vadd.f32 0.0, %v5548
      %v5550 = vpop.f32.mrf.mxu0
      %v5551 = vpop.f32.mrf.mxu0
      %v5552 = vadd.f32 0.0, %v5551
      %v5553 = vpop.f32.mrf.mxu0
      %5554 = vmatprep.mubr.bf16.mxu0 %v5104
      %5555 = vmatmul.mubr.bf16.gmra.mxu0 %v5064
      %v5556 = vpop.f32.mrf.mxu0
      %v5557 = vadd.f32 0.0, %v5556
      %v5558 = vpop.f32.mrf.mxu0
      %v5559 = vpop.f32.mrf.mxu0
      %v5560 = vpop.f32.mrf.mxu0
      %5561 = vmatprep.mubr.bf16.mxu0 %v5105
      %5562 = vmatmul.mubr.bf16.gmra.mxu0 %v5065
      %v5563 = vpop.f32.mrf.mxu0
      %v5564 = vadd.f32 0.0, %v5563
      %v5565 = vpop.f32.mrf.mxu0
      %v5566 = vpop.f32.mrf.mxu0
      %v5567 = vadd.f32 0.0, %v5566
      %v5568 = vpop.f32.mrf.mxu0
      %5569 = vmatprep.mubr.bf16.mxu0 %v5106
      %5570 = vmatmul.mubr.bf16.gmra.mxu0 %v5066
      %v5571 = vpop.f32.mrf.mxu0
      %v5572 = vadd.f32 0.0, %v5571
      %v5573 = vpop.f32.mrf.mxu0
      %v5574 = vpop.f32.mrf.mxu0
      %v5575 = vadd.f32 0.0, %v5574
      %v5576 = vpop.f32.mrf.mxu0
      %5577 = vmatprep.mubr.bf16.mxu0 %v5107
      %5578 = vmatmul.mubr.bf16.gmra.mxu0 %v5067
      %v5579 = vpop.f32.mrf.mxu0
      %v5580 = vpop.f32.mrf.mxu0
      %v5581 = vpop.f32.mrf.mxu0
      %v5582 = vadd.f32 0.0, %v5581
      %v5583 = vpop.f32.mrf.mxu0
      %5584 = vmatprep.mubr.bf16.mxu0 %v5108
      %5585 = vmatmul.mubr.bf16.gmra.mxu0 %v5068
      %v5586 = vpop.f32.mrf.mxu0
      %v5587 = vadd.f32 0.0, %v5586
      %v5588 = vpop.f32.mrf.mxu0
      %v5589 = vpop.f32.mrf.mxu0
      %v5590 = vadd.f32 0.0, %v5589
      %v5591 = vpop.f32.mrf.mxu0
      %5592 = vmatprep.mubr.bf16.mxu0 %v5109
      %5593 = vmatmul.mubr.bf16.gmra.mxu0 %v5069
      %v5594 = vpop.f32.mrf.mxu0
      %v5595 = vadd.f32 0.0, %v5594
      %v5596 = vpop.f32.mrf.mxu0
      %v5597 = vpop.f32.mrf.mxu0
      %v5598 = vpop.f32.mrf.mxu0
      %5599 = vmatprep.mubr.bf16.mxu0 %v5110
      %5600 = vmatmul.mubr.bf16.gmra.mxu0 %v5070
      %v5601 = vpop.f32.mrf.mxu0
      %v5602 = vadd.f32 0.0, %v5601
      %v5603 = vpop.f32.mrf.mxu0
      %v5604 = vpop.f32.mrf.mxu0
      %v5605 = vadd.f32 0.0, %v5604
      %v5606 = vpop.f32.mrf.mxu0
      %5607 = vmatprep.mubr.bf16.mxu0 %v5111
      %5608 = vmatmul.mubr.bf16.gmra.mxu0 %v5071
      %v5609 = vpop.f32.mrf.mxu0
      %v5610 = vadd.f32 0.0, %v5609
      %v5611 = vpop.f32.mrf.mxu0
      %v5612 = vpop.f32.mrf.mxu0
      %v5613 = vadd.f32 0.0, %v5612
      %v5614 = vpop.f32.mrf.mxu0
      %5615 = vmatprep.mubr.bf16.mxu0 %v5112
      %5616 = vmatmul.mubr.bf16.gmra.mxu0 %v5072
      %v5617 = vpop.f32.mrf.mxu0
      %v5618 = vpop.f32.mrf.mxu0
      %v5619 = vpop.f32.mrf.mxu0
      %v5620 = vadd.f32 0.0, %v5619
      %v5621 = vpop.f32.mrf.mxu0
      %5622 = vmatprep.mubr.bf16.mxu0 %v5113
      %5623 = vmatmul.mubr.bf16.gmra.mxu0 %v5073
      %v5624 = vpop.f32.mrf.mxu0
      %v5625 = vadd.f32 0.0, %v5624
      %v5626 = vpop.f32.mrf.mxu0
      %v5627 = vpop.f32.mrf.mxu0
      %v5628 = vadd.f32 0.0, %v5627
      %v5629 = vpop.f32.mrf.mxu0
      %5630 = vmatprep.mubr.bf16.mxu0 %v5114
      %5631 = vmatmul.mubr.bf16.gmra.mxu0 %v5074
      %v5632 = vpop.f32.mrf.mxu0
      %v5633 = vadd.f32 0.0, %v5632
      %v5634 = vpop.f32.mrf.mxu0
      %v5635 = vpop.f32.mrf.mxu0
      %v5636 = vpop.f32.mrf.mxu0
      %5637 = vmatprep.mubr.bf16.mxu0 %v5115
      %5638 = vmatmul.mubr.bf16.gmra.mxu0 %v5075
      %v5639 = vpop.f32.mrf.mxu0
      %v5640 = vadd.f32 0.0, %v5639
      %v5641 = vpop.f32.mrf.mxu0
      %v5642 = vpop.f32.mrf.mxu0
      %v5643 = vadd.f32 0.0, %v5642
      %v5644 = vpop.f32.mrf.mxu0
      %5645 = vmatprep.mubr.bf16.mxu0 %v5116
      %5646 = vmatmul.mubr.bf16.gmra.mxu0 %v5076
      %v5647 = vpop.f32.mrf.mxu0
      %v5648 = vadd.f32 0.0, %v5647
      %v5649 = vpop.f32.mrf.mxu0
      %v5650 = vpop.f32.mrf.mxu0
      %v5651 = vadd.f32 0.0, %v5650
      %v5652 = vpop.f32.mrf.mxu0
      %5653 = vmatprep.mubr.bf16.mxu0 %v5117
      %5654 = vmatmul.mubr.bf16.gmra.mxu0 %v5077
      %v5655 = vpop.f32.mrf.mxu0
      %v5656 = vpop.f32.mrf.mxu0
      %v5657 = vpop.f32.mrf.mxu0
      %v5658 = vadd.f32 0.0, %v5657
      %v5659 = vpop.f32.mrf.mxu0
      %5660 = vmatprep.mubr.bf16.mxu0 %v5118
      %5661 = vmatmul.mubr.bf16.gmra.mxu0 %v5078
      %v5662 = vpop.f32.mrf.mxu0
      %v5663 = vadd.f32 0.0, %v5662
      %v5664 = vpop.f32.mrf.mxu0
      %v5665 = vpop.f32.mrf.mxu0
      %v5666 = vadd.f32 0.0, %v5665
      %v5667 = vpop.f32.mrf.mxu0
      %5668 = vmatprep.mubr.bf16.mxu0 %v5119
      %5669 = vmatmul.mubr.bf16.gmra.mxu0 %v5079
      %v5670 = vpop.f32.mrf.mxu0
      %v5671 = vadd.f32 0.0, %v5670
      %v5672 = vpop.f32.mrf.mxu0
      %v5673 = vpop.f32.mrf.mxu0
      %v5674 = vpop.f32.mrf.mxu0
      %5675 = vmatprep.mubr.bf16.mxu0 %v5120
      %5676 = vmatmul.mubr.bf16.gmra.mxu0 %v5080
      %v5677 = vpop.f32.mrf.mxu0
      %v5678 = vadd.f32 0.0, %v5677
      %v5679 = vpop.f32.mrf.mxu0
      %v5680 = vpop.f32.mrf.mxu0
      %v5681 = vadd.f32 0.0, %v5680
      %v5682 = vpop.f32.mrf.mxu0
      %5683 = vmatprep.mubr.bf16.mxu0 %v5121
      %5684 = vmatmul.mubr.bf16.gmra.mxu0 %v5081
      %v5685 = vpop.f32.mrf.mxu0
      %v5686 = vadd.f32 0.0, %v5685
      %v5687 = vpop.f32.mrf.mxu0
      %v5688 = vpop.f32.mrf.mxu0
      %v5689 = vadd.f32 0.0, %v5688
      %v5690 = vpop.f32.mrf.mxu0
      %5691 = vdwg.mxu0
      %5692 = vmatprep.subr.bf16.mxu0 0
      %5693 = vmatpush1.bf16.msra.mxu0 %v5330
      %5694 = vmatprep.subr.bf16.mxu0 0
      %5695 = vmatpush1.bf16.msra.mxu0 %v5329
      %5696 = vmatprep.subr.bf16.mxu0 0
      %5697 = vmatpush1.bf16.msra.mxu0 %v5328
      %5698 = vmatprep.subr.bf16.mxu0 0
      %5699 = vmatpush1.bf16.msra.mxu0 %v5327
      %5700 = vmatprep.subr.bf16.mxu0 0
      %5701 = vmatpush1.bf16.msra.mxu0 %v5326
      %5702 = vmatprep.subr.bf16.mxu0 0
      %5703 = vmatpush1.bf16.msra.mxu0 %v5325
      %5704 = vmatprep.subr.bf16.mxu0 0
      %5705 = vmatpush1.bf16.msra.mxu0 %v5324
      %5706 = vmatprep.subr.bf16.mxu0 0
      %5707 = vmatpush1.bf16.msra.mxu0 %v5323
      %5708 = vmatprep.subr.bf16.mxu0 0
      %5709 = vmatpush2.bf16.msra.mxu0 0
      %5710 = vmatprep.subr.bf16.mxu0 0
      %5711 = vmatpush2.bf16.msra.mxu0 0
      %5712 = vmatprep.subr.bf16.mxu0 0
      %5713 = vmatpush2.bf16.msra.mxu0 0
      %5714 = vmatprep.subr.bf16.mxu0 0
      %5715 = vmatpush2.bf16.msra.mxu0 0
      %5716 = vmatprep.subr.bf16.mxu0 0
      %5717 = vmatpush2.bf16.msra.mxu0 0
      %5718 = vmatprep.subr.bf16.mxu0 0
      %5719 = vmatpush2.bf16.msra.mxu0 0
      %5720 = vmatprep.subr.bf16.mxu0 0
      %5721 = vmatpush2.bf16.msra.mxu0 0
      %5722 = vmatprep.subr.bf16.mxu0 0
      %5723 = vmatpush2.bf16.msra.mxu0 0
      %5724 = vmatprep.mubr.bf16.mxu0 0
      %5725 = vmatmul.mubr.bf16.gmra.mxu0 %v5122
      %v5726 = vpop.f32.mrf.mxu0
      %v5727 = vpop.f32.mrf.mxu0
      %v5728 = vpop.f32.mrf.mxu0
      %v5729 = vadd.f32 %v5392, %v5728
      %v5730 = vpop.f32.mrf.mxu0
      %5731 = vmatprep.mubr.bf16.mxu0 0
      %5732 = vmatmul.mubr.bf16.gmra.mxu0 %v5123
      %v5733 = vpop.f32.mrf.mxu0
      %v5734 = vadd.f32 %v5397, %v5733
      %v5735 = vpop.f32.mrf.mxu0
      %v5736 = vpop.f32.mrf.mxu0
      %v5737 = vadd.f32 %v5400, %v5736
      %v5738 = vpop.f32.mrf.mxu0
      %5739 = vmatprep.mubr.bf16.mxu0 0
      %5740 = vmatmul.mubr.bf16.gmra.mxu0 %v5124
      %v5741 = vpop.f32.mrf.mxu0
      %v5742 = vadd.f32 %v5405, %v5741
      %v5743 = vpop.f32.mrf.mxu0
      %v5744 = vpop.f32.mrf.mxu0
      %v5745 = vpop.f32.mrf.mxu0
      %5746 = vmatprep.mubr.bf16.mxu0 0
      %5747 = vmatmul.mubr.bf16.gmra.mxu0 %v5125
      %v5748 = vpop.f32.mrf.mxu0
      %v5749 = vadd.f32 %v5412, %v5748
      %v5750 = vpop.f32.mrf.mxu0
      %v5751 = vpop.f32.mrf.mxu0
      %v5752 = vadd.f32 %v5415, %v5751
      %v5753 = vpop.f32.mrf.mxu0
      %5754 = vmatprep.mubr.bf16.mxu0 0
      %5755 = vmatmul.mubr.bf16.gmra.mxu0 %v5126
      %v5756 = vpop.f32.mrf.mxu0
      %v5757 = vadd.f32 %v5420, %v5756
      %v5758 = vpop.f32.mrf.mxu0
      %v5759 = vpop.f32.mrf.mxu0
      %v5760 = vadd.f32 %v5423, %v5759
      %v5761 = vpop.f32.mrf.mxu0
      %5762 = vmatprep.mubr.bf16.mxu0 0
      %5763 = vmatmul.mubr.bf16.gmra.mxu0 %v5127
      %v5764 = vpop.f32.mrf.mxu0
      %v5765 = vpop.f32.mrf.mxu0
      %v5766 = vpop.f32.mrf.mxu0
      %v5767 = vadd.f32 %v5430, %v5766
      %v5768 = vpop.f32.mrf.mxu0
      %5769 = vmatprep.mubr.bf16.mxu0 0
      %5770 = vmatmul.mubr.bf16.gmra.mxu0 %v5128
      %v5771 = vpop.f32.mrf.mxu0
      %v5772 = vadd.f32 %v5435, %v5771
      %v5773 = vpop.f32.mrf.mxu0
      %v5774 = vpop.f32.mrf.mxu0
      %v5775 = vadd.f32 %v5438, %v5774
      %v5776 = vpop.f32.mrf.mxu0
      %5777 = vmatprep.mubr.bf16.mxu0 0
      %5778 = vmatmul.mubr.bf16.gmra.mxu0 %v5129
      %v5779 = vpop.f32.mrf.mxu0
      %v5780 = vadd.f32 %v5443, %v5779
      %v5781 = vpop.f32.mrf.mxu0
      %v5782 = vpop.f32.mrf.mxu0
      %v5783 = vpop.f32.mrf.mxu0
      %5784 = vmatprep.mubr.bf16.mxu0 0
      %5785 = vmatmul.mubr.bf16.gmra.mxu0 %v5130
      %v5786 = vpop.f32.mrf.mxu0
      %v5787 = vadd.f32 %v5450, %v5786
      %v5788 = vpop.f32.mrf.mxu0
      %v5789 = vpop.f32.mrf.mxu0
      %v5790 = vadd.f32 %v5453, %v5789
      %v5791 = vpop.f32.mrf.mxu0
      %5792 = vmatprep.mubr.bf16.mxu0 0
      %5793 = vmatmul.mubr.bf16.gmra.mxu0 %v5131
      %v5794 = vpop.f32.mrf.mxu0
      %v5795 = vadd.f32 %v5458, %v5794
      %v5796 = vpop.f32.mrf.mxu0
      %v5797 = vpop.f32.mrf.mxu0
      %v5798 = vadd.f32 %v5461, %v5797
      %v5799 = vpop.f32.mrf.mxu0
      %5800 = vmatprep.mubr.bf16.mxu0 0
      %5801 = vmatmul.mubr.bf16.gmra.mxu0 %v5132
      %v5802 = vpop.f32.mrf.mxu0
      %v5803 = vpop.f32.mrf.mxu0
      %v5804 = vpop.f32.mrf.mxu0
      %v5805 = vadd.f32 %v5468, %v5804
      %v5806 = vpop.f32.mrf.mxu0
      %5807 = vmatprep.mubr.bf16.mxu0 0
      %5808 = vmatmul.mubr.bf16.gmra.mxu0 %v5133
      %v5809 = vpop.f32.mrf.mxu0
      %v5810 = vadd.f32 %v5473, %v5809
      %v5811 = vpop.f32.mrf.mxu0
      %v5812 = vpop.f32.mrf.mxu0
      %v5813 = vadd.f32 %v5476, %v5812
      %v5814 = vpop.f32.mrf.mxu0
      %5815 = vmatprep.mubr.bf16.mxu0 0
      %5816 = vmatmul.mubr.bf16.gmra.mxu0 %v5134
      %v5817 = vpop.f32.mrf.mxu0
      %v5818 = vadd.f32 %v5481, %v5817
      %v5819 = vpop.f32.mrf.mxu0
      %v5820 = vpop.f32.mrf.mxu0
      %v5821 = vpop.f32.mrf.mxu0
      %5822 = vmatprep.mubr.bf16.mxu0 0
      %5823 = vmatmul.mubr.bf16.gmra.mxu0 %v5135
      %v5824 = vpop.f32.mrf.mxu0
      %v5825 = vadd.f32 %v5488, %v5824
      %v5826 = vpop.f32.mrf.mxu0
      %v5827 = vpop.f32.mrf.mxu0
      %v5828 = vadd.f32 %v5491, %v5827
      %v5829 = vpop.f32.mrf.mxu0
      %5830 = vmatprep.mubr.bf16.mxu0 0
      %5831 = vmatmul.mubr.bf16.gmra.mxu0 %v5136
      %v5832 = vpop.f32.mrf.mxu0
      %v5833 = vadd.f32 %v5496, %v5832
      %v5834 = vpop.f32.mrf.mxu0
      %v5835 = vpop.f32.mrf.mxu0
      %v5836 = vadd.f32 %v5499, %v5835
      %v5837 = vpop.f32.mrf.mxu0
      %5838 = vmatprep.mubr.bf16.mxu0 0
      %5839 = vmatmul.mubr.bf16.gmra.mxu0 %v5137
      %v5840 = vpop.f32.mrf.mxu0
      %v5841 = vpop.f32.mrf.mxu0
      %v5842 = vpop.f32.mrf.mxu0
      %v5843 = vadd.f32 %v5506, %v5842
      %v5844 = vpop.f32.mrf.mxu0
      %5845 = vmatprep.mubr.bf16.mxu0 0
      %5846 = vmatmul.mubr.bf16.gmra.mxu0 %v5138
      %v5847 = vpop.f32.mrf.mxu0
      %v5848 = vadd.f32 %v5511, %v5847
      %v5849 = vpop.f32.mrf.mxu0
      %v5850 = vpop.f32.mrf.mxu0
      %v5851 = vadd.f32 %v5514, %v5850
      %v5852 = vpop.f32.mrf.mxu0
      %5853 = vmatprep.mubr.bf16.mxu0 0
      %5854 = vmatmul.mubr.bf16.gmra.mxu0 %v5139
      %v5855 = vpop.f32.mrf.mxu0
      %v5856 = vadd.f32 %v5519, %v5855
      %v5857 = vpop.f32.mrf.mxu0
      %v5858 = vpop.f32.mrf.mxu0
      %v5859 = vpop.f32.mrf.mxu0
      %5860 = vmatprep.mubr.bf16.mxu0 0
      %5861 = vmatmul.mubr.bf16.gmra.mxu0 %v5140
      %v5862 = vpop.f32.mrf.mxu0
      %v5863 = vadd.f32 %v5526, %v5862
      %v5864 = vpop.f32.mrf.mxu0
      %v5865 = vpop.f32.mrf.mxu0
      %v5866 = vadd.f32 %v5529, %v5865
      %v5867 = vpop.f32.mrf.mxu0
      %5868 = vmatprep.mubr.bf16.mxu0 0
      %5869 = vmatmul.mubr.bf16.gmra.mxu0 %v5141
      %v5870 = vpop.f32.mrf.mxu0
      %v5871 = vadd.f32 %v5534, %v5870
      %v5872 = vpop.f32.mrf.mxu0
      %v5873 = vpop.f32.mrf.mxu0
      %v5874 = vadd.f32 %v5537, %v5873
      %v5875 = vpop.f32.mrf.mxu0
      %5876 = vmatprep.mubr.bf16.mxu0 0
      %5877 = vmatmul.mubr.bf16.gmra.mxu0 %v5142
      %v5878 = vpop.f32.mrf.mxu0
      %v5879 = vpop.f32.mrf.mxu0
      %v5880 = vpop.f32.mrf.mxu0
      %v5881 = vadd.f32 %v5544, %v5880
      %v5882 = vpop.f32.mrf.mxu0
      %5883 = vmatprep.mubr.bf16.mxu0 0
      %5884 = vmatmul.mubr.bf16.gmra.mxu0 %v5143
      %v5885 = vpop.f32.mrf.mxu0
      %v5886 = vadd.f32 %v5549, %v5885
      %v5887 = vpop.f32.mrf.mxu0
      %v5888 = vpop.f32.mrf.mxu0
      %v5889 = vadd.f32 %v5552, %v5888
      %v5890 = vpop.f32.mrf.mxu0
      %5891 = vmatprep.mubr.bf16.mxu0 0
      %5892 = vmatmul.mubr.bf16.gmra.mxu0 %v5144
      %v5893 = vpop.f32.mrf.mxu0
      %v5894 = vadd.f32 %v5557, %v5893
      %v5895 = vpop.f32.mrf.mxu0
      %v5896 = vpop.f32.mrf.mxu0
      %v5897 = vpop.f32.mrf.mxu0
      %5898 = vmatprep.mubr.bf16.mxu0 0
      %5899 = vmatmul.mubr.bf16.gmra.mxu0 %v5145
      %v5900 = vpop.f32.mrf.mxu0
      %v5901 = vadd.f32 %v5564, %v5900
      %v5902 = vpop.f32.mrf.mxu0
      %v5903 = vpop.f32.mrf.mxu0
      %v5904 = vadd.f32 %v5567, %v5903
      %v5905 = vpop.f32.mrf.mxu0
      %5906 = vmatprep.mubr.bf16.mxu0 0
      %5907 = vmatmul.mubr.bf16.gmra.mxu0 %v5146
      %v5908 = vpop.f32.mrf.mxu0
      %v5909 = vadd.f32 %v5572, %v5908
      %v5910 = vpop.f32.mrf.mxu0
      %v5911 = vpop.f32.mrf.mxu0
      %v5912 = vadd.f32 %v5575, %v5911
      %v5913 = vpop.f32.mrf.mxu0
      %5914 = vmatprep.mubr.bf16.mxu0 0
      %5915 = vmatmul.mubr.bf16.gmra.mxu0 %v5147
      %v5916 = vpop.f32.mrf.mxu0
      %v5917 = vpop.f32.mrf.mxu0
      %v5918 = vpop.f32.mrf.mxu0
      %v5919 = vadd.f32 %v5582, %v5918
      %v5920 = vpop.f32.mrf.mxu0
      %5921 = vmatprep.mubr.bf16.mxu0 0
      %5922 = vmatmul.mubr.bf16.gmra.mxu0 %v5148
      %v5923 = vpop.f32.mrf.mxu0
      %v5924 = vadd.f32 %v5587, %v5923
      %v5925 = vpop.f32.mrf.mxu0
      %v5926 = vpop.f32.mrf.mxu0
      %v5927 = vadd.f32 %v5590, %v5926
      %v5928 = vpop.f32.mrf.mxu0
      %5929 = vmatprep.mubr.bf16.mxu0 0
      %5930 = vmatmul.mubr.bf16.gmra.mxu0 %v5149
      %v5931 = vpop.f32.mrf.mxu0
      %v5932 = vadd.f32 %v5595, %v5931
      %v5933 = vpop.f32.mrf.mxu0
      %v5934 = vpop.f32.mrf.mxu0
      %v5935 = vpop.f32.mrf.mxu0
      %5936 = vmatprep.mubr.bf16.mxu0 0
      %5937 = vmatmul.mubr.bf16.gmra.mxu0 %v5150
      %v5938 = vpop.f32.mrf.mxu0
      %v5939 = vadd.f32 %v5602, %v5938
      %v5940 = vpop.f32.mrf.mxu0
      %v5941 = vpop.f32.mrf.mxu0
      %v5942 = vadd.f32 %v5605, %v5941
      %v5943 = vpop.f32.mrf.mxu0
      %5944 = vmatprep.mubr.bf16.mxu0 0
      %5945 = vmatmul.mubr.bf16.gmra.mxu0 %v5151
      %v5946 = vpop.f32.mrf.mxu0
      %v5947 = vadd.f32 %v5610, %v5946
      %v5948 = vpop.f32.mrf.mxu0
      %v5949 = vpop.f32.mrf.mxu0
      %v5950 = vadd.f32 %v5613, %v5949
      %v5951 = vpop.f32.mrf.mxu0
      %5952 = vmatprep.mubr.bf16.mxu0 0
      %5953 = vmatmul.mubr.bf16.gmra.mxu0 %v5152
      %v5954 = vpop.f32.mrf.mxu0
      %v5955 = vpop.f32.mrf.mxu0
      %v5956 = vpop.f32.mrf.mxu0
      %v5957 = vadd.f32 %v5620, %v5956
      %v5958 = vpop.f32.mrf.mxu0
      %5959 = vmatprep.mubr.bf16.mxu0 0
      %5960 = vmatmul.mubr.bf16.gmra.mxu0 %v5153
      %v5961 = vpop.f32.mrf.mxu0
      %v5962 = vadd.f32 %v5625, %v5961
      %v5963 = vpop.f32.mrf.mxu0
      %v5964 = vpop.f32.mrf.mxu0
      %v5965 = vadd.f32 %v5628, %v5964
      %v5966 = vpop.f32.mrf.mxu0
      %5967 = vmatprep.mubr.bf16.mxu0 0
      %5968 = vmatmul.mubr.bf16.gmra.mxu0 %v5154
      %v5969 = vpop.f32.mrf.mxu0
      %v5970 = vadd.f32 %v5633, %v5969
      %v5971 = vpop.f32.mrf.mxu0
      %v5972 = vpop.f32.mrf.mxu0
      %v5973 = vpop.f32.mrf.mxu0
      %5974 = vmatprep.mubr.bf16.mxu0 0
      %5975 = vmatmul.mubr.bf16.gmra.mxu0 %v5155
      %v5976 = vpop.f32.mrf.mxu0
      %v5977 = vadd.f32 %v5640, %v5976
      %v5978 = vpop.f32.mrf.mxu0
      %v5979 = vpop.f32.mrf.mxu0
      %v5980 = vadd.f32 %v5643, %v5979
      %v5981 = vpop.f32.mrf.mxu0
      %5982 = vmatprep.mubr.bf16.mxu0 0
      %5983 = vmatmul.mubr.bf16.gmra.mxu0 %v5156
      %v5984 = vpop.f32.mrf.mxu0
      %v5985 = vadd.f32 %v5648, %v5984
      %v5986 = vpop.f32.mrf.mxu0
      %v5987 = vpop.f32.mrf.mxu0
      %v5988 = vadd.f32 %v5651, %v5987
      %v5989 = vpop.f32.mrf.mxu0
      %5990 = vmatprep.mubr.bf16.mxu0 0
      %5991 = vmatmul.mubr.bf16.gmra.mxu0 %v5157
      %v5992 = vpop.f32.mrf.mxu0
      %v5993 = vpop.f32.mrf.mxu0
      %v5994 = vpop.f32.mrf.mxu0
      %v5995 = vadd.f32 %v5658, %v5994
      %v5996 = vpop.f32.mrf.mxu0
      %5997 = vmatprep.mubr.bf16.mxu0 0
      %5998 = vmatmul.mubr.bf16.gmra.mxu0 %v5158
      %v5999 = vpop.f32.mrf.mxu0
      %v6000 = vadd.f32 %v5663, %v5999
      %v6001 = vpop.f32.mrf.mxu0
      %v6002 = vpop.f32.mrf.mxu0
      %v6003 = vadd.f32 %v5666, %v6002
      %v6004 = vpop.f32.mrf.mxu0
      %6005 = vmatprep.mubr.bf16.mxu0 0
      %6006 = vmatmul.mubr.bf16.gmra.mxu0 %v5159
      %v6007 = vpop.f32.mrf.mxu0
      %v6008 = vadd.f32 %v5671, %v6007
      %v6009 = vpop.f32.mrf.mxu0
      %v6010 = vpop.f32.mrf.mxu0
      %v6011 = vpop.f32.mrf.mxu0
      %6012 = vmatprep.mubr.bf16.mxu0 0
      %6013 = vmatmul.mubr.bf16.gmra.mxu0 %v5160
      %v6014 = vpop.f32.mrf.mxu0
      %v6015 = vadd.f32 %v5678, %v6014
      %v6016 = vpop.f32.mrf.mxu0
      %v6017 = vpop.f32.mrf.mxu0
      %v6018 = vadd.f32 %v5681, %v6017
      %v6019 = vpop.f32.mrf.mxu0
      %6020 = vmatprep.mubr.bf16.mxu0 0
      %6021 = vmatmul.mubr.bf16.gmra.mxu0 %v5161
      %v6022 = vpop.f32.mrf.mxu0
      %v6023 = vadd.f32 %v5686, %v6022
      %v6024 = vpop.f32.mrf.mxu0
      %v6025 = vpop.f32.mrf.mxu0
      %v6026 = vadd.f32 %v5689, %v6025
      %v6027 = vpop.f32.mrf.mxu0
      %6028 = vdwg.mxu0
      %s6029 = scalar_lea.vmem %s5, 2
      %v6030 = vld [vmem:[%s6029] sm:$0x1]
      %v6032 = vlaneseq
      %v6033 = vshrl.u32 %v6032, 7
      %v6034 = vsub.s32 0, %v6033
      %v6035 = vrot.slane %v6030, %v6034
      %v6037 = vmul.f32 %v5729, %v6035
      %v6038 = vmul.f32 %v5734, %v6035
      %v6039 = vmul.f32 %v5737, %v6035
      %v6040 = vmul.f32 %v5742, %v6035
      %v6041 = vmul.f32 %v5749, %v6035
      %v6042 = vmul.f32 %v5752, %v6035
      %v6043 = vmul.f32 %v5757, %v6035
      %v6044 = vmul.f32 %v5760, %v6035
      %v6045 = vmul.f32 %v5767, %v6035
      %v6046 = vmul.f32 %v5772, %v6035
      %v6047 = vmul.f32 %v5775, %v6035
      %v6048 = vmul.f32 %v5780, %v6035
      %v6049 = vmul.f32 %v5787, %v6035
      %v6050 = vmul.f32 %v5790, %v6035
      %v6051 = vmul.f32 %v5795, %v6035
      %v6052 = vmul.f32 %v5798, %v6035
      %v6053 = vmul.f32 %v5805, %v6035
      %v6054 = vmul.f32 %v5810, %v6035
      %v6055 = vmul.f32 %v5813, %v6035
      %v6056 = vmul.f32 %v5818, %v6035
      %v6057 = vmul.f32 %v5825, %v6035
      %v6058 = vmul.f32 %v5828, %v6035
      %v6059 = vmul.f32 %v5833, %v6035
      %v6060 = vmul.f32 %v5836, %v6035
      %v6061 = vmul.f32 %v5843, %v6035
      %v6062 = vmul.f32 %v5848, %v6035
      %v6063 = vmul.f32 %v5851, %v6035
      %v6064 = vmul.f32 %v5856, %v6035
      %v6065 = vmul.f32 %v5863, %v6035
      %v6066 = vmul.f32 %v5866, %v6035
      %v6067 = vmul.f32 %v5871, %v6035
      %v6068 = vmul.f32 %v5874, %v6035
      %v6069 = vmul.f32 %v5881, %v6035
      %v6070 = vmul.f32 %v5886, %v6035
      %v6071 = vmul.f32 %v5889, %v6035
      %v6072 = vmul.f32 %v5894, %v6035
      %v6073 = vmul.f32 %v5901, %v6035
      %v6074 = vmul.f32 %v5904, %v6035
      %v6075 = vmul.f32 %v5909, %v6035
      %v6076 = vmul.f32 %v5912, %v6035
      %v6077 = vmul.f32 %v5919, %v6035
      %v6078 = vmul.f32 %v5924, %v6035
      %v6079 = vmul.f32 %v5927, %v6035
      %v6080 = vmul.f32 %v5932, %v6035
      %v6081 = vmul.f32 %v5939, %v6035
      %v6082 = vmul.f32 %v5942, %v6035
      %v6083 = vmul.f32 %v5947, %v6035
      %v6084 = vmul.f32 %v5950, %v6035
      %v6085 = vmul.f32 %v5957, %v6035
      %v6086 = vmul.f32 %v5962, %v6035
      %v6087 = vmul.f32 %v5965, %v6035
      %v6088 = vmul.f32 %v5970, %v6035
      %v6089 = vmul.f32 %v5977, %v6035
      %v6090 = vmul.f32 %v5980, %v6035
      %v6091 = vmul.f32 %v5985, %v6035
      %v6092 = vmul.f32 %v5988, %v6035
      %v6093 = vmul.f32 %v5995, %v6035
      %v6094 = vmul.f32 %v6000, %v6035
      %v6095 = vmul.f32 %v6003, %v6035
      %v6096 = vmul.f32 %v6008, %v6035
      %v6097 = vmul.f32 %v6015, %v6035
      %v6098 = vmul.f32 %v6018, %v6035
      %v6099 = vmul.f32 %v6023, %v6035
      %v6100 = vmul.f32 %v6026, %v6035
      %s6101 = scalar_lea.vmem %s6, 2
      %v6102 = vld [vmem:[%s6101] sm:$0x1]
      %v6104 = vlaneseq
      %v6105 = vshrl.u32 %v6104, 7
      %v6106 = vsub.s32 0, %v6105
      %v6107 = vrot.slane %v6102, %v6106
      %v6109 = vadd.f32 %v6037, %v6107
      %v6110 = vadd.f32 %v6038, %v6107
      %v6111 = vadd.f32 %v6039, %v6107
      %v6112 = vadd.f32 %v6040, %v6107
      %v6113 = vadd.f32 %v6041, %v6107
      %v6114 = vadd.f32 %v6042, %v6107
      %v6115 = vadd.f32 %v6043, %v6107
      %v6116 = vadd.f32 %v6044, %v6107
      %v6117 = vadd.f32 %v6045, %v6107
      %v6118 = vadd.f32 %v6046, %v6107
      %v6119 = vadd.f32 %v6047, %v6107
      %v6120 = vadd.f32 %v6048, %v6107
      %v6121 = vadd.f32 %v6049, %v6107
      %v6122 = vadd.f32 %v6050, %v6107
      %v6123 = vadd.f32 %v6051, %v6107
      %v6124 = vadd.f32 %v6052, %v6107
      %v6125 = vadd.f32 %v6053, %v6107
      %v6126 = vadd.f32 %v6054, %v6107
      %v6127 = vadd.f32 %v6055, %v6107
      %v6128 = vadd.f32 %v6056, %v6107
      %v6129 = vadd.f32 %v6057, %v6107
      %v6130 = vadd.f32 %v6058, %v6107
      %v6131 = vadd.f32 %v6059, %v6107
      %v6132 = vadd.f32 %v6060, %v6107
      %v6133 = vadd.f32 %v6061, %v6107
      %v6134 = vadd.f32 %v6062, %v6107
      %v6135 = vadd.f32 %v6063, %v6107
      %v6136 = vadd.f32 %v6064, %v6107
      %v6137 = vadd.f32 %v6065, %v6107
      %v6138 = vadd.f32 %v6066, %v6107
      %v6139 = vadd.f32 %v6067, %v6107
      %v6140 = vadd.f32 %v6068, %v6107
      %v6141 = vadd.f32 %v6069, %v6107
      %v6142 = vadd.f32 %v6070, %v6107
      %v6143 = vadd.f32 %v6071, %v6107
      %v6144 = vadd.f32 %v6072, %v6107
      %v6145 = vadd.f32 %v6073, %v6107
      %v6146 = vadd.f32 %v6074, %v6107
      %v6147 = vadd.f32 %v6075, %v6107
      %v6148 = vadd.f32 %v6076, %v6107
      %v6149 = vadd.f32 %v6077, %v6107
      %v6150 = vadd.f32 %v6078, %v6107
      %v6151 = vadd.f32 %v6079, %v6107
      %v6152 = vadd.f32 %v6080, %v6107
      %v6153 = vadd.f32 %v6081, %v6107
      %v6154 = vadd.f32 %v6082, %v6107
      %v6155 = vadd.f32 %v6083, %v6107
      %v6156 = vadd.f32 %v6084, %v6107
      %v6157 = vadd.f32 %v6085, %v6107
      %v6158 = vadd.f32 %v6086, %v6107
      %v6159 = vadd.f32 %v6087, %v6107
      %v6160 = vadd.f32 %v6088, %v6107
      %v6161 = vadd.f32 %v6089, %v6107
      %v6162 = vadd.f32 %v6090, %v6107
      %v6163 = vadd.f32 %v6091, %v6107
      %v6164 = vadd.f32 %v6092, %v6107
      %v6165 = vadd.f32 %v6093, %v6107
      %v6166 = vadd.f32 %v6094, %v6107
      %v6167 = vadd.f32 %v6095, %v6107
      %v6168 = vadd.f32 %v6096, %v6107
      %v6169 = vadd.f32 %v6097, %v6107
      %v6170 = vadd.f32 %v6098, %v6107
      %v6171 = vadd.f32 %v6099, %v6107
      %v6172 = vadd.f32 %v6100, %v6107
      %v6173 = vmax.f32 %v6109, 0.0
      %v6174 = vmax.f32 %v6110, 0.0
      %v6175 = vmax.f32 %v6111, 0.0
      %v6176 = vmax.f32 %v6112, 0.0
      %v6177 = vmax.f32 %v6113, 0.0
      %v6178 = vmax.f32 %v6114, 0.0
      %v6179 = vmax.f32 %v6115, 0.0
      %v6180 = vmax.f32 %v6116, 0.0
      %v6181 = vmax.f32 %v6117, 0.0
      %v6182 = vmax.f32 %v6118, 0.0
      %v6183 = vmax.f32 %v6119, 0.0
      %v6184 = vmax.f32 %v6120, 0.0
      %v6185 = vmax.f32 %v6121, 0.0
      %v6186 = vmax.f32 %v6122, 0.0
      %v6187 = vmax.f32 %v6123, 0.0
      %v6188 = vmax.f32 %v6124, 0.0
      %v6189 = vmax.f32 %v6125, 0.0
      %v6190 = vmax.f32 %v6126, 0.0
      %v6191 = vmax.f32 %v6127, 0.0
      %v6192 = vmax.f32 %v6128, 0.0
      %v6193 = vmax.f32 %v6129, 0.0
      %v6194 = vmax.f32 %v6130, 0.0
      %v6195 = vmax.f32 %v6131, 0.0
      %v6196 = vmax.f32 %v6132, 0.0
      %v6197 = vmax.f32 %v6133, 0.0
      %v6198 = vmax.f32 %v6134, 0.0
      %v6199 = vmax.f32 %v6135, 0.0
      %v6200 = vmax.f32 %v6136, 0.0
      %v6201 = vmax.f32 %v6137, 0.0
      %v6202 = vmax.f32 %v6138, 0.0
      %v6203 = vmax.f32 %v6139, 0.0
      %v6204 = vmax.f32 %v6140, 0.0
      %v6205 = vmax.f32 %v6141, 0.0
      %v6206 = vmax.f32 %v6142, 0.0
      %v6207 = vmax.f32 %v6143, 0.0
      %v6208 = vmax.f32 %v6144, 0.0
      %v6209 = vmax.f32 %v6145, 0.0
      %v6210 = vmax.f32 %v6146, 0.0
      %v6211 = vmax.f32 %v6147, 0.0
      %v6212 = vmax.f32 %v6148, 0.0
      %v6213 = vmax.f32 %v6149, 0.0
      %v6214 = vmax.f32 %v6150, 0.0
      %v6215 = vmax.f32 %v6151, 0.0
      %v6216 = vmax.f32 %v6152, 0.0
      %v6217 = vmax.f32 %v6153, 0.0
      %v6218 = vmax.f32 %v6154, 0.0
      %v6219 = vmax.f32 %v6155, 0.0
      %v6220 = vmax.f32 %v6156, 0.0
      %v6221 = vmax.f32 %v6157, 0.0
      %v6222 = vmax.f32 %v6158, 0.0
      %v6223 = vmax.f32 %v6159, 0.0
      %v6224 = vmax.f32 %v6160, 0.0
      %v6225 = vmax.f32 %v6161, 0.0
      %v6226 = vmax.f32 %v6162, 0.0
      %v6227 = vmax.f32 %v6163, 0.0
      %v6228 = vmax.f32 %v6164, 0.0
      %v6229 = vmax.f32 %v6165, 0.0
      %v6230 = vmax.f32 %v6166, 0.0
      %v6231 = vmax.f32 %v6167, 0.0
      %v6232 = vmax.f32 %v6168, 0.0
      %v6233 = vmax.f32 %v6169, 0.0
      %v6234 = vmax.f32 %v6170, 0.0
      %v6235 = vmax.f32 %v6171, 0.0
      %v6236 = vmax.f32 %v6172, 0.0
      %v6237 = vsel %vm411, %v6173, 0.0
      %v6238 = vsel %vm412, %v6174, 0.0
      %v6239 = vsel %vm413, %v6175, 0.0
      %v6240 = vsel %vm414, %v6176, 0.0
      %v6241 = vsel %vm411, %v6177, 0.0
      %v6242 = vsel %vm412, %v6178, 0.0
      %v6243 = vsel %vm413, %v6179, 0.0
      %v6244 = vsel %vm414, %v6180, 0.0
      %v6245 = vsel %vm411, %v6181, 0.0
      %v6246 = vsel %vm412, %v6182, 0.0
      %v6247 = vsel %vm413, %v6183, 0.0
      %v6248 = vsel %vm414, %v6184, 0.0
      %v6249 = vsel %vm411, %v6185, 0.0
      %v6250 = vsel %vm412, %v6186, 0.0
      %v6251 = vsel %vm413, %v6187, 0.0
      %v6252 = vsel %vm414, %v6188, 0.0
      %v6253 = vsel %vm411, %v6189, 0.0
      %v6254 = vsel %vm412, %v6190, 0.0
      %v6255 = vsel %vm413, %v6191, 0.0
      %v6256 = vsel %vm414, %v6192, 0.0
      %v6257 = vsel %vm411, %v6193, 0.0
      %v6258 = vsel %vm412, %v6194, 0.0
      %v6259 = vsel %vm413, %v6195, 0.0
      %v6260 = vsel %vm414, %v6196, 0.0
      %v6261 = vsel %vm411, %v6197, 0.0
      %v6262 = vsel %vm412, %v6198, 0.0
      %v6263 = vsel %vm413, %v6199, 0.0
      %v6264 = vsel %vm414, %v6200, 0.0
      %v6265 = vsel %vm411, %v6201, 0.0
      %v6266 = vsel %vm412, %v6202, 0.0
      %v6267 = vsel %vm413, %v6203, 0.0
      %v6268 = vsel %vm414, %v6204, 0.0
      %v6269 = vsel %vm411, %v6205, 0.0
      %v6270 = vsel %vm412, %v6206, 0.0
      %v6271 = vsel %vm413, %v6207, 0.0
      %v6272 = vsel %vm414, %v6208, 0.0
      %v6273 = vsel %vm411, %v6209, 0.0
      %v6274 = vsel %vm412, %v6210, 0.0
      %v6275 = vsel %vm413, %v6211, 0.0
      %v6276 = vsel %vm414, %v6212, 0.0
      %v6277 = vsel %vm411, %v6213, 0.0
      %v6278 = vsel %vm412, %v6214, 0.0
      %v6279 = vsel %vm413, %v6215, 0.0
      %v6280 = vsel %vm414, %v6216, 0.0
      %v6281 = vsel %vm411, %v6217, 0.0
      %v6282 = vsel %vm412, %v6218, 0.0
      %v6283 = vsel %vm413, %v6219, 0.0
      %v6284 = vsel %vm414, %v6220, 0.0
      %v6285 = vsel %vm411, %v6221, 0.0
      %v6286 = vsel %vm412, %v6222, 0.0
      %v6287 = vsel %vm413, %v6223, 0.0
      %v6288 = vsel %vm414, %v6224, 0.0
      %v6289 = vsel %vm411, %v6225, 0.0
      %v6290 = vsel %vm412, %v6226, 0.0
      %v6291 = vsel %vm413, %v6227, 0.0
      %v6292 = vsel %vm414, %v6228, 0.0
      %v6293 = vsel %vm411, %v6229, 0.0
      %v6294 = vsel %vm412, %v6230, 0.0
      %v6295 = vsel %vm413, %v6231, 0.0
      %v6296 = vsel %vm414, %v6232, 0.0
      %v6297 = vsel %vm411, %v6233, 0.0
      %v6298 = vsel %vm412, %v6234, 0.0
      %v6299 = vsel %vm413, %v6235, 0.0
      %v6300 = vsel %vm414, %v6236, 0.0
      %v6301 = vadd.f32 %v6237, %v1451
      %v6302 = vadd.f32 %v6238, %v1452
      %v6303 = vadd.f32 %v6239, %v1453
      %v6304 = vadd.f32 %v6240, %v1454
      %v6305 = vadd.f32 %v6241, %v1456
      %v6306 = vadd.f32 %v6242, %v1457
      %v6307 = vadd.f32 %v6243, %v1458
      %v6308 = vadd.f32 %v6244, %v1459
      %v6309 = vadd.f32 %v6245, %v1461
      %v6310 = vadd.f32 %v6246, %v1462
      %v6311 = vadd.f32 %v6247, %v1463
      %v6312 = vadd.f32 %v6248, %v1464
      %v6313 = vadd.f32 %v6249, %v1466
      %v6314 = vadd.f32 %v6250, %v1467
      %v6315 = vadd.f32 %v6251, %v1468
      %v6316 = vadd.f32 %v6252, %v1469
      %v6317 = vadd.f32 %v6253, %v1471
      %v6318 = vadd.f32 %v6254, %v1472
      %v6319 = vadd.f32 %v6255, %v1473
      %v6320 = vadd.f32 %v6256, %v1474
      %v6321 = vadd.f32 %v6257, %v1476
      %v6322 = vadd.f32 %v6258, %v1477
      %v6323 = vadd.f32 %v6259, %v1478
      %v6324 = vadd.f32 %v6260, %v1479
      %v6325 = vadd.f32 %v6261, %v1481
      %v6326 = vadd.f32 %v6262, %v1482
      %v6327 = vadd.f32 %v6263, %v1483
      %v6328 = vadd.f32 %v6264, %v1484
      %v6329 = vadd.f32 %v6265, %v1486
      %v6330 = vadd.f32 %v6266, %v1487
      %v6331 = vadd.f32 %v6267, %v1488
      %v6332 = vadd.f32 %v6268, %v1489
      %v6333 = vadd.f32 %v6269, %v1491
      %v6334 = vadd.f32 %v6270, %v1492
      %v6335 = vadd.f32 %v6271, %v1493
      %v6336 = vadd.f32 %v6272, %v1494
      %v6337 = vadd.f32 %v6273, %v1496
      %v6338 = vadd.f32 %v6274, %v1497
      %v6339 = vadd.f32 %v6275, %v1498
      %v6340 = vadd.f32 %v6276, %v1499
      %v6341 = vadd.f32 %v6277, %v1501
      %v6342 = vadd.f32 %v6278, %v1502
      %v6343 = vadd.f32 %v6279, %v1503
      %v6344 = vadd.f32 %v6280, %v1504
      %v6345 = vadd.f32 %v6281, %v1506
      %v6346 = vadd.f32 %v6282, %v1507
      %v6347 = vadd.f32 %v6283, %v1508
      %v6348 = vadd.f32 %v6284, %v1509
      %v6349 = vadd.f32 %v6285, %v1511
      %v6350 = vadd.f32 %v6286, %v1512
      %v6351 = vadd.f32 %v6287, %v1513
      %v6352 = vadd.f32 %v6288, %v1514
      %v6353 = vadd.f32 %v6289, %v1516
      %v6354 = vadd.f32 %v6290, %v1517
      %v6355 = vadd.f32 %v6291, %v1518
      %v6356 = vadd.f32 %v6292, %v1519
      %v6357 = vadd.f32 %v6293, %v1521
      %v6358 = vadd.f32 %v6294, %v1522
      %v6359 = vadd.f32 %v6295, %v1523
      %v6360 = vadd.f32 %v6296, %v1524
      %v6361 = vadd.f32 %v6297, %v1526
      %v6362 = vadd.f32 %v6298, %v1527
      %v6363 = vadd.f32 %v6299, %v1528
      %v6364 = vadd.f32 %v6300, %v1529
      %v6365 = vrot.slane %v6301, 1
      %v6366 = vrot.slane %v6302, 1
      %v6367 = vrot.slane %v6303, 1
      %v6368 = vrot.slane %v6305, 1
      %v6369 = vrot.slane %v6306, 1
      %v6370 = vrot.slane %v6307, 1
      %v6371 = vrot.slane %v6309, 1
      %v6372 = vrot.slane %v6310, 1
      %v6373 = vrot.slane %v6311, 1
      %v6374 = vrot.slane %v6313, 1
      %v6375 = vrot.slane %v6314, 1
      %v6376 = vrot.slane %v6315, 1
      %v6377 = vrot.slane %v6317, 1
      %v6378 = vrot.slane %v6318, 1
      %v6379 = vrot.slane %v6319, 1
      %v6380 = vrot.slane %v6321, 1
      %v6381 = vrot.slane %v6322, 1
      %v6382 = vrot.slane %v6323, 1
      %v6383 = vrot.slane %v6325, 1
      %v6384 = vrot.slane %v6326, 1
      %v6385 = vrot.slane %v6327, 1
      %v6386 = vrot.slane %v6329, 1
      %v6387 = vrot.slane %v6330, 1
      %v6388 = vrot.slane %v6331, 1
      %v6389 = vrot.slane %v6333, 1
      %v6390 = vrot.slane %v6334, 1
      %v6391 = vrot.slane %v6335, 1
      %v6392 = vrot.slane %v6337, 1
      %v6393 = vrot.slane %v6338, 1
      %v6394 = vrot.slane %v6339, 1
      %v6395 = vrot.slane %v6341, 1
      %v6396 = vrot.slane %v6342, 1
      %v6397 = vrot.slane %v6343, 1
      %v6398 = vrot.slane %v6345, 1
      %v6399 = vrot.slane %v6346, 1
      %v6400 = vrot.slane %v6347, 1
      %v6401 = vrot.slane %v6349, 1
      %v6402 = vrot.slane %v6350, 1
      %v6403 = vrot.slane %v6351, 1
      %v6404 = vrot.slane %v6353, 1
      %v6405 = vrot.slane %v6354, 1
      %v6406 = vrot.slane %v6355, 1
      %v6407 = vrot.slane %v6357, 1
      %v6408 = vrot.slane %v6358, 1
      %v6409 = vrot.slane %v6359, 1
      %v6410 = vrot.slane %v6361, 1
      %v6411 = vrot.slane %v6362, 1
      %v6412 = vrot.slane %v6363, 1
      %v6413 = vsel %vm1851, %v6411, %v6412
      %v6414 = vsel %vm1851, %v6410, %v6411
      %v6415 = vsel %vm1851, %v6408, %v6409
      %v6416 = vsel %vm1851, %v6407, %v6408
      %v6417 = vsel %vm1851, %v6405, %v6406
      %v6418 = vsel %vm1851, %v6404, %v6405
      %v6419 = vsel %vm1851, %v6402, %v6403
      %v6420 = vsel %vm1851, %v6401, %v6402
      %v6421 = vsel %vm1851, %v6399, %v6400
      %v6422 = vsel %vm1851, %v6398, %v6399
      %v6423 = vsel %vm1851, %v6396, %v6397
      %v6424 = vsel %vm1851, %v6395, %v6396
      %v6425 = vsel %vm1851, %v6393, %v6394
      %v6426 = vsel %vm1851, %v6392, %v6393
      %v6427 = vsel %vm1851, %v6390, %v6391
      %v6428 = vsel %vm1851, %v6389, %v6390
      %v6429 = vsel %vm1851, %v6387, %v6388
      %v6430 = vsel %vm1851, %v6386, %v6387
      %v6431 = vsel %vm1851, %v6384, %v6385
      %v6432 = vsel %vm1851, %v6383, %v6384
      %v6433 = vsel %vm1851, %v6381, %v6382
      %v6434 = vsel %vm1851, %v6380, %v6381
      %v6435 = vsel %vm1851, %v6378, %v6379
      %v6436 = vsel %vm1851, %v6377, %v6378
      %v6437 = vsel %vm1851, %v6375, %v6376
      %v6438 = vsel %vm1851, %v6374, %v6375
      %v6439 = vsel %vm1851, %v6372, %v6373
      %v6440 = vsel %vm1851, %v6371, %v6372
      %v6441 = vsel %vm1851, %v6369, %v6370
      %v6442 = vsel %vm1851, %v6368, %v6369
      %v6443 = vsel %vm1851, %v6366, %v6367
      %v6444 = vsel %vm1851, %v6365, %v6366
      %v6445 = vadd.f32 %v6301, %v6444
      %v6446 = vadd.f32 %v6302, %v6443
      %v6447 = vadd.f32 %v6305, %v6442
      %v6448 = vadd.f32 %v6306, %v6441
      %v6449 = vadd.f32 %v6309, %v6440
      %v6450 = vadd.f32 %v6310, %v6439
      %v6451 = vadd.f32 %v6313, %v6438
      %v6452 = vadd.f32 %v6314, %v6437
      %v6453 = vadd.f32 %v6317, %v6436
      %v6454 = vadd.f32 %v6318, %v6435
      %v6455 = vadd.f32 %v6321, %v6434
      %v6456 = vadd.f32 %v6322, %v6433
      %v6457 = vadd.f32 %v6325, %v6432
      %v6458 = vadd.f32 %v6326, %v6431
      %v6459 = vadd.f32 %v6329, %v6430
      %v6460 = vadd.f32 %v6330, %v6429
      %v6461 = vadd.f32 %v6333, %v6428
      %v6462 = vadd.f32 %v6334, %v6427
      %v6463 = vadd.f32 %v6337, %v6426
      %v6464 = vadd.f32 %v6338, %v6425
      %v6465 = vadd.f32 %v6341, %v6424
      %v6466 = vadd.f32 %v6342, %v6423
      %v6467 = vadd.f32 %v6345, %v6422
      %v6468 = vadd.f32 %v6346, %v6421
      %v6469 = vadd.f32 %v6349, %v6420
      %v6470 = vadd.f32 %v6350, %v6419
      %v6471 = vadd.f32 %v6353, %v6418
      %v6472 = vadd.f32 %v6354, %v6417
      %v6473 = vadd.f32 %v6357, %v6416
      %v6474 = vadd.f32 %v6358, %v6415
      %v6475 = vadd.f32 %v6361, %v6414
      %v6476 = vadd.f32 %v6362, %v6413
      %v6477 = vrot.slane %v6301, 2
      %v6478 = vrot.slane %v6302, 2
      %v6479 = vrot.slane %v6303, 2
      %v6480 = vrot.slane %v6305, 2
      %v6481 = vrot.slane %v6306, 2
      %v6482 = vrot.slane %v6307, 2
      %v6483 = vrot.slane %v6309, 2
      %v6484 = vrot.slane %v6310, 2
      %v6485 = vrot.slane %v6311, 2
      %v6486 = vrot.slane %v6313, 2
      %v6487 = vrot.slane %v6314, 2
      %v6488 = vrot.slane %v6315, 2
      %v6489 = vrot.slane %v6317, 2
      %v6490 = vrot.slane %v6318, 2
      %v6491 = vrot.slane %v6319, 2
      %v6492 = vrot.slane %v6321, 2
      %v6493 = vrot.slane %v6322, 2
      %v6494 = vrot.slane %v6323, 2
      %v6495 = vrot.slane %v6325, 2
      %v6496 = vrot.slane %v6326, 2
      %v6497 = vrot.slane %v6327, 2
      %v6498 = vrot.slane %v6329, 2
      %v6499 = vrot.slane %v6330, 2
      %v6500 = vrot.slane %v6331, 2
      %v6501 = vrot.slane %v6333, 2
      %v6502 = vrot.slane %v6334, 2
      %v6503 = vrot.slane %v6335, 2
      %v6504 = vrot.slane %v6337, 2
      %v6505 = vrot.slane %v6338, 2
      %v6506 = vrot.slane %v6339, 2
      %v6507 = vrot.slane %v6341, 2
      %v6508 = vrot.slane %v6342, 2
      %v6509 = vrot.slane %v6343, 2
      %v6510 = vrot.slane %v6345, 2
      %v6511 = vrot.slane %v6346, 2
      %v6512 = vrot.slane %v6347, 2
      %v6513 = vrot.slane %v6349, 2
      %v6514 = vrot.slane %v6350, 2
      %v6515 = vrot.slane %v6351, 2
      %v6516 = vrot.slane %v6353, 2
      %v6517 = vrot.slane %v6354, 2
      %v6518 = vrot.slane %v6355, 2
      %v6519 = vrot.slane %v6357, 2
      %v6520 = vrot.slane %v6358, 2
      %v6521 = vrot.slane %v6359, 2
      %v6522 = vrot.slane %v6361, 2
      %v6523 = vrot.slane %v6362, 2
      %v6524 = vrot.slane %v6363, 2
      %v6525 = vsel %vm3525, %v6523, %v6524
      %v6526 = vsel %vm3525, %v6522, %v6523
      %v6527 = vsel %vm3525, %v6520, %v6521
      %v6528 = vsel %vm3525, %v6519, %v6520
      %v6529 = vsel %vm3525, %v6517, %v6518
      %v6530 = vsel %vm3525, %v6516, %v6517
      %v6531 = vsel %vm3525, %v6514, %v6515
      %v6532 = vsel %vm3525, %v6513, %v6514
      %v6533 = vsel %vm3525, %v6511, %v6512
      %v6534 = vsel %vm3525, %v6510, %v6511
      %v6535 = vsel %vm3525, %v6508, %v6509
      %v6536 = vsel %vm3525, %v6507, %v6508
      %v6537 = vsel %vm3525, %v6505, %v6506
      %v6538 = vsel %vm3525, %v6504, %v6505
      %v6539 = vsel %vm3525, %v6502, %v6503
      %v6540 = vsel %vm3525, %v6501, %v6502
      %v6541 = vsel %vm3525, %v6499, %v6500
      %v6542 = vsel %vm3525, %v6498, %v6499
      %v6543 = vsel %vm3525, %v6496, %v6497
      %v6544 = vsel %vm3525, %v6495, %v6496
      %v6545 = vsel %vm3525, %v6493, %v6494
      %v6546 = vsel %vm3525, %v6492, %v6493
      %v6547 = vsel %vm3525, %v6490, %v6491
      %v6548 = vsel %vm3525, %v6489, %v6490
      %v6549 = vsel %vm3525, %v6487, %v6488
      %v6550 = vsel %vm3525, %v6486, %v6487
      %v6551 = vsel %vm3525, %v6484, %v6485
      %v6552 = vsel %vm3525, %v6483, %v6484
      %v6553 = vsel %vm3525, %v6481, %v6482
      %v6554 = vsel %vm3525, %v6480, %v6481
      %v6555 = vsel %vm3525, %v6478, %v6479
      %v6556 = vsel %vm3525, %v6477, %v6478
      %v6557 = vadd.f32 %v6445, %v6556
      %v6558 = vadd.f32 %v6446, %v6555
      %v6559 = vadd.f32 %v6447, %v6554
      %v6560 = vadd.f32 %v6448, %v6553
      %v6561 = vadd.f32 %v6449, %v6552
      %v6562 = vadd.f32 %v6450, %v6551
      %v6563 = vadd.f32 %v6451, %v6550
      %v6564 = vadd.f32 %v6452, %v6549
      %v6565 = vadd.f32 %v6453, %v6548
      %v6566 = vadd.f32 %v6454, %v6547
      %v6567 = vadd.f32 %v6455, %v6546
      %v6568 = vadd.f32 %v6456, %v6545
      %v6569 = vadd.f32 %v6457, %v6544
      %v6570 = vadd.f32 %v6458, %v6543
      %v6571 = vadd.f32 %v6459, %v6542
      %v6572 = vadd.f32 %v6460, %v6541
      %v6573 = vadd.f32 %v6461, %v6540
      %v6574 = vadd.f32 %v6462, %v6539
      %v6575 = vadd.f32 %v6463, %v6538
      %v6576 = vadd.f32 %v6464, %v6537
      %v6577 = vadd.f32 %v6465, %v6536
      %v6578 = vadd.f32 %v6466, %v6535
      %v6579 = vadd.f32 %v6467, %v6534
      %v6580 = vadd.f32 %v6468, %v6533
      %v6581 = vadd.f32 %v6469, %v6532
      %v6582 = vadd.f32 %v6470, %v6531
      %v6583 = vadd.f32 %v6471, %v6530
      %v6584 = vadd.f32 %v6472, %v6529
      %v6585 = vadd.f32 %v6473, %v6528
      %v6586 = vadd.f32 %v6474, %v6527
      %v6587 = vadd.f32 %v6475, %v6526
      %v6588 = vadd.f32 %v6476, %v6525
      %v6589 = vrot.slane %v6301, 3
      %v6590 = vrot.slane %v6302, 3
      %v6591 = vrot.slane %v6303, 3
      %v6592 = vrot.slane %v6305, 3
      %v6593 = vrot.slane %v6306, 3
      %v6594 = vrot.slane %v6307, 3
      %v6595 = vrot.slane %v6309, 3
      %v6596 = vrot.slane %v6310, 3
      %v6597 = vrot.slane %v6311, 3
      %v6598 = vrot.slane %v6313, 3
      %v6599 = vrot.slane %v6314, 3
      %v6600 = vrot.slane %v6315, 3
      %v6601 = vrot.slane %v6317, 3
      %v6602 = vrot.slane %v6318, 3
      %v6603 = vrot.slane %v6319, 3
      %v6604 = vrot.slane %v6321, 3
      %v6605 = vrot.slane %v6322, 3
      %v6606 = vrot.slane %v6323, 3
      %v6607 = vrot.slane %v6325, 3
      %v6608 = vrot.slane %v6326, 3
      %v6609 = vrot.slane %v6327, 3
      %v6610 = vrot.slane %v6329, 3
      %v6611 = vrot.slane %v6330, 3
      %v6612 = vrot.slane %v6331, 3
      %v6613 = vrot.slane %v6333, 3
      %v6614 = vrot.slane %v6334, 3
      %v6615 = vrot.slane %v6335, 3
      %v6616 = vrot.slane %v6337, 3
      %v6617 = vrot.slane %v6338, 3
      %v6618 = vrot.slane %v6339, 3
      %v6619 = vrot.slane %v6341, 3
      %v6620 = vrot.slane %v6342, 3
      %v6621 = vrot.slane %v6343, 3
      %v6622 = vrot.slane %v6345, 3
      %v6623 = vrot.slane %v6346, 3
      %v6624 = vrot.slane %v6347, 3
      %v6625 = vrot.slane %v6349, 3
      %v6626 = vrot.slane %v6350, 3
      %v6627 = vrot.slane %v6351, 3
      %v6628 = vrot.slane %v6353, 3
      %v6629 = vrot.slane %v6354, 3
      %v6630 = vrot.slane %v6355, 3
      %v6631 = vrot.slane %v6357, 3
      %v6632 = vrot.slane %v6358, 3
      %v6633 = vrot.slane %v6359, 3
      %v6634 = vrot.slane %v6361, 3
      %v6635 = vrot.slane %v6362, 3
      %v6636 = vrot.slane %v6363, 3
      %vm6637 = vcmp.lt.s32.totalorder %v395, 5
      %v6638 = vsel %vm6637, %v6635, %v6636
      %v6639 = vsel %vm6637, %v6634, %v6635
      %v6640 = vsel %vm6637, %v6632, %v6633
      %v6641 = vsel %vm6637, %v6631, %v6632
      %v6642 = vsel %vm6637, %v6629, %v6630
      %v6643 = vsel %vm6637, %v6628, %v6629
      %v6644 = vsel %vm6637, %v6626, %v6627
      %v6645 = vsel %vm6637, %v6625, %v6626
      %v6646 = vsel %vm6637, %v6623, %v6624
      %v6647 = vsel %vm6637, %v6622, %v6623
      %v6648 = vsel %vm6637, %v6620, %v6621
      %v6649 = vsel %vm6637, %v6619, %v6620
      %v6650 = vsel %vm6637, %v6617, %v6618
      %v6651 = vsel %vm6637, %v6616, %v6617
      %v6652 = vsel %vm6637, %v6614, %v6615
      %v6653 = vsel %vm6637, %v6613, %v6614
      %v6654 = vsel %vm6637, %v6611, %v6612
      %v6655 = vsel %vm6637, %v6610, %v6611
      %v6656 = vsel %vm6637, %v6608, %v6609
      %v6657 = vsel %vm6637, %v6607, %v6608
      %v6658 = vsel %vm6637, %v6605, %v6606
      %v6659 = vsel %vm6637, %v6604, %v6605
      %v6660 = vsel %vm6637, %v6602, %v6603
      %v6661 = vsel %vm6637, %v6601, %v6602
      %v6662 = vsel %vm6637, %v6599, %v6600
      %v6663 = vsel %vm6637, %v6598, %v6599
      %v6664 = vsel %vm6637, %v6596, %v6597
      %v6665 = vsel %vm6637, %v6595, %v6596
      %v6666 = vsel %vm6637, %v6593, %v6594
      %v6667 = vsel %vm6637, %v6592, %v6593
      %v6668 = vsel %vm6637, %v6590, %v6591
      %v6669 = vsel %vm6637, %v6589, %v6590
      %v6670 = vadd.f32 %v6557, %v6669
      %v6671 = vadd.f32 %v6558, %v6668
      %v6672 = vadd.f32 %v6559, %v6667
      %v6673 = vadd.f32 %v6560, %v6666
      %v6674 = vadd.f32 %v6561, %v6665
      %v6675 = vadd.f32 %v6562, %v6664
      %v6676 = vadd.f32 %v6563, %v6663
      %v6677 = vadd.f32 %v6564, %v6662
      %v6678 = vadd.f32 %v6565, %v6661
      %v6679 = vadd.f32 %v6566, %v6660
      %v6680 = vadd.f32 %v6567, %v6659
      %v6681 = vadd.f32 %v6568, %v6658
      %v6682 = vadd.f32 %v6569, %v6657
      %v6683 = vadd.f32 %v6570, %v6656
      %v6684 = vadd.f32 %v6571, %v6655
      %v6685 = vadd.f32 %v6572, %v6654
      %v6686 = vadd.f32 %v6573, %v6653
      %v6687 = vadd.f32 %v6574, %v6652
      %v6688 = vadd.f32 %v6575, %v6651
      %v6689 = vadd.f32 %v6576, %v6650
      %v6690 = vadd.f32 %v6577, %v6649
      %v6691 = vadd.f32 %v6578, %v6648
      %v6692 = vadd.f32 %v6579, %v6647
      %v6693 = vadd.f32 %v6580, %v6646
      %v6694 = vadd.f32 %v6581, %v6645
      %v6695 = vadd.f32 %v6582, %v6644
      %v6696 = vadd.f32 %v6583, %v6643
      %v6697 = vadd.f32 %v6584, %v6642
      %v6698 = vadd.f32 %v6585, %v6641
      %v6699 = vadd.f32 %v6586, %v6640
      %v6700 = vadd.f32 %v6587, %v6639
      %v6701 = vadd.f32 %v6588, %v6638
      %v6702 = vrot.slane %v6301, 4
      %v6703 = vrot.slane %v6302, 4
      %v6704 = vrot.slane %v6303, 4
      %v6705 = vrot.slane %v6305, 4
      %v6706 = vrot.slane %v6306, 4
      %v6707 = vrot.slane %v6307, 4
      %v6708 = vrot.slane %v6309, 4
      %v6709 = vrot.slane %v6310, 4
      %v6710 = vrot.slane %v6311, 4
      %v6711 = vrot.slane %v6313, 4
      %v6712 = vrot.slane %v6314, 4
      %v6713 = vrot.slane %v6315, 4
      %v6714 = vrot.slane %v6317, 4
      %v6715 = vrot.slane %v6318, 4
      %v6716 = vrot.slane %v6319, 4
      %v6717 = vrot.slane %v6321, 4
      %v6718 = vrot.slane %v6322, 4
      %v6719 = vrot.slane %v6323, 4
      %v6720 = vrot.slane %v6325, 4
      %v6721 = vrot.slane %v6326, 4
      %v6722 = vrot.slane %v6327, 4
      %v6723 = vrot.slane %v6329, 4
      %v6724 = vrot.slane %v6330, 4
      %v6725 = vrot.slane %v6331, 4
      %v6726 = vrot.slane %v6333, 4
      %v6727 = vrot.slane %v6334, 4
      %v6728 = vrot.slane %v6335, 4
      %v6729 = vrot.slane %v6337, 4
      %v6730 = vrot.slane %v6338, 4
      %v6731 = vrot.slane %v6339, 4
      %v6732 = vrot.slane %v6341, 4
      %v6733 = vrot.slane %v6342, 4
      %v6734 = vrot.slane %v6343, 4
      %v6735 = vrot.slane %v6345, 4
      %v6736 = vrot.slane %v6346, 4
      %v6737 = vrot.slane %v6347, 4
      %v6738 = vrot.slane %v6349, 4
      %v6739 = vrot.slane %v6350, 4
      %v6740 = vrot.slane %v6351, 4
      %v6741 = vrot.slane %v6353, 4
      %v6742 = vrot.slane %v6354, 4
      %v6743 = vrot.slane %v6355, 4
      %v6744 = vrot.slane %v6357, 4
      %v6745 = vrot.slane %v6358, 4
      %v6746 = vrot.slane %v6359, 4
      %v6747 = vrot.slane %v6361, 4
      %v6748 = vrot.slane %v6362, 4
      %v6749 = vrot.slane %v6363, 4
      %v6750 = vsel %vm4961, %v6748, %v6749
      %v6751 = vsel %vm4961, %v6747, %v6748
      %v6752 = vsel %vm4961, %v6745, %v6746
      %v6753 = vsel %vm4961, %v6744, %v6745
      %v6754 = vsel %vm4961, %v6742, %v6743
      %v6755 = vsel %vm4961, %v6741, %v6742
      %v6756 = vsel %vm4961, %v6739, %v6740
      %v6757 = vsel %vm4961, %v6738, %v6739
      %v6758 = vsel %vm4961, %v6736, %v6737
      %v6759 = vsel %vm4961, %v6735, %v6736
      %v6760 = vsel %vm4961, %v6733, %v6734
      %v6761 = vsel %vm4961, %v6732, %v6733
      %v6762 = vsel %vm4961, %v6730, %v6731
      %v6763 = vsel %vm4961, %v6729, %v6730
      %v6764 = vsel %vm4961, %v6727, %v6728
      %v6765 = vsel %vm4961, %v6726, %v6727
      %v6766 = vsel %vm4961, %v6724, %v6725
      %v6767 = vsel %vm4961, %v6723, %v6724
      %v6768 = vsel %vm4961, %v6721, %v6722
      %v6769 = vsel %vm4961, %v6720, %v6721
      %v6770 = vsel %vm4961, %v6718, %v6719
      %v6771 = vsel %vm4961, %v6717, %v6718
      %v6772 = vsel %vm4961, %v6715, %v6716
      %v6773 = vsel %vm4961, %v6714, %v6715
      %v6774 = vsel %vm4961, %v6712, %v6713
      %v6775 = vsel %vm4961, %v6711, %v6712
      %v6776 = vsel %vm4961, %v6709, %v6710
      %v6777 = vsel %vm4961, %v6708, %v6709
      %v6778 = vsel %vm4961, %v6706, %v6707
      %v6779 = vsel %vm4961, %v6705, %v6706
      %v6780 = vsel %vm4961, %v6703, %v6704
      %v6781 = vsel %vm4961, %v6702, %v6703
      %v6782 = vadd.f32 %v6670, %v6781
      %v6783 = vadd.f32 %v6671, %v6780
      %v6784 = vadd.f32 %v6672, %v6779
      %v6785 = vadd.f32 %v6673, %v6778
      %v6786 = vadd.f32 %v6674, %v6777
      %v6787 = vadd.f32 %v6675, %v6776
      %v6788 = vadd.f32 %v6676, %v6775
      %v6789 = vadd.f32 %v6677, %v6774
      %v6790 = vadd.f32 %v6678, %v6773
      %v6791 = vadd.f32 %v6679, %v6772
      %v6792 = vadd.f32 %v6680, %v6771
      %v6793 = vadd.f32 %v6681, %v6770
      %v6794 = vadd.f32 %v6682, %v6769
      %v6795 = vadd.f32 %v6683, %v6768
      %v6796 = vadd.f32 %v6684, %v6767
      %v6797 = vadd.f32 %v6685, %v6766
      %v6798 = vadd.f32 %v6686, %v6765
      %v6799 = vadd.f32 %v6687, %v6764
      %v6800 = vadd.f32 %v6688, %v6763
      %v6801 = vadd.f32 %v6689, %v6762
      %v6802 = vadd.f32 %v6690, %v6761
      %v6803 = vadd.f32 %v6691, %v6760
      %v6804 = vadd.f32 %v6692, %v6759
      %v6805 = vadd.f32 %v6693, %v6758
      %v6806 = vadd.f32 %v6694, %v6757
      %v6807 = vadd.f32 %v6695, %v6756
      %v6808 = vadd.f32 %v6696, %v6755
      %v6809 = vadd.f32 %v6697, %v6754
      %v6810 = vadd.f32 %v6698, %v6753
      %v6811 = vadd.f32 %v6699, %v6752
      %v6812 = vadd.f32 %v6700, %v6751
      %v6813 = vadd.f32 %v6701, %v6750
      %v6814 = vrot.slane %v6301, 5
      %v6815 = vrot.slane %v6302, 5
      %v6816 = vrot.slane %v6303, 5
      %v6817 = vrot.slane %v6305, 5
      %v6818 = vrot.slane %v6306, 5
      %v6819 = vrot.slane %v6307, 5
      %v6820 = vrot.slane %v6309, 5
      %v6821 = vrot.slane %v6310, 5
      %v6822 = vrot.slane %v6311, 5
      %v6823 = vrot.slane %v6313, 5
      %v6824 = vrot.slane %v6314, 5
      %v6825 = vrot.slane %v6315, 5
      %v6826 = vrot.slane %v6317, 5
      %v6827 = vrot.slane %v6318, 5
      %v6828 = vrot.slane %v6319, 5
      %v6829 = vrot.slane %v6321, 5
      %v6830 = vrot.slane %v6322, 5
      %v6831 = vrot.slane %v6323, 5
      %v6832 = vrot.slane %v6325, 5
      %v6833 = vrot.slane %v6326, 5
      %v6834 = vrot.slane %v6327, 5
      %v6835 = vrot.slane %v6329, 5
      %v6836 = vrot.slane %v6330, 5
      %v6837 = vrot.slane %v6331, 5
      %v6838 = vrot.slane %v6333, 5
      %v6839 = vrot.slane %v6334, 5
      %v6840 = vrot.slane %v6335, 5
      %v6841 = vrot.slane %v6337, 5
      %v6842 = vrot.slane %v6338, 5
      %v6843 = vrot.slane %v6339, 5
      %v6844 = vrot.slane %v6341, 5
      %v6845 = vrot.slane %v6342, 5
      %v6846 = vrot.slane %v6343, 5
      %v6847 = vrot.slane %v6345, 5
      %v6848 = vrot.slane %v6346, 5
      %v6849 = vrot.slane %v6347, 5
      %v6850 = vrot.slane %v6349, 5
      %v6851 = vrot.slane %v6350, 5
      %v6852 = vrot.slane %v6351, 5
      %v6853 = vrot.slane %v6353, 5
      %v6854 = vrot.slane %v6354, 5
      %v6855 = vrot.slane %v6355, 5
      %v6856 = vrot.slane %v6357, 5
      %v6857 = vrot.slane %v6358, 5
      %v6858 = vrot.slane %v6359, 5
      %v6859 = vrot.slane %v6361, 5
      %v6860 = vrot.slane %v6362, 5
      %v6861 = vrot.slane %v6363, 5
      %vm6862 = vcmp.lt.s32.totalorder %v395, 3
      %v6863 = vsel %vm6862, %v6860, %v6861
      %v6864 = vsel %vm6862, %v6859, %v6860
      %v6865 = vsel %vm6862, %v6857, %v6858
      %v6866 = vsel %vm6862, %v6856, %v6857
      %v6867 = vsel %vm6862, %v6854, %v6855
      %v6868 = vsel %vm6862, %v6853, %v6854
      %v6869 = vsel %vm6862, %v6851, %v6852
      %v6870 = vsel %vm6862, %v6850, %v6851
      %v6871 = vsel %vm6862, %v6848, %v6849
      %v6872 = vsel %vm6862, %v6847, %v6848
      %v6873 = vsel %vm6862, %v6845, %v6846
      %v6874 = vsel %vm6862, %v6844, %v6845
      %v6875 = vsel %vm6862, %v6842, %v6843
      %v6876 = vsel %vm6862, %v6841, %v6842
      %v6877 = vsel %vm6862, %v6839, %v6840
      %v6878 = vsel %vm6862, %v6838, %v6839
      %v6879 = vsel %vm6862, %v6836, %v6837
      %v6880 = vsel %vm6862, %v6835, %v6836
      %v6881 = vsel %vm6862, %v6833, %v6834
      %v6882 = vsel %vm6862, %v6832, %v6833
      %v6883 = vsel %vm6862, %v6830, %v6831
      %v6884 = vsel %vm6862, %v6829, %v6830
      %v6885 = vsel %vm6862, %v6827, %v6828
      %v6886 = vsel %vm6862, %v6826, %v6827
      %v6887 = vsel %vm6862, %v6824, %v6825
      %v6888 = vsel %vm6862, %v6823, %v6824
      %v6889 = vsel %vm6862, %v6821, %v6822
      %v6890 = vsel %vm6862, %v6820, %v6821
      %v6891 = vsel %vm6862, %v6818, %v6819
      %v6892 = vsel %vm6862, %v6817, %v6818
      %v6893 = vsel %vm6862, %v6815, %v6816
      %v6894 = vsel %vm6862, %v6814, %v6815
      %v6895 = vadd.f32 %v6782, %v6894
      %v6896 = vadd.f32 %v6783, %v6893
      %v6897 = vadd.f32 %v6784, %v6892
      %v6898 = vadd.f32 %v6785, %v6891
      %v6899 = vadd.f32 %v6786, %v6890
      %v6900 = vadd.f32 %v6787, %v6889
      %v6901 = vadd.f32 %v6788, %v6888
      %v6902 = vadd.f32 %v6789, %v6887
      %v6903 = vadd.f32 %v6790, %v6886
      %v6904 = vadd.f32 %v6791, %v6885
      %v6905 = vadd.f32 %v6792, %v6884
      %v6906 = vadd.f32 %v6793, %v6883
      %v6907 = vadd.f32 %v6794, %v6882
      %v6908 = vadd.f32 %v6795, %v6881
      %v6909 = vadd.f32 %v6796, %v6880
      %v6910 = vadd.f32 %v6797, %v6879
      %v6911 = vadd.f32 %v6798, %v6878
      %v6912 = vadd.f32 %v6799, %v6877
      %v6913 = vadd.f32 %v6800, %v6876
      %v6914 = vadd.f32 %v6801, %v6875
      %v6915 = vadd.f32 %v6802, %v6874
      %v6916 = vadd.f32 %v6803, %v6873
      %v6917 = vadd.f32 %v6804, %v6872
      %v6918 = vadd.f32 %v6805, %v6871
      %v6919 = vadd.f32 %v6806, %v6870
      %v6920 = vadd.f32 %v6807, %v6869
      %v6921 = vadd.f32 %v6808, %v6868
      %v6922 = vadd.f32 %v6809, %v6867
      %v6923 = vadd.f32 %v6810, %v6866
      %v6924 = vadd.f32 %v6811, %v6865
      %v6925 = vadd.f32 %v6812, %v6864
      %v6926 = vadd.f32 %v6813, %v6863
      %v6927 = vrot.slane %v6301, 6
      %v6928 = vrot.slane %v6302, 6
      %v6929 = vrot.slane %v6303, 6
      %v6930 = vrot.slane %v6305, 6
      %v6931 = vrot.slane %v6306, 6
      %v6932 = vrot.slane %v6307, 6
      %v6933 = vrot.slane %v6309, 6
      %v6934 = vrot.slane %v6310, 6
      %v6935 = vrot.slane %v6311, 6
      %v6936 = vrot.slane %v6313, 6
      %v6937 = vrot.slane %v6314, 6
      %v6938 = vrot.slane %v6315, 6
      %v6939 = vrot.slane %v6317, 6
      %v6940 = vrot.slane %v6318, 6
      %v6941 = vrot.slane %v6319, 6
      %v6942 = vrot.slane %v6321, 6
      %v6943 = vrot.slane %v6322, 6
      %v6944 = vrot.slane %v6323, 6
      %v6945 = vrot.slane %v6325, 6
      %v6946 = vrot.slane %v6326, 6
      %v6947 = vrot.slane %v6327, 6
      %v6948 = vrot.slane %v6329, 6
      %v6949 = vrot.slane %v6330, 6
      %v6950 = vrot.slane %v6331, 6
      %v6951 = vrot.slane %v6333, 6
      %v6952 = vrot.slane %v6334, 6
      %v6953 = vrot.slane %v6335, 6
      %v6954 = vrot.slane %v6337, 6
      %v6955 = vrot.slane %v6338, 6
      %v6956 = vrot.slane %v6339, 6
      %v6957 = vrot.slane %v6341, 6
      %v6958 = vrot.slane %v6342, 6
      %v6959 = vrot.slane %v6343, 6
      %v6960 = vrot.slane %v6345, 6
      %v6961 = vrot.slane %v6346, 6
      %v6962 = vrot.slane %v6347, 6
      %v6963 = vrot.slane %v6349, 6
      %v6964 = vrot.slane %v6350, 6
      %v6965 = vrot.slane %v6351, 6
      %v6966 = vrot.slane %v6353, 6
      %v6967 = vrot.slane %v6354, 6
      %v6968 = vrot.slane %v6355, 6
      %v6969 = vrot.slane %v6357, 6
      %v6970 = vrot.slane %v6358, 6
      %v6971 = vrot.slane %v6359, 6
      %v6972 = vrot.slane %v6361, 6
      %v6973 = vrot.slane %v6362, 6
      %v6974 = vrot.slane %v6363, 6
      %v6975 = vsel %vm3284, %v6973, %v6974
      %v6976 = vsel %vm3284, %v6972, %v6973
      %v6977 = vsel %vm3284, %v6970, %v6971
      %v6978 = vsel %vm3284, %v6969, %v6970
      %v6979 = vsel %vm3284, %v6967, %v6968
      %v6980 = vsel %vm3284, %v6966, %v6967
      %v6981 = vsel %vm3284, %v6964, %v6965
      %v6982 = vsel %vm3284, %v6963, %v6964
      %v6983 = vsel %vm3284, %v6961, %v6962
      %v6984 = vsel %vm3284, %v6960, %v6961
      %v6985 = vsel %vm3284, %v6958, %v6959
      %v6986 = vsel %vm3284, %v6957, %v6958
      %v6987 = vsel %vm3284, %v6955, %v6956
      %v6988 = vsel %vm3284, %v6954, %v6955
      %v6989 = vsel %vm3284, %v6952, %v6953
      %v6990 = vsel %vm3284, %v6951, %v6952
      %v6991 = vsel %vm3284, %v6949, %v6950
      %v6992 = vsel %vm3284, %v6948, %v6949
      %v6993 = vsel %vm3284, %v6946, %v6947
      %v6994 = vsel %vm3284, %v6945, %v6946
      %v6995 = vsel %vm3284, %v6943, %v6944
      %v6996 = vsel %vm3284, %v6942, %v6943
      %v6997 = vsel %vm3284, %v6940, %v6941
      %v6998 = vsel %vm3284, %v6939, %v6940
      %v6999 = vsel %vm3284, %v6937, %v6938
      %v7000 = vsel %vm3284, %v6936, %v6937
      %v7001 = vsel %vm3284, %v6934, %v6935
      %v7002 = vsel %vm3284, %v6933, %v6934
      %v7003 = vsel %vm3284, %v6931, %v6932
      %v7004 = vsel %vm3284, %v6930, %v6931
      %v7005 = vsel %vm3284, %v6928, %v6929
      %v7006 = vsel %vm3284, %v6927, %v6928
      %v7007 = vadd.f32 %v6895, %v7006
      %v7008 = vadd.f32 %v6896, %v7005
      %v7009 = vadd.f32 %v6897, %v7004
      %v7010 = vadd.f32 %v6898, %v7003
      %v7011 = vadd.f32 %v6899, %v7002
      %v7012 = vadd.f32 %v6900, %v7001
      %v7013 = vadd.f32 %v6901, %v7000
      %v7014 = vadd.f32 %v6902, %v6999
      %v7015 = vadd.f32 %v6903, %v6998
      %v7016 = vadd.f32 %v6904, %v6997
      %v7017 = vadd.f32 %v6905, %v6996
      %v7018 = vadd.f32 %v6906, %v6995
      %v7019 = vadd.f32 %v6907, %v6994
      %v7020 = vadd.f32 %v6908, %v6993
      %v7021 = vadd.f32 %v6909, %v6992
      %v7022 = vadd.f32 %v6910, %v6991
      %v7023 = vadd.f32 %v6911, %v6990
      %v7024 = vadd.f32 %v6912, %v6989
      %v7025 = vadd.f32 %v6913, %v6988
      %v7026 = vadd.f32 %v6914, %v6987
      %v7027 = vadd.f32 %v6915, %v6986
      %v7028 = vadd.f32 %v6916, %v6985
      %v7029 = vadd.f32 %v6917, %v6984
      %v7030 = vadd.f32 %v6918, %v6983
      %v7031 = vadd.f32 %v6919, %v6982
      %v7032 = vadd.f32 %v6920, %v6981
      %v7033 = vadd.f32 %v6921, %v6980
      %v7034 = vadd.f32 %v6922, %v6979
      %v7035 = vadd.f32 %v6923, %v6978
      %v7036 = vadd.f32 %v6924, %v6977
      %v7037 = vadd.f32 %v6925, %v6976
      %v7038 = vadd.f32 %v6926, %v6975
      %v7039 = vrot.slane %v6301, 7
      %v7040 = vrot.slane %v6302, 7
      %v7041 = vrot.slane %v6303, 7
      %v7042 = vrot.slane %v6305, 7
      %v7043 = vrot.slane %v6306, 7
      %v7044 = vrot.slane %v6307, 7
      %v7045 = vrot.slane %v6309, 7
      %v7046 = vrot.slane %v6310, 7
      %v7047 = vrot.slane %v6311, 7
      %v7048 = vrot.slane %v6313, 7
      %v7049 = vrot.slane %v6314, 7
      %v7050 = vrot.slane %v6315, 7
      %v7051 = vrot.slane %v6317, 7
      %v7052 = vrot.slane %v6318, 7
      %v7053 = vrot.slane %v6319, 7
      %v7054 = vrot.slane %v6321, 7
      %v7055 = vrot.slane %v6322, 7
      %v7056 = vrot.slane %v6323, 7
      %v7057 = vrot.slane %v6325, 7
      %v7058 = vrot.slane %v6326, 7
      %v7059 = vrot.slane %v6327, 7
      %v7060 = vrot.slane %v6329, 7
      %v7061 = vrot.slane %v6330, 7
      %v7062 = vrot.slane %v6331, 7
      %v7063 = vrot.slane %v6333, 7
      %v7064 = vrot.slane %v6334, 7
      %v7065 = vrot.slane %v6335, 7
      %v7066 = vrot.slane %v6337, 7
      %v7067 = vrot.slane %v6338, 7
      %v7068 = vrot.slane %v6339, 7
      %v7069 = vrot.slane %v6341, 7
      %v7070 = vrot.slane %v6342, 7
      %v7071 = vrot.slane %v6343, 7
      %v7072 = vrot.slane %v6345, 7
      %v7073 = vrot.slane %v6346, 7
      %v7074 = vrot.slane %v6347, 7
      %v7075 = vrot.slane %v6349, 7
      %v7076 = vrot.slane %v6350, 7
      %v7077 = vrot.slane %v6351, 7
      %v7078 = vrot.slane %v6353, 7
      %v7079 = vrot.slane %v6354, 7
      %v7080 = vrot.slane %v6355, 7
      %v7081 = vrot.slane %v6357, 7
      %v7082 = vrot.slane %v6358, 7
      %v7083 = vrot.slane %v6359, 7
      %v7084 = vrot.slane %v6361, 7
      %v7085 = vrot.slane %v6362, 7
      %v7086 = vrot.slane %v6363, 7
      %v7087 = vsel %vm1610, %v7085, %v7086
      %v7088 = vsel %vm1610, %v7084, %v7085
      %v7089 = vsel %vm1610, %v7082, %v7083
      %v7090 = vsel %vm1610, %v7081, %v7082
      %v7091 = vsel %vm1610, %v7079, %v7080
      %v7092 = vsel %vm1610, %v7078, %v7079
      %v7093 = vsel %vm1610, %v7076, %v7077
      %v7094 = vsel %vm1610, %v7075, %v7076
      %v7095 = vsel %vm1610, %v7073, %v7074
      %v7096 = vsel %vm1610, %v7072, %v7073
      %v7097 = vsel %vm1610, %v7070, %v7071
      %v7098 = vsel %vm1610, %v7069, %v7070
      %v7099 = vsel %vm1610, %v7067, %v7068
      %v7100 = vsel %vm1610, %v7066, %v7067
      %v7101 = vsel %vm1610, %v7064, %v7065
      %v7102 = vsel %vm1610, %v7063, %v7064
      %v7103 = vsel %vm1610, %v7061, %v7062
      %v7104 = vsel %vm1610, %v7060, %v7061
      %v7105 = vsel %vm1610, %v7058, %v7059
      %v7106 = vsel %vm1610, %v7057, %v7058
      %v7107 = vsel %vm1610, %v7055, %v7056
      %v7108 = vsel %vm1610, %v7054, %v7055
      %v7109 = vsel %vm1610, %v7052, %v7053
      %v7110 = vsel %vm1610, %v7051, %v7052
      %v7111 = vsel %vm1610, %v7049, %v7050
      %v7112 = vsel %vm1610, %v7048, %v7049
      %v7113 = vsel %vm1610, %v7046, %v7047
      %v7114 = vsel %vm1610, %v7045, %v7046
      %v7115 = vsel %vm1610, %v7043, %v7044
      %v7116 = vsel %vm1610, %v7042, %v7043
      %v7117 = vsel %vm1610, %v7040, %v7041
      %v7118 = vsel %vm1610, %v7039, %v7040
      %v7119 = vadd.f32 %v7007, %v7118
      %v7120 = vadd.f32 %v7008, %v7117
      %v7121 = vadd.f32 %v7009, %v7116
      %v7122 = vadd.f32 %v7010, %v7115
      %v7123 = vadd.f32 %v7011, %v7114
      %v7124 = vadd.f32 %v7012, %v7113
      %v7125 = vadd.f32 %v7013, %v7112
      %v7126 = vadd.f32 %v7014, %v7111
      %v7127 = vadd.f32 %v7015, %v7110
      %v7128 = vadd.f32 %v7016, %v7109
      %v7129 = vadd.f32 %v7017, %v7108
      %v7130 = vadd.f32 %v7018, %v7107
      %v7131 = vadd.f32 %v7019, %v7106
      %v7132 = vadd.f32 %v7020, %v7105
      %v7133 = vadd.f32 %v7021, %v7104
      %v7134 = vadd.f32 %v7022, %v7103
      %v7135 = vadd.f32 %v7023, %v7102
      %v7136 = vadd.f32 %v7024, %v7101
      %v7137 = vadd.f32 %v7025, %v7100
      %v7138 = vadd.f32 %v7026, %v7099
      %v7139 = vadd.f32 %v7027, %v7098
      %v7140 = vadd.f32 %v7028, %v7097
      %v7141 = vadd.f32 %v7029, %v7096
      %v7142 = vadd.f32 %v7030, %v7095
      %v7143 = vadd.f32 %v7031, %v7094
      %v7144 = vadd.f32 %v7032, %v7093
      %v7145 = vadd.f32 %v7033, %v7092
      %v7146 = vadd.f32 %v7034, %v7091
      %v7147 = vadd.f32 %v7035, %v7090
      %v7148 = vadd.f32 %v7036, %v7089
      %v7149 = vadd.f32 %v7037, %v7088
      %v7150 = vadd.f32 %v7038, %v7087
      %v7151 = vadd.f32 %v7119, %v6302
      %v7152 = vadd.f32 %v7120, %v6303
      %v7153 = vadd.f32 %v7121, %v6306
      %v7154 = vadd.f32 %v7122, %v6307
      %v7155 = vadd.f32 %v7123, %v6310
      %v7156 = vadd.f32 %v7124, %v6311
      %v7157 = vadd.f32 %v7125, %v6314
      %v7158 = vadd.f32 %v7126, %v6315
      %v7159 = vadd.f32 %v7127, %v6318
      %v7160 = vadd.f32 %v7128, %v6319
      %v7161 = vadd.f32 %v7129, %v6322
      %v7162 = vadd.f32 %v7130, %v6323
      %v7163 = vadd.f32 %v7131, %v6326
      %v7164 = vadd.f32 %v7132, %v6327
      %v7165 = vadd.f32 %v7133, %v6330
      %v7166 = vadd.f32 %v7134, %v6331
      %v7167 = vadd.f32 %v7135, %v6334
      %v7168 = vadd.f32 %v7136, %v6335
      %v7169 = vadd.f32 %v7137, %v6338
      %v7170 = vadd.f32 %v7138, %v6339
      %v7171 = vadd.f32 %v7139, %v6342
      %v7172 = vadd.f32 %v7140, %v6343
      %v7173 = vadd.f32 %v7141, %v6346
      %v7174 = vadd.f32 %v7142, %v6347
      %v7175 = vadd.f32 %v7143, %v6350
      %v7176 = vadd.f32 %v7144, %v6351
      %v7177 = vadd.f32 %v7145, %v6354
      %v7178 = vadd.f32 %v7146, %v6355
      %v7179 = vadd.f32 %v7147, %v6358
      %v7180 = vadd.f32 %v7148, %v6359
      %v7181 = vadd.f32 %v7149, %v6362
      %v7182 = vadd.f32 %v7150, %v6363
      %v7183 = vrot.slane %v6304, 1
      %v7184 = vrot.slane %v6308, 1
      %v7185 = vrot.slane %v6312, 1
      %v7186 = vrot.slane %v6316, 1
      %v7187 = vrot.slane %v6320, 1
      %v7188 = vrot.slane %v6324, 1
      %v7189 = vrot.slane %v6328, 1
      %v7190 = vrot.slane %v6332, 1
      %v7191 = vrot.slane %v6336, 1
      %v7192 = vrot.slane %v6340, 1
      %v7193 = vrot.slane %v6344, 1
      %v7194 = vrot.slane %v6348, 1
      %v7195 = vrot.slane %v6352, 1
      %v7196 = vrot.slane %v6356, 1
      %v7197 = vrot.slane %v6360, 1
      %v7198 = vrot.slane %v6364, 1
      %v7199 = vsel %vm1851, %v6412, %v7198
      %v7200 = vsel %vm1851, %v6409, %v7197
      %v7201 = vsel %vm1851, %v6406, %v7196
      %v7202 = vsel %vm1851, %v6403, %v7195
      %v7203 = vsel %vm1851, %v6400, %v7194
      %v7204 = vsel %vm1851, %v6397, %v7193
      %v7205 = vsel %vm1851, %v6394, %v7192
      %v7206 = vsel %vm1851, %v6391, %v7191
      %v7207 = vsel %vm1851, %v6388, %v7190
      %v7208 = vsel %vm1851, %v6385, %v7189
      %v7209 = vsel %vm1851, %v6382, %v7188
      %v7210 = vsel %vm1851, %v6379, %v7187
      %v7211 = vsel %vm1851, %v6376, %v7186
      %v7212 = vsel %vm1851, %v6373, %v7185
      %v7213 = vsel %vm1851, %v6370, %v7184
      %v7214 = vsel %vm1851, %v6367, %v7183
      %v7215 = vadd.f32 %v7151, %v6443
      %v7216 = vadd.f32 %v7152, %v7214
      %v7217 = vadd.f32 %v7153, %v6441
      %v7218 = vadd.f32 %v7154, %v7213
      %v7219 = vadd.f32 %v7155, %v6439
      %v7220 = vadd.f32 %v7156, %v7212
      %v7221 = vadd.f32 %v7157, %v6437
      %v7222 = vadd.f32 %v7158, %v7211
      %v7223 = vadd.f32 %v7159, %v6435
      %v7224 = vadd.f32 %v7160, %v7210
      %v7225 = vadd.f32 %v7161, %v6433
      %v7226 = vadd.f32 %v7162, %v7209
      %v7227 = vadd.f32 %v7163, %v6431
      %v7228 = vadd.f32 %v7164, %v7208
      %v7229 = vadd.f32 %v7165, %v6429
      %v7230 = vadd.f32 %v7166, %v7207
      %v7231 = vadd.f32 %v7167, %v6427
      %v7232 = vadd.f32 %v7168, %v7206
      %v7233 = vadd.f32 %v7169, %v6425
      %v7234 = vadd.f32 %v7170, %v7205
      %v7235 = vadd.f32 %v7171, %v6423
      %v7236 = vadd.f32 %v7172, %v7204
      %v7237 = vadd.f32 %v7173, %v6421
      %v7238 = vadd.f32 %v7174, %v7203
      %v7239 = vadd.f32 %v7175, %v6419
      %v7240 = vadd.f32 %v7176, %v7202
      %v7241 = vadd.f32 %v7177, %v6417
      %v7242 = vadd.f32 %v7178, %v7201
      %v7243 = vadd.f32 %v7179, %v6415
      %v7244 = vadd.f32 %v7180, %v7200
      %v7245 = vadd.f32 %v7181, %v6413
      %v7246 = vadd.f32 %v7182, %v7199
      %v7247 = vmul.f32 %v7215, 0.1
      %v7248 = vmul.f32 %v7216, 0.1
      %v7249 = vmul.f32 %v7217, 0.1
      %v7250 = vmul.f32 %v7218, 0.1
      %v7251 = vmul.f32 %v7219, 0.1
      %v7252 = vmul.f32 %v7220, 0.1
      %v7253 = vmul.f32 %v7221, 0.1
      %v7254 = vmul.f32 %v7222, 0.1
      %v7255 = vmul.f32 %v7223, 0.1
      %v7256 = vmul.f32 %v7224, 0.1
      %v7257 = vmul.f32 %v7225, 0.1
      %v7258 = vmul.f32 %v7226, 0.1
      %v7259 = vmul.f32 %v7227, 0.1
      %v7260 = vmul.f32 %v7228, 0.1
      %v7261 = vmul.f32 %v7229, 0.1
      %v7262 = vmul.f32 %v7230, 0.1
      %v7263 = vmul.f32 %v7231, 0.1
      %v7264 = vmul.f32 %v7232, 0.1
      %v7265 = vmul.f32 %v7233, 0.1
      %v7266 = vmul.f32 %v7234, 0.1
      %v7267 = vmul.f32 %v7235, 0.1
      %v7268 = vmul.f32 %v7236, 0.1
      %v7269 = vmul.f32 %v7237, 0.1
      %v7270 = vmul.f32 %v7238, 0.1
      %v7271 = vmul.f32 %v7239, 0.1
      %v7272 = vmul.f32 %v7240, 0.1
      %v7273 = vmul.f32 %v7241, 0.1
      %v7274 = vmul.f32 %v7242, 0.1
      %v7275 = vmul.f32 %v7243, 0.1
      %v7276 = vmul.f32 %v7244, 0.1
      %v7277 = vmul.f32 %v7245, 0.1
      %v7278 = vmul.f32 %v7246, 0.1
      %v7279 = vpack.c.bf16 %v7247, %v7247
      %v7280 = vpack.c.bf16 %v7249, %v7249
      %v7281 = vpack.c.bf16 %v7251, %v7251
      %v7282 = vpack.c.bf16 %v7253, %v7253
      %v7283 = vpack.c.bf16 %v7255, %v7255
      %v7284 = vpack.c.bf16 %v7257, %v7257
      %v7285 = vpack.c.bf16 %v7259, %v7259
      %v7286 = vpack.c.bf16 %v7261, %v7261
      %v7287 = vpack.c.bf16 %v7263, %v7263
      %v7288 = vpack.c.bf16 %v7265, %v7265
      %v7289 = vpack.c.bf16 %v7267, %v7267
      %v7290 = vpack.c.bf16 %v7269, %v7269
      %v7291 = vpack.c.bf16 %v7271, %v7271
      %v7292 = vpack.c.bf16 %v7273, %v7273
      %v7293 = vpack.c.bf16 %v7275, %v7275
      %v7294 = vpack.c.bf16 %v7277, %v7277
      %v7295 = vpack.c.bf16 %v7248, %v7248
      %v7296 = vpack.c.bf16 %v7250, %v7250
      %v7297 = vpack.c.bf16 %v7252, %v7252
      %v7298 = vpack.c.bf16 %v7254, %v7254
      %v7299 = vpack.c.bf16 %v7256, %v7256
      %v7300 = vpack.c.bf16 %v7258, %v7258
      %v7301 = vpack.c.bf16 %v7260, %v7260
      %v7302 = vpack.c.bf16 %v7262, %v7262
      %v7303 = vpack.c.bf16 %v7264, %v7264
      %v7304 = vpack.c.bf16 %v7266, %v7266
      %v7305 = vpack.c.bf16 %v7268, %v7268
      %v7306 = vpack.c.bf16 %v7270, %v7270
      %v7307 = vpack.c.bf16 %v7272, %v7272
      %v7308 = vpack.c.bf16 %v7274, %v7274
      %v7309 = vpack.c.bf16 %v7276, %v7276
      %v7310 = vpack.c.bf16 %v7278, %v7278
      %v7327 = vunpack.c.l.b16 %v7279
      %v7328 = vunpack.c.l.b16 %v7280
      %v7329 = vunpack.c.l.b16 %v7281
      %v7330 = vunpack.c.l.b16 %v7282
      %v7331 = vunpack.c.l.b16 %v7283
      %v7332 = vunpack.c.l.b16 %v7284
      %v7333 = vunpack.c.l.b16 %v7285
      %v7334 = vunpack.c.l.b16 %v7286
      %v7335 = vunpack.c.l.b16 %v7287
      %v7336 = vunpack.c.l.b16 %v7288
      %v7337 = vunpack.c.l.b16 %v7289
      %v7338 = vunpack.c.l.b16 %v7290
      %v7339 = vunpack.c.l.b16 %v7291
      %v7340 = vunpack.c.l.b16 %v7292
      %v7341 = vunpack.c.l.b16 %v7293
      %v7342 = vunpack.c.l.b16 %v7294
      %v7343 = vrot.slane %v7328, 7
      %vm7344 = vcmask 1041409
      %v7345 = vsel %vm7344, %v7343, %v7327
      %v7346 = vrot.slane %v7329, 6
      %vm7347 = vcmask 1042434
      %v7348 = vsel %vm7347, %v7346, %v7345
      %v7349 = vrot.slane %v7330, 5
      %vm7350 = vcmask 1043459
      %v7351 = vsel %vm7350, %v7349, %v7348
      %v7352 = vrot.slane %v7331, 4
      %vm7353 = vcmask 1044484
      %v7354 = vsel %vm7353, %v7352, %v7351
      %v7355 = vrot.slane %v7332, 3
      %vm7356 = vcmask 1045509
      %v7357 = vsel %vm7356, %v7355, %v7354
      %v7358 = vrot.slane %v7333, 2
      %vm7359 = vcmask 1046534
      %v7360 = vsel %vm7359, %v7358, %v7357
      %v7361 = vrot.slane %v7334, 1
      %vm7362 = vcmask 1047559
      %v7363 = vsel %vm7362, %v7361, %v7360
      %v7364 = vrot.slane %v7336, 7
      %v7365 = vsel %vm7344, %v7364, %v7335
      %v7366 = vrot.slane %v7337, 6
      %v7367 = vsel %vm7347, %v7366, %v7365
      %v7368 = vrot.slane %v7338, 5
      %v7369 = vsel %vm7350, %v7368, %v7367
      %v7370 = vrot.slane %v7339, 4
      %v7371 = vsel %vm7353, %v7370, %v7369
      %v7372 = vrot.slane %v7340, 3
      %v7373 = vsel %vm7356, %v7372, %v7371
      %v7374 = vrot.slane %v7341, 2
      %v7375 = vsel %vm7359, %v7374, %v7373
      %v7376 = vrot.slane %v7342, 1
      %v7377 = vsel %vm7362, %v7376, %v7375
      %v7378 = vpack.c.b16 %v7377, %v7363
      %v7380 = vrot.slane %v7327, 1
      %v7381 = vsel %vm7344, %v7328, %v7380
      %v7382 = vrot.slane %v7329, 7
      %v7383 = vsel %vm7347, %v7382, %v7381
      %v7384 = vrot.slane %v7330, 6
      %v7385 = vsel %vm7350, %v7384, %v7383
      %v7386 = vrot.slane %v7331, 5
      %v7387 = vsel %vm7353, %v7386, %v7385
      %v7388 = vrot.slane %v7332, 4
      %v7389 = vsel %vm7356, %v7388, %v7387
      %v7390 = vrot.slane %v7333, 3
      %v7391 = vsel %vm7359, %v7390, %v7389
      %v7392 = vrot.slane %v7334, 2
      %v7393 = vsel %vm7362, %v7392, %v7391
      %v7394 = vrot.slane %v7335, 1
      %v7395 = vsel %vm7344, %v7336, %v7394
      %v7396 = vrot.slane %v7337, 7
      %v7397 = vsel %vm7347, %v7396, %v7395
      %v7398 = vrot.slane %v7338, 6
      %v7399 = vsel %vm7350, %v7398, %v7397
      %v7400 = vrot.slane %v7339, 5
      %v7401 = vsel %vm7353, %v7400, %v7399
      %v7402 = vrot.slane %v7340, 4
      %v7403 = vsel %vm7356, %v7402, %v7401
      %v7404 = vrot.slane %v7341, 3
      %v7405 = vsel %vm7359, %v7404, %v7403
      %v7406 = vrot.slane %v7342, 2
      %v7407 = vsel %vm7362, %v7406, %v7405
      %v7408 = vpack.c.b16 %v7407, %v7393
      %v7410 = vrot.slane %v7327, 2
      %v7411 = vrot.slane %v7328, 1
      %v7412 = vsel %vm7344, %v7411, %v7410
      %v7413 = vsel %vm7347, %v7329, %v7412
      %v7414 = vrot.slane %v7330, 7
      %v7415 = vsel %vm7350, %v7414, %v7413
      %v7416 = vrot.slane %v7331, 6
      %v7417 = vsel %vm7353, %v7416, %v7415
      %v7418 = vrot.slane %v7332, 5
      %v7419 = vsel %vm7356, %v7418, %v7417
      %v7420 = vrot.slane %v7333, 4
      %v7421 = vsel %vm7359, %v7420, %v7419
      %v7422 = vrot.slane %v7334, 3
      %v7423 = vsel %vm7362, %v7422, %v7421
      %v7424 = vrot.slane %v7335, 2
      %v7425 = vrot.slane %v7336, 1
      %v7426 = vsel %vm7344, %v7425, %v7424
      %v7427 = vsel %vm7347, %v7337, %v7426
      %v7428 = vrot.slane %v7338, 7
      %v7429 = vsel %vm7350, %v7428, %v7427
      %v7430 = vrot.slane %v7339, 6
      %v7431 = vsel %vm7353, %v7430, %v7429
      %v7432 = vrot.slane %v7340, 5
      %v7433 = vsel %vm7356, %v7432, %v7431
      %v7434 = vrot.slane %v7341, 4
      %v7435 = vsel %vm7359, %v7434, %v7433
      %v7436 = vrot.slane %v7342, 3
      %v7437 = vsel %vm7362, %v7436, %v7435
      %v7438 = vpack.c.b16 %v7437, %v7423
      %v7440 = vrot.slane %v7327, 3
      %v7441 = vrot.slane %v7328, 2
      %v7442 = vsel %vm7344, %v7441, %v7440
      %v7443 = vrot.slane %v7329, 1
      %v7444 = vsel %vm7347, %v7443, %v7442
      %v7445 = vsel %vm7350, %v7330, %v7444
      %v7446 = vrot.slane %v7331, 7
      %v7447 = vsel %vm7353, %v7446, %v7445
      %v7448 = vrot.slane %v7332, 6
      %v7449 = vsel %vm7356, %v7448, %v7447
      %v7450 = vrot.slane %v7333, 5
      %v7451 = vsel %vm7359, %v7450, %v7449
      %v7452 = vrot.slane %v7334, 4
      %v7453 = vsel %vm7362, %v7452, %v7451
      %v7454 = vrot.slane %v7335, 3
      %v7455 = vrot.slane %v7336, 2
      %v7456 = vsel %vm7344, %v7455, %v7454
      %v7457 = vrot.slane %v7337, 1
      %v7458 = vsel %vm7347, %v7457, %v7456
      %v7459 = vsel %vm7350, %v7338, %v7458
      %v7460 = vrot.slane %v7339, 7
      %v7461 = vsel %vm7353, %v7460, %v7459
      %v7462 = vrot.slane %v7340, 6
      %v7463 = vsel %vm7356, %v7462, %v7461
      %v7464 = vrot.slane %v7341, 5
      %v7465 = vsel %vm7359, %v7464, %v7463
      %v7466 = vrot.slane %v7342, 4
      %v7467 = vsel %vm7362, %v7466, %v7465
      %v7468 = vpack.c.b16 %v7467, %v7453
      %v7470 = vrot.slane %v7327, 4
      %v7471 = vrot.slane %v7328, 3
      %v7472 = vsel %vm7344, %v7471, %v7470
      %v7473 = vrot.slane %v7329, 2
      %v7474 = vsel %vm7347, %v7473, %v7472
      %v7475 = vrot.slane %v7330, 1
      %v7476 = vsel %vm7350, %v7475, %v7474
      %v7477 = vsel %vm7353, %v7331, %v7476
      %v7478 = vrot.slane %v7332, 7
      %v7479 = vsel %vm7356, %v7478, %v7477
      %v7480 = vrot.slane %v7333, 6
      %v7481 = vsel %vm7359, %v7480, %v7479
      %v7482 = vrot.slane %v7334, 5
      %v7483 = vsel %vm7362, %v7482, %v7481
      %v7484 = vrot.slane %v7335, 4
      %v7485 = vrot.slane %v7336, 3
      %v7486 = vsel %vm7344, %v7485, %v7484
      %v7487 = vrot.slane %v7337, 2
      %v7488 = vsel %vm7347, %v7487, %v7486
      %v7489 = vrot.slane %v7338, 1
      %v7490 = vsel %vm7350, %v7489, %v7488
      %v7491 = vsel %vm7353, %v7339, %v7490
      %v7492 = vrot.slane %v7340, 7
      %v7493 = vsel %vm7356, %v7492, %v7491
      %v7494 = vrot.slane %v7341, 6
      %v7495 = vsel %vm7359, %v7494, %v7493
      %v7496 = vrot.slane %v7342, 5
      %v7497 = vsel %vm7362, %v7496, %v7495
      %v7498 = vpack.c.b16 %v7497, %v7483
      %v7500 = vrot.slane %v7327, 5
      %v7501 = vrot.slane %v7328, 4
      %v7502 = vsel %vm7344, %v7501, %v7500
      %v7503 = vrot.slane %v7329, 3
      %v7504 = vsel %vm7347, %v7503, %v7502
      %v7505 = vrot.slane %v7330, 2
      %v7506 = vsel %vm7350, %v7505, %v7504
      %v7507 = vrot.slane %v7331, 1
      %v7508 = vsel %vm7353, %v7507, %v7506
      %v7509 = vsel %vm7356, %v7332, %v7508
      %v7510 = vrot.slane %v7333, 7
      %v7511 = vsel %vm7359, %v7510, %v7509
      %v7512 = vrot.slane %v7334, 6
      %v7513 = vsel %vm7362, %v7512, %v7511
      %v7514 = vrot.slane %v7335, 5
      %v7515 = vrot.slane %v7336, 4
      %v7516 = vsel %vm7344, %v7515, %v7514
      %v7517 = vrot.slane %v7337, 3
      %v7518 = vsel %vm7347, %v7517, %v7516
      %v7519 = vrot.slane %v7338, 2
      %v7520 = vsel %vm7350, %v7519, %v7518
      %v7521 = vrot.slane %v7339, 1
      %v7522 = vsel %vm7353, %v7521, %v7520
      %v7523 = vsel %vm7356, %v7340, %v7522
      %v7524 = vrot.slane %v7341, 7
      %v7525 = vsel %vm7359, %v7524, %v7523
      %v7526 = vrot.slane %v7342, 6
      %v7527 = vsel %vm7362, %v7526, %v7525
      %v7528 = vpack.c.b16 %v7527, %v7513
      %v7530 = vrot.slane %v7327, 6
      %v7531 = vrot.slane %v7328, 5
      %v7532 = vsel %vm7344, %v7531, %v7530
      %v7533 = vrot.slane %v7329, 4
      %v7534 = vsel %vm7347, %v7533, %v7532
      %v7535 = vrot.slane %v7330, 3
      %v7536 = vsel %vm7350, %v7535, %v7534
      %v7537 = vrot.slane %v7331, 2
      %v7538 = vsel %vm7353, %v7537, %v7536
      %v7539 = vrot.slane %v7332, 1
      %v7540 = vsel %vm7356, %v7539, %v7538
      %v7541 = vsel %vm7359, %v7333, %v7540
      %v7542 = vrot.slane %v7334, 7
      %v7543 = vsel %vm7362, %v7542, %v7541
      %v7544 = vrot.slane %v7335, 6
      %v7545 = vrot.slane %v7336, 5
      %v7546 = vsel %vm7344, %v7545, %v7544
      %v7547 = vrot.slane %v7337, 4
      %v7548 = vsel %vm7347, %v7547, %v7546
      %v7549 = vrot.slane %v7338, 3
      %v7550 = vsel %vm7350, %v7549, %v7548
      %v7551 = vrot.slane %v7339, 2
      %v7552 = vsel %vm7353, %v7551, %v7550
      %v7553 = vrot.slane %v7340, 1
      %v7554 = vsel %vm7356, %v7553, %v7552
      %v7555 = vsel %vm7359, %v7341, %v7554
      %v7556 = vrot.slane %v7342, 7
      %v7557 = vsel %vm7362, %v7556, %v7555
      %v7558 = vpack.c.b16 %v7557, %v7543
      %v7560 = vrot.slane %v7327, 7
      %v7561 = vrot.slane %v7328, 6
      %v7562 = vsel %vm7344, %v7561, %v7560
      %v7563 = vrot.slane %v7329, 5
      %v7564 = vsel %vm7347, %v7563, %v7562
      %v7565 = vrot.slane %v7330, 4
      %v7566 = vsel %vm7350, %v7565, %v7564
      %v7567 = vrot.slane %v7331, 3
      %v7568 = vsel %vm7353, %v7567, %v7566
      %v7569 = vrot.slane %v7332, 2
      %v7570 = vsel %vm7356, %v7569, %v7568
      %v7571 = vrot.slane %v7333, 1
      %v7572 = vsel %vm7359, %v7571, %v7570
      %v7573 = vsel %vm7362, %v7334, %v7572
      %v7574 = vrot.slane %v7335, 7
      %v7575 = vrot.slane %v7336, 6
      %v7576 = vsel %vm7344, %v7575, %v7574
      %v7577 = vrot.slane %v7337, 5
      %v7578 = vsel %vm7347, %v7577, %v7576
      %v7579 = vrot.slane %v7338, 4
      %v7580 = vsel %vm7350, %v7579, %v7578
      %v7581 = vrot.slane %v7339, 3
      %v7582 = vsel %vm7353, %v7581, %v7580
      %v7583 = vrot.slane %v7340, 2
      %v7584 = vsel %vm7356, %v7583, %v7582
      %v7585 = vrot.slane %v7341, 1
      %v7586 = vsel %vm7359, %v7585, %v7584
      %v7587 = vsel %vm7362, %v7342, %v7586
      %v7588 = vpack.c.b16 %v7587, %v7573
      %v7606 = vunpack.c.l.b16 %v7295
      %v7607 = vunpack.c.l.b16 %v7296
      %v7608 = vunpack.c.l.b16 %v7297
      %v7609 = vunpack.c.l.b16 %v7298
      %v7610 = vunpack.c.l.b16 %v7299
      %v7611 = vunpack.c.l.b16 %v7300
      %v7612 = vunpack.c.l.b16 %v7301
      %v7613 = vunpack.c.l.b16 %v7302
      %v7614 = vunpack.c.l.b16 %v7303
      %v7615 = vunpack.c.l.b16 %v7304
      %v7616 = vunpack.c.l.b16 %v7305
      %v7617 = vunpack.c.l.b16 %v7306
      %v7618 = vunpack.c.l.b16 %v7307
      %v7619 = vunpack.c.l.b16 %v7308
      %v7620 = vunpack.c.l.b16 %v7309
      %v7621 = vunpack.c.l.b16 %v7310
      %v7622 = vrot.slane %v7607, 7
      %v7623 = vsel %vm7344, %v7622, %v7606
      %v7624 = vrot.slane %v7608, 6
      %v7625 = vsel %vm7347, %v7624, %v7623
      %v7626 = vrot.slane %v7609, 5
      %v7627 = vsel %vm7350, %v7626, %v7625
      %v7628 = vrot.slane %v7610, 4
      %v7629 = vsel %vm7353, %v7628, %v7627
      %v7630 = vrot.slane %v7611, 3
      %v7631 = vsel %vm7356, %v7630, %v7629
      %v7632 = vrot.slane %v7612, 2
      %v7633 = vsel %vm7359, %v7632, %v7631
      %v7634 = vrot.slane %v7613, 1
      %v7635 = vsel %vm7362, %v7634, %v7633
      %v7636 = vrot.slane %v7615, 7
      %v7637 = vsel %vm7344, %v7636, %v7614
      %v7638 = vrot.slane %v7616, 6
      %v7639 = vsel %vm7347, %v7638, %v7637
      %v7640 = vrot.slane %v7617, 5
      %v7641 = vsel %vm7350, %v7640, %v7639
      %v7642 = vrot.slane %v7618, 4
      %v7643 = vsel %vm7353, %v7642, %v7641
      %v7644 = vrot.slane %v7619, 3
      %v7645 = vsel %vm7356, %v7644, %v7643
      %v7646 = vrot.slane %v7620, 2
      %v7647 = vsel %vm7359, %v7646, %v7645
      %v7648 = vrot.slane %v7621, 1
      %v7649 = vsel %vm7362, %v7648, %v7647
      %v7650 = vpack.c.b16 %v7649, %v7635
      %v7652 = vrot.slane %v7606, 1
      %v7653 = vsel %vm7344, %v7607, %v7652
      %v7654 = vrot.slane %v7608, 7
      %v7655 = vsel %vm7347, %v7654, %v7653
      %v7656 = vrot.slane %v7609, 6
      %v7657 = vsel %vm7350, %v7656, %v7655
      %v7658 = vrot.slane %v7610, 5
      %v7659 = vsel %vm7353, %v7658, %v7657
      %v7660 = vrot.slane %v7611, 4
      %v7661 = vsel %vm7356, %v7660, %v7659
      %v7662 = vrot.slane %v7612, 3
      %v7663 = vsel %vm7359, %v7662, %v7661
      %v7664 = vrot.slane %v7613, 2
      %v7665 = vsel %vm7362, %v7664, %v7663
      %v7666 = vrot.slane %v7614, 1
      %v7667 = vsel %vm7344, %v7615, %v7666
      %v7668 = vrot.slane %v7616, 7
      %v7669 = vsel %vm7347, %v7668, %v7667
      %v7670 = vrot.slane %v7617, 6
      %v7671 = vsel %vm7350, %v7670, %v7669
      %v7672 = vrot.slane %v7618, 5
      %v7673 = vsel %vm7353, %v7672, %v7671
      %v7674 = vrot.slane %v7619, 4
      %v7675 = vsel %vm7356, %v7674, %v7673
      %v7676 = vrot.slane %v7620, 3
      %v7677 = vsel %vm7359, %v7676, %v7675
      %v7678 = vrot.slane %v7621, 2
      %v7679 = vsel %vm7362, %v7678, %v7677
      %v7680 = vpack.c.b16 %v7679, %v7665
      %v7682 = vrot.slane %v7606, 2
      %v7683 = vrot.slane %v7607, 1
      %v7684 = vsel %vm7344, %v7683, %v7682
      %v7685 = vsel %vm7347, %v7608, %v7684
      %v7686 = vrot.slane %v7609, 7
      %v7687 = vsel %vm7350, %v7686, %v7685
      %v7688 = vrot.slane %v7610, 6
      %v7689 = vsel %vm7353, %v7688, %v7687
      %v7690 = vrot.slane %v7611, 5
      %v7691 = vsel %vm7356, %v7690, %v7689
      %v7692 = vrot.slane %v7612, 4
      %v7693 = vsel %vm7359, %v7692, %v7691
      %v7694 = vrot.slane %v7613, 3
      %v7695 = vsel %vm7362, %v7694, %v7693
      %v7696 = vrot.slane %v7614, 2
      %v7697 = vrot.slane %v7615, 1
      %v7698 = vsel %vm7344, %v7697, %v7696
      %v7699 = vsel %vm7347, %v7616, %v7698
      %v7700 = vrot.slane %v7617, 7
      %v7701 = vsel %vm7350, %v7700, %v7699
      %v7702 = vrot.slane %v7618, 6
      %v7703 = vsel %vm7353, %v7702, %v7701
      %v7704 = vrot.slane %v7619, 5
      %v7705 = vsel %vm7356, %v7704, %v7703
      %v7706 = vrot.slane %v7620, 4
      %v7707 = vsel %vm7359, %v7706, %v7705
      %v7708 = vrot.slane %v7621, 3
      %v7709 = vsel %vm7362, %v7708, %v7707
      %v7710 = vpack.c.b16 %v7709, %v7695
      %v7712 = vrot.slane %v7606, 3
      %v7713 = vrot.slane %v7607, 2
      %v7714 = vsel %vm7344, %v7713, %v7712
      %v7715 = vrot.slane %v7608, 1
      %v7716 = vsel %vm7347, %v7715, %v7714
      %v7717 = vsel %vm7350, %v7609, %v7716
      %v7718 = vrot.slane %v7610, 7
      %v7719 = vsel %vm7353, %v7718, %v7717
      %v7720 = vrot.slane %v7611, 6
      %v7721 = vsel %vm7356, %v7720, %v7719
      %v7722 = vrot.slane %v7612, 5
      %v7723 = vsel %vm7359, %v7722, %v7721
      %v7724 = vrot.slane %v7613, 4
      %v7725 = vsel %vm7362, %v7724, %v7723
      %v7726 = vrot.slane %v7614, 3
      %v7727 = vrot.slane %v7615, 2
      %v7728 = vsel %vm7344, %v7727, %v7726
      %v7729 = vrot.slane %v7616, 1
      %v7730 = vsel %vm7347, %v7729, %v7728
      %v7731 = vsel %vm7350, %v7617, %v7730
      %v7732 = vrot.slane %v7618, 7
      %v7733 = vsel %vm7353, %v7732, %v7731
      %v7734 = vrot.slane %v7619, 6
      %v7735 = vsel %vm7356, %v7734, %v7733
      %v7736 = vrot.slane %v7620, 5
      %v7737 = vsel %vm7359, %v7736, %v7735
      %v7738 = vrot.slane %v7621, 4
      %v7739 = vsel %vm7362, %v7738, %v7737
      %v7740 = vpack.c.b16 %v7739, %v7725
      %v7742 = vrot.slane %v7606, 4
      %v7743 = vrot.slane %v7607, 3
      %v7744 = vsel %vm7344, %v7743, %v7742
      %v7745 = vrot.slane %v7608, 2
      %v7746 = vsel %vm7347, %v7745, %v7744
      %v7747 = vrot.slane %v7609, 1
      %v7748 = vsel %vm7350, %v7747, %v7746
      %v7749 = vsel %vm7353, %v7610, %v7748
      %v7750 = vrot.slane %v7611, 7
      %v7751 = vsel %vm7356, %v7750, %v7749
      %v7752 = vrot.slane %v7612, 6
      %v7753 = vsel %vm7359, %v7752, %v7751
      %v7754 = vrot.slane %v7613, 5
      %v7755 = vsel %vm7362, %v7754, %v7753
      %v7756 = vrot.slane %v7614, 4
      %v7757 = vrot.slane %v7615, 3
      %v7758 = vsel %vm7344, %v7757, %v7756
      %v7759 = vrot.slane %v7616, 2
      %v7760 = vsel %vm7347, %v7759, %v7758
      %v7761 = vrot.slane %v7617, 1
      %v7762 = vsel %vm7350, %v7761, %v7760
      %v7763 = vsel %vm7353, %v7618, %v7762
      %v7764 = vrot.slane %v7619, 7
      %v7765 = vsel %vm7356, %v7764, %v7763
      %v7766 = vrot.slane %v7620, 6
      %v7767 = vsel %vm7359, %v7766, %v7765
      %v7768 = vrot.slane %v7621, 5
      %v7769 = vsel %vm7362, %v7768, %v7767
      %v7770 = vpack.c.b16 %v7769, %v7755
      %v7772 = vld [vmem:[%s7] sm:$0xff]
      %v7773 = vld [vmem:[%s7 + $0x8] sm:$0xff]
      %v7774 = vld [vmem:[%s7 + $0x10] sm:$0xff]
      %v7775 = vld [vmem:[%s7 + $0x18] sm:$0xff]
      %v7776 = vld [vmem:[%s7 + $0x20] sm:$0xff]
      %v7777 = vld [vmem:[%s7 + $0x28] sm:$0xff]
      %v7778 = vld [vmem:[%s7 + $0x30] sm:$0xff]
      %v7779 = vld [vmem:[%s7 + $0x38] sm:$0xff]
      %v7780 = vld [vmem:[%s7 + $0x40] sm:$0xff]
      %v7781 = vld [vmem:[%s7 + $0x48] sm:$0xff]
      %v7782 = vld [vmem:[%s7 + $0x50] sm:$0xff]
      %v7783 = vld [vmem:[%s7 + $0x58] sm:$0xff]
      %v7784 = vld [vmem:[%s7 + $0x60] sm:$0xff]
      %v7785 = vld [vmem:[%s7 + $0x68] sm:$0xff]
      %v7786 = vld [vmem:[%s7 + $0x70] sm:$0xff]
      %v7787 = vld [vmem:[%s7 + $0x78] sm:$0xff]
      %v7788 = vld [vmem:[%s7 + $0x80] sm:$0xff]
      %v7789 = vld [vmem:[%s7 + $0x88] sm:$0xff]
      %v7790 = vld [vmem:[%s7 + $0x90] sm:$0xff]
      %v7791 = vld [vmem:[%s7 + $0x98] sm:$0xff]
      %v7792 = vld [vmem:[%s7 + $0xa0] sm:$0xff]
      %v7793 = vld [vmem:[%s7 + $0xa8] sm:$0xff]
      %v7794 = vld [vmem:[%s7 + $0xb0] sm:$0xff]
      %v7795 = vld [vmem:[%s7 + $0xb8] sm:$0xff]
      %v7796 = vld [vmem:[%s7 + $0xc0] sm:$0xff]
      %v7797 = vld [vmem:[%s7 + $0xc8] sm:$0xff]
      %v7798 = vld [vmem:[%s7 + $0xd0] sm:$0xff]
      %v7799 = vld [vmem:[%s7 + $0xd8] sm:$0xff]
      %v7800 = vld [vmem:[%s7 + $0xe0] sm:$0xff]
      %v7801 = vld [vmem:[%s7 + $0xe8] sm:$0xff]
      %v7802 = vld [vmem:[%s7 + $0xf0] sm:$0xff]
      %v7803 = vld [vmem:[%s7 + $0xf8] sm:$0xff]
      %v7804 = vld [vmem:[%s7 + $0x100] sm:$0xff]
      %v7805 = vld [vmem:[%s7 + $0x108] sm:$0xff]
      %v7806 = vld [vmem:[%s7 + $0x110] sm:$0xff]
      %v7807 = vld [vmem:[%s7 + $0x118] sm:$0xff]
      %v7808 = vld [vmem:[%s7 + $0x120] sm:$0xff]
      %v7809 = vld [vmem:[%s7 + $0x128] sm:$0xff]
      %v7810 = vld [vmem:[%s7 + $0x130] sm:$0xff]
      %v7811 = vld [vmem:[%s7 + $0x138] sm:$0xff]
      %v7812 = vld [vmem:[%s7 + $0x140] sm:$0xff]
      %v7813 = vld [vmem:[%s7 + $0x148] sm:$0xff]
      %v7814 = vld [vmem:[%s7 + $0x150] sm:$0xff]
      %v7815 = vld [vmem:[%s7 + $0x158] sm:$0xff]
      %v7816 = vld [vmem:[%s7 + $0x160] sm:$0xff]
      %v7817 = vld [vmem:[%s7 + $0x168] sm:$0xff]
      %v7818 = vld [vmem:[%s7 + $0x170] sm:$0xff]
      %v7819 = vld [vmem:[%s7 + $0x178] sm:$0xff]
      %v7820 = vld [vmem:[%s7 + $0x180] sm:$0xff]
      %v7821 = vld [vmem:[%s7 + $0x188] sm:$0xff]
      %v7822 = vld [vmem:[%s7 + $0x190] sm:$0xff]
      %v7823 = vld [vmem:[%s7 + $0x198] sm:$0xff]
      %v7824 = vld [vmem:[%s7 + $0x1a0] sm:$0xff]
      %v7825 = vld [vmem:[%s7 + $0x1a8] sm:$0xff]
      %v7826 = vld [vmem:[%s7 + $0x1b0] sm:$0xff]
      %v7827 = vld [vmem:[%s7 + $0x1b8] sm:$0xff]
      %v7828 = vld [vmem:[%s7 + $0x1c0] sm:$0xff]
      %v7829 = vld [vmem:[%s7 + $0x1c8] sm:$0xff]
      %v7830 = vld [vmem:[%s7 + $0x1d0] sm:$0xff]
      %v7831 = vld [vmem:[%s7 + $0x1d8] sm:$0xff]
      %v7832 = vld [vmem:[%s7 + $0x1e0] sm:$0xff]
      %v7833 = vld [vmem:[%s7 + $0x1e8] sm:$0xff]
      %v7834 = vld [vmem:[%s7 + $0x1f0] sm:$0xff]
      %v7835 = vld [vmem:[%s7 + $0x1f8] sm:$0xff]
      %v7836 = vld [vmem:[%s7 + $0x200] sm:$0xff]
      %v7837 = vld [vmem:[%s7 + $0x208] sm:$0xff]
      %v7838 = vld [vmem:[%s7 + $0x210] sm:$0xff]
      %v7839 = vld [vmem:[%s7 + $0x218] sm:$0xff]
      %v7840 = vld [vmem:[%s7 + $0x220] sm:$0xff]
      %v7841 = vld [vmem:[%s7 + $0x228] sm:$0xff]
      %v7842 = vld [vmem:[%s7 + $0x230] sm:$0xff]
      %v7843 = vld [vmem:[%s7 + $0x238] sm:$0xff]
      %v7844 = vld [vmem:[%s7 + $0x240] sm:$0xff]
      %v7845 = vld [vmem:[%s7 + $0x248] sm:$0xff]
      %v7846 = vld [vmem:[%s7 + $0x250] sm:$0xff]
      %v7847 = vld [vmem:[%s7 + $0x258] sm:$0xff]
      %v7848 = vld [vmem:[%s7 + $0x260] sm:$0xff]
      %v7849 = vld [vmem:[%s7 + $0x268] sm:$0xff]
      %v7850 = vld [vmem:[%s7 + $0x270] sm:$0xff]
      %v7851 = vld [vmem:[%s7 + $0x278] sm:$0xff]
      %v7852 = vld [vmem:[%s7 + $0x280] sm:$0xff]
      %v7853 = vld [vmem:[%s7 + $0x288] sm:$0xff]
      %v7854 = vld [vmem:[%s7 + $0x290] sm:$0xff]
      %v7855 = vld [vmem:[%s7 + $0x298] sm:$0xff]
      %v7856 = vld [vmem:[%s7 + $0x2a0] sm:$0xff]
      %v7857 = vld [vmem:[%s7 + $0x2a8] sm:$0xff]
      %v7858 = vld [vmem:[%s7 + $0x2b0] sm:$0xff]
      %v7859 = vld [vmem:[%s7 + $0x2b8] sm:$0xff]
      %v7860 = vld [vmem:[%s7 + $0x2c0] sm:$0xff]
      %v7861 = vld [vmem:[%s7 + $0x2c8] sm:$0xff]
      %v7862 = vld [vmem:[%s7 + $0x2d0] sm:$0xff]
      %v7863 = vld [vmem:[%s7 + $0x2d8] sm:$0xff]
      %v7864 = vld [vmem:[%s7 + $0x2e0] sm:$0xff]
      %v7865 = vld [vmem:[%s7 + $0x2e8] sm:$0xff]
      %v7866 = vld [vmem:[%s7 + $0x2f0] sm:$0xff]
      %v7867 = vld [vmem:[%s7 + $0x2f8] sm:$0xff]
      %v7868 = vld [vmem:[%s7 + $0x300] sm:$0xff]
      %v7869 = vld [vmem:[%s7 + $0x308] sm:$0xff]
      %v7870 = vld [vmem:[%s7 + $0x310] sm:$0xff]
      %v7871 = vld [vmem:[%s7 + $0x318] sm:$0xff]
      %v7872 = vld [vmem:[%s7 + $0x320] sm:$0xff]
      %v7873 = vld [vmem:[%s7 + $0x328] sm:$0xff]
      %v7874 = vld [vmem:[%s7 + $0x330] sm:$0xff]
      %v7875 = vld [vmem:[%s7 + $0x338] sm:$0xff]
      %v7876 = vld [vmem:[%s7 + $0x340] sm:$0xff]
      %v7877 = vld [vmem:[%s7 + $0x348] sm:$0xff]
      %v7878 = vld [vmem:[%s7 + $0x350] sm:$0xff]
      %v7879 = vld [vmem:[%s7 + $0x358] sm:$0xff]
      %v7880 = vld [vmem:[%s7 + $0x360] sm:$0xff]
      %v7881 = vld [vmem:[%s7 + $0x368] sm:$0xff]
      %v7882 = vld [vmem:[%s7 + $0x370] sm:$0xff]
      %v7883 = vld [vmem:[%s7 + $0x378] sm:$0xff]
      %v7884 = vld [vmem:[%s7 + $0x380] sm:$0xff]
      %v7885 = vld [vmem:[%s7 + $0x388] sm:$0xff]
      %v7886 = vld [vmem:[%s7 + $0x390] sm:$0xff]
      %v7887 = vld [vmem:[%s7 + $0x398] sm:$0xff]
      %v7888 = vld [vmem:[%s7 + $0x3a0] sm:$0xff]
      %v7889 = vld [vmem:[%s7 + $0x3a8] sm:$0xff]
      %v7890 = vld [vmem:[%s7 + $0x3b0] sm:$0xff]
      %v7891 = vld [vmem:[%s7 + $0x3b8] sm:$0xff]
      %v7892 = vld [vmem:[%s7 + $0x3c0] sm:$0xff]
      %v7893 = vld [vmem:[%s7 + $0x3c8] sm:$0xff]
      %v7894 = vld [vmem:[%s7 + $0x3d0] sm:$0xff]
      %v7895 = vld [vmem:[%s7 + $0x3d8] sm:$0xff]
      %v7896 = vld [vmem:[%s7 + $0x3e0] sm:$0xff]
      %v7897 = vld [vmem:[%s7 + $0x3e8] sm:$0xff]
      %v7898 = vld [vmem:[%s7 + $0x3f0] sm:$0xff]
      %v7899 = vld [vmem:[%s7 + $0x3f8] sm:$0xff]
      %v7900 = vld [vmem:[%s7 + $0x400] sm:$0xff]
      %v7901 = vld [vmem:[%s7 + $0x408] sm:$0xff]
      %v7902 = vld [vmem:[%s7 + $0x410] sm:$0xff]
      %v7903 = vld [vmem:[%s7 + $0x418] sm:$0xff]
      %v7904 = vld [vmem:[%s7 + $0x420] sm:$0xff]
      %v7905 = vld [vmem:[%s7 + $0x428] sm:$0xff]
      %v7906 = vld [vmem:[%s7 + $0x430] sm:$0xff]
      %v7907 = vld [vmem:[%s7 + $0x438] sm:$0xff]
      %v7908 = vld [vmem:[%s7 + $0x440] sm:$0xff]
      %v7909 = vld [vmem:[%s7 + $0x448] sm:$0xff]
      %v7910 = vld [vmem:[%s7 + $0x450] sm:$0xff]
      %v7911 = vld [vmem:[%s7 + $0x458] sm:$0xff]
      %v7912 = vld [vmem:[%s7 + $0x460] sm:$0xff]
      %v7913 = vld [vmem:[%s7 + $0x468] sm:$0xff]
      %v7914 = vld [vmem:[%s7 + $0x470] sm:$0xff]
      %v7915 = vld [vmem:[%s7 + $0x478] sm:$0xff]
      %v7916 = vld [vmem:[%s7 + $0x480] sm:$0xff]
      %v7917 = vld [vmem:[%s7 + $0x488] sm:$0xff]
      %v7918 = vld [vmem:[%s7 + $0x490] sm:$0xff]
      %v7919 = vld [vmem:[%s7 + $0x498] sm:$0xff]
      %v7920 = vld [vmem:[%s7 + $0x4a0] sm:$0xff]
      %v7921 = vld [vmem:[%s7 + $0x4a8] sm:$0xff]
      %v7922 = vld [vmem:[%s7 + $0x4b0] sm:$0xff]
      %v7923 = vld [vmem:[%s7 + $0x4b8] sm:$0xff]
      %v7924 = vld [vmem:[%s7 + $0x4c0] sm:$0xff]
      %v7925 = vld [vmem:[%s7 + $0x4c8] sm:$0xff]
      %v7926 = vld [vmem:[%s7 + $0x4d0] sm:$0xff]
      %v7927 = vld [vmem:[%s7 + $0x4d8] sm:$0xff]
      %v7928 = vld [vmem:[%s7 + $0x4e0] sm:$0xff]
      %v7929 = vld [vmem:[%s7 + $0x4e8] sm:$0xff]
      %v7930 = vld [vmem:[%s7 + $0x4f0] sm:$0xff]
      %v7931 = vld [vmem:[%s7 + $0x4f8] sm:$0xff]
      %v7932 = vld [vmem:[%s7 + $0x500] sm:$0xff]
      %v7933 = vld [vmem:[%s7 + $0x508] sm:$0xff]
      %v7934 = vld [vmem:[%s7 + $0x510] sm:$0xff]
      %v7935 = vld [vmem:[%s7 + $0x518] sm:$0xff]
      %v7936 = vld [vmem:[%s7 + $0x520] sm:$0xff]
      %v7937 = vld [vmem:[%s7 + $0x528] sm:$0xff]
      %v7938 = vld [vmem:[%s7 + $0x530] sm:$0xff]
      %v7939 = vld [vmem:[%s7 + $0x538] sm:$0xff]
      %v7940 = vld [vmem:[%s7 + $0x540] sm:$0xff]
      %v7941 = vld [vmem:[%s7 + $0x548] sm:$0xff]
      %v7942 = vld [vmem:[%s7 + $0x550] sm:$0xff]
      %v7943 = vld [vmem:[%s7 + $0x558] sm:$0xff]
      %v7944 = vld [vmem:[%s7 + $0x560] sm:$0xff]
      %v7945 = vld [vmem:[%s7 + $0x568] sm:$0xff]
      %v7946 = vld [vmem:[%s7 + $0x570] sm:$0xff]
      %v7947 = vld [vmem:[%s7 + $0x578] sm:$0xff]
      %v7948 = vld [vmem:[%s7 + $0x580] sm:$0xff]
      %v7949 = vld [vmem:[%s7 + $0x588] sm:$0xff]
      %v7950 = vld [vmem:[%s7 + $0x590] sm:$0xff]
      %v7951 = vld [vmem:[%s7 + $0x598] sm:$0xff]
      %v7952 = vld [vmem:[%s7 + $0x5a0] sm:$0xff]
      %v7953 = vld [vmem:[%s7 + $0x5a8] sm:$0xff]
      %v7954 = vld [vmem:[%s7 + $0x5b0] sm:$0xff]
      %v7955 = vld [vmem:[%s7 + $0x5b8] sm:$0xff]
      %v7956 = vld [vmem:[%s7 + $0x5c0] sm:$0xff]
      %v7957 = vld [vmem:[%s7 + $0x5c8] sm:$0xff]
      %v7958 = vld [vmem:[%s7 + $0x5d0] sm:$0xff]
      %v7959 = vld [vmem:[%s7 + $0x5d8] sm:$0xff]
      %v7960 = vld [vmem:[%s7 + $0x5e0] sm:$0xff]
      %v7961 = vld [vmem:[%s7 + $0x5e8] sm:$0xff]
      %v7962 = vld [vmem:[%s7 + $0x5f0] sm:$0xff]
      %v7963 = vld [vmem:[%s7 + $0x5f8] sm:$0xff]
      %v7964 = vld [vmem:[%s7 + $0x600] sm:$0xff]
      %v7965 = vld [vmem:[%s7 + $0x608] sm:$0xff]
      %v7966 = vld [vmem:[%s7 + $0x610] sm:$0xff]
      %v7967 = vld [vmem:[%s7 + $0x618] sm:$0xff]
      %v7968 = vld [vmem:[%s7 + $0x620] sm:$0xff]
      %v7969 = vld [vmem:[%s7 + $0x628] sm:$0xff]
      %v7970 = vld [vmem:[%s7 + $0x630] sm:$0xff]
      %v7971 = vld [vmem:[%s7 + $0x638] sm:$0xff]
      %v7972 = vld [vmem:[%s7 + $0x640] sm:$0xff]
      %v7973 = vld [vmem:[%s7 + $0x648] sm:$0xff]
      %v7974 = vld [vmem:[%s7 + $0x650] sm:$0xff]
      %v7975 = vld [vmem:[%s7 + $0x658] sm:$0xff]
      %v7976 = vld [vmem:[%s7 + $0x660] sm:$0xff]
      %v7977 = vld [vmem:[%s7 + $0x668] sm:$0xff]
      %v7978 = vld [vmem:[%s7 + $0x670] sm:$0xff]
      %v7979 = vld [vmem:[%s7 + $0x678] sm:$0xff]
      %v8188 = vunpack.c.l.b16 %v7772
      %v8189 = vunpack.c.h.b16 %v7772
      %v8190 = vunpack.c.l.b16 %v7773
      %v8191 = vunpack.c.h.b16 %v7773
      %v8192 = vunpack.c.l.b16 %v7774
      %v8193 = vunpack.c.h.b16 %v7774
      %v8194 = vunpack.c.l.b16 %v7775
      %v8195 = vunpack.c.h.b16 %v7775
      %v8196 = vunpack.c.l.b16 %v7776
      %v8197 = vunpack.c.h.b16 %v7776
      %v8198 = vunpack.c.l.b16 %v7777
      %v8199 = vunpack.c.h.b16 %v7777
      %v8200 = vunpack.c.l.b16 %v7778
      %v8201 = vunpack.c.h.b16 %v7778
      %v8202 = vunpack.c.l.b16 %v7779
      %v8203 = vunpack.c.h.b16 %v7779
      %v8204 = vunpack.c.l.b16 %v7780
      %v8205 = vunpack.c.h.b16 %v7780
      %v8206 = vunpack.c.l.b16 %v7781
      %v8207 = vunpack.c.h.b16 %v7781
      %v8208 = vunpack.c.l.b16 %v7782
      %v8209 = vunpack.c.h.b16 %v7782
      %v8210 = vunpack.c.l.b16 %v7783
      %v8211 = vunpack.c.h.b16 %v7783
      %v8212 = vunpack.c.l.b16 %v7784
      %v8213 = vunpack.c.h.b16 %v7784
      %v8214 = vunpack.c.l.b16 %v7785
      %v8215 = vunpack.c.h.b16 %v7785
      %v8216 = vunpack.c.l.b16 %v7786
      %v8217 = vunpack.c.h.b16 %v7786
      %v8218 = vunpack.c.l.b16 %v7787
      %v8219 = vunpack.c.h.b16 %v7787
      %v8220 = vunpack.c.l.b16 %v7788
      %v8221 = vunpack.c.h.b16 %v7788
      %v8222 = vunpack.c.l.b16 %v7789
      %v8223 = vunpack.c.h.b16 %v7789
      %v8224 = vunpack.c.l.b16 %v7790
      %v8225 = vunpack.c.h.b16 %v7790
      %v8226 = vunpack.c.l.b16 %v7791
      %v8227 = vunpack.c.h.b16 %v7791
      %v8228 = vunpack.c.l.b16 %v7792
      %v8229 = vunpack.c.h.b16 %v7792
      %v8230 = vunpack.c.l.b16 %v7793
      %v8231 = vunpack.c.h.b16 %v7793
      %v8232 = vunpack.c.l.b16 %v7794
      %v8233 = vunpack.c.h.b16 %v7794
      %v8234 = vunpack.c.l.b16 %v7795
      %v8235 = vunpack.c.h.b16 %v7795
      %v8236 = vunpack.c.l.b16 %v7796
      %v8237 = vunpack.c.h.b16 %v7796
      %v8238 = vunpack.c.l.b16 %v7797
      %v8239 = vunpack.c.h.b16 %v7797
      %v8240 = vunpack.c.l.b16 %v7798
      %v8241 = vunpack.c.h.b16 %v7798
      %v8242 = vunpack.c.l.b16 %v7799
      %v8243 = vunpack.c.h.b16 %v7799
      %v8244 = vunpack.c.l.b16 %v7800
      %v8245 = vunpack.c.h.b16 %v7800
      %v8246 = vunpack.c.l.b16 %v7801
      %v8247 = vunpack.c.h.b16 %v7801
      %v8248 = vunpack.c.l.b16 %v7802
      %v8249 = vunpack.c.h.b16 %v7802
      %v8250 = vunpack.c.l.b16 %v7803
      %v8251 = vunpack.c.h.b16 %v7803
      %v8252 = vunpack.c.l.b16 %v7804
      %v8253 = vunpack.c.h.b16 %v7804
      %v8254 = vunpack.c.l.b16 %v7805
      %v8255 = vunpack.c.h.b16 %v7805
      %v8256 = vunpack.c.l.b16 %v7806
      %v8257 = vunpack.c.h.b16 %v7806
      %v8258 = vunpack.c.l.b16 %v7807
      %v8259 = vunpack.c.h.b16 %v7807
      %v8260 = vunpack.c.l.b16 %v7808
      %v8261 = vunpack.c.h.b16 %v7808
      %v8262 = vunpack.c.l.b16 %v7809
      %v8263 = vunpack.c.h.b16 %v7809
      %v8264 = vunpack.c.l.b16 %v7810
      %v8265 = vunpack.c.h.b16 %v7810
      %v8266 = vunpack.c.l.b16 %v7811
      %v8267 = vunpack.c.h.b16 %v7811
      %v8268 = vunpack.c.l.b16 %v7812
      %v8269 = vunpack.c.h.b16 %v7812
      %v8270 = vunpack.c.l.b16 %v7813
      %v8271 = vunpack.c.h.b16 %v7813
      %v8272 = vunpack.c.l.b16 %v7814
      %v8273 = vunpack.c.h.b16 %v7814
      %v8274 = vunpack.c.l.b16 %v7815
      %v8275 = vunpack.c.h.b16 %v7815
      %v8276 = vunpack.c.l.b16 %v7816
      %v8277 = vunpack.c.h.b16 %v7816
      %v8278 = vunpack.c.l.b16 %v7817
      %v8279 = vunpack.c.h.b16 %v7817
      %v8280 = vunpack.c.l.b16 %v7818
      %v8281 = vunpack.c.h.b16 %v7818
      %v8282 = vunpack.c.l.b16 %v7819
      %v8283 = vunpack.c.h.b16 %v7819
      %v8284 = vunpack.c.l.b16 %v7820
      %v8285 = vunpack.c.h.b16 %v7820
      %v8286 = vunpack.c.l.b16 %v7821
      %v8287 = vunpack.c.h.b16 %v7821
      %v8288 = vunpack.c.l.b16 %v7822
      %v8289 = vunpack.c.h.b16 %v7822
      %v8290 = vunpack.c.l.b16 %v7823
      %v8291 = vunpack.c.h.b16 %v7823
      %v8292 = vunpack.c.l.b16 %v7824
      %v8293 = vunpack.c.h.b16 %v7824
      %v8294 = vunpack.c.l.b16 %v7825
      %v8295 = vunpack.c.h.b16 %v7825
      %v8296 = vunpack.c.l.b16 %v7826
      %v8297 = vunpack.c.h.b16 %v7826
      %v8298 = vunpack.c.l.b16 %v7827
      %v8299 = vunpack.c.h.b16 %v7827
      %v8300 = vunpack.c.l.b16 %v7828
      %v8301 = vunpack.c.h.b16 %v7828
      %v8302 = vunpack.c.l.b16 %v7829
      %v8303 = vunpack.c.h.b16 %v7829
      %v8304 = vunpack.c.l.b16 %v7830
      %v8305 = vunpack.c.h.b16 %v7830
      %v8306 = vunpack.c.l.b16 %v7831
      %v8307 = vunpack.c.h.b16 %v7831
      %v8308 = vunpack.c.l.b16 %v7832
      %v8309 = vunpack.c.h.b16 %v7832
      %v8310 = vunpack.c.l.b16 %v7833
      %v8311 = vunpack.c.h.b16 %v7833
      %v8312 = vunpack.c.l.b16 %v7834
      %v8313 = vunpack.c.h.b16 %v7834
      %v8314 = vunpack.c.l.b16 %v7835
      %v8315 = vunpack.c.h.b16 %v7835
      %v8316 = vunpack.c.l.b16 %v7836
      %v8317 = vunpack.c.h.b16 %v7836
      %v8318 = vunpack.c.l.b16 %v7837
      %v8319 = vunpack.c.h.b16 %v7837
      %v8320 = vunpack.c.l.b16 %v7838
      %v8321 = vunpack.c.h.b16 %v7838
      %v8322 = vunpack.c.l.b16 %v7839
      %v8323 = vunpack.c.h.b16 %v7839
      %v8324 = vunpack.c.l.b16 %v7840
      %v8325 = vunpack.c.h.b16 %v7840
      %v8326 = vunpack.c.l.b16 %v7841
      %v8327 = vunpack.c.h.b16 %v7841
      %v8328 = vunpack.c.l.b16 %v7842
      %v8329 = vunpack.c.h.b16 %v7842
      %v8330 = vunpack.c.l.b16 %v7843
      %v8331 = vunpack.c.h.b16 %v7843
      %v8332 = vunpack.c.l.b16 %v7844
      %v8333 = vunpack.c.h.b16 %v7844
      %v8334 = vunpack.c.l.b16 %v7845
      %v8335 = vunpack.c.h.b16 %v7845
      %v8336 = vunpack.c.l.b16 %v7846
      %v8337 = vunpack.c.h.b16 %v7846
      %v8338 = vunpack.c.l.b16 %v7847
      %v8339 = vunpack.c.h.b16 %v7847
      %v8340 = vunpack.c.l.b16 %v7848
      %v8341 = vunpack.c.h.b16 %v7848
      %v8342 = vunpack.c.l.b16 %v7849
      %v8343 = vunpack.c.h.b16 %v7849
      %v8344 = vunpack.c.l.b16 %v7850
      %v8345 = vunpack.c.h.b16 %v7850
      %v8346 = vunpack.c.l.b16 %v7851
      %v8347 = vunpack.c.h.b16 %v7851
      %v8348 = vunpack.c.l.b16 %v7852
      %v8349 = vunpack.c.h.b16 %v7852
      %v8350 = vunpack.c.l.b16 %v7853
      %v8351 = vunpack.c.h.b16 %v7853
      %v8352 = vunpack.c.l.b16 %v7854
      %v8353 = vunpack.c.h.b16 %v7854
      %v8354 = vunpack.c.l.b16 %v7855
      %v8355 = vunpack.c.h.b16 %v7855
      %v8356 = vunpack.c.l.b16 %v7856
      %v8357 = vunpack.c.h.b16 %v7856
      %v8358 = vunpack.c.l.b16 %v7857
      %v8359 = vunpack.c.h.b16 %v7857
      %v8360 = vunpack.c.l.b16 %v7858
      %v8361 = vunpack.c.h.b16 %v7858
      %v8362 = vunpack.c.l.b16 %v7859
      %v8363 = vunpack.c.h.b16 %v7859
      %v8364 = vunpack.c.l.b16 %v7860
      %v8365 = vunpack.c.h.b16 %v7860
      %v8366 = vunpack.c.l.b16 %v7861
      %v8367 = vunpack.c.h.b16 %v7861
      %v8368 = vunpack.c.l.b16 %v7862
      %v8369 = vunpack.c.h.b16 %v7862
      %v8370 = vunpack.c.l.b16 %v7863
      %v8371 = vunpack.c.h.b16 %v7863
      %v8372 = vunpack.c.l.b16 %v7864
      %v8373 = vunpack.c.h.b16 %v7864
      %v8374 = vunpack.c.l.b16 %v7865
      %v8375 = vunpack.c.h.b16 %v7865
      %v8376 = vunpack.c.l.b16 %v7866
      %v8377 = vunpack.c.h.b16 %v7866
      %v8378 = vunpack.c.l.b16 %v7867
      %v8379 = vunpack.c.h.b16 %v7867
      %v8380 = vunpack.c.l.b16 %v7868
      %v8381 = vunpack.c.h.b16 %v7868
      %v8382 = vunpack.c.l.b16 %v7869
      %v8383 = vunpack.c.h.b16 %v7869
      %v8384 = vunpack.c.l.b16 %v7870
      %v8385 = vunpack.c.h.b16 %v7870
      %v8386 = vunpack.c.l.b16 %v7871
      %v8387 = vunpack.c.h.b16 %v7871
      %v8388 = vunpack.c.l.b16 %v7872
      %v8389 = vunpack.c.h.b16 %v7872
      %v8390 = vunpack.c.l.b16 %v7873
      %v8391 = vunpack.c.h.b16 %v7873
      %v8392 = vunpack.c.l.b16 %v7874
      %v8393 = vunpack.c.h.b16 %v7874
      %v8394 = vunpack.c.l.b16 %v7875
      %v8395 = vunpack.c.h.b16 %v7875
      %v8396 = vunpack.c.l.b16 %v7876
      %v8397 = vunpack.c.h.b16 %v7876
      %v8398 = vunpack.c.l.b16 %v7877
      %v8399 = vunpack.c.h.b16 %v7877
      %v8400 = vunpack.c.l.b16 %v7878
      %v8401 = vunpack.c.h.b16 %v7878
      %v8402 = vunpack.c.l.b16 %v7879
      %v8403 = vunpack.c.h.b16 %v7879
      %v8404 = vunpack.c.l.b16 %v7880
      %v8405 = vunpack.c.h.b16 %v7880
      %v8406 = vunpack.c.l.b16 %v7881
      %v8407 = vunpack.c.h.b16 %v7881
      %v8408 = vunpack.c.l.b16 %v7882
      %v8409 = vunpack.c.h.b16 %v7882
      %v8410 = vunpack.c.l.b16 %v7883
      %v8411 = vunpack.c.h.b16 %v7883
      %v8412 = vunpack.c.l.b16 %v7884
      %v8413 = vunpack.c.h.b16 %v7884
      %v8414 = vunpack.c.l.b16 %v7885
      %v8415 = vunpack.c.h.b16 %v7885
      %v8416 = vunpack.c.l.b16 %v7886
      %v8417 = vunpack.c.h.b16 %v7886
      %v8418 = vunpack.c.l.b16 %v7887
      %v8419 = vunpack.c.h.b16 %v7887
      %v8420 = vunpack.c.l.b16 %v7888
      %v8421 = vunpack.c.h.b16 %v7888
      %v8422 = vunpack.c.l.b16 %v7889
      %v8423 = vunpack.c.h.b16 %v7889
      %v8424 = vunpack.c.l.b16 %v7890
      %v8425 = vunpack.c.h.b16 %v7890
      %v8426 = vunpack.c.l.b16 %v7891
      %v8427 = vunpack.c.h.b16 %v7891
      %v8428 = vunpack.c.l.b16 %v7892
      %v8429 = vunpack.c.h.b16 %v7892
      %v8430 = vunpack.c.l.b16 %v7893
      %v8431 = vunpack.c.h.b16 %v7893
      %v8432 = vunpack.c.l.b16 %v7894
      %v8433 = vunpack.c.h.b16 %v7894
      %v8434 = vunpack.c.l.b16 %v7895
      %v8435 = vunpack.c.h.b16 %v7895
      %v8436 = vunpack.c.l.b16 %v7896
      %v8437 = vunpack.c.h.b16 %v7896
      %v8438 = vunpack.c.l.b16 %v7897
      %v8439 = vunpack.c.h.b16 %v7897
      %v8440 = vunpack.c.l.b16 %v7898
      %v8441 = vunpack.c.h.b16 %v7898
      %v8442 = vunpack.c.l.b16 %v7899
      %v8443 = vunpack.c.h.b16 %v7899
      %v8444 = vunpack.c.l.b16 %v7900
      %v8445 = vunpack.c.h.b16 %v7900
      %v8446 = vunpack.c.l.b16 %v7901
      %v8447 = vunpack.c.h.b16 %v7901
      %v8448 = vunpack.c.l.b16 %v7902
      %v8449 = vunpack.c.h.b16 %v7902
      %v8450 = vunpack.c.l.b16 %v7903
      %v8451 = vunpack.c.h.b16 %v7903
      %v8452 = vunpack.c.l.b16 %v7904
      %v8453 = vunpack.c.h.b16 %v7904
      %v8454 = vunpack.c.l.b16 %v7905
      %v8455 = vunpack.c.h.b16 %v7905
      %v8456 = vunpack.c.l.b16 %v7906
      %v8457 = vunpack.c.h.b16 %v7906
      %v8458 = vunpack.c.l.b16 %v7907
      %v8459 = vunpack.c.h.b16 %v7907
      %v8460 = vunpack.c.l.b16 %v7908
      %v8461 = vunpack.c.h.b16 %v7908
      %v8462 = vunpack.c.l.b16 %v7909
      %v8463 = vunpack.c.h.b16 %v7909
      %v8464 = vunpack.c.l.b16 %v7910
      %v8465 = vunpack.c.h.b16 %v7910
      %v8466 = vunpack.c.l.b16 %v7911
      %v8467 = vunpack.c.h.b16 %v7911
      %v8468 = vunpack.c.l.b16 %v7912
      %v8469 = vunpack.c.h.b16 %v7912
      %v8470 = vunpack.c.l.b16 %v7913
      %v8471 = vunpack.c.h.b16 %v7913
      %v8472 = vunpack.c.l.b16 %v7914
      %v8473 = vunpack.c.h.b16 %v7914
      %v8474 = vunpack.c.l.b16 %v7915
      %v8475 = vunpack.c.h.b16 %v7915
      %v8476 = vunpack.c.l.b16 %v7916
      %v8477 = vunpack.c.h.b16 %v7916
      %v8478 = vunpack.c.l.b16 %v7917
      %v8479 = vunpack.c.h.b16 %v7917
      %v8480 = vunpack.c.l.b16 %v7918
      %v8481 = vunpack.c.h.b16 %v7918
      %v8482 = vunpack.c.l.b16 %v7919
      %v8483 = vunpack.c.h.b16 %v7919
      %v8484 = vunpack.c.l.b16 %v7920
      %v8485 = vunpack.c.h.b16 %v7920
      %v8486 = vunpack.c.l.b16 %v7921
      %v8487 = vunpack.c.h.b16 %v7921
      %v8488 = vunpack.c.l.b16 %v7922
      %v8489 = vunpack.c.h.b16 %v7922
      %v8490 = vunpack.c.l.b16 %v7923
      %v8491 = vunpack.c.h.b16 %v7923
      %v8492 = vunpack.c.l.b16 %v7924
      %v8493 = vunpack.c.h.b16 %v7924
      %v8494 = vunpack.c.l.b16 %v7925
      %v8495 = vunpack.c.h.b16 %v7925
      %v8496 = vunpack.c.l.b16 %v7926
      %v8497 = vunpack.c.h.b16 %v7926
      %v8498 = vunpack.c.l.b16 %v7927
      %v8499 = vunpack.c.h.b16 %v7927
      %v8500 = vunpack.c.l.b16 %v7928
      %v8501 = vunpack.c.h.b16 %v7928
      %v8502 = vunpack.c.l.b16 %v7929
      %v8503 = vunpack.c.h.b16 %v7929
      %v8504 = vunpack.c.l.b16 %v7930
      %v8505 = vunpack.c.h.b16 %v7930
      %v8506 = vunpack.c.l.b16 %v7931
      %v8507 = vunpack.c.h.b16 %v7931
      %v8508 = vunpack.c.l.b16 %v7932
      %v8509 = vunpack.c.h.b16 %v7932
      %v8510 = vunpack.c.l.b16 %v7933
      %v8511 = vunpack.c.h.b16 %v7933
      %v8512 = vunpack.c.l.b16 %v7934
      %v8513 = vunpack.c.h.b16 %v7934
      %v8514 = vunpack.c.l.b16 %v7935
      %v8515 = vunpack.c.h.b16 %v7935
      %v8516 = vunpack.c.l.b16 %v7936
      %v8517 = vunpack.c.h.b16 %v7936
      %v8518 = vunpack.c.l.b16 %v7937
      %v8519 = vunpack.c.h.b16 %v7937
      %v8520 = vunpack.c.l.b16 %v7938
      %v8521 = vunpack.c.h.b16 %v7938
      %v8522 = vunpack.c.l.b16 %v7939
      %v8523 = vunpack.c.h.b16 %v7939
      %v8524 = vunpack.c.l.b16 %v7940
      %v8525 = vunpack.c.h.b16 %v7940
      %v8526 = vunpack.c.l.b16 %v7941
      %v8527 = vunpack.c.h.b16 %v7941
      %v8528 = vunpack.c.l.b16 %v7942
      %v8529 = vunpack.c.h.b16 %v7942
      %v8530 = vunpack.c.l.b16 %v7943
      %v8531 = vunpack.c.h.b16 %v7943
      %v8532 = vunpack.c.l.b16 %v7944
      %v8533 = vunpack.c.h.b16 %v7944
      %v8534 = vunpack.c.l.b16 %v7945
      %v8535 = vunpack.c.h.b16 %v7945
      %v8536 = vunpack.c.l.b16 %v7946
      %v8537 = vunpack.c.h.b16 %v7946
      %v8538 = vunpack.c.l.b16 %v7947
      %v8539 = vunpack.c.h.b16 %v7947
      %v8540 = vunpack.c.l.b16 %v7948
      %v8541 = vunpack.c.h.b16 %v7948
      %v8542 = vunpack.c.l.b16 %v7949
      %v8543 = vunpack.c.h.b16 %v7949
      %v8544 = vunpack.c.l.b16 %v7950
      %v8545 = vunpack.c.h.b16 %v7950
      %v8546 = vunpack.c.l.b16 %v7951
      %v8547 = vunpack.c.h.b16 %v7951
      %v8548 = vunpack.c.l.b16 %v7952
      %v8549 = vunpack.c.h.b16 %v7952
      %v8550 = vunpack.c.l.b16 %v7953
      %v8551 = vunpack.c.h.b16 %v7953
      %v8552 = vunpack.c.l.b16 %v7954
      %v8553 = vunpack.c.h.b16 %v7954
      %v8554 = vunpack.c.l.b16 %v7955
      %v8555 = vunpack.c.h.b16 %v7955
      %v8556 = vunpack.c.l.b16 %v7956
      %v8557 = vunpack.c.h.b16 %v7956
      %v8558 = vunpack.c.l.b16 %v7957
      %v8559 = vunpack.c.h.b16 %v7957
      %v8560 = vunpack.c.l.b16 %v7958
      %v8561 = vunpack.c.h.b16 %v7958
      %v8562 = vunpack.c.l.b16 %v7959
      %v8563 = vunpack.c.h.b16 %v7959
      %v8564 = vunpack.c.l.b16 %v7960
      %v8565 = vunpack.c.h.b16 %v7960
      %v8566 = vunpack.c.l.b16 %v7961
      %v8567 = vunpack.c.h.b16 %v7961
      %v8568 = vunpack.c.l.b16 %v7962
      %v8569 = vunpack.c.h.b16 %v7962
      %v8570 = vunpack.c.l.b16 %v7963
      %v8571 = vunpack.c.h.b16 %v7963
      %v8572 = vunpack.c.l.b16 %v7964
      %v8573 = vunpack.c.h.b16 %v7964
      %v8574 = vunpack.c.l.b16 %v7965
      %v8575 = vunpack.c.h.b16 %v7965
      %v8576 = vunpack.c.l.b16 %v7966
      %v8577 = vunpack.c.h.b16 %v7966
      %v8578 = vunpack.c.l.b16 %v7967
      %v8579 = vunpack.c.h.b16 %v7967
      %v8580 = vunpack.c.l.b16 %v7968
      %v8581 = vunpack.c.h.b16 %v7968
      %v8582 = vunpack.c.l.b16 %v7969
      %v8583 = vunpack.c.h.b16 %v7969
      %v8584 = vunpack.c.l.b16 %v7970
      %v8585 = vunpack.c.h.b16 %v7970
      %v8586 = vunpack.c.l.b16 %v7971
      %v8587 = vunpack.c.h.b16 %v7971
      %v8588 = vunpack.c.l.b16 %v7972
      %v8589 = vunpack.c.h.b16 %v7972
      %v8590 = vunpack.c.l.b16 %v7973
      %v8591 = vunpack.c.h.b16 %v7973
      %v8592 = vunpack.c.l.b16 %v7974
      %v8593 = vunpack.c.h.b16 %v7974
      %v8594 = vunpack.c.l.b16 %v7975
      %v8595 = vunpack.c.h.b16 %v7975
      %v8596 = vunpack.c.l.b16 %v7976
      %v8597 = vunpack.c.h.b16 %v7976
      %v8598 = vunpack.c.l.b16 %v7977
      %v8599 = vunpack.c.h.b16 %v7977
      %v8600 = vunpack.c.l.b16 %v7978
      %v8601 = vunpack.c.h.b16 %v7978
      %v8602 = vunpack.c.l.b16 %v7979
      %v8603 = vunpack.c.h.b16 %v7979
      %v8604 = vpack.c.b16 %v8190, %v8188
      %v8605 = vpack.c.b16 %v8191, %v8189
      %v8606 = vpack.c.b16 %v8194, %v8192
      %v8607 = vpack.c.b16 %v8195, %v8193
      %v8608 = vpack.c.b16 %v8198, %v8196
      %v8609 = vpack.c.b16 %v8199, %v8197
      %v8610 = vpack.c.b16 %v8202, %v8200
      %v8611 = vpack.c.b16 %v8203, %v8201
      %v8612 = vpack.c.b16 %v8206, %v8204
      %v8613 = vpack.c.b16 %v8207, %v8205
      %v8614 = vpack.c.b16 %v8210, %v8208
      %v8615 = vpack.c.b16 %v8211, %v8209
      %v8616 = vpack.c.b16 %v8214, %v8212
      %v8617 = vpack.c.b16 %v8215, %v8213
      %v8618 = vpack.c.b16 %v8218, %v8216
      %v8619 = vpack.c.b16 %v8219, %v8217
      %v8620 = vpack.c.b16 %v8222, %v8220
      %v8621 = vpack.c.b16 %v8223, %v8221
      %v8622 = vpack.c.b16 %v8226, %v8224
      %v8623 = vpack.c.b16 %v8227, %v8225
      %v8624 = vpack.c.b16 %v8230, %v8228
      %v8625 = vpack.c.b16 %v8231, %v8229
      %v8626 = vpack.c.b16 %v8234, %v8232
      %v8627 = vpack.c.b16 %v8235, %v8233
      %v8628 = vpack.c.b16 %v8238, %v8236
      %v8629 = vpack.c.b16 %v8239, %v8237
      %v8630 = vpack.c.b16 %v8242, %v8240
      %v8631 = vpack.c.b16 %v8243, %v8241
      %v8632 = vpack.c.b16 %v8246, %v8244
      %v8633 = vpack.c.b16 %v8247, %v8245
      %v8634 = vpack.c.b16 %v8250, %v8248
      %v8635 = vpack.c.b16 %v8251, %v8249
      %v8636 = vpack.c.b16 %v8254, %v8252
      %v8637 = vpack.c.b16 %v8255, %v8253
      %v8638 = vpack.c.b16 %v8258, %v8256
      %v8639 = vpack.c.b16 %v8259, %v8257
      %v8640 = vpack.c.b16 %v8262, %v8260
      %v8641 = vpack.c.b16 %v8263, %v8261
      %v8642 = vpack.c.b16 %v8266, %v8264
      %v8643 = vpack.c.b16 %v8267, %v8265
      %v8644 = vpack.c.b16 %v8270, %v8268
      %v8645 = vpack.c.b16 %v8271, %v8269
      %v8646 = vpack.c.b16 %v8274, %v8272
      %v8647 = vpack.c.b16 %v8275, %v8273
      %v8648 = vpack.c.b16 %v8278, %v8276
      %v8649 = vpack.c.b16 %v8279, %v8277
      %v8650 = vpack.c.b16 %v8282, %v8280
      %v8651 = vpack.c.b16 %v8283, %v8281
      %v8652 = vpack.c.b16 %v8286, %v8284
      %v8653 = vpack.c.b16 %v8287, %v8285
      %v8654 = vpack.c.b16 %v8290, %v8288
      %v8655 = vpack.c.b16 %v8291, %v8289
      %v8656 = vpack.c.b16 %v8294, %v8292
      %v8657 = vpack.c.b16 %v8295, %v8293
      %v8658 = vpack.c.b16 %v8298, %v8296
      %v8659 = vpack.c.b16 %v8299, %v8297
      %v8660 = vpack.c.b16 %v8302, %v8300
      %v8661 = vpack.c.b16 %v8303, %v8301
      %v8662 = vpack.c.b16 %v8306, %v8304
      %v8663 = vpack.c.b16 %v8307, %v8305
      %v8664 = vpack.c.b16 %v8310, %v8308
      %v8665 = vpack.c.b16 %v8311, %v8309
      %v8666 = vpack.c.b16 %v8314, %v8312
      %v8667 = vpack.c.b16 %v8315, %v8313
      %v8668 = vpack.c.b16 %v8318, %v8316
      %v8669 = vpack.c.b16 %v8319, %v8317
      %v8670 = vpack.c.b16 %v8322, %v8320
      %v8671 = vpack.c.b16 %v8323, %v8321
      %v8672 = vpack.c.b16 %v8326, %v8324
      %v8673 = vpack.c.b16 %v8327, %v8325
      %v8674 = vpack.c.b16 %v8330, %v8328
      %v8675 = vpack.c.b16 %v8331, %v8329
      %v8676 = vpack.c.b16 %v8334, %v8332
      %v8677 = vpack.c.b16 %v8335, %v8333
      %v8678 = vpack.c.b16 %v8338, %v8336
      %v8679 = vpack.c.b16 %v8339, %v8337
      %v8680 = vpack.c.b16 %v8342, %v8340
      %v8681 = vpack.c.b16 %v8343, %v8341
      %v8682 = vpack.c.b16 %v8346, %v8344
      %v8683 = vpack.c.b16 %v8347, %v8345
      %v8684 = vpack.c.b16 %v8350, %v8348
      %v8685 = vpack.c.b16 %v8351, %v8349
      %v8686 = vpack.c.b16 %v8354, %v8352
      %v8687 = vpack.c.b16 %v8355, %v8353
      %v8688 = vpack.c.b16 %v8358, %v8356
      %v8689 = vpack.c.b16 %v8359, %v8357
      %v8690 = vpack.c.b16 %v8362, %v8360
      %v8691 = vpack.c.b16 %v8363, %v8361
      %v8692 = vpack.c.b16 %v8366, %v8364
      %v8693 = vpack.c.b16 %v8367, %v8365
      %v8694 = vpack.c.b16 %v8370, %v8368
      %v8695 = vpack.c.b16 %v8371, %v8369
      %v8696 = vpack.c.b16 %v8374, %v8372
      %v8697 = vpack.c.b16 %v8375, %v8373
      %v8698 = vpack.c.b16 %v8378, %v8376
      %v8699 = vpack.c.b16 %v8379, %v8377
      %v8700 = vpack.c.b16 %v8382, %v8380
      %v8701 = vpack.c.b16 %v8383, %v8381
      %v8702 = vpack.c.b16 %v8386, %v8384
      %v8703 = vpack.c.b16 %v8387, %v8385
      %v8704 = vpack.c.b16 %v8390, %v8388
      %v8705 = vpack.c.b16 %v8391, %v8389
      %v8706 = vpack.c.b16 %v8394, %v8392
      %v8707 = vpack.c.b16 %v8395, %v8393
      %v8708 = vpack.c.b16 %v8398, %v8396
      %v8709 = vpack.c.b16 %v8399, %v8397
      %v8710 = vpack.c.b16 %v8402, %v8400
      %v8711 = vpack.c.b16 %v8403, %v8401
      %v8712 = vpack.c.b16 %v8406, %v8404
      %v8713 = vpack.c.b16 %v8407, %v8405
      %v8714 = vpack.c.b16 %v8410, %v8408
      %v8715 = vpack.c.b16 %v8411, %v8409
      %v8716 = vpack.c.b16 %v8414, %v8412
      %v8717 = vpack.c.b16 %v8415, %v8413
      %v8718 = vpack.c.b16 %v8418, %v8416
      %v8719 = vpack.c.b16 %v8419, %v8417
      %v8720 = vpack.c.b16 %v8422, %v8420
      %v8721 = vpack.c.b16 %v8423, %v8421
      %v8722 = vpack.c.b16 %v8426, %v8424
      %v8723 = vpack.c.b16 %v8427, %v8425
      %v8724 = vpack.c.b16 %v8430, %v8428
      %v8725 = vpack.c.b16 %v8431, %v8429
      %v8726 = vpack.c.b16 %v8434, %v8432
      %v8727 = vpack.c.b16 %v8435, %v8433
      %v8728 = vpack.c.b16 %v8438, %v8436
      %v8729 = vpack.c.b16 %v8439, %v8437
      %v8730 = vpack.c.b16 %v8442, %v8440
      %v8731 = vpack.c.b16 %v8443, %v8441
      %v8732 = vpack.c.b16 %v8446, %v8444
      %v8733 = vpack.c.b16 %v8447, %v8445
      %v8734 = vpack.c.b16 %v8450, %v8448
      %v8735 = vpack.c.b16 %v8451, %v8449
      %v8736 = vpack.c.b16 %v8454, %v8452
      %v8737 = vpack.c.b16 %v8455, %v8453
      %v8738 = vpack.c.b16 %v8458, %v8456
      %v8739 = vpack.c.b16 %v8459, %v8457
      %v8740 = vpack.c.b16 %v8462, %v8460
      %v8741 = vpack.c.b16 %v8463, %v8461
      %v8742 = vpack.c.b16 %v8466, %v8464
      %v8743 = vpack.c.b16 %v8467, %v8465
      %v8744 = vpack.c.b16 %v8470, %v8468
      %v8745 = vpack.c.b16 %v8471, %v8469
      %v8746 = vpack.c.b16 %v8474, %v8472
      %v8747 = vpack.c.b16 %v8475, %v8473
      %v8748 = vpack.c.b16 %v8478, %v8476
      %v8749 = vpack.c.b16 %v8479, %v8477
      %v8750 = vpack.c.b16 %v8482, %v8480
      %v8751 = vpack.c.b16 %v8483, %v8481
      %v8752 = vpack.c.b16 %v8486, %v8484
      %v8753 = vpack.c.b16 %v8487, %v8485
      %v8754 = vpack.c.b16 %v8490, %v8488
      %v8755 = vpack.c.b16 %v8491, %v8489
      %v8756 = vpack.c.b16 %v8494, %v8492
      %v8757 = vpack.c.b16 %v8495, %v8493
      %v8758 = vpack.c.b16 %v8498, %v8496
      %v8759 = vpack.c.b16 %v8499, %v8497
      %v8760 = vpack.c.b16 %v8502, %v8500
      %v8761 = vpack.c.b16 %v8503, %v8501
      %v8762 = vpack.c.b16 %v8506, %v8504
      %v8763 = vpack.c.b16 %v8507, %v8505
      %v8764 = vpack.c.b16 %v8510, %v8508
      %v8765 = vpack.c.b16 %v8511, %v8509
      %v8766 = vpack.c.b16 %v8514, %v8512
      %v8767 = vpack.c.b16 %v8515, %v8513
      %v8768 = vpack.c.b16 %v8518, %v8516
      %v8769 = vpack.c.b16 %v8519, %v8517
      %v8770 = vpack.c.b16 %v8522, %v8520
      %v8771 = vpack.c.b16 %v8523, %v8521
      %v8772 = vpack.c.b16 %v8526, %v8524
      %v8773 = vpack.c.b16 %v8527, %v8525
      %v8774 = vpack.c.b16 %v8530, %v8528
      %v8775 = vpack.c.b16 %v8531, %v8529
      %v8776 = vpack.c.b16 %v8534, %v8532
      %v8777 = vpack.c.b16 %v8535, %v8533
      %v8778 = vpack.c.b16 %v8538, %v8536
      %v8779 = vpack.c.b16 %v8539, %v8537
      %v8780 = vpack.c.b16 %v8542, %v8540
      %v8781 = vpack.c.b16 %v8543, %v8541
      %v8782 = vpack.c.b16 %v8546, %v8544
      %v8783 = vpack.c.b16 %v8547, %v8545
      %v8784 = vpack.c.b16 %v8550, %v8548
      %v8785 = vpack.c.b16 %v8551, %v8549
      %v8786 = vpack.c.b16 %v8554, %v8552
      %v8787 = vpack.c.b16 %v8555, %v8553
      %v8788 = vpack.c.b16 %v8558, %v8556
      %v8789 = vpack.c.b16 %v8559, %v8557
      %v8790 = vpack.c.b16 %v8562, %v8560
      %v8791 = vpack.c.b16 %v8563, %v8561
      %v8792 = vpack.c.b16 %v8566, %v8564
      %v8793 = vpack.c.b16 %v8567, %v8565
      %v8794 = vpack.c.b16 %v8570, %v8568
      %v8795 = vpack.c.b16 %v8571, %v8569
      %v8796 = vpack.c.b16 %v8574, %v8572
      %v8797 = vpack.c.b16 %v8575, %v8573
      %v8798 = vpack.c.b16 %v8578, %v8576
      %v8799 = vpack.c.b16 %v8579, %v8577
      %v8800 = vpack.c.b16 %v8582, %v8580
      %v8801 = vpack.c.b16 %v8583, %v8581
      %v8802 = vpack.c.b16 %v8586, %v8584
      %v8803 = vpack.c.b16 %v8587, %v8585
      %v8804 = vpack.c.b16 %v8590, %v8588
      %v8805 = vpack.c.b16 %v8591, %v8589
      %v8806 = vpack.c.b16 %v8594, %v8592
      %v8807 = vpack.c.b16 %v8595, %v8593
      %v8808 = vpack.c.b16 %v8598, %v8596
      %v8809 = vpack.c.b16 %v8599, %v8597
      %v8810 = vpack.c.b16 %v8602, %v8600
      %v8811 = vpack.c.b16 %v8603, %v8601
      %9020 = vmatprep.subr.bf16.mxu0 %v8619
      %9021 = vmatpush1.bf16.msra.mxu0 %v8618
      %9022 = vmatprep.subr.bf16.mxu0 %v8617
      %9023 = vmatpush1.bf16.msra.mxu0 %v8616
      %9024 = vmatprep.subr.bf16.mxu0 %v8615
      %9025 = vmatpush1.bf16.msra.mxu0 %v8614
      %9026 = vmatprep.subr.bf16.mxu0 %v8613
      %9027 = vmatpush1.bf16.msra.mxu0 %v8612
      %9028 = vmatprep.subr.bf16.mxu0 %v8611
      %9029 = vmatpush1.bf16.msra.mxu0 %v8610
      %9030 = vmatprep.subr.bf16.mxu0 %v8609
      %9031 = vmatpush1.bf16.msra.mxu0 %v8608
      %9032 = vmatprep.subr.bf16.mxu0 %v8607
      %9033 = vmatpush1.bf16.msra.mxu0 %v8606
      %9034 = vmatprep.subr.bf16.mxu0 %v8605
      %9035 = vmatpush1.bf16.msra.mxu0 %v8604
      %9036 = vmatprep.subr.bf16.mxu0 %v8635
      %9037 = vmatpush2.bf16.msra.mxu0 %v8634
      %9038 = vmatprep.subr.bf16.mxu0 %v8633
      %9039 = vmatpush2.bf16.msra.mxu0 %v8632
      %9040 = vmatprep.subr.bf16.mxu0 %v8631
      %9041 = vmatpush2.bf16.msra.mxu0 %v8630
      %9042 = vmatprep.subr.bf16.mxu0 %v8629
      %9043 = vmatpush2.bf16.msra.mxu0 %v8628
      %9044 = vmatprep.subr.bf16.mxu0 %v8627
      %9045 = vmatpush2.bf16.msra.mxu0 %v8626
      %9046 = vmatprep.subr.bf16.mxu0 %v8625
      %9047 = vmatpush2.bf16.msra.mxu0 %v8624
      %9048 = vmatprep.subr.bf16.mxu0 %v8623
      %9049 = vmatpush2.bf16.msra.mxu0 %v8622
      %9050 = vmatprep.subr.bf16.mxu0 %v8621
      %9051 = vmatpush2.bf16.msra.mxu0 %v8620
      %9052 = vmatprep.mubr.bf16.mxu0 %v7408
      %9053 = vmatmul.mubr.bf16.gmra.mxu0 %v7378
      %v9054 = vpop.f32.mrf.mxu0
      %v9055 = vadd.f32 0.0, %v9054
      %v9056 = vpop.f32.mrf.mxu0
      %v9057 = vadd.f32 0.0, %v9056
      %v9058 = vpop.f32.mrf.mxu0
      %v9059 = vadd.f32 0.0, %v9058
      %v9060 = vpop.f32.mrf.mxu0
      %v9061 = vadd.f32 0.0, %v9060
      %9062 = vdwg.mxu0
      %9063 = vmatprep.subr.bf16.mxu0 %v8651
      %9064 = vmatpush1.bf16.msra.mxu0 %v8650
      %9065 = vmatprep.subr.bf16.mxu0 %v8649
      %9066 = vmatpush1.bf16.msra.mxu0 %v8648
      %9067 = vmatprep.subr.bf16.mxu0 %v8647
      %9068 = vmatpush1.bf16.msra.mxu0 %v8646
      %9069 = vmatprep.subr.bf16.mxu0 %v8645
      %9070 = vmatpush1.bf16.msra.mxu0 %v8644
      %9071 = vmatprep.subr.bf16.mxu0 %v8643
      %9072 = vmatpush1.bf16.msra.mxu0 %v8642
      %9073 = vmatprep.subr.bf16.mxu0 %v8641
      %9074 = vmatpush1.bf16.msra.mxu0 %v8640
      %9075 = vmatprep.subr.bf16.mxu0 %v8639
      %9076 = vmatpush1.bf16.msra.mxu0 %v8638
      %9077 = vmatprep.subr.bf16.mxu0 %v8637
      %9078 = vmatpush1.bf16.msra.mxu0 %v8636
      %9079 = vmatprep.subr.bf16.mxu0 %v8667
      %9080 = vmatpush2.bf16.msra.mxu0 %v8666
      %9081 = vmatprep.subr.bf16.mxu0 %v8665
      %9082 = vmatpush2.bf16.msra.mxu0 %v8664
      %9083 = vmatprep.subr.bf16.mxu0 %v8663
      %9084 = vmatpush2.bf16.msra.mxu0 %v8662
      %9085 = vmatprep.subr.bf16.mxu0 %v8661
      %9086 = vmatpush2.bf16.msra.mxu0 %v8660
      %9087 = vmatprep.subr.bf16.mxu0 %v8659
      %9088 = vmatpush2.bf16.msra.mxu0 %v8658
      %9089 = vmatprep.subr.bf16.mxu0 %v8657
      %9090 = vmatpush2.bf16.msra.mxu0 %v8656
      %9091 = vmatprep.subr.bf16.mxu0 %v8655
      %9092 = vmatpush2.bf16.msra.mxu0 %v8654
      %9093 = vmatprep.subr.bf16.mxu0 %v8653
      %9094 = vmatpush2.bf16.msra.mxu0 %v8652
      %9095 = vmatprep.mubr.bf16.mxu0 %v7468
      %9096 = vmatmul.mubr.bf16.gmra.mxu0 %v7438
      %v9097 = vpop.f32.mrf.mxu0
      %v9098 = vadd.f32 %v9055, %v9097
      %v9099 = vpop.f32.mrf.mxu0
      %v9100 = vadd.f32 %v9057, %v9099
      %v9101 = vpop.f32.mrf.mxu0
      %v9102 = vadd.f32 %v9059, %v9101
      %v9103 = vpop.f32.mrf.mxu0
      %v9104 = vadd.f32 %v9061, %v9103
      %9105 = vdwg.mxu0
      %9106 = vmatprep.subr.bf16.mxu0 %v8683
      %9107 = vmatpush1.bf16.msra.mxu0 %v8682
      %9108 = vmatprep.subr.bf16.mxu0 %v8681
      %9109 = vmatpush1.bf16.msra.mxu0 %v8680
      %9110 = vmatprep.subr.bf16.mxu0 %v8679
      %9111 = vmatpush1.bf16.msra.mxu0 %v8678
      %9112 = vmatprep.subr.bf16.mxu0 %v8677
      %9113 = vmatpush1.bf16.msra.mxu0 %v8676
      %9114 = vmatprep.subr.bf16.mxu0 %v8675
      %9115 = vmatpush1.bf16.msra.mxu0 %v8674
      %9116 = vmatprep.subr.bf16.mxu0 %v8673
      %9117 = vmatpush1.bf16.msra.mxu0 %v8672
      %9118 = vmatprep.subr.bf16.mxu0 %v8671
      %9119 = vmatpush1.bf16.msra.mxu0 %v8670
      %9120 = vmatprep.subr.bf16.mxu0 %v8669
      %9121 = vmatpush1.bf16.msra.mxu0 %v8668
      %9122 = vmatprep.subr.bf16.mxu0 %v8699
      %9123 = vmatpush2.bf16.msra.mxu0 %v8698
      %9124 = vmatprep.subr.bf16.mxu0 %v8697
      %9125 = vmatpush2.bf16.msra.mxu0 %v8696
      %9126 = vmatprep.subr.bf16.mxu0 %v8695
      %9127 = vmatpush2.bf16.msra.mxu0 %v8694
      %9128 = vmatprep.subr.bf16.mxu0 %v8693
      %9129 = vmatpush2.bf16.msra.mxu0 %v8692
      %9130 = vmatprep.subr.bf16.mxu0 %v8691
      %9131 = vmatpush2.bf16.msra.mxu0 %v8690
      %9132 = vmatprep.subr.bf16.mxu0 %v8689
      %9133 = vmatpush2.bf16.msra.mxu0 %v8688
      %9134 = vmatprep.subr.bf16.mxu0 %v8687
      %9135 = vmatpush2.bf16.msra.mxu0 %v8686
      %9136 = vmatprep.subr.bf16.mxu0 %v8685
      %9137 = vmatpush2.bf16.msra.mxu0 %v8684
      %9138 = vmatprep.mubr.bf16.mxu0 %v7528
      %9139 = vmatmul.mubr.bf16.gmra.mxu0 %v7498
      %v9140 = vpop.f32.mrf.mxu0
      %v9141 = vadd.f32 %v9098, %v9140
      %v9142 = vpop.f32.mrf.mxu0
      %v9143 = vadd.f32 %v9100, %v9142
      %v9144 = vpop.f32.mrf.mxu0
      %v9145 = vadd.f32 %v9102, %v9144
      %v9146 = vpop.f32.mrf.mxu0
      %v9147 = vadd.f32 %v9104, %v9146
      %9148 = vdwg.mxu0
      %9149 = vmatprep.subr.bf16.mxu0 %v8715
      %9150 = vmatpush1.bf16.msra.mxu0 %v8714
      %9151 = vmatprep.subr.bf16.mxu0 %v8713
      %9152 = vmatpush1.bf16.msra.mxu0 %v8712
      %9153 = vmatprep.subr.bf16.mxu0 %v8711
      %9154 = vmatpush1.bf16.msra.mxu0 %v8710
      %9155 = vmatprep.subr.bf16.mxu0 %v8709
      %9156 = vmatpush1.bf16.msra.mxu0 %v8708
      %9157 = vmatprep.subr.bf16.mxu0 %v8707
      %9158 = vmatpush1.bf16.msra.mxu0 %v8706
      %9159 = vmatprep.subr.bf16.mxu0 %v8705
      %9160 = vmatpush1.bf16.msra.mxu0 %v8704
      %9161 = vmatprep.subr.bf16.mxu0 %v8703
      %9162 = vmatpush1.bf16.msra.mxu0 %v8702
      %9163 = vmatprep.subr.bf16.mxu0 %v8701
      %9164 = vmatpush1.bf16.msra.mxu0 %v8700
      %9165 = vmatprep.subr.bf16.mxu0 %v8731
      %9166 = vmatpush2.bf16.msra.mxu0 %v8730
      %9167 = vmatprep.subr.bf16.mxu0 %v8729
      %9168 = vmatpush2.bf16.msra.mxu0 %v8728
      %9169 = vmatprep.subr.bf16.mxu0 %v8727
      %9170 = vmatpush2.bf16.msra.mxu0 %v8726
      %9171 = vmatprep.subr.bf16.mxu0 %v8725
      %9172 = vmatpush2.bf16.msra.mxu0 %v8724
      %9173 = vmatprep.subr.bf16.mxu0 %v8723
      %9174 = vmatpush2.bf16.msra.mxu0 %v8722
      %9175 = vmatprep.subr.bf16.mxu0 %v8721
      %9176 = vmatpush2.bf16.msra.mxu0 %v8720
      %9177 = vmatprep.subr.bf16.mxu0 %v8719
      %9178 = vmatpush2.bf16.msra.mxu0 %v8718
      %9179 = vmatprep.subr.bf16.mxu0 %v8717
      %9180 = vmatpush2.bf16.msra.mxu0 %v8716
      %9181 = vmatprep.mubr.bf16.mxu0 %v7588
      %9182 = vmatmul.mubr.bf16.gmra.mxu0 %v7558
      %v9183 = vpop.f32.mrf.mxu0
      %v9184 = vadd.f32 %v9141, %v9183
      %v9185 = vpop.f32.mrf.mxu0
      %v9186 = vadd.f32 %v9143, %v9185
      %v9187 = vpop.f32.mrf.mxu0
      %v9188 = vadd.f32 %v9145, %v9187
      %v9189 = vpop.f32.mrf.mxu0
      %v9190 = vadd.f32 %v9147, %v9189
      %9191 = vdwg.mxu0
      %9192 = vmatprep.subr.bf16.mxu0 %v8747
      %9193 = vmatpush1.bf16.msra.mxu0 %v8746
      %9194 = vmatprep.subr.bf16.mxu0 %v8745
      %9195 = vmatpush1.bf16.msra.mxu0 %v8744
      %9196 = vmatprep.subr.bf16.mxu0 %v8743
      %9197 = vmatpush1.bf16.msra.mxu0 %v8742
      %9198 = vmatprep.subr.bf16.mxu0 %v8741
      %9199 = vmatpush1.bf16.msra.mxu0 %v8740
      %9200 = vmatprep.subr.bf16.mxu0 %v8739
      %9201 = vmatpush1.bf16.msra.mxu0 %v8738
      %9202 = vmatprep.subr.bf16.mxu0 %v8737
      %9203 = vmatpush1.bf16.msra.mxu0 %v8736
      %9204 = vmatprep.subr.bf16.mxu0 %v8735
      %9205 = vmatpush1.bf16.msra.mxu0 %v8734
      %9206 = vmatprep.subr.bf16.mxu0 %v8733
      %9207 = vmatpush1.bf16.msra.mxu0 %v8732
      %9208 = vmatprep.subr.bf16.mxu0 %v8763
      %9209 = vmatpush2.bf16.msra.mxu0 %v8762
      %9210 = vmatprep.subr.bf16.mxu0 %v8761
      %9211 = vmatpush2.bf16.msra.mxu0 %v8760
      %9212 = vmatprep.subr.bf16.mxu0 %v8759
      %9213 = vmatpush2.bf16.msra.mxu0 %v8758
      %9214 = vmatprep.subr.bf16.mxu0 %v8757
      %9215 = vmatpush2.bf16.msra.mxu0 %v8756
      %9216 = vmatprep.subr.bf16.mxu0 %v8755
      %9217 = vmatpush2.bf16.msra.mxu0 %v8754
      %9218 = vmatprep.subr.bf16.mxu0 %v8753
      %9219 = vmatpush2.bf16.msra.mxu0 %v8752
      %9220 = vmatprep.subr.bf16.mxu0 %v8751
      %9221 = vmatpush2.bf16.msra.mxu0 %v8750
      %9222 = vmatprep.subr.bf16.mxu0 %v8749
      %9223 = vmatpush2.bf16.msra.mxu0 %v8748
      %9224 = vmatprep.mubr.bf16.mxu0 %v7680
      %9225 = vmatmul.mubr.bf16.gmra.mxu0 %v7650
      %v9226 = vpop.f32.mrf.mxu0
      %v9227 = vadd.f32 %v9184, %v9226
      %v9228 = vpop.f32.mrf.mxu0
      %v9229 = vadd.f32 %v9186, %v9228
      %v9230 = vpop.f32.mrf.mxu0
      %v9231 = vadd.f32 %v9188, %v9230
      %v9232 = vpop.f32.mrf.mxu0
      %v9233 = vadd.f32 %v9190, %v9232
      %9234 = vdwg.mxu0
      %9235 = vmatprep.subr.bf16.mxu0 %v8779
      %9236 = vmatpush1.bf16.msra.mxu0 %v8778
      %9237 = vmatprep.subr.bf16.mxu0 %v8777
      %9238 = vmatpush1.bf16.msra.mxu0 %v8776
      %9239 = vmatprep.subr.bf16.mxu0 %v8775
      %9240 = vmatpush1.bf16.msra.mxu0 %v8774
      %9241 = vmatprep.subr.bf16.mxu0 %v8773
      %9242 = vmatpush1.bf16.msra.mxu0 %v8772
      %9243 = vmatprep.subr.bf16.mxu0 %v8771
      %9244 = vmatpush1.bf16.msra.mxu0 %v8770
      %9245 = vmatprep.subr.bf16.mxu0 %v8769
      %9246 = vmatpush1.bf16.msra.mxu0 %v8768
      %9247 = vmatprep.subr.bf16.mxu0 %v8767
      %9248 = vmatpush1.bf16.msra.mxu0 %v8766
      %9249 = vmatprep.subr.bf16.mxu0 %v8765
      %9250 = vmatpush1.bf16.msra.mxu0 %v8764
      %9251 = vmatprep.subr.bf16.mxu0 %v8795
      %9252 = vmatpush2.bf16.msra.mxu0 %v8794
      %9253 = vmatprep.subr.bf16.mxu0 %v8793
      %9254 = vmatpush2.bf16.msra.mxu0 %v8792
      %9255 = vmatprep.subr.bf16.mxu0 %v8791
      %9256 = vmatpush2.bf16.msra.mxu0 %v8790
      %9257 = vmatprep.subr.bf16.mxu0 %v8789
      %9258 = vmatpush2.bf16.msra.mxu0 %v8788
      %9259 = vmatprep.subr.bf16.mxu0 %v8787
      %9260 = vmatpush2.bf16.msra.mxu0 %v8786
      %9261 = vmatprep.subr.bf16.mxu0 %v8785
      %9262 = vmatpush2.bf16.msra.mxu0 %v8784
      %9263 = vmatprep.subr.bf16.mxu0 %v8783
      %9264 = vmatpush2.bf16.msra.mxu0 %v8782
      %9265 = vmatprep.subr.bf16.mxu0 %v8781
      %9266 = vmatpush2.bf16.msra.mxu0 %v8780
      %9267 = vmatprep.mubr.bf16.mxu0 %v7740
      %9268 = vmatmul.mubr.bf16.gmra.mxu0 %v7710
      %v9269 = vpop.f32.mrf.mxu0
      %v9270 = vadd.f32 %v9227, %v9269
      %v9271 = vpop.f32.mrf.mxu0
      %v9272 = vadd.f32 %v9229, %v9271
      %v9273 = vpop.f32.mrf.mxu0
      %v9274 = vadd.f32 %v9231, %v9273
      %v9275 = vpop.f32.mrf.mxu0
      %v9276 = vadd.f32 %v9233, %v9275
      %9277 = vdwg.mxu0
      %9278 = vmatprep.subr.bf16.mxu0 %v8811
      %9279 = vmatpush1.bf16.msra.mxu0 %v8810
      %9280 = vmatprep.subr.bf16.mxu0 %v8809
      %9281 = vmatpush1.bf16.msra.mxu0 %v8808
      %9282 = vmatprep.subr.bf16.mxu0 %v8807
      %9283 = vmatpush1.bf16.msra.mxu0 %v8806
      %9284 = vmatprep.subr.bf16.mxu0 %v8805
      %9285 = vmatpush1.bf16.msra.mxu0 %v8804
      %9286 = vmatprep.subr.bf16.mxu0 %v8803
      %9287 = vmatpush1.bf16.msra.mxu0 %v8802
      %9288 = vmatprep.subr.bf16.mxu0 %v8801
      %9289 = vmatpush1.bf16.msra.mxu0 %v8800
      %9290 = vmatprep.subr.bf16.mxu0 %v8799
      %9291 = vmatpush1.bf16.msra.mxu0 %v8798
      %9292 = vmatprep.subr.bf16.mxu0 %v8797
      %9293 = vmatpush1.bf16.msra.mxu0 %v8796
      %9294 = vmatprep.subr.bf16.mxu0 0
      %9295 = vmatpush2.bf16.msra.mxu0 0
      %9296 = vmatprep.subr.bf16.mxu0 0
      %9297 = vmatpush2.bf16.msra.mxu0 0
      %9298 = vmatprep.subr.bf16.mxu0 0
      %9299 = vmatpush2.bf16.msra.mxu0 0
      %9300 = vmatprep.subr.bf16.mxu0 0
      %9301 = vmatpush2.bf16.msra.mxu0 0
      %9302 = vmatprep.subr.bf16.mxu0 0
      %9303 = vmatpush2.bf16.msra.mxu0 0
      %9304 = vmatprep.subr.bf16.mxu0 0
      %9305 = vmatpush2.bf16.msra.mxu0 0
      %9306 = vmatprep.subr.bf16.mxu0 0
      %9307 = vmatpush2.bf16.msra.mxu0 0
      %9308 = vmatprep.subr.bf16.mxu0 0
      %9309 = vmatpush2.bf16.msra.mxu0 0
      %9310 = vmatprep.mubr.bf16.mxu0 0
      %9311 = vmatmul.mubr.bf16.gmra.mxu0 %v7770
      %v9312 = vpop.f32.mrf.mxu0
      %v9313 = vadd.f32 %v9270, %v9312
      %v9314 = vpop.f32.mrf.mxu0
      %v9315 = vadd.f32 %v9272, %v9314
      %v9316 = vpop.f32.mrf.mxu0
      %v9317 = vadd.f32 %v9274, %v9316
      %v9318 = vpop.f32.mrf.mxu0
      %v9319 = vadd.f32 %v9276, %v9318
      %9320 = vdwg.mxu0
      %v9321 = vld [vmem:[%s8] sm:$0x3]
      %v9323 = vlaneseq
      %v9324 = vshrl.u32 %v9323, 7
      %v9325 = vsub.s32 0, %v9324
      %v9326 = vrot.slane %v9321, %v9325
      %v9327 = vlaneseq
      %v9328 = vshrl.u32 %v9327, 7
      %v9329 = vsub.s32 1, %v9328
      %v9330 = vrot.slane %v9321, %v9329
      %v9333 = vmul.f32 %v9313, %v9326
      %v9334 = vmul.f32 %v9315, %v9330
      %v9335 = vmul.f32 %v9317, %v9326
      %v9336 = vmul.f32 %v9319, %v9330
      %v9337 = vld [vmem:[%s9] sm:$0x3]
      %v9339 = vlaneseq
      %v9340 = vshrl.u32 %v9339, 7
      %v9341 = vsub.s32 0, %v9340
      %v9342 = vrot.slane %v9337, %v9341
      %v9343 = vlaneseq
      %v9344 = vshrl.u32 %v9343, 7
      %v9345 = vsub.s32 1, %v9344
      %v9346 = vrot.slane %v9337, %v9345
      %v9349 = vadd.f32 %v9333, %v9342
      %v9350 = vadd.f32 %v9334, %v9346
      %v9351 = vadd.f32 %v9335, %v9342
      %v9352 = vadd.f32 %v9336, %v9346
      %v9353 = vmax.f32 %v9349, 0.0
      %v9354 = vmax.f32 %v9350, 0.0
      %v9355 = vmax.f32 %v9351, 0.0
      %v9356 = vmax.f32 %v9352, 0.0
      %v9357 = vpack.c.bf16 %v9355, %v9353
      %v9358 = vpack.c.bf16 %v9356, %v9354
      %v9359 = vld [vmem:[%s10] sm:$0xf]
      %v9360 = vld [vmem:[%s10 + $0x4] sm:$0xf]
      %v9361 = vld [vmem:[%s10 + $0x8] sm:$0xf]
      %v9362 = vld [vmem:[%s10 + $0xc] sm:$0xf]
      %v9363 = vld [vmem:[%s10 + $0x10] sm:$0xf]
      %v9364 = vld [vmem:[%s10 + $0x14] sm:$0xf]
      %v9365 = vld [vmem:[%s10 + $0x18] sm:$0xf]
      %v9366 = vld [vmem:[%s10 + $0x1c] sm:$0xf]
      %v9367 = vld [vmem:[%s10 + $0x20] sm:$0xf]
      %v9368 = vld [vmem:[%s10 + $0x24] sm:$0xf]
      %v9369 = vld [vmem:[%s10 + $0x28] sm:$0xf]
      %v9370 = vld [vmem:[%s10 + $0x2c] sm:$0xf]
      %v9371 = vld [vmem:[%s10 + $0x30] sm:$0xf]
      %v9372 = vld [vmem:[%s10 + $0x34] sm:$0xf]
      %v9373 = vld [vmem:[%s10 + $0x38] sm:$0xf]
      %v9374 = vld [vmem:[%s10 + $0x3c] sm:$0xf]
      %v9375 = vld [vmem:[%s10 + $0x40] sm:$0xf]
      %v9376 = vld [vmem:[%s10 + $0x44] sm:$0xf]
      %v9377 = vld [vmem:[%s10 + $0x48] sm:$0xf]
      %v9378 = vld [vmem:[%s10 + $0x4c] sm:$0xf]
      %v9379 = vld [vmem:[%s10 + $0x50] sm:$0xf]
      %v9380 = vld [vmem:[%s10 + $0x54] sm:$0xf]
      %v9381 = vld [vmem:[%s10 + $0x58] sm:$0xf]
      %v9382 = vld [vmem:[%s10 + $0x5c] sm:$0xf]
      %v9383 = vld [vmem:[%s10 + $0x60] sm:$0xf]
      %v9384 = vld [vmem:[%s10 + $0x64] sm:$0xf]
      %v9385 = vld [vmem:[%s10 + $0x68] sm:$0xf]
      %v9386 = vld [vmem:[%s10 + $0x6c] sm:$0xf]
      %v9387 = vld [vmem:[%s10 + $0x70] sm:$0xf]
      %v9388 = vld [vmem:[%s10 + $0x74] sm:$0xf]
      %v9389 = vld [vmem:[%s10 + $0x78] sm:$0xf]
      %v9390 = vld [vmem:[%s10 + $0x7c] sm:$0xf]
      %v9423 = vunpack.c.l.b16 %v9359
      %v9424 = vunpack.c.l.b16 %v9360
      %v9425 = vunpack.c.l.b16 %v9361
      %v9426 = vunpack.c.l.b16 %v9362
      %v9427 = vunpack.c.l.b16 %v9363
      %v9428 = vunpack.c.l.b16 %v9364
      %v9429 = vunpack.c.l.b16 %v9365
      %v9430 = vunpack.c.l.b16 %v9366
      %v9431 = vunpack.c.l.b16 %v9367
      %v9432 = vunpack.c.l.b16 %v9368
      %v9433 = vunpack.c.l.b16 %v9369
      %v9434 = vunpack.c.l.b16 %v9370
      %v9435 = vunpack.c.l.b16 %v9371
      %v9436 = vunpack.c.l.b16 %v9372
      %v9437 = vunpack.c.l.b16 %v9373
      %v9438 = vunpack.c.l.b16 %v9374
      %v9439 = vunpack.c.l.b16 %v9375
      %v9440 = vunpack.c.l.b16 %v9376
      %v9441 = vunpack.c.l.b16 %v9377
      %v9442 = vunpack.c.l.b16 %v9378
      %v9443 = vunpack.c.l.b16 %v9379
      %v9444 = vunpack.c.l.b16 %v9380
      %v9445 = vunpack.c.l.b16 %v9381
      %v9446 = vunpack.c.l.b16 %v9382
      %v9447 = vunpack.c.l.b16 %v9383
      %v9448 = vunpack.c.l.b16 %v9384
      %v9449 = vunpack.c.l.b16 %v9385
      %v9450 = vunpack.c.l.b16 %v9386
      %v9451 = vunpack.c.l.b16 %v9387
      %v9452 = vunpack.c.l.b16 %v9388
      %v9453 = vunpack.c.l.b16 %v9389
      %v9454 = vunpack.c.l.b16 %v9390
      %v9455 = vpack.c.b16 %v9424, %v9423
      %v9456 = vpack.c.b16 %v9426, %v9425
      %v9457 = vpack.c.b16 %v9428, %v9427
      %v9458 = vpack.c.b16 %v9430, %v9429
      %v9459 = vpack.c.b16 %v9432, %v9431
      %v9460 = vpack.c.b16 %v9434, %v9433
      %v9461 = vpack.c.b16 %v9436, %v9435
      %v9462 = vpack.c.b16 %v9438, %v9437
      %v9463 = vpack.c.b16 %v9440, %v9439
      %v9464 = vpack.c.b16 %v9442, %v9441
      %v9465 = vpack.c.b16 %v9444, %v9443
      %v9466 = vpack.c.b16 %v9446, %v9445
      %v9467 = vpack.c.b16 %v9448, %v9447
      %v9468 = vpack.c.b16 %v9450, %v9449
      %v9469 = vpack.c.b16 %v9452, %v9451
      %v9470 = vpack.c.b16 %v9454, %v9453
      %9487 = vmatprep.subr.bf16.mxu0 0
      %9488 = vmatpush1.bf16.msra.mxu0 %v9462
      %9489 = vmatprep.subr.bf16.mxu0 0
      %9490 = vmatpush1.bf16.msra.mxu0 %v9461
      %9491 = vmatprep.subr.bf16.mxu0 0
      %9492 = vmatpush1.bf16.msra.mxu0 %v9460
      %9493 = vmatprep.subr.bf16.mxu0 0
      %9494 = vmatpush1.bf16.msra.mxu0 %v9459
      %9495 = vmatprep.subr.bf16.mxu0 0
      %9496 = vmatpush1.bf16.msra.mxu0 %v9458
      %9497 = vmatprep.subr.bf16.mxu0 0
      %9498 = vmatpush1.bf16.msra.mxu0 %v9457
      %9499 = vmatprep.subr.bf16.mxu0 0
      %9500 = vmatpush1.bf16.msra.mxu0 %v9456
      %9501 = vmatprep.subr.bf16.mxu0 0
      %9502 = vmatpush1.bf16.msra.mxu0 %v9455
      %9503 = vmatprep.subr.bf16.mxu0 0
      %9504 = vmatpush2.bf16.msra.mxu0 %v9470
      %9505 = vmatprep.subr.bf16.mxu0 0
      %9506 = vmatpush2.bf16.msra.mxu0 %v9469
      %9507 = vmatprep.subr.bf16.mxu0 0
      %9508 = vmatpush2.bf16.msra.mxu0 %v9468
      %9509 = vmatprep.subr.bf16.mxu0 0
      %9510 = vmatpush2.bf16.msra.mxu0 %v9467
      %9511 = vmatprep.subr.bf16.mxu0 0
      %9512 = vmatpush2.bf16.msra.mxu0 %v9466
      %9513 = vmatprep.subr.bf16.mxu0 0
      %9514 = vmatpush2.bf16.msra.mxu0 %v9465
      %9515 = vmatprep.subr.bf16.mxu0 0
      %9516 = vmatpush2.bf16.msra.mxu0 %v9464
      %9517 = vmatprep.subr.bf16.mxu0 0
      %9518 = vmatpush2.bf16.msra.mxu0 %v9463
      %9519 = vmatprep.mubr.bf16.mxu0 %v9358
      %9520 = vmatmul.mubr.bf16.gmra.mxu0 %v9357
      %v9521 = vpop.f32.mrf.mxu0
      %v9522 = vadd.f32 0.0, %v9521
      %v9523 = vpop.f32.mrf.mxu0
      %v9524 = vpop.f32.mrf.mxu0
      %v9525 = vadd.f32 0.0, %v9524
      %v9526 = vpop.f32.mrf.mxu0
      %9527 = vdwg.mxu0
      %9528 = vst [vmem:[%s391] sm:$0xff] %v9522
      %9529 = vst [vmem:[%s391 + $0x8] sm:$0xff] %v9525
      %s9530 = smul.u32 2, %s22
      %p9531 = scmp.lt.s32.totalorder %s9530, 3
      %s9532 = scalar_select %p9531, %s9530, 3
      %s9533 = smul.addr %s9532, 8
      %s9534 = scalar_lea.vmem %s11, %s9533
      // Predicated region
      $region65: #{_lambda_.1} parent=63 // pred_check
        %p9535 = pneg %p276
      $region66: #{_lambda_.1} parent=63 // pred_check_branch
        %9537 = sbr.rel (%p9535) target = $region68
      $region67: #{_lambda_.1} parent=63 // pred_region
        %s9538 = smul.u32 2, %s22
      $region68: #{_lambda_.1} parent=63 // pred_fallthru
        _
    $region64: #{_lambda_.1} parent=5 // pred_fallthru
      _
    %p9539 = scmp.le.s32.totalorder 2, %s17
    // Predicated region
    $region69: #{_lambda_.1} parent=5 // pred_check
      %p9540 = pneg %p9539
    $region70: #{_lambda_.1} parent=5 // pred_check_branch
      %9542 = sbr.rel (%p9540) target = $region72
    $region71: #{_lambda_.1} parent=5 // pred_region
      %s9543 = ssub.s32 %s17, 2
      // Predicated region
      $region73: #{_lambda_.1} parent=71 // pred_check
        %p9544 = pneg %p282
      $region74: #{_lambda_.1} parent=71 // pred_check_branch
        %9546 = sbr.rel (%p9544) target = $region76
      $region75: #{_lambda_.1} parent=71 // pred_region
        %s9547 = smul.u32 2, %s23
        %p9548 = scmp.lt.s32.totalorder %s9547, 3
        %s9549 = scalar_select %p9548, %s9547, 3
        %s9550 = smul.addr %s9549, 8
        %s9551 = scalar_lea.vmem %s11, %s9550
      $region76: #{_lambda_.1} parent=71 // pred_fallthru
        _
    $region72: #{_lambda_.1} parent=5 // pred_fallthru
      _
  $region6: #{_lambda_.1} parent=0 // loop_footer
    %s21 = sadd.s32 1, %s17
  $region7: #{_lambda_.1} parent=0 // loop_footer_branch
    %16 = sbr.rel target = $region3
  $region8: #{_lambda_.1} parent=0 // loop_exit
    _

</llo_original>
